<compile_context>
chip_gen: v7x
topology: tpu7x:2x2x1
jax: 0.10.0
libtpu: 0.0.40
codegen_flags: <defaults>
</compile_context>

<pallas_src>
import functools

import jax
import jax.numpy as jnp
import numpy as np
from jax import lax
from jax.experimental import pallas as pl
from jax.experimental.pallas import tpu as pltpu


# -----------------------------------------------------------------------------
# Host-side (trace-time) constant builders
# -----------------------------------------------------------------------------
def _bilinear_matrix_np(in_size, out_size):
    """PyTorch bilinear (align_corners=False) 1-D interpolation matrix (out, in)."""
    scale = in_size / out_size
    i = np.arange(out_size, dtype=np.float64)
    src = np.maximum((i + 0.5) * scale - 0.5, 0.0)
    i0 = np.clip(np.floor(src).astype(np.int64), 0, in_size - 1)
    i1 = np.minimum(i0 + 1, in_size - 1)
    w1 = src - i0
    w0 = 1.0 - w1
    A = np.zeros((out_size, in_size), np.float64)
    A[np.arange(out_size), i0] += w0
    A[np.arange(out_size), i1] += w1
    return A.astype(np.float32)


def _maxpool_select_np(h_in, w_in):
    """9 one-hot gather matrices implementing MaxPool2d(3, stride=2, padding=1).

    Out-of-range taps gather 0.0, which is safe because the pooled operand is
    post-ReLU (>= 0) and every window contains at least one valid element.
    """
    h_out = (h_in + 2 - 3) // 2 + 1
    w_out = (w_in + 2 - 3) // 2 + 1
    S = np.zeros((9, h_out * w_out, h_in * w_in), np.float32)
    for kh in range(3):
        for kw in range(3):
            t = kh * 3 + kw
            for oh in range(h_out):
                ih = 2 * oh - 1 + kh
                if not (0 <= ih < h_in):
                    continue
                for ow in range(w_out):
                    iw = 2 * ow - 1 + kw
                    if 0 <= iw < w_in:
                        S[t, oh * w_out + ow, ih * w_in + iw] = 1.0
    return S, h_out, w_out


def _final_resize_select_np(hp, wp, final_size):
    """(Hf*Wf, hp*wp) matrix: bilinear resize of the valid (hp-4, wp-4) top-left
    corner of the wp-wide conv grid to final_size; garbage grid columns -> 0."""
    hc, wc = hp - 4, wp - 4
    hf, wf = final_size
    R = np.kron(_bilinear_matrix_np(hc, hf), _bilinear_matrix_np(wc, wf))
    Rsel = np.zeros((hf * wf, hp * wp), np.float32)
    for oh in range(hc):
        for ow in range(wc):
            Rsel[:, oh * wp + ow] = R[:, oh * wc + ow]
    return Rsel


# -----------------------------------------------------------------------------
# Parameters (deterministic, synthetic) and packing (weights -> matmul layout)
# -----------------------------------------------------------------------------
def _bn_affine(key, c):
    """Fold eval-mode BatchNorm (gamma, beta, running stats) to scale/shift."""
    k1, k2, k3, k4 = jax.random.split(key, 4)
    gamma = jax.random.uniform(k1, (c,), jnp.float32, 0.5, 1.5)
    beta = 0.1 * jax.random.normal(k2, (c,), jnp.float32)
    mean = 0.1 * jax.random.normal(k3, (c,), jnp.float32)
    var = jax.random.uniform(k4, (c,), jnp.float32, 0.5, 1.5)
    scale = gamma * jax.lax.rsqrt(var + 1e-5)
    shift = beta - mean * scale
    return scale, shift


def init_decoder_params(key, num_joints):
    """PyTorch-layout parameters (Conv2d weight = (Cout, Cin, kh, kw))."""
    ks = jax.random.split(key, 12)
    p = {}
    p["ll_w"] = 0.05 * jax.random.normal(ks[0], (48, 256, 1, 1), jnp.float32)
    p["ll_b"] = 0.05 * jax.random.normal(ks[1], (48,), jnp.float32)
    p["ll_scale"], p["ll_shift"] = _bn_affine(ks[2], 48)

    p["c1_w"] = 0.02 * jax.random.normal(ks[3], (256, 304, 3, 3), jnp.float32)
    p["c1_b"] = 0.02 * jax.random.normal(ks[4], (256,), jnp.float32)
    p["c1_scale"], p["c1_shift"] = _bn_affine(ks[5], 256)

    p["c2_w"] = 0.02 * jax.random.normal(ks[6], (256, 256, 3, 3), jnp.float32)
    p["c2_b"] = 0.02 * jax.random.normal(ks[7], (256,), jnp.float32)
    p["c2_scale"], p["c2_shift"] = _bn_affine(ks[8], 256)

    p["c3_w"] = 0.05 * jax.random.normal(ks[9], (num_joints, 256, 1, 1), jnp.float32)
    p["c3_b"] = 0.05 * jax.random.normal(ks[10], (num_joints,), jnp.float32)
    p["c3_scale"], p["c3_shift"] = _bn_affine(ks[11], num_joints)
    return p


def pack_decoder_params(p):
    """Pre-pack weights into matmul layout, fold conv bias into the BN shift,
    cast conv weights to bf16 (MXU inputs); done once, outside the forward."""
    bf16 = jnp.bfloat16

    def fold(b, scale, shift):
        return scale.reshape(1, -1), (b * scale + shift).reshape(1, -1)

    q = {}
    q["ll_w"] = p["ll_w"].reshape(48, 256).T.astype(bf16)                      # (256, 48)
    q["ll_s"], q["ll_t"] = fold(p["ll_b"], p["ll_scale"], p["ll_shift"])

    q["c1_w"] = jnp.transpose(p["c1_w"], (2, 3, 1, 0)).reshape(9, 304, 256).astype(bf16)
    q["c1_s"], q["c1_t"] = fold(p["c1_b"], p["c1_scale"], p["c1_shift"])

    q["c2_w"] = jnp.transpose(p["c2_w"], (2, 3, 1, 0)).reshape(9, 256, 256).astype(bf16)
    q["c2_s"], q["c2_t"] = fold(p["c2_b"], p["c2_scale"], p["c2_shift"])

    nj = p["c3_w"].shape[0]
    q["c3_w"] = p["c3_w"].reshape(nj, 256).T.astype(bf16)                      # (256, J)
    q["c3_s"], q["c3_t"] = fold(p["c3_b"], p["c3_scale"], p["c3_shift"])
    return q


# -----------------------------------------------------------------------------
# The single fused Pallas kernel (one grid step == one batch element)
# -----------------------------------------------------------------------------
def _decoder_kernel(low_ref, x_ref,
                    wll_ref, ll_s_ref, ll_t_ref,
                    spool_ref, r1_ref,
                    w1_ref, c1_s_ref, c1_t_ref,
                    w2_ref, c2_s_ref, c2_t_ref,
                    wc3_ref, c3_s_ref, c3_t_ref,
                    r2_ref,
                    o_ref,
                    cat_ref, h1_ref,
                    *, grid_rows, pad_rows, tap_offs):
    f32 = jnp.float32
    bf16 = jnp.bfloat16
    cin = cat_ref.shape[1]          # 304

    # --- low-level branch: 1x1 conv (+ folded bias) + BN + ReLU -------------
    low = low_ref[0].astype(bf16)                                     # (Hl*Wl, 256)
    y = jnp.dot(low, wll_ref[...], preferred_element_type=f32)        # (Hl*Wl, 48)
    y = jnp.maximum(y * ll_s_ref[...] + ll_t_ref[...], 0.0)

    # --- MaxPool2d(3, stride=2, padding=1) as 9 gather-matmuls + running max
    pooled = jnp.dot(spool_ref[0], y, preferred_element_type=f32)     # (G, 48)
    for t in range(1, 9):
        pooled = jnp.maximum(
            pooled, jnp.dot(spool_ref[t], y, preferred_element_type=f32))

    # --- bilinear upsample of x to the pooled grid (resize-as-matmul) -------
    x_up = jnp.dot(r1_ref[...], x_ref[0], preferred_element_type=f32)  # (G, 256)

    # --- channel concat [x_up | pooled] written straight into the padded grid
    cat_ref[0:grid_rows, 0:256] = x_up
    cat_ref[0:grid_rows, 256:cin] = pooled
    cat_ref[grid_rows:pad_rows, :] = jnp.zeros((pad_rows - grid_rows, cin), f32)

    # --- 3x3 conv #1 (VALID) + BN + ReLU: 9 shifted-slice matmuls -----------
    acc = None
    for t, off in enumerate(tap_offs):
        patch = cat_ref[off:off + grid_rows, :].astype(bf16)          # (G, 304)
        d = jnp.dot(patch, w1_ref[t], preferred_element_type=f32)     # (G, 256)
        acc = d if acc is None else acc + d
    h1 = jnp.maximum(acc * c1_s_ref[...] + c1_t_ref[...], 0.0)

    h1_ref[0:grid_rows, :] = h1
    h1_ref[grid_rows:pad_rows, :] = jnp.zeros((pad_rows - grid_rows, 256), f32)

    # --- 3x3 conv #2 (VALID) + BN + ReLU -------------------------------------
    acc = None
    for t, off in enumerate(tap_offs):
        patch = h1_ref[off:off + grid_rows, :].astype(bf16)
        d = jnp.dot(patch, w2_ref[t], preferred_element_type=f32)
        acc = d if acc is None else acc + d
    h2 = jnp.maximum(acc * c2_s_ref[...] + c2_t_ref[...], 0.0)        # (G, 256)

    # --- final 1x1 conv + BN + ReLU ------------------------------------------
    h3 = jnp.dot(h2.astype(bf16), wc3_ref[...], preferred_element_type=f32)
    h3 = jnp.maximum(h3 * c3_s_ref[...] + c3_t_ref[...], 0.0)         # (G, J)

    # --- final bilinear resize of the valid corner (select+resize matmul) ---
    o_ref[0] = jnp.dot(r2_ref[...], h3, preferred_element_type=f32)   # (Hf*Wf, J)


# -----------------------------------------------------------------------------
# Forward wrapper (NCHW in / NCHW out, like PyTorch)
# -----------------------------------------------------------------------------
def decoder_forward(packed, low_level, x, final_size):
    N, c_low, hl, wl = low_level.shape
    _, c_x, hx, wx = x.shape
    assert c_low == 256 and c_x == 256

    hp, wp = (hl + 2 - 3) // 2 + 1, (wl + 2 - 3) // 2 + 1  # pooled spatial size
    assert hp >= 5 and wp >= 5, "low_level too small for two VALID 3x3 convs"
    grid_rows = hp * wp
    pad_rows = grid_rows + 3 * wp          # room for tap offsets (max 2*wp + 2)
    tap_offs = tuple(kh * wp + kw for kh in range(3) for kw in range(3))
    hf, wf = final_size
    nj = packed["c3_w"].shape[1]

    # host-built constant matrices (trace-time)
    spool_np, hp2, wp2 = _maxpool_select_np(hl, wl)
    assert (hp2, wp2) == (hp, wp)
    spool = jnp.asarray(spool_np)                                            # (9, G, Hl*Wl)
    r1 = jnp.asarray(np.kron(_bilinear_matrix_np(hx, hp),
                             _bilinear_matrix_np(wx, wp)))                   # (G, Hx*Wx)
    r2 = jnp.asarray(_final_resize_select_np(hp, wp, final_size))            # (Hf*Wf, G)

    # NCHW -> channels-last, spatial flattened (rows = h*W + w, lanes = C)
    low2d = jnp.transpose(low_level, (0, 2, 3, 1)).reshape(N, hl * wl, 256)
    x2d = jnp.transpose(x, (0, 2, 3, 1)).reshape(N, hx * wx, 256)
    low2d = low2d.astype(jnp.float32)
    x2d = x2d.astype(jnp.float32)

    kernel = functools.partial(_decoder_kernel, grid_rows=grid_rows,
                               pad_rows=pad_rows, tap_offs=tap_offs)

    def full(a):
        nd = a.ndim
        return pl.BlockSpec(tuple(a.shape), lambda b, nd=nd: (0,) * nd)

    out = pl.pallas_call(
        kernel,
        out_shape=jax.ShapeDtypeStruct((N, hf * wf, nj), jnp.float32),
        grid=(N,),
        in_specs=[
            pl.BlockSpec((1, hl * wl, 256), lambda b: (b, 0, 0)),
            pl.BlockSpec((1, hx * wx, 256), lambda b: (b, 0, 0)),
            full(packed["ll_w"]), full(packed["ll_s"]), full(packed["ll_t"]),
            full(spool), full(r1),
            full(packed["c1_w"]), full(packed["c1_s"]), full(packed["c1_t"]),
            full(packed["c2_w"]), full(packed["c2_s"]), full(packed["c2_t"]),
            full(packed["c3_w"]), full(packed["c3_s"]), full(packed["c3_t"]),
            full(r2),
        ],
        out_specs=pl.BlockSpec((1, hf * wf, nj), lambda b: (b, 0, 0)),
        scratch_shapes=[
            pltpu.VMEM((pad_rows, 304), jnp.float32),   # concat grid (with pad rows)
            pltpu.VMEM((pad_rows, 256), jnp.float32),   # conv1 output grid (with pad rows)
        ],
        compiler_params=pltpu.CompilerParams(
            dimension_semantics=("parallel",)),
    )(low2d, x2d,
      packed["ll_w"], packed["ll_s"], packed["ll_t"],
      spool, r1,
      packed["c1_w"], packed["c1_s"], packed["c1_t"],
      packed["c2_w"], packed["c2_s"], packed["c2_t"],
      packed["c3_w"], packed["c3_s"], packed["c3_t"],
      r2)

    # (N, Hf*Wf, J) -> NCHW
    return jnp.transpose(out, (0, 2, 1)).reshape(N, nj, hf, wf)


# -----------------------------------------------------------------------------
# Plain-JAX (XLA) reference of the PyTorch module, for a numerical self-check
# -----------------------------------------------------------------------------
def decoder_reference(params, low_level, x, final_size):
    f32 = jnp.float32
    low = jnp.transpose(low_level, (0, 2, 3, 1)).astype(f32)   # NHWC
    xx = jnp.transpose(x, (0, 2, 3, 1)).astype(f32)

    def conv(inp, w, b):
        w_hwio = jnp.transpose(w, (2, 3, 1, 0))
        out = lax.conv_general_dilated(inp, w_hwio, (1, 1), "VALID",
                                       dimension_numbers=("NHWC", "HWIO", "NHWC"))
        return out + b.reshape(1, 1, 1, -1)

    def bn_relu(z, scale, shift):
        return jnp.maximum(z * scale.reshape(1, 1, 1, -1) + shift.reshape(1, 1, 1, -1), 0.0)

    y = bn_relu(conv(low, params["ll_w"], params["ll_b"]),
                params["ll_scale"], params["ll_shift"])
    y = jnp.pad(y, ((0, 0), (1, 1), (1, 1), (0, 0)), constant_values=-jnp.inf)
    y = lax.reduce_window(y, -jnp.inf, lax.max, (1, 3, 3, 1), (1, 2, 2, 1), "VALID")

    hp, wp = y.shape[1], y.shape[2]
    ah = jnp.asarray(_bilinear_matrix_np(xx.shape[1], hp))
    aw = jnp.asarray(_bilinear_matrix_np(xx.shape[2], wp))
    xx = jnp.einsum("oh,nhwc->nowc", ah, xx)
    xx = jnp.einsum("pw,nowc->nopc", aw, xx)

    out = jnp.concatenate([xx, y], axis=-1)
    out = bn_relu(conv(out, params["c1_w"], params["c1_b"]),
                  params["c1_scale"], params["c1_shift"])
    out = bn_relu(conv(out, params["c2_w"], params["c2_b"]),
                  params["c2_scale"], params["c2_shift"])
    out = bn_relu(conv(out, params["c3_w"], params["c3_b"]),
                  params["c3_scale"], params["c3_shift"])

    hf, wf = final_size
    bh = jnp.asarray(_bilinear_matrix_np(out.shape[1], hf))
    bw = jnp.asarray(_bilinear_matrix_np(out.shape[2], wf))
    out = jnp.einsum("oh,nhwc->nowc", bh, out)
    out = jnp.einsum("pw,nowc->nopc", bw, out)
    return jnp.transpose(out, (0, 3, 1, 2))


if __name__ == "__main__":
    key = jax.random.PRNGKey(0)
    k_p, k_ll, k_x = jax.random.split(key, 3)

    num_joints = 16
    final_size = (16, 16)

    params = init_decoder_params(k_p, num_joints)
    packed = pack_decoder_params(params)

    # Inputs (NCHW like PyTorch). Channel counts are fixed by the architecture.
    low_level = jax.random.normal(k_ll, (2, 256, 16, 16), jnp.float32)
    x = jax.random.normal(k_x, (2, 256, 4, 4), jnp.float32)

    fwd = jax.jit(functools.partial(decoder_forward, final_size=final_size))
    out = jax.block_until_ready(fwd(packed, low_level, x))

    assert out.shape == (2, num_joints, final_size[0], final_size[1]), out.shape
    assert bool(jnp.all(jnp.isfinite(out)))

    # Numerical self-check against the plain-JAX reference (bf16 conv weights in
    # the kernel vs f32 reference -> generous relative-L2 tolerance).
    ref = jax.block_until_ready(
        jax.jit(functools.partial(decoder_reference, final_size=final_size))(
            params, low_level, x))
    rel = float(jnp.linalg.norm(out - ref) / (jnp.linalg.norm(ref) + 1e-6))
    assert rel < 5e-2, f"relative L2 error too large: {rel}"

    print("KERNEL_OK")
</pallas_src>

<mosaic_0001>
module attributes {stable_mosaic.version = 11 : i64} {
  func.func @_decoder_kernel(%arg0: i32, %arg1: memref<1x256x256xf32, #tpu.memory_space<vmem>>, %arg2: memref<1x16x256xf32, #tpu.memory_space<vmem>>, %arg3: memref<256x48xbf16, #tpu.memory_space<vmem>>, %arg4: memref<1x48xf32, #tpu.memory_space<vmem>>, %arg5: memref<1x48xf32, #tpu.memory_space<vmem>>, %arg6: memref<9x64x256xf32, #tpu.memory_space<vmem>>, %arg7: memref<64x16xf32, #tpu.memory_space<vmem>>, %arg8: memref<9x304x256xbf16, #tpu.memory_space<vmem>>, %arg9: memref<1x256xf32, #tpu.memory_space<vmem>>, %arg10: memref<1x256xf32, #tpu.memory_space<vmem>>, %arg11: memref<9x256x256xbf16, #tpu.memory_space<vmem>>, %arg12: memref<1x256xf32, #tpu.memory_space<vmem>>, %arg13: memref<1x256xf32, #tpu.memory_space<vmem>>, %arg14: memref<256x16xbf16, #tpu.memory_space<vmem>>, %arg15: memref<1x16xf32, #tpu.memory_space<vmem>>, %arg16: memref<1x16xf32, #tpu.memory_space<vmem>>, %arg17: memref<256x64xf32, #tpu.memory_space<vmem>>, %arg18: memref<1x256x16xf32, #tpu.memory_space<vmem>>, %arg19: memref<88x304xf32, #tpu.memory_space<vmem>>, %arg20: memref<88x256xf32, #tpu.memory_space<vmem>>) attributes {dimension_semantics = [#tpu.dimension_semantics<parallel>], iteration_bounds = array<i64: 2>, scalar_prefetch = 0 : i64, scratch_operands = 2 : i64, tpu.core_type = #tpu.core_type<tc>, window_params = [{transform_indices = @transform_0, window_bounds = array<i64: 1, 256, 256>}, {transform_indices = @transform_1, window_bounds = array<i64: 1, 16, 256>}, {pipeline_mode = #tpu.pipeline_mode<synchronous>, transform_indices = @transform_2, window_bounds = array<i64: 256, 48>}, {pipeline_mode = #tpu.pipeline_mode<synchronous>, transform_indices = @transform_3, window_bounds = array<i64: 1, 48>}, {pipeline_mode = #tpu.pipeline_mode<synchronous>, transform_indices = @transform_4, window_bounds = array<i64: 1, 48>}, {pipeline_mode = #tpu.pipeline_mode<synchronous>, transform_indices = @transform_5, window_bounds = array<i64: 9, 64, 256>}, {pipeline_mode = #tpu.pipeline_mode<synchronous>, transform_indices = @transform_6, window_bounds = array<i64: 64, 16>}, {pipeline_mode = #tpu.pipeline_mode<synchronous>, transform_indices = @transform_7, window_bounds = array<i64: 9, 304, 256>}, {pipeline_mode = #tpu.pipeline_mode<synchronous>, transform_indices = @transform_8, window_bounds = array<i64: 1, 256>}, {pipeline_mode = #tpu.pipeline_mode<synchronous>, transform_indices = @transform_9, window_bounds = array<i64: 1, 256>}, {pipeline_mode = #tpu.pipeline_mode<synchronous>, transform_indices = @transform_10, window_bounds = array<i64: 9, 256, 256>}, {pipeline_mode = #tpu.pipeline_mode<synchronous>, transform_indices = @transform_11, window_bounds = array<i64: 1, 256>}, {pipeline_mode = #tpu.pipeline_mode<synchronous>, transform_indices = @transform_12, window_bounds = array<i64: 1, 256>}, {pipeline_mode = #tpu.pipeline_mode<synchronous>, transform_indices = @transform_13, window_bounds = array<i64: 256, 16>}, {pipeline_mode = #tpu.pipeline_mode<synchronous>, transform_indices = @transform_14, window_bounds = array<i64: 1, 16>}, {pipeline_mode = #tpu.pipeline_mode<synchronous>, transform_indices = @transform_15, window_bounds = array<i64: 1, 16>}, {pipeline_mode = #tpu.pipeline_mode<synchronous>, transform_indices = @transform_16, window_bounds = array<i64: 256, 64>}, {transform_indices = @transform_17, window_bounds = array<i64: 1, 256, 16>}]} {
    %c0 = arith.constant 0 : index
    %c0_0 = arith.constant 0 : index
    %c0_1 = arith.constant 0 : index
    %0 = vector.load %arg1[%c0, %c0_0, %c0_1] : memref<1x256x256xf32, #tpu.memory_space<vmem>>, vector<1x256x256xf32>
    %1 = vector.shape_cast %0 : vector<1x256x256xf32> to vector<256x256xf32>
    %2 = arith.truncf %1 : vector<256x256xf32> to vector<256x256xbf16>
    %c0_2 = arith.constant 0 : index
    %c0_3 = arith.constant 0 : index
    %3 = vector.load %arg3[%c0_2, %c0_3] : memref<256x48xbf16, #tpu.memory_space<vmem>>, vector<256x48xbf16>
    %cst = arith.constant dense<0.000000e+00> : vector<256x48xf32>
    %4 = tpu.matmul %2, %3, %cst {dimension_numbers = #tpu.dot_dimension_numbers<[1], [0], [0], [1], [0, 0, 1, 1], [], []>} : vector<256x256xbf16>, vector<256x48xbf16>, vector<256x48xf32> -> vector<256x48xf32>
    %c0_4 = arith.constant 0 : index
    %c0_5 = arith.constant 0 : index
    %5 = vector.load %arg4[%c0_4, %c0_5] : memref<1x48xf32, #tpu.memory_space<vmem>>, vector<1x48xf32>
    %6 = vector.broadcast %5 : vector<1x48xf32> to vector<256x48xf32>
    %7 = arith.mulf %4, %6 : vector<256x48xf32>
    %c0_6 = arith.constant 0 : index
    %c0_7 = arith.constant 0 : index
    %8 = vector.load %arg5[%c0_6, %c0_7] : memref<1x48xf32, #tpu.memory_space<vmem>>, vector<1x48xf32>
    %9 = vector.broadcast %8 : vector<1x48xf32> to vector<256x48xf32>
    %10 = arith.addf %7, %9 : vector<256x48xf32>
    %cst_8 = arith.constant 0.000000e+00 : f32
    %11 = vector.broadcast %cst_8 : f32 to vector<256x48xf32>
    %12 = arith.maximumf %10, %11 : vector<256x48xf32>
    %c0_9 = arith.constant 0 : index
    %c0_10 = arith.constant 0 : index
    %c0_11 = arith.constant 0 : index
    %13 = vector.load %arg6[%c0_9, %c0_10, %c0_11] : memref<9x64x256xf32, #tpu.memory_space<vmem>>, vector<1x64x256xf32>
    %14 = vector.shape_cast %13 : vector<1x64x256xf32> to vector<64x256xf32>
    %cst_12 = arith.constant dense<0.000000e+00> : vector<64x48xf32>
    %15 = tpu.matmul %14, %12, %cst_12 {dimension_numbers = #tpu.dot_dimension_numbers<[1], [0], [0], [1], [0, 0, 1, 1], [], []>} : vector<64x256xf32>, vector<256x48xf32>, vector<64x48xf32> -> vector<64x48xf32>
    %c1 = arith.constant 1 : index
    %c0_13 = arith.constant 0 : index
    %c0_14 = arith.constant 0 : index
    %16 = vector.load %arg6[%c1, %c0_13, %c0_14] : memref<9x64x256xf32, #tpu.memory_space<vmem>>, vector<1x64x256xf32>
    %17 = vector.shape_cast %16 : vector<1x64x256xf32> to vector<64x256xf32>
    %cst_15 = arith.constant dense<0.000000e+00> : vector<64x48xf32>
    %18 = tpu.matmul %17, %12, %cst_15 {dimension_numbers = #tpu.dot_dimension_numbers<[1], [0], [0], [1], [0, 0, 1, 1], [], []>} : vector<64x256xf32>, vector<256x48xf32>, vector<64x48xf32> -> vector<64x48xf32>
    %19 = arith.maximumf %15, %18 : vector<64x48xf32>
    %c2 = arith.constant 2 : index
    %c0_16 = arith.constant 0 : index
    %c0_17 = arith.constant 0 : index
    %20 = vector.load %arg6[%c2, %c0_16, %c0_17] : memref<9x64x256xf32, #tpu.memory_space<vmem>>, vector<1x64x256xf32>
    %21 = vector.shape_cast %20 : vector<1x64x256xf32> to vector<64x256xf32>
    %cst_18 = arith.constant dense<0.000000e+00> : vector<64x48xf32>
    %22 = tpu.matmul %21, %12, %cst_18 {dimension_numbers = #tpu.dot_dimension_numbers<[1], [0], [0], [1], [0, 0, 1, 1], [], []>} : vector<64x256xf32>, vector<256x48xf32>, vector<64x48xf32> -> vector<64x48xf32>
    %23 = arith.maximumf %19, %22 : vector<64x48xf32>
    %c3 = arith.constant 3 : index
    %c0_19 = arith.constant 0 : index
    %c0_20 = arith.constant 0 : index
    %24 = vector.load %arg6[%c3, %c0_19, %c0_20] : memref<9x64x256xf32, #tpu.memory_space<vmem>>, vector<1x64x256xf32>
    %25 = vector.shape_cast %24 : vector<1x64x256xf32> to vector<64x256xf32>
    %cst_21 = arith.constant dense<0.000000e+00> : vector<64x48xf32>
    %26 = tpu.matmul %25, %12, %cst_21 {dimension_numbers = #tpu.dot_dimension_numbers<[1], [0], [0], [1], [0, 0, 1, 1], [], []>} : vector<64x256xf32>, vector<256x48xf32>, vector<64x48xf32> -> vector<64x48xf32>
    %27 = arith.maximumf %23, %26 : vector<64x48xf32>
    %c4 = arith.constant 4 : index
    %c0_22 = arith.constant 0 : index
    %c0_23 = arith.constant 0 : index
    %28 = vector.load %arg6[%c4, %c0_22, %c0_23] : memref<9x64x256xf32, #tpu.memory_space<vmem>>, vector<1x64x256xf32>
    %29 = vector.shape_cast %28 : vector<1x64x256xf32> to vector<64x256xf32>
    %cst_24 = arith.constant dense<0.000000e+00> : vector<64x48xf32>
    %30 = tpu.matmul %29, %12, %cst_24 {dimension_numbers = #tpu.dot_dimension_numbers<[1], [0], [0], [1], [0, 0, 1, 1], [], []>} : vector<64x256xf32>, vector<256x48xf32>, vector<64x48xf32> -> vector<64x48xf32>
    %31 = arith.maximumf %27, %30 : vector<64x48xf32>
    %c5 = arith.constant 5 : index
    %c0_25 = arith.constant 0 : index
    %c0_26 = arith.constant 0 : index
    %32 = vector.load %arg6[%c5, %c0_25, %c0_26] : memref<9x64x256xf32, #tpu.memory_space<vmem>>, vector<1x64x256xf32>
    %33 = vector.shape_cast %32 : vector<1x64x256xf32> to vector<64x256xf32>
    %cst_27 = arith.constant dense<0.000000e+00> : vector<64x48xf32>
    %34 = tpu.matmul %33, %12, %cst_27 {dimension_numbers = #tpu.dot_dimension_numbers<[1], [0], [0], [1], [0, 0, 1, 1], [], []>} : vector<64x256xf32>, vector<256x48xf32>, vector<64x48xf32> -> vector<64x48xf32>
    %35 = arith.maximumf %31, %34 : vector<64x48xf32>
    %c6 = arith.constant 6 : index
    %c0_28 = arith.constant 0 : index
    %c0_29 = arith.constant 0 : index
    %36 = vector.load %arg6[%c6, %c0_28, %c0_29] : memref<9x64x256xf32, #tpu.memory_space<vmem>>, vector<1x64x256xf32>
    %37 = vector.shape_cast %36 : vector<1x64x256xf32> to vector<64x256xf32>
    %cst_30 = arith.constant dense<0.000000e+00> : vector<64x48xf32>
    %38 = tpu.matmul %37, %12, %cst_30 {dimension_numbers = #tpu.dot_dimension_numbers<[1], [0], [0], [1], [0, 0, 1, 1], [], []>} : vector<64x256xf32>, vector<256x48xf32>, vector<64x48xf32> -> vector<64x48xf32>
    %39 = arith.maximumf %35, %38 : vector<64x48xf32>
    %c7 = arith.constant 7 : index
    %c0_31 = arith.constant 0 : index
    %c0_32 = arith.constant 0 : index
    %40 = vector.load %arg6[%c7, %c0_31, %c0_32] : memref<9x64x256xf32, #tpu.memory_space<vmem>>, vector<1x64x256xf32>
    %41 = vector.shape_cast %40 : vector<1x64x256xf32> to vector<64x256xf32>
    %cst_33 = arith.constant dense<0.000000e+00> : vector<64x48xf32>
    %42 = tpu.matmul %41, %12, %cst_33 {dimension_numbers = #tpu.dot_dimension_numbers<[1], [0], [0], [1], [0, 0, 1, 1], [], []>} : vector<64x256xf32>, vector<256x48xf32>, vector<64x48xf32> -> vector<64x48xf32>
    %43 = arith.maximumf %39, %42 : vector<64x48xf32>
    %c8 = arith.constant 8 : index
    %c0_34 = arith.constant 0 : index
    %c0_35 = arith.constant 0 : index
    %44 = vector.load %arg6[%c8, %c0_34, %c0_35] : memref<9x64x256xf32, #tpu.memory_space<vmem>>, vector<1x64x256xf32>
    %45 = vector.shape_cast %44 : vector<1x64x256xf32> to vector<64x256xf32>
    %cst_36 = arith.constant dense<0.000000e+00> : vector<64x48xf32>
    %46 = tpu.matmul %45, %12, %cst_36 {dimension_numbers = #tpu.dot_dimension_numbers<[1], [0], [0], [1], [0, 0, 1, 1], [], []>} : vector<64x256xf32>, vector<256x48xf32>, vector<64x48xf32> -> vector<64x48xf32>
    %47 = arith.maximumf %43, %46 : vector<64x48xf32>
    %c0_37 = arith.constant 0 : index
    %c0_38 = arith.constant 0 : index
    %48 = vector.load %arg7[%c0_37, %c0_38] : memref<64x16xf32, #tpu.memory_space<vmem>>, vector<64x16xf32>
    %c0_39 = arith.constant 0 : index
    %c0_40 = arith.constant 0 : index
    %c0_41 = arith.constant 0 : index
    %49 = vector.load %arg2[%c0_39, %c0_40, %c0_41] : memref<1x16x256xf32, #tpu.memory_space<vmem>>, vector<1x16x256xf32>
    %50 = vector.shape_cast %49 : vector<1x16x256xf32> to vector<16x256xf32>
    %cst_42 = arith.constant dense<0.000000e+00> : vector<64x256xf32>
    %51 = tpu.matmul %48, %50, %cst_42 {dimension_numbers = #tpu.dot_dimension_numbers<[1], [0], [0], [1], [0, 0, 1, 1], [], []>} : vector<64x16xf32>, vector<16x256xf32>, vector<64x256xf32> -> vector<64x256xf32>
    %c0_43 = arith.constant 0 : index
    %c0_44 = arith.constant 0 : index
    %52 = vector.load %arg19[%c0_43, %c0_44] : memref<88x304xf32, #tpu.memory_space<vmem>>, vector<64x256xf32>
    tpu.vector_store %arg19[%c0_43, %c0_44], %51 {strides = array<i32>} : memref<88x304xf32, #tpu.memory_space<vmem>>, vector<64x256xf32>,
    %c0_45 = arith.constant 0 : index
    %c256 = arith.constant 256 : index
    %53 = vector.load %arg19[%c0_45, %c256] : memref<88x304xf32, #tpu.memory_space<vmem>>, vector<64x48xf32>
    tpu.vector_store %arg19[%c0_45, %c256], %47 {strides = array<i32>} : memref<88x304xf32, #tpu.memory_space<vmem>>, vector<64x48xf32>,
    %cst_46 = arith.constant 0.000000e+00 : f32
    %54 = vector.broadcast %cst_46 : f32 to vector<24x304xf32>
    %c64 = arith.constant 64 : index
    %c0_47 = arith.constant 0 : index
    %55 = vector.load %arg19[%c64, %c0_47] : memref<88x304xf32, #tpu.memory_space<vmem>>, vector<24x304xf32>
    tpu.vector_store %arg19[%c64, %c0_47], %54 {strides = array<i32>} : memref<88x304xf32, #tpu.memory_space<vmem>>, vector<24x304xf32>,
    %c0_48 = arith.constant 0 : index
    %c0_49 = arith.constant 0 : index
    %56 = vector.load %arg19[%c0_48, %c0_49] : memref<88x304xf32, #tpu.memory_space<vmem>>, vector<64x304xf32>
    %57 = arith.truncf %56 : vector<64x304xf32> to vector<64x304xbf16>
    %c0_50 = arith.constant 0 : index
    %c0_51 = arith.constant 0 : index
    %c0_52 = arith.constant 0 : index
    %58 = vector.load %arg8[%c0_50, %c0_51, %c0_52] : memref<9x304x256xbf16, #tpu.memory_space<vmem>>, vector<1x304x256xbf16>
    %59 = vector.shape_cast %58 : vector<1x304x256xbf16> to vector<304x256xbf16>
    %cst_53 = arith.constant dense<0.000000e+00> : vector<64x256xf32>
    %60 = tpu.matmul %57, %59, %cst_53 {dimension_numbers = #tpu.dot_dimension_numbers<[1], [0], [0], [1], [0, 0, 1, 1], [], []>} : vector<64x304xbf16>, vector<304x256xbf16>, vector<64x256xf32> -> vector<64x256xf32>
    %c1_54 = arith.constant 1 : index
    %c0_55 = arith.constant 0 : index
    %61 = vector.load %arg19[%c1_54, %c0_55] : memref<88x304xf32, #tpu.memory_space<vmem>>, vector<64x304xf32>
    %62 = arith.truncf %61 : vector<64x304xf32> to vector<64x304xbf16>
    %c1_56 = arith.constant 1 : index
    %c0_57 = arith.constant 0 : index
    %c0_58 = arith.constant 0 : index
    %63 = vector.load %arg8[%c1_56, %c0_57, %c0_58] : memref<9x304x256xbf16, #tpu.memory_space<vmem>>, vector<1x304x256xbf16>
    %64 = vector.shape_cast %63 : vector<1x304x256xbf16> to vector<304x256xbf16>
    %cst_59 = arith.constant dense<0.000000e+00> : vector<64x256xf32>
    %65 = tpu.matmul %62, %64, %cst_59 {dimension_numbers = #tpu.dot_dimension_numbers<[1], [0], [0], [1], [0, 0, 1, 1], [], []>} : vector<64x304xbf16>, vector<304x256xbf16>, vector<64x256xf32> -> vector<64x256xf32>
    %66 = arith.addf %60, %65 : vector<64x256xf32>
    %c2_60 = arith.constant 2 : index
    %c0_61 = arith.constant 0 : index
    %67 = vector.load %arg19[%c2_60, %c0_61] : memref<88x304xf32, #tpu.memory_space<vmem>>, vector<64x304xf32>
    %68 = arith.truncf %67 : vector<64x304xf32> to vector<64x304xbf16>
    %c2_62 = arith.constant 2 : index
    %c0_63 = arith.constant 0 : index
    %c0_64 = arith.constant 0 : index
    %69 = vector.load %arg8[%c2_62, %c0_63, %c0_64] : memref<9x304x256xbf16, #tpu.memory_space<vmem>>, vector<1x304x256xbf16>
    %70 = vector.shape_cast %69 : vector<1x304x256xbf16> to vector<304x256xbf16>
    %cst_65 = arith.constant dense<0.000000e+00> : vector<64x256xf32>
    %71 = tpu.matmul %68, %70, %cst_65 {dimension_numbers = #tpu.dot_dimension_numbers<[1], [0], [0], [1], [0, 0, 1, 1], [], []>} : vector<64x304xbf16>, vector<304x256xbf16>, vector<64x256xf32> -> vector<64x256xf32>
    %72 = arith.addf %66, %71 : vector<64x256xf32>
    %c8_66 = arith.constant 8 : index
    %c0_67 = arith.constant 0 : index
    %73 = vector.load %arg19[%c8_66, %c0_67] : memref<88x304xf32, #tpu.memory_space<vmem>>, vector<64x304xf32>
    %74 = arith.truncf %73 : vector<64x304xf32> to vector<64x304xbf16>
    %c3_68 = arith.constant 3 : index
    %c0_69 = arith.constant 0 : index
    %c0_70 = arith.constant 0 : index
    %75 = vector.load %arg8[%c3_68, %c0_69, %c0_70] : memref<9x304x256xbf16, #tpu.memory_space<vmem>>, vector<1x304x256xbf16>
    %76 = vector.shape_cast %75 : vector<1x304x256xbf16> to vector<304x256xbf16>
    %cst_71 = arith.constant dense<0.000000e+00> : vector<64x256xf32>
    %77 = tpu.matmul %74, %76, %cst_71 {dimension_numbers = #tpu.dot_dimension_numbers<[1], [0], [0], [1], [0, 0, 1, 1], [], []>} : vector<64x304xbf16>, vector<304x256xbf16>, vector<64x256xf32> -> vector<64x256xf32>
    %78 = arith.addf %72, %77 : vector<64x256xf32>
    %c9 = arith.constant 9 : index
    %c0_72 = arith.constant 0 : index
    %79 = vector.load %arg19[%c9, %c0_72] : memref<88x304xf32, #tpu.memory_space<vmem>>, vector<64x304xf32>
    %80 = arith.truncf %79 : vector<64x304xf32> to vector<64x304xbf16>
    %c4_73 = arith.constant 4 : index
    %c0_74 = arith.constant 0 : index
    %c0_75 = arith.constant 0 : index
    %81 = vector.load %arg8[%c4_73, %c0_74, %c0_75] : memref<9x304x256xbf16, #tpu.memory_space<vmem>>, vector<1x304x256xbf16>
    %82 = vector.shape_cast %81 : vector<1x304x256xbf16> to vector<304x256xbf16>
    %cst_76 = arith.constant dense<0.000000e+00> : vector<64x256xf32>
    %83 = tpu.matmul %80, %82, %cst_76 {dimension_numbers = #tpu.dot_dimension_numbers<[1], [0], [0], [1], [0, 0, 1, 1], [], []>} : vector<64x304xbf16>, vector<304x256xbf16>, vector<64x256xf32> -> vector<64x256xf32>
    %84 = arith.addf %78, %83 : vector<64x256xf32>
    %c10 = arith.constant 10 : index
    %c0_77 = arith.constant 0 : index
    %85 = vector.load %arg19[%c10, %c0_77] : memref<88x304xf32, #tpu.memory_space<vmem>>, vector<64x304xf32>
    %86 = arith.truncf %85 : vector<64x304xf32> to vector<64x304xbf16>
    %c5_78 = arith.constant 5 : index
    %c0_79 = arith.constant 0 : index
    %c0_80 = arith.constant 0 : index
    %87 = vector.load %arg8[%c5_78, %c0_79, %c0_80] : memref<9x304x256xbf16, #tpu.memory_space<vmem>>, vector<1x304x256xbf16>
    %88 = vector.shape_cast %87 : vector<1x304x256xbf16> to vector<304x256xbf16>
    %cst_81 = arith.constant dense<0.000000e+00> : vector<64x256xf32>
    %89 = tpu.matmul %86, %88, %cst_81 {dimension_numbers = #tpu.dot_dimension_numbers<[1], [0], [0], [1], [0, 0, 1, 1], [], []>} : vector<64x304xbf16>, vector<304x256xbf16>, vector<64x256xf32> -> vector<64x256xf32>
    %90 = arith.addf %84, %89 : vector<64x256xf32>
    %c16 = arith.constant 16 : index
    %c0_82 = arith.constant 0 : index
    %91 = vector.load %arg19[%c16, %c0_82] : memref<88x304xf32, #tpu.memory_space<vmem>>, vector<64x304xf32>
    %92 = arith.truncf %91 : vector<64x304xf32> to vector<64x304xbf16>
    %c6_83 = arith.constant 6 : index
    %c0_84 = arith.constant 0 : index
    %c0_85 = arith.constant 0 : index
    %93 = vector.load %arg8[%c6_83, %c0_84, %c0_85] : memref<9x304x256xbf16, #tpu.memory_space<vmem>>, vector<1x304x256xbf16>
    %94 = vector.shape_cast %93 : vector<1x304x256xbf16> to vector<304x256xbf16>
    %cst_86 = arith.constant dense<0.000000e+00> : vector<64x256xf32>
    %95 = tpu.matmul %92, %94, %cst_86 {dimension_numbers = #tpu.dot_dimension_numbers<[1], [0], [0], [1], [0, 0, 1, 1], [], []>} : vector<64x304xbf16>, vector<304x256xbf16>, vector<64x256xf32> -> vector<64x256xf32>
    %96 = arith.addf %90, %95 : vector<64x256xf32>
    %c17 = arith.constant 17 : index
    %c0_87 = arith.constant 0 : index
    %97 = vector.load %arg19[%c17, %c0_87] : memref<88x304xf32, #tpu.memory_space<vmem>>, vector<64x304xf32>
    %98 = arith.truncf %97 : vector<64x304xf32> to vector<64x304xbf16>
    %c7_88 = arith.constant 7 : index
    %c0_89 = arith.constant 0 : index
    %c0_90 = arith.constant 0 : index
    %99 = vector.load %arg8[%c7_88, %c0_89, %c0_90] : memref<9x304x256xbf16, #tpu.memory_space<vmem>>, vector<1x304x256xbf16>
    %100 = vector.shape_cast %99 : vector<1x304x256xbf16> to vector<304x256xbf16>
    %cst_91 = arith.constant dense<0.000000e+00> : vector<64x256xf32>
    %101 = tpu.matmul %98, %100, %cst_91 {dimension_numbers = #tpu.dot_dimension_numbers<[1], [0], [0], [1], [0, 0, 1, 1], [], []>} : vector<64x304xbf16>, vector<304x256xbf16>, vector<64x256xf32> -> vector<64x256xf32>
    %102 = arith.addf %96, %101 : vector<64x256xf32>
    %c18 = arith.constant 18 : index
    %c0_92 = arith.constant 0 : index
    %103 = vector.load %arg19[%c18, %c0_92] : memref<88x304xf32, #tpu.memory_space<vmem>>, vector<64x304xf32>
    %104 = arith.truncf %103 : vector<64x304xf32> to vector<64x304xbf16>
    %c8_93 = arith.constant 8 : index
    %c0_94 = arith.constant 0 : index
    %c0_95 = arith.constant 0 : index
    %105 = vector.load %arg8[%c8_93, %c0_94, %c0_95] : memref<9x304x256xbf16, #tpu.memory_space<vmem>>, vector<1x304x256xbf16>
    %106 = vector.shape_cast %105 : vector<1x304x256xbf16> to vector<304x256xbf16>
    %cst_96 = arith.constant dense<0.000000e+00> : vector<64x256xf32>
    %107 = tpu.matmul %104, %106, %cst_96 {dimension_numbers = #tpu.dot_dimension_numbers<[1], [0], [0], [1], [0, 0, 1, 1], [], []>} : vector<64x304xbf16>, vector<304x256xbf16>, vector<64x256xf32> -> vector<64x256xf32>
    %108 = arith.addf %102, %107 : vector<64x256xf32>
    %c0_97 = arith.constant 0 : index
    %c0_98 = arith.constant 0 : index
    %109 = vector.load %arg9[%c0_97, %c0_98] : memref<1x256xf32, #tpu.memory_space<vmem>>, vector<1x256xf32>
    %110 = vector.broadcast %109 : vector<1x256xf32> to vector<64x256xf32>
    %111 = arith.mulf %108, %110 : vector<64x256xf32>
    %c0_99 = arith.constant 0 : index
    %c0_100 = arith.constant 0 : index
    %112 = vector.load %arg10[%c0_99, %c0_100] : memref<1x256xf32, #tpu.memory_space<vmem>>, vector<1x256xf32>
    %113 = vector.broadcast %112 : vector<1x256xf32> to vector<64x256xf32>
    %114 = arith.addf %111, %113 : vector<64x256xf32>
    %cst_101 = arith.constant 0.000000e+00 : f32
    %115 = vector.broadcast %cst_101 : f32 to vector<64x256xf32>
    %116 = arith.maximumf %114, %115 : vector<64x256xf32>
    %c0_102 = arith.constant 0 : index
    %c0_103 = arith.constant 0 : index
    %117 = vector.load %arg20[%c0_102, %c0_103] : memref<88x256xf32, #tpu.memory_space<vmem>>, vector<64x256xf32>
    tpu.vector_store %arg20[%c0_102, %c0_103], %116 {strides = array<i32>} : memref<88x256xf32, #tpu.memory_space<vmem>>, vector<64x256xf32>,
    %cst_104 = arith.constant 0.000000e+00 : f32
    %118 = vector.broadcast %cst_104 : f32 to vector<24x256xf32>
    %c64_105 = arith.constant 64 : index
    %c0_106 = arith.constant 0 : index
    %119 = vector.load %arg20[%c64_105, %c0_106] : memref<88x256xf32, #tpu.memory_space<vmem>>, vector<24x256xf32>
    tpu.vector_store %arg20[%c64_105, %c0_106], %118 {strides = array<i32>} : memref<88x256xf32, #tpu.memory_space<vmem>>, vector<24x256xf32>,
    %c0_107 = arith.constant 0 : index
    %c0_108 = arith.constant 0 : index
    %120 = vector.load %arg20[%c0_107, %c0_108] : memref<88x256xf32, #tpu.memory_space<vmem>>, vector<64x256xf32>
    %121 = arith.truncf %120 : vector<64x256xf32> to vector<64x256xbf16>
    %c0_109 = arith.constant 0 : index
    %c0_110 = arith.constant 0 : index
    %c0_111 = arith.constant 0 : index
    %122 = vector.load %arg11[%c0_109, %c0_110, %c0_111] : memref<9x256x256xbf16, #tpu.memory_space<vmem>>, vector<1x256x256xbf16>
    %123 = vector.shape_cast %122 : vector<1x256x256xbf16> to vector<256x256xbf16>
    %cst_112 = arith.constant dense<0.000000e+00> : vector<64x256xf32>
    %124 = tpu.matmul %121, %123, %cst_112 {dimension_numbers = #tpu.dot_dimension_numbers<[1], [0], [0], [1], [0, 0, 1, 1], [], []>} : vector<64x256xbf16>, vector<256x256xbf16>, vector<64x256xf32> -> vector<64x256xf32>
    %c1_113 = arith.constant 1 : index
    %c0_114 = arith.constant 0 : index
    %125 = vector.load %arg20[%c1_113, %c0_114] : memref<88x256xf32, #tpu.memory_space<vmem>>, vector<64x256xf32>
    %126 = arith.truncf %125 : vector<64x256xf32> to vector<64x256xbf16>
    %c1_115 = arith.constant 1 : index
    %c0_116 = arith.constant 0 : index
    %c0_117 = arith.constant 0 : index
    %127 = vector.load %arg11[%c1_115, %c0_116, %c0_117] : memref<9x256x256xbf16, #tpu.memory_space<vmem>>, vector<1x256x256xbf16>
    %128 = vector.shape_cast %127 : vector<1x256x256xbf16> to vector<256x256xbf16>
    %cst_118 = arith.constant dense<0.000000e+00> : vector<64x256xf32>
    %129 = tpu.matmul %126, %128, %cst_118 {dimension_numbers = #tpu.dot_dimension_numbers<[1], [0], [0], [1], [0, 0, 1, 1], [], []>} : vector<64x256xbf16>, vector<256x256xbf16>, vector<64x256xf32> -> vector<64x256xf32>
    %130 = arith.addf %124, %129 : vector<64x256xf32>
    %c2_119 = arith.constant 2 : index
    %c0_120 = arith.constant 0 : index
    %131 = vector.load %arg20[%c2_119, %c0_120] : memref<88x256xf32, #tpu.memory_space<vmem>>, vector<64x256xf32>
    %132 = arith.truncf %131 : vector<64x256xf32> to vector<64x256xbf16>
    %c2_121 = arith.constant 2 : index
    %c0_122 = arith.constant 0 : index
    %c0_123 = arith.constant 0 : index
    %133 = vector.load %arg11[%c2_121, %c0_122, %c0_123] : memref<9x256x256xbf16, #tpu.memory_space<vmem>>, vector<1x256x256xbf16>
    %134 = vector.shape_cast %133 : vector<1x256x256xbf16> to vector<256x256xbf16>
    %cst_124 = arith.constant dense<0.000000e+00> : vector<64x256xf32>
    %135 = tpu.matmul %132, %134, %cst_124 {dimension_numbers = #tpu.dot_dimension_numbers<[1], [0], [0], [1], [0, 0, 1, 1], [], []>} : vector<64x256xbf16>, vector<256x256xbf16>, vector<64x256xf32> -> vector<64x256xf32>
    %136 = arith.addf %130, %135 : vector<64x256xf32>
    %c8_125 = arith.constant 8 : index
    %c0_126 = arith.constant 0 : index
    %137 = vector.load %arg20[%c8_125, %c0_126] : memref<88x256xf32, #tpu.memory_space<vmem>>, vector<64x256xf32>
    %138 = arith.truncf %137 : vector<64x256xf32> to vector<64x256xbf16>
    %c3_127 = arith.constant 3 : index
    %c0_128 = arith.constant 0 : index
    %c0_129 = arith.constant 0 : index
    %139 = vector.load %arg11[%c3_127, %c0_128, %c0_129] : memref<9x256x256xbf16, #tpu.memory_space<vmem>>, vector<1x256x256xbf16>
    %140 = vector.shape_cast %139 : vector<1x256x256xbf16> to vector<256x256xbf16>
    %cst_130 = arith.constant dense<0.000000e+00> : vector<64x256xf32>
    %141 = tpu.matmul %138, %140, %cst_130 {dimension_numbers = #tpu.dot_dimension_numbers<[1], [0], [0], [1], [0, 0, 1, 1], [], []>} : vector<64x256xbf16>, vector<256x256xbf16>, vector<64x256xf32> -> vector<64x256xf32>
    %142 = arith.addf %136, %141 : vector<64x256xf32>
    %c9_131 = arith.constant 9 : index
    %c0_132 = arith.constant 0 : index
    %143 = vector.load %arg20[%c9_131, %c0_132] : memref<88x256xf32, #tpu.memory_space<vmem>>, vector<64x256xf32>
    %144 = arith.truncf %143 : vector<64x256xf32> to vector<64x256xbf16>
    %c4_133 = arith.constant 4 : index
    %c0_134 = arith.constant 0 : index
    %c0_135 = arith.constant 0 : index
    %145 = vector.load %arg11[%c4_133, %c0_134, %c0_135] : memref<9x256x256xbf16, #tpu.memory_space<vmem>>, vector<1x256x256xbf16>
    %146 = vector.shape_cast %145 : vector<1x256x256xbf16> to vector<256x256xbf16>
    %cst_136 = arith.constant dense<0.000000e+00> : vector<64x256xf32>
    %147 = tpu.matmul %144, %146, %cst_136 {dimension_numbers = #tpu.dot_dimension_numbers<[1], [0], [0], [1], [0, 0, 1, 1], [], []>} : vector<64x256xbf16>, vector<256x256xbf16>, vector<64x256xf32> -> vector<64x256xf32>
    %148 = arith.addf %142, %147 : vector<64x256xf32>
    %c10_137 = arith.constant 10 : index
    %c0_138 = arith.constant 0 : index
    %149 = vector.load %arg20[%c10_137, %c0_138] : memref<88x256xf32, #tpu.memory_space<vmem>>, vector<64x256xf32>
    %150 = arith.truncf %149 : vector<64x256xf32> to vector<64x256xbf16>
    %c5_139 = arith.constant 5 : index
    %c0_140 = arith.constant 0 : index
    %c0_141 = arith.constant 0 : index
    %151 = vector.load %arg11[%c5_139, %c0_140, %c0_141] : memref<9x256x256xbf16, #tpu.memory_space<vmem>>, vector<1x256x256xbf16>
    %152 = vector.shape_cast %151 : vector<1x256x256xbf16> to vector<256x256xbf16>
    %cst_142 = arith.constant dense<0.000000e+00> : vector<64x256xf32>
    %153 = tpu.matmul %150, %152, %cst_142 {dimension_numbers = #tpu.dot_dimension_numbers<[1], [0], [0], [1], [0, 0, 1, 1], [], []>} : vector<64x256xbf16>, vector<256x256xbf16>, vector<64x256xf32> -> vector<64x256xf32>
    %154 = arith.addf %148, %153 : vector<64x256xf32>
    %c16_143 = arith.constant 16 : index
    %c0_144 = arith.constant 0 : index
    %155 = vector.load %arg20[%c16_143, %c0_144] : memref<88x256xf32, #tpu.memory_space<vmem>>, vector<64x256xf32>
    %156 = arith.truncf %155 : vector<64x256xf32> to vector<64x256xbf16>
    %c6_145 = arith.constant 6 : index
    %c0_146 = arith.constant 0 : index
    %c0_147 = arith.constant 0 : index
    %157 = vector.load %arg11[%c6_145, %c0_146, %c0_147] : memref<9x256x256xbf16, #tpu.memory_space<vmem>>, vector<1x256x256xbf16>
    %158 = vector.shape_cast %157 : vector<1x256x256xbf16> to vector<256x256xbf16>
    %cst_148 = arith.constant dense<0.000000e+00> : vector<64x256xf32>
    %159 = tpu.matmul %156, %158, %cst_148 {dimension_numbers = #tpu.dot_dimension_numbers<[1], [0], [0], [1], [0, 0, 1, 1], [], []>} : vector<64x256xbf16>, vector<256x256xbf16>, vector<64x256xf32> -> vector<64x256xf32>
    %160 = arith.addf %154, %159 : vector<64x256xf32>
    %c17_149 = arith.constant 17 : index
    %c0_150 = arith.constant 0 : index
    %161 = vector.load %arg20[%c17_149, %c0_150] : memref<88x256xf32, #tpu.memory_space<vmem>>, vector<64x256xf32>
    %162 = arith.truncf %161 : vector<64x256xf32> to vector<64x256xbf16>
    %c7_151 = arith.constant 7 : index
    %c0_152 = arith.constant 0 : index
    %c0_153 = arith.constant 0 : index
    %163 = vector.load %arg11[%c7_151, %c0_152, %c0_153] : memref<9x256x256xbf16, #tpu.memory_space<vmem>>, vector<1x256x256xbf16>
    %164 = vector.shape_cast %163 : vector<1x256x256xbf16> to vector<256x256xbf16>
    %cst_154 = arith.constant dense<0.000000e+00> : vector<64x256xf32>
    %165 = tpu.matmul %162, %164, %cst_154 {dimension_numbers = #tpu.dot_dimension_numbers<[1], [0], [0], [1], [0, 0, 1, 1], [], []>} : vector<64x256xbf16>, vector<256x256xbf16>, vector<64x256xf32> -> vector<64x256xf32>
    %166 = arith.addf %160, %165 : vector<64x256xf32>
    %c18_155 = arith.constant 18 : index
    %c0_156 = arith.constant 0 : index
    %167 = vector.load %arg20[%c18_155, %c0_156] : memref<88x256xf32, #tpu.memory_space<vmem>>, vector<64x256xf32>
    %168 = arith.truncf %167 : vector<64x256xf32> to vector<64x256xbf16>
    %c8_157 = arith.constant 8 : index
    %c0_158 = arith.constant 0 : index
    %c0_159 = arith.constant 0 : index
    %169 = vector.load %arg11[%c8_157, %c0_158, %c0_159] : memref<9x256x256xbf16, #tpu.memory_space<vmem>>, vector<1x256x256xbf16>
    %170 = vector.shape_cast %169 : vector<1x256x256xbf16> to vector<256x256xbf16>
    %cst_160 = arith.constant dense<0.000000e+00> : vector<64x256xf32>
    %171 = tpu.matmul %168, %170, %cst_160 {dimension_numbers = #tpu.dot_dimension_numbers<[1], [0], [0], [1], [0, 0, 1, 1], [], []>} : vector<64x256xbf16>, vector<256x256xbf16>, vector<64x256xf32> -> vector<64x256xf32>
    %172 = arith.addf %166, %171 : vector<64x256xf32>
    %c0_161 = arith.constant 0 : index
    %c0_162 = arith.constant 0 : index
    %173 = vector.load %arg12[%c0_161, %c0_162] : memref<1x256xf32, #tpu.memory_space<vmem>>, vector<1x256xf32>
    %174 = vector.broadcast %173 : vector<1x256xf32> to vector<64x256xf32>
    %175 = arith.mulf %172, %174 : vector<64x256xf32>
    %c0_163 = arith.constant 0 : index
    %c0_164 = arith.constant 0 : index
    %176 = vector.load %arg13[%c0_163, %c0_164] : memref<1x256xf32, #tpu.memory_space<vmem>>, vector<1x256xf32>
    %177 = vector.broadcast %176 : vector<1x256xf32> to vector<64x256xf32>
    %178 = arith.addf %175, %177 : vector<64x256xf32>
    %cst_165 = arith.constant 0.000000e+00 : f32
    %179 = vector.broadcast %cst_165 : f32 to vector<64x256xf32>
    %180 = arith.maximumf %178, %179 : vector<64x256xf32>
    %181 = arith.truncf %180 : vector<64x256xf32> to vector<64x256xbf16>
    %c0_166 = arith.constant 0 : index
    %c0_167 = arith.constant 0 : index
    %182 = vector.load %arg14[%c0_166, %c0_167] : memref<256x16xbf16, #tpu.memory_space<vmem>>, vector<256x16xbf16>
    %cst_168 = arith.constant dense<0.000000e+00> : vector<64x16xf32>
    %183 = tpu.matmul %181, %182, %cst_168 {dimension_numbers = #tpu.dot_dimension_numbers<[1], [0], [0], [1], [0, 0, 1, 1], [], []>} : vector<64x256xbf16>, vector<256x16xbf16>, vector<64x16xf32> -> vector<64x16xf32>
    %c0_169 = arith.constant 0 : index
    %c0_170 = arith.constant 0 : index
    %184 = vector.load %arg15[%c0_169, %c0_170] : memref<1x16xf32, #tpu.memory_space<vmem>>, vector<1x16xf32>
    %185 = vector.broadcast %184 : vector<1x16xf32> to vector<64x16xf32>
    %186 = arith.mulf %183, %185 : vector<64x16xf32>
    %c0_171 = arith.constant 0 : index
    %c0_172 = arith.constant 0 : index
    %187 = vector.load %arg16[%c0_171, %c0_172] : memref<1x16xf32, #tpu.memory_space<vmem>>, vector<1x16xf32>
    %188 = vector.broadcast %187 : vector<1x16xf32> to vector<64x16xf32>
    %189 = arith.addf %186, %188 : vector<64x16xf32>
    %cst_173 = arith.constant 0.000000e+00 : f32
    %190 = vector.broadcast %cst_173 : f32 to vector<64x16xf32>
    %191 = arith.maximumf %189, %190 : vector<64x16xf32>
    %c0_174 = arith.constant 0 : index
    %c0_175 = arith.constant 0 : index
    %192 = vector.load %arg17[%c0_174, %c0_175] : memref<256x64xf32, #tpu.memory_space<vmem>>, vector<256x64xf32>
    %cst_176 = arith.constant dense<0.000000e+00> : vector<256x16xf32>
    %193 = tpu.matmul %192, %191, %cst_176 {dimension_numbers = #tpu.dot_dimension_numbers<[1], [0], [0], [1], [0, 0, 1, 1], [], []>} : vector<256x64xf32>, vector<64x16xf32>, vector<256x16xf32> -> vector<256x16xf32>
    %c0_177 = arith.constant 0 : index
    %c0_178 = arith.constant 0 : index
    %c0_179 = arith.constant 0 : index
    %194 = vector.load %arg18[%c0_177, %c0_178, %c0_179] : memref<1x256x16xf32, #tpu.memory_space<vmem>>, vector<1x256x16xf32>
    %195 = vector.shape_cast %194 : vector<1x256x16xf32> to vector<256x16xf32>
    %196 = vector.shape_cast %193 : vector<256x16xf32> to vector<1x256x16xf32>
    tpu.vector_store %arg18[%c0_177, %c0_178, %c0_179], %196 {strides = array<i32>} : memref<1x256x16xf32, #tpu.memory_space<vmem>>, vector<1x256x16xf32>,
    return
  }
  func.func @transform_0(%arg0: i32) -> (i32, i32, i32) {
    %c0_i32 = arith.constant 0 : i32
    %c0_i32_0 = arith.constant 0 : i32
    %c0_i32_1 = arith.constant 0 : i32
    return %arg0, %c0_i32, %c0_i32_0 : i32, i32, i32
  }
  func.func @transform_1(%arg0: i32) -> (i32, i32, i32) {
    %c0_i32 = arith.constant 0 : i32
    %c0_i32_0 = arith.constant 0 : i32
    %c0_i32_1 = arith.constant 0 : i32
    return %arg0, %c0_i32, %c0_i32_0 : i32, i32, i32
  }
  func.func @transform_2(%arg0: i32) -> (i32, i32) {
    %c0_i32 = arith.constant 0 : i32
    %c0_i32_0 = arith.constant 0 : i32
    %c0_i32_1 = arith.constant 0 : i32
    return %c0_i32, %c0_i32_0 : i32, i32
  }
  func.func @transform_3(%arg0: i32) -> (i32, i32) {
    %c0_i32 = arith.constant 0 : i32
    %c0_i32_0 = arith.constant 0 : i32
    %c0_i32_1 = arith.constant 0 : i32
    return %c0_i32, %c0_i32_0 : i32, i32
  }
  func.func @transform_4(%arg0: i32) -> (i32, i32) {
    %c0_i32 = arith.constant 0 : i32
    %c0_i32_0 = arith.constant 0 : i32
    %c0_i32_1 = arith.constant 0 : i32
    return %c0_i32, %c0_i32_0 : i32, i32
  }
  func.func @transform_5(%arg0: i32) -> (i32, i32, i32) {
    %c0_i32 = arith.constant 0 : i32
    %c0_i32_0 = arith.constant 0 : i32
    %c0_i32_1 = arith.constant 0 : i32
    %c0_i32_2 = arith.constant 0 : i32
    return %c0_i32, %c0_i32_0, %c0_i32_1 : i32, i32, i32
  }
  func.func @transform_6(%arg0: i32) -> (i32, i32) {
    %c0_i32 = arith.constant 0 : i32
    %c0_i32_0 = arith.constant 0 : i32
    %c0_i32_1 = arith.constant 0 : i32
    return %c0_i32, %c0_i32_0 : i32, i32
  }
  func.func @transform_7(%arg0: i32) -> (i32, i32, i32) {
    %c0_i32 = arith.constant 0 : i32
    %c0_i32_0 = arith.constant 0 : i32
    %c0_i32_1 = arith.constant 0 : i32
    %c0_i32_2 = arith.constant 0 : i32
    return %c0_i32, %c0_i32_0, %c0_i32_1 : i32, i32, i32
  }
  func.func @transform_8(%arg0: i32) -> (i32, i32) {
    %c0_i32 = arith.constant 0 : i32
    %c0_i32_0 = arith.constant 0 : i32
    %c0_i32_1 = arith.constant 0 : i32
    return %c0_i32, %c0_i32_0 : i32, i32
  }
  func.func @transform_9(%arg0: i32) -> (i32, i32) {
    %c0_i32 = arith.constant 0 : i32
    %c0_i32_0 = arith.constant 0 : i32
    %c0_i32_1 = arith.constant 0 : i32
    return %c0_i32, %c0_i32_0 : i32, i32
  }
  func.func @transform_10(%arg0: i32) -> (i32, i32, i32) {
    %c0_i32 = arith.constant 0 : i32
    %c0_i32_0 = arith.constant 0 : i32
    %c0_i32_1 = arith.constant 0 : i32
    %c0_i32_2 = arith.constant 0 : i32
    return %c0_i32, %c0_i32_0, %c0_i32_1 : i32, i32, i32
  }
  func.func @transform_11(%arg0: i32) -> (i32, i32) {
    %c0_i32 = arith.constant 0 : i32
    %c0_i32_0 = arith.constant 0 : i32
    %c0_i32_1 = arith.constant 0 : i32
    return %c0_i32, %c0_i32_0 : i32, i32
  }
  func.func @transform_12(%arg0: i32) -> (i32, i32) {
    %c0_i32 = arith.constant 0 : i32
    %c0_i32_0 = arith.constant 0 : i32
    %c0_i32_1 = arith.constant 0 : i32
    return %c0_i32, %c0_i32_0 : i32, i32
  }
  func.func @transform_13(%arg0: i32) -> (i32, i32) {
    %c0_i32 = arith.constant 0 : i32
    %c0_i32_0 = arith.constant 0 : i32
    %c0_i32_1 = arith.constant 0 : i32
    return %c0_i32, %c0_i32_0 : i32, i32
  }
  func.func @transform_14(%arg0: i32) -> (i32, i32) {
    %c0_i32 = arith.constant 0 : i32
    %c0_i32_0 = arith.constant 0 : i32
    %c0_i32_1 = arith.constant 0 : i32
    return %c0_i32, %c0_i32_0 : i32, i32
  }
  func.func @transform_15(%arg0: i32) -> (i32, i32) {
    %c0_i32 = arith.constant 0 : i32
    %c0_i32_0 = arith.constant 0 : i32
    %c0_i32_1 = arith.constant 0 : i32
    return %c0_i32, %c0_i32_0 : i32, i32
  }
  func.func @transform_16(%arg0: i32) -> (i32, i32) {
    %c0_i32 = arith.constant 0 : i32
    %c0_i32_0 = arith.constant 0 : i32
    %c0_i32_1 = arith.constant 0 : i32
    return %c0_i32, %c0_i32_0 : i32, i32
  }
  func.func @transform_17(%arg0: i32) -> (i32, i32, i32) {
    %c0_i32 = arith.constant 0 : i32
    %c0_i32_0 = arith.constant 0 : i32
    %c0_i32_1 = arith.constant 0 : i32
    return %arg0, %c0_i32, %c0_i32_0 : i32, i32, i32
  }
}

</mosaic_0001>

<llo_original>
// kernel: decoder_forward.1
$region0: #{decoder_forward.1}
  #allocation0 [shape = 'u32[]', space=smem, size = 0x4, offset = 0x4, fixed_abs, tag = 'smem constant byte address 0x4 - core index']
  #allocation1 [shape = 'u32[144,128]{1,0:T(1,128)}', space=vmem, size = 0x12000, scoped, tag = 'internal scratch']
  #allocation2 [shape = 'f32[88,304]{1,0:T(8,128)}', space=vmem, size = 0x21000, scoped, tag = 'scratch operand']
  #allocation3 [shape = 'f32[88,256]{1,0:T(8,128)}', space=vmem, size = 0x16000, scoped, tag = 'scratch operand']
  %s0 = inlined_call_operand.hbm [shape: f32[2,256,256], index: 0, kind: input, shape index: {}]
  %s1 = inlined_call_operand.vmem [shape: f32[2,16,256], index: 1, kind: input, shape index: {}]
  %s2 = inlined_call_operand.vmem [shape: bf16[256,48], index: 2, kind: input, shape index: {}]
  %s3 = inlined_call_operand.hbm [shape: f32[1,48], index: 3, kind: input, shape index: {}]
  %s4 = inlined_call_operand.hbm [shape: f32[1,48], index: 4, kind: input, shape index: {}]
  %s5 = inlined_call_operand.hbm [shape: f32[9,64,256], index: 5, kind: input, shape index: {}]
  %s6 = inlined_call_operand.hbm [shape: f32[64,16], index: 6, kind: input, shape index: {}]
  %s7 = inlined_call_operand.hbm [shape: bf16[9,304,256], index: 7, kind: input, shape index: {}]
  %s8 = inlined_call_operand.hbm [shape: f32[1,256], index: 8, kind: input, shape index: {}]
  %s9 = inlined_call_operand.hbm [shape: f32[1,256], index: 9, kind: input, shape index: {}]
  %s10 = inlined_call_operand.hbm [shape: bf16[9,256,256], index: 10, kind: input, shape index: {}]
  %s11 = inlined_call_operand.hbm [shape: f32[1,256], index: 11, kind: input, shape index: {}]
  %s12 = inlined_call_operand.hbm [shape: f32[1,256], index: 12, kind: input, shape index: {}]
  %s13 = inlined_call_operand.vmem [shape: bf16[256,16], index: 13, kind: input, shape index: {}]
  %s14 = inlined_call_operand.hbm [shape: f32[1,16], index: 14, kind: input, shape index: {}]
  %s15 = inlined_call_operand.hbm [shape: f32[1,16], index: 15, kind: input, shape index: {}]
  %s16 = inlined_call_operand.hbm [shape: f32[256,64], index: 16, kind: input, shape index: {}]
  %s17 = inlined_call_operand.vmem [shape: f32[2,256,16], index: 17, kind: output, shape index: {}]
  %s18 = sld [smem:[#allocation0]]
  $region157: #{decoder_forward.1} parent=0
    _
  %s20 = ssub.s32 1, %s18
  %s21 = scalar_select 0, %s20, %s18
  $region1: #{decoder_forward.1} parent=0
    #allocation4 [shape = 'u8[524288]{0}', space=vmem, size = 0x80000, scoped, tag = 'input window, operand 0']
    #allocation5 [shape = 's32[2]{0}', space=sflag, size = 0x8, scoped, tag = 'scoped memory for decoder_forward.1']
    #allocation6 [shape = 'u8[512]{0}', space=vmem, size = 0x400, scoped, tag = 'input window, operand 3, single buffered']
    #allocation7 [shape = 's32[1]{0}', space=sflag, size = 0x4, scoped, tag = 'scoped memory for decoder_forward.1']
    #allocation8 [shape = 'u8[512]{0}', space=vmem, size = 0x400, scoped, tag = 'input window, operand 4, single buffered']
    #allocation9 [shape = 'u8[589824]{0}', space=vmem, size = 0x90000, scoped, tag = 'input window, operand 5, single buffered']
    #allocation10 [shape = 's32[1]{0}', space=sflag, size = 0x4, scoped, tag = 'scoped memory for decoder_forward.1']
    #allocation11 [shape = 'u8[32768]{0}', space=vmem, size = 0x8000, scoped, tag = 'input window, operand 6, single buffered']
    #allocation12 [shape = 'u8[1400832]{0}', space=vmem, size = 0x156000, scoped, tag = 'input window, operand 7, single buffered']
    #allocation13 [shape = 's32[1]{0}', space=sflag, size = 0x4, scoped, tag = 'scoped memory for decoder_forward.1']
    #allocation14 [shape = 'u8[1024]{0}', space=vmem, size = 0x400, scoped, tag = 'input window, operand 8, single buffered']
    #allocation15 [shape = 'u8[1024]{0}', space=vmem, size = 0x400, scoped, tag = 'input window, operand 9, single buffered']
    #allocation16 [shape = 's32[1]{0}', space=sflag, size = 0x4, scoped, tag = 'scoped memory for decoder_forward.1']
    #allocation17 [shape = 'u8[1179648]{0}', space=vmem, size = 0x120000, scoped, tag = 'input window, operand 10, single buffered']
    #allocation18 [shape = 'u8[1024]{0}', space=vmem, size = 0x400, scoped, tag = 'input window, operand 11, single buffered']
    #allocation19 [shape = 's32[1]{0}', space=sflag, size = 0x4, scoped, tag = 'scoped memory for decoder_forward.1']
    #allocation20 [shape = 'u8[1024]{0}', space=vmem, size = 0x400, scoped, tag = 'input window, operand 12, single buffered']
    #allocation21 [shape = 'u8[512]{0}', space=vmem, size = 0x400, scoped, tag = 'input window, operand 14, single buffered']
    #allocation22 [shape = 's32[1]{0}', space=sflag, size = 0x4, scoped, tag = 'scoped memory for decoder_forward.1']
    #allocation23 [shape = 'u8[512]{0}', space=vmem, size = 0x400, scoped, tag = 'input window, operand 15, single buffered']
    #allocation24 [shape = 'u8[131072]{0}', space=vmem, size = 0x20000, scoped, tag = 'input window, operand 16, single buffered']
    #allocation25 [shape = 's32[1]{0}', space=sflag, size = 0x4, scoped, tag = 'scoped memory for decoder_forward.1']
    %22 = vsyncpa [#allocation5], 0
    %s23 = scalar_lea.sflag [#allocation5], 1
    %24 = vsyncpa %s23, 0
    %25 = vsyncpa [#allocation7], 0
    %26 = vsyncpa [#allocation10], 0
    %27 = vsyncpa [#allocation13], 0
    %28 = vsyncpa [#allocation16], 0
    %29 = vsyncpa [#allocation19], 0
    %30 = vsyncpa [#allocation22], 0
    %31 = vsyncpa [#allocation25], 0
    loop: start=0, step=1, limit=4
    $region2: #{decoder_forward.1} parent=1 // loop_pre_header
      _
    $region3: #{decoder_forward.1} parent=1 // loop_header
      %s33 = sphi 0, %s37
      %p34 = scmp.ge.s32.totalorder %s33, 4
      %s43 = sphi 0, %s45
      %s46 = sphi 0, %s43
      %s47 = sphi 0, %s46
      %s63 = sphi 0, %s47
      %s69 = sphi 0, %s71
      %s72 = sphi 0, %s69
      %s73 = sphi 0, %s72
      %s89 = sphi 0, %s73
      %s93 = sphi 0, %s93
      %s95 = sphi 0, %s93
      %s96 = sphi 0, %s95
      %s110 = sphi 0, %s96
      %s114 = sphi 0, %s114
      %s116 = sphi 0, %s114
      %s117 = sphi 0, %s116
      %s131 = sphi 0, %s117
      %s135 = sphi 0, %s135
      %s137 = sphi 0, %s135
      %s138 = sphi 0, %s137
      %s152 = sphi 0, %s138
      %s156 = sphi 0, %s156
      %s158 = sphi 0, %s156
      %s159 = sphi 0, %s158
      %s173 = sphi 0, %s159
      %s177 = sphi 0, %s177
      %s179 = sphi 0, %s177
      %s180 = sphi 0, %s179
      %s194 = sphi 0, %s180
      %s198 = sphi 0, %s198
      %s200 = sphi 0, %s198
      %s201 = sphi 0, %s200
      %s215 = sphi 0, %s201
      %s219 = sphi 0, %s219
      %s221 = sphi 0, %s219
      %s222 = sphi 0, %s221
      %s236 = sphi 0, %s222
      %s240 = sphi 0, %s240
      %s242 = sphi 0, %s240
      %s243 = sphi 0, %s242
      %s257 = sphi 0, %s243
      %s261 = sphi 0, %s261
      %s263 = sphi 0, %s261
      %s264 = sphi 0, %s263
      %s278 = sphi 0, %s264
      %s282 = sphi 0, %s282
      %s284 = sphi 0, %s282
      %s285 = sphi 0, %s284
      %s299 = sphi 0, %s285
      %s303 = sphi 0, %s303
      %s305 = sphi 0, %s303
      %s306 = sphi 0, %s305
      %s320 = sphi 0, %s306
      %s324 = sphi 0, %s324
      %s326 = sphi 0, %s324
      %s327 = sphi 0, %s326
      %s341 = sphi 0, %s327
      %s345 = sphi 0, %s345
      %s347 = sphi 0, %s345
      %s348 = sphi 0, %s347
      %s362 = sphi 0, %s348
      %s366 = sphi 0, %s366
      %s368 = sphi 0, %s366
      %s369 = sphi 0, %s368
      %s383 = sphi 0, %s369
      %s387 = sphi 0, %s387
      %s389 = sphi 0, %s387
      %s390 = sphi 0, %s389
      %s404 = sphi 0, %s390
      %s410 = sphi 0, %s412
      %s413 = sphi 0, %s410
      %s414 = sphi 0, %s413
      %s430 = sphi 0, %s414
    $region4: #{decoder_forward.1} parent=1 // loop_header_branch
      %36 = sbr.rel (%p34) target = $region8
    $region5: #{decoder_forward.1} parent=1 // loop_body
      %s38 = ssub.s32 %s33, 1
      %s39 = ssub.s32 %s33, 2
      %s40 = sadd.s32 %s33, 1
      %s41 = ssub.s32 %s33, %s40
      %p42 = scmp.eq.s32.totalorder %s41, 0
      %s44 = sadd.s32 %s43, 1
      %s45 = scalar_select %p42, %s43, %s44
      %p48 = pneg %p42
      %p49 = scmp.eq.s32.totalorder %s33, 1
      %p50 = por %p48, %p49
      %p51 = scmp.ne.s32.totalorder %s43, %s46
      %p52 = scmp.eq.s32.totalorder %s33, 0
      %p53 = por %p51, %p52
      %p54 = scmp.ne.s32.totalorder %s43, %s46
      %p55 = scmp.eq.s32.totalorder %s38, 1
      %p56 = por %p54, %p55
      %p57 = scmp.ne.s32.totalorder %s46, %s47
      %p58 = scmp.eq.s32.totalorder %s38, 0
      %p59 = por %p57, %p58
      %p60 = scmp.ne.s32.totalorder %s46, %s47
      %p61 = scmp.eq.s32.totalorder %s39, 1
      %p62 = por %p60, %p61
      %p64 = scmp.ne.s32.totalorder %s47, %s63
      %p65 = scmp.eq.s32.totalorder %s39, 0
      %p66 = por %p64, %p65
      %s67 = ssub.s32 %s33, %s40
      %p68 = scmp.eq.s32.totalorder %s67, 0
      %s70 = sadd.s32 %s69, 1
      %s71 = scalar_select %p68, %s69, %s70
      %p74 = pneg %p68
      %p75 = scmp.eq.s32.totalorder %s33, 1
      %p76 = por %p74, %p75
      %p77 = scmp.ne.s32.totalorder %s69, %s72
      %p78 = scmp.eq.s32.totalorder %s33, 0
      %p79 = por %p77, %p78
      %p80 = scmp.ne.s32.totalorder %s69, %s72
      %p81 = scmp.eq.s32.totalorder %s38, 1
      %p82 = por %p80, %p81
      %p83 = scmp.ne.s32.totalorder %s72, %s73
      %p84 = scmp.eq.s32.totalorder %s38, 0
      %p85 = por %p83, %p84
      %p86 = scmp.ne.s32.totalorder %s72, %s73
      %p87 = scmp.eq.s32.totalorder %s39, 1
      %p88 = por %p86, %p87
      %p90 = scmp.ne.s32.totalorder %s73, %s89
      %p91 = scmp.eq.s32.totalorder %s39, 0
      %p92 = por %p90, %p91
      %s94 = sadd.s32 %s93, 1
      %p97 = scmp.eq.s32.totalorder %s33, 1
      %p98 = scmp.ne.s32.totalorder %s93, %s95
      %p99 = scmp.eq.s32.totalorder %s33, 0
      %p100 = por %p98, %p99
      %p101 = scmp.ne.s32.totalorder %s93, %s95
      %p102 = scmp.eq.s32.totalorder %s38, 1
      %p103 = por %p101, %p102
      %p104 = scmp.ne.s32.totalorder %s95, %s96
      %p105 = scmp.eq.s32.totalorder %s38, 0
      %p106 = por %p104, %p105
      %p107 = scmp.ne.s32.totalorder %s95, %s96
      %p108 = scmp.eq.s32.totalorder %s39, 1
      %p109 = por %p107, %p108
      %p111 = scmp.ne.s32.totalorder %s96, %s110
      %p112 = scmp.eq.s32.totalorder %s39, 0
      %p113 = por %p111, %p112
      %s115 = sadd.s32 %s114, 1
      %p118 = scmp.eq.s32.totalorder %s33, 1
      %p119 = scmp.ne.s32.totalorder %s114, %s116
      %p120 = scmp.eq.s32.totalorder %s33, 0
      %p121 = por %p119, %p120
      %p122 = scmp.ne.s32.totalorder %s114, %s116
      %p123 = scmp.eq.s32.totalorder %s38, 1
      %p124 = por %p122, %p123
      %p125 = scmp.ne.s32.totalorder %s116, %s117
      %p126 = scmp.eq.s32.totalorder %s38, 0
      %p127 = por %p125, %p126
      %p128 = scmp.ne.s32.totalorder %s116, %s117
      %p129 = scmp.eq.s32.totalorder %s39, 1
      %p130 = por %p128, %p129
      %p132 = scmp.ne.s32.totalorder %s117, %s131
      %p133 = scmp.eq.s32.totalorder %s39, 0
      %p134 = por %p132, %p133
      %s136 = sadd.s32 %s135, 1
      %p139 = scmp.eq.s32.totalorder %s33, 1
      %p140 = scmp.ne.s32.totalorder %s135, %s137
      %p141 = scmp.eq.s32.totalorder %s33, 0
      %p142 = por %p140, %p141
      %p143 = scmp.ne.s32.totalorder %s135, %s137
      %p144 = scmp.eq.s32.totalorder %s38, 1
      %p145 = por %p143, %p144
      %p146 = scmp.ne.s32.totalorder %s137, %s138
      %p147 = scmp.eq.s32.totalorder %s38, 0
      %p148 = por %p146, %p147
      %p149 = scmp.ne.s32.totalorder %s137, %s138
      %p150 = scmp.eq.s32.totalorder %s39, 1
      %p151 = por %p149, %p150
      %p153 = scmp.ne.s32.totalorder %s138, %s152
      %p154 = scmp.eq.s32.totalorder %s39, 0
      %p155 = por %p153, %p154
      %s157 = sadd.s32 %s156, 1
      %p160 = scmp.eq.s32.totalorder %s33, 1
      %p161 = scmp.ne.s32.totalorder %s156, %s158
      %p162 = scmp.eq.s32.totalorder %s33, 0
      %p163 = por %p161, %p162
      %p164 = scmp.ne.s32.totalorder %s156, %s158
      %p165 = scmp.eq.s32.totalorder %s38, 1
      %p166 = por %p164, %p165
      %p167 = scmp.ne.s32.totalorder %s158, %s159
      %p168 = scmp.eq.s32.totalorder %s38, 0
      %p169 = por %p167, %p168
      %p170 = scmp.ne.s32.totalorder %s158, %s159
      %p171 = scmp.eq.s32.totalorder %s39, 1
      %p172 = por %p170, %p171
      %p174 = scmp.ne.s32.totalorder %s159, %s173
      %p175 = scmp.eq.s32.totalorder %s39, 0
      %p176 = por %p174, %p175
      %s178 = sadd.s32 %s177, 1
      %p181 = scmp.eq.s32.totalorder %s33, 1
      %p182 = scmp.ne.s32.totalorder %s177, %s179
      %p183 = scmp.eq.s32.totalorder %s33, 0
      %p184 = por %p182, %p183
      %p185 = scmp.ne.s32.totalorder %s177, %s179
      %p186 = scmp.eq.s32.totalorder %s38, 1
      %p187 = por %p185, %p186
      %p188 = scmp.ne.s32.totalorder %s179, %s180
      %p189 = scmp.eq.s32.totalorder %s38, 0
      %p190 = por %p188, %p189
      %p191 = scmp.ne.s32.totalorder %s179, %s180
      %p192 = scmp.eq.s32.totalorder %s39, 1
      %p193 = por %p191, %p192
      %p195 = scmp.ne.s32.totalorder %s180, %s194
      %p196 = scmp.eq.s32.totalorder %s39, 0
      %p197 = por %p195, %p196
      %s199 = sadd.s32 %s198, 1
      %p202 = scmp.eq.s32.totalorder %s33, 1
      %p203 = scmp.ne.s32.totalorder %s198, %s200
      %p204 = scmp.eq.s32.totalorder %s33, 0
      %p205 = por %p203, %p204
      %p206 = scmp.ne.s32.totalorder %s198, %s200
      %p207 = scmp.eq.s32.totalorder %s38, 1
      %p208 = por %p206, %p207
      %p209 = scmp.ne.s32.totalorder %s200, %s201
      %p210 = scmp.eq.s32.totalorder %s38, 0
      %p211 = por %p209, %p210
      %p212 = scmp.ne.s32.totalorder %s200, %s201
      %p213 = scmp.eq.s32.totalorder %s39, 1
      %p214 = por %p212, %p213
      %p216 = scmp.ne.s32.totalorder %s201, %s215
      %p217 = scmp.eq.s32.totalorder %s39, 0
      %p218 = por %p216, %p217
      %s220 = sadd.s32 %s219, 1
      %p223 = scmp.eq.s32.totalorder %s33, 1
      %p224 = scmp.ne.s32.totalorder %s219, %s221
      %p225 = scmp.eq.s32.totalorder %s33, 0
      %p226 = por %p224, %p225
      %p227 = scmp.ne.s32.totalorder %s219, %s221
      %p228 = scmp.eq.s32.totalorder %s38, 1
      %p229 = por %p227, %p228
      %p230 = scmp.ne.s32.totalorder %s221, %s222
      %p231 = scmp.eq.s32.totalorder %s38, 0
      %p232 = por %p230, %p231
      %p233 = scmp.ne.s32.totalorder %s221, %s222
      %p234 = scmp.eq.s32.totalorder %s39, 1
      %p235 = por %p233, %p234
      %p237 = scmp.ne.s32.totalorder %s222, %s236
      %p238 = scmp.eq.s32.totalorder %s39, 0
      %p239 = por %p237, %p238
      %s241 = sadd.s32 %s240, 1
      %p244 = scmp.eq.s32.totalorder %s33, 1
      %p245 = scmp.ne.s32.totalorder %s240, %s242
      %p246 = scmp.eq.s32.totalorder %s33, 0
      %p247 = por %p245, %p246
      %p248 = scmp.ne.s32.totalorder %s240, %s242
      %p249 = scmp.eq.s32.totalorder %s38, 1
      %p250 = por %p248, %p249
      %p251 = scmp.ne.s32.totalorder %s242, %s243
      %p252 = scmp.eq.s32.totalorder %s38, 0
      %p253 = por %p251, %p252
      %p254 = scmp.ne.s32.totalorder %s242, %s243
      %p255 = scmp.eq.s32.totalorder %s39, 1
      %p256 = por %p254, %p255
      %p258 = scmp.ne.s32.totalorder %s243, %s257
      %p259 = scmp.eq.s32.totalorder %s39, 0
      %p260 = por %p258, %p259
      %s262 = sadd.s32 %s261, 1
      %p265 = scmp.eq.s32.totalorder %s33, 1
      %p266 = scmp.ne.s32.totalorder %s261, %s263
      %p267 = scmp.eq.s32.totalorder %s33, 0
      %p268 = por %p266, %p267
      %p269 = scmp.ne.s32.totalorder %s261, %s263
      %p270 = scmp.eq.s32.totalorder %s38, 1
      %p271 = por %p269, %p270
      %p272 = scmp.ne.s32.totalorder %s263, %s264
      %p273 = scmp.eq.s32.totalorder %s38, 0
      %p274 = por %p272, %p273
      %p275 = scmp.ne.s32.totalorder %s263, %s264
      %p276 = scmp.eq.s32.totalorder %s39, 1
      %p277 = por %p275, %p276
      %p279 = scmp.ne.s32.totalorder %s264, %s278
      %p280 = scmp.eq.s32.totalorder %s39, 0
      %p281 = por %p279, %p280
      %s283 = sadd.s32 %s282, 1
      %p286 = scmp.eq.s32.totalorder %s33, 1
      %p287 = scmp.ne.s32.totalorder %s282, %s284
      %p288 = scmp.eq.s32.totalorder %s33, 0
      %p289 = por %p287, %p288
      %p290 = scmp.ne.s32.totalorder %s282, %s284
      %p291 = scmp.eq.s32.totalorder %s38, 1
      %p292 = por %p290, %p291
      %p293 = scmp.ne.s32.totalorder %s284, %s285
      %p294 = scmp.eq.s32.totalorder %s38, 0
      %p295 = por %p293, %p294
      %p296 = scmp.ne.s32.totalorder %s284, %s285
      %p297 = scmp.eq.s32.totalorder %s39, 1
      %p298 = por %p296, %p297
      %p300 = scmp.ne.s32.totalorder %s285, %s299
      %p301 = scmp.eq.s32.totalorder %s39, 0
      %p302 = por %p300, %p301
      %s304 = sadd.s32 %s303, 1
      %p307 = scmp.eq.s32.totalorder %s33, 1
      %p308 = scmp.ne.s32.totalorder %s303, %s305
      %p309 = scmp.eq.s32.totalorder %s33, 0
      %p310 = por %p308, %p309
      %p311 = scmp.ne.s32.totalorder %s303, %s305
      %p312 = scmp.eq.s32.totalorder %s38, 1
      %p313 = por %p311, %p312
      %p314 = scmp.ne.s32.totalorder %s305, %s306
      %p315 = scmp.eq.s32.totalorder %s38, 0
      %p316 = por %p314, %p315
      %p317 = scmp.ne.s32.totalorder %s305, %s306
      %p318 = scmp.eq.s32.totalorder %s39, 1
      %p319 = por %p317, %p318
      %p321 = scmp.ne.s32.totalorder %s306, %s320
      %p322 = scmp.eq.s32.totalorder %s39, 0
      %p323 = por %p321, %p322
      %s325 = sadd.s32 %s324, 1
      %p328 = scmp.eq.s32.totalorder %s33, 1
      %p329 = scmp.ne.s32.totalorder %s324, %s326
      %p330 = scmp.eq.s32.totalorder %s33, 0
      %p331 = por %p329, %p330
      %p332 = scmp.ne.s32.totalorder %s324, %s326
      %p333 = scmp.eq.s32.totalorder %s38, 1
      %p334 = por %p332, %p333
      %p335 = scmp.ne.s32.totalorder %s326, %s327
      %p336 = scmp.eq.s32.totalorder %s38, 0
      %p337 = por %p335, %p336
      %p338 = scmp.ne.s32.totalorder %s326, %s327
      %p339 = scmp.eq.s32.totalorder %s39, 1
      %p340 = por %p338, %p339
      %p342 = scmp.ne.s32.totalorder %s327, %s341
      %p343 = scmp.eq.s32.totalorder %s39, 0
      %p344 = por %p342, %p343
      %s346 = sadd.s32 %s345, 1
      %p349 = scmp.eq.s32.totalorder %s33, 1
      %p350 = scmp.ne.s32.totalorder %s345, %s347
      %p351 = scmp.eq.s32.totalorder %s33, 0
      %p352 = por %p350, %p351
      %p353 = scmp.ne.s32.totalorder %s345, %s347
      %p354 = scmp.eq.s32.totalorder %s38, 1
      %p355 = por %p353, %p354
      %p356 = scmp.ne.s32.totalorder %s347, %s348
      %p357 = scmp.eq.s32.totalorder %s38, 0
      %p358 = por %p356, %p357
      %p359 = scmp.ne.s32.totalorder %s347, %s348
      %p360 = scmp.eq.s32.totalorder %s39, 1
      %p361 = por %p359, %p360
      %p363 = scmp.ne.s32.totalorder %s348, %s362
      %p364 = scmp.eq.s32.totalorder %s39, 0
      %p365 = por %p363, %p364
      %s367 = sadd.s32 %s366, 1
      %p370 = scmp.eq.s32.totalorder %s33, 1
      %p371 = scmp.ne.s32.totalorder %s366, %s368
      %p372 = scmp.eq.s32.totalorder %s33, 0
      %p373 = por %p371, %p372
      %p374 = scmp.ne.s32.totalorder %s366, %s368
      %p375 = scmp.eq.s32.totalorder %s38, 1
      %p376 = por %p374, %p375
      %p377 = scmp.ne.s32.totalorder %s368, %s369
      %p378 = scmp.eq.s32.totalorder %s38, 0
      %p379 = por %p377, %p378
      %p380 = scmp.ne.s32.totalorder %s368, %s369
      %p381 = scmp.eq.s32.totalorder %s39, 1
      %p382 = por %p380, %p381
      %p384 = scmp.ne.s32.totalorder %s369, %s383
      %p385 = scmp.eq.s32.totalorder %s39, 0
      %p386 = por %p384, %p385
      %s388 = sadd.s32 %s387, 1
      %p391 = scmp.eq.s32.totalorder %s33, 1
      %p392 = scmp.ne.s32.totalorder %s387, %s389
      %p393 = scmp.eq.s32.totalorder %s33, 0
      %p394 = por %p392, %p393
      %p395 = scmp.ne.s32.totalorder %s387, %s389
      %p396 = scmp.eq.s32.totalorder %s38, 1
      %p397 = por %p395, %p396
      %p398 = scmp.ne.s32.totalorder %s389, %s390
      %p399 = scmp.eq.s32.totalorder %s38, 0
      %p400 = por %p398, %p399
      %p401 = scmp.ne.s32.totalorder %s389, %s390
      %p402 = scmp.eq.s32.totalorder %s39, 1
      %p403 = por %p401, %p402
      %p405 = scmp.ne.s32.totalorder %s390, %s404
      %p406 = scmp.eq.s32.totalorder %s39, 0
      %p407 = por %p405, %p406
      %s408 = ssub.s32 %s33, %s40
      %p409 = scmp.eq.s32.totalorder %s408, 0
      %s411 = sadd.s32 %s410, 1
      %s412 = scalar_select %p409, %s410, %s411
      %p415 = pneg %p409
      %p416 = scmp.eq.s32.totalorder %s33, 1
      %p417 = por %p415, %p416
      %p418 = scmp.ne.s32.totalorder %s410, %s413
      %p419 = scmp.eq.s32.totalorder %s33, 0
      %p420 = por %p418, %p419
      %p421 = scmp.ne.s32.totalorder %s410, %s413
      %p422 = scmp.eq.s32.totalorder %s38, 1
      %p423 = por %p421, %p422
      %p424 = scmp.ne.s32.totalorder %s413, %s414
      %p425 = scmp.eq.s32.totalorder %s38, 0
      %p426 = por %p424, %p425
      %p427 = scmp.ne.s32.totalorder %s413, %s414
      %p428 = scmp.eq.s32.totalorder %s39, 1
      %p429 = por %p427, %p428
      %p431 = scmp.ne.s32.totalorder %s414, %s430
      %p432 = scmp.eq.s32.totalorder %s39, 0
      %p433 = por %p431, %p432
      %p434 = scmp.le.s32.totalorder 1, %s33
      %p435 = scmp.lt.s32.totalorder %s33, 3
      %p436 = pnand %p434, %p435
      %p437 = pneg %p436
      // Predicated region
      $region9: #{decoder_forward.1} parent=5 // pred_check
        _
      $region10: #{decoder_forward.1} parent=5 // pred_check_branch
        %439 = sbr.rel (%p436) target = $region12
      $region11: #{decoder_forward.1} parent=5 // pred_region
        %s440 = ssub.s32 %s33, 1
        // Predicated region
        $region13: #{decoder_forward.1} parent=11 // pred_check
          %p441 = pneg %p106
        $region14: #{decoder_forward.1} parent=11 // pred_check_branch
          %443 = sbr.rel (%p441) target = $region16
        $region15: #{decoder_forward.1} parent=11 // pred_region
          _
        $region16: #{decoder_forward.1} parent=11 // pred_fallthru
          _
        // Predicated region
        $region17: #{decoder_forward.1} parent=11 // pred_check
          %p444 = pneg %p127
        $region18: #{decoder_forward.1} parent=11 // pred_check_branch
          %446 = sbr.rel (%p444) target = $region20
        $region19: #{decoder_forward.1} parent=11 // pred_region
          %s448 = ssub.s32 16, 16
          %449 = vsyncadd [#allocation7], %s448
          %s451 = sshll.u32 [#allocation6], 4
          %s452 = int_to_ptr.vmem [resolvable:$true] %s451
          %454 = dma.hbm_to_vmem [thread:$0]  %s3, 16, %s452, [#allocation7]
        $region20: #{decoder_forward.1} parent=11 // pred_fallthru
          _
        // Predicated region
        $region21: #{decoder_forward.1} parent=11 // pred_check
          %p455 = pneg %p148
        $region22: #{decoder_forward.1} parent=11 // pred_check_branch
          %457 = sbr.rel (%p455) target = $region24
        $region23: #{decoder_forward.1} parent=11 // pred_region
          %s459 = ssub.s32 16, 16
          %460 = vsyncadd [#allocation7], %s459
          %s462 = sshll.u32 [#allocation8], 4
          %s463 = int_to_ptr.vmem [resolvable:$true] %s462
          %465 = dma.hbm_to_vmem [thread:$0]  %s4, 16, %s463, [#allocation7]
        $region24: #{decoder_forward.1} parent=11 // pred_fallthru
          _
        // Predicated region
        $region25: #{decoder_forward.1} parent=11 // pred_check
          %p466 = pneg %p169
        $region26: #{decoder_forward.1} parent=11 // pred_check_branch
          %468 = sbr.rel (%p466) target = $region28
        $region27: #{decoder_forward.1} parent=11 // pred_region
          %s470 = ssub.s32 18432, 18432
          %471 = vsyncadd [#allocation10], %s470
          %s472 = sshll.u32 [#allocation9], 4
          %s473 = int_to_ptr.vmem [resolvable:$true] %s472
          %478 = dma.hbm_to_vmem [thread:$0]  %s5, 18432, %s473, [#allocation10], 256, 256, 16
        $region28: #{decoder_forward.1} parent=11 // pred_fallthru
          _
        // Predicated region
        $region29: #{decoder_forward.1} parent=11 // pred_check
          %p479 = pneg %p190
        $region30: #{decoder_forward.1} parent=11 // pred_check_branch
          %481 = sbr.rel (%p479) target = $region32
        $region31: #{decoder_forward.1} parent=11 // pred_region
          %s483 = ssub.s32 1024, 1024
          %484 = vsyncadd [#allocation10], %s483
          %s485 = sshll.u32 [#allocation11], 4
          %s486 = int_to_ptr.vmem [resolvable:$true] %s485
          %491 = dma.hbm_to_vmem [thread:$0]  %s6, 1024, %s486, [#allocation10], 128, 128, 8
        $region32: #{decoder_forward.1} parent=11 // pred_fallthru
          _
        // Predicated region
        $region33: #{decoder_forward.1} parent=11 // pred_check
          %p492 = pneg %p211
        $region34: #{decoder_forward.1} parent=11 // pred_check_branch
          %494 = sbr.rel (%p492) target = $region36
        $region35: #{decoder_forward.1} parent=11 // pred_region
          %s496 = ssub.s32 43776, 43776
          %497 = vsyncadd [#allocation13], %s496
          %s498 = sshll.u32 [#allocation12], 4
          %s499 = int_to_ptr.vmem [resolvable:$true] %s498
          %504 = dma.hbm_to_vmem [thread:$0]  %s7, 43776, %s499, [#allocation13], 128, 128, 8
        $region36: #{decoder_forward.1} parent=11 // pred_fallthru
          _
        // Predicated region
        $region37: #{decoder_forward.1} parent=11 // pred_check
          %p505 = pneg %p232
        $region38: #{decoder_forward.1} parent=11 // pred_check_branch
          %507 = sbr.rel (%p505) target = $region40
        $region39: #{decoder_forward.1} parent=11 // pred_region
          %s509 = ssub.s32 32, 32
          %510 = vsyncadd [#allocation13], %s509
          %s512 = sshll.u32 [#allocation14], 4
          %s513 = int_to_ptr.vmem [resolvable:$true] %s512
          %515 = dma.hbm_to_vmem [thread:$0]  %s8, 32, %s513, [#allocation13]
        $region40: #{decoder_forward.1} parent=11 // pred_fallthru
          _
        // Predicated region
        $region41: #{decoder_forward.1} parent=11 // pred_check
          %p516 = pneg %p253
        $region42: #{decoder_forward.1} parent=11 // pred_check_branch
          %518 = sbr.rel (%p516) target = $region44
        $region43: #{decoder_forward.1} parent=11 // pred_region
          %s520 = ssub.s32 32, 32
          %521 = vsyncadd [#allocation16], %s520
          %s523 = sshll.u32 [#allocation15], 4
          %s524 = int_to_ptr.vmem [resolvable:$true] %s523
          %526 = dma.hbm_to_vmem [thread:$0]  %s9, 32, %s524, [#allocation16]
        $region44: #{decoder_forward.1} parent=11 // pred_fallthru
          _
        // Predicated region
        $region45: #{decoder_forward.1} parent=11 // pred_check
          %p527 = pneg %p274
        $region46: #{decoder_forward.1} parent=11 // pred_check_branch
          %529 = sbr.rel (%p527) target = $region48
        $region47: #{decoder_forward.1} parent=11 // pred_region
          %s531 = ssub.s32 36864, 36864
          %532 = vsyncadd [#allocation16], %s531
          %s533 = sshll.u32 [#allocation17], 4
          %s534 = int_to_ptr.vmem [resolvable:$true] %s533
          %539 = dma.hbm_to_vmem [thread:$0]  %s10, 36864, %s534, [#allocation16], 128, 128, 8
        $region48: #{decoder_forward.1} parent=11 // pred_fallthru
          _
        // Predicated region
        $region49: #{decoder_forward.1} parent=11 // pred_check
          %p540 = pneg %p295
        $region50: #{decoder_forward.1} parent=11 // pred_check_branch
          %542 = sbr.rel (%p540) target = $region52
        $region51: #{decoder_forward.1} parent=11 // pred_region
          %s544 = ssub.s32 32, 32
          %545 = vsyncadd [#allocation19], %s544
          %s547 = sshll.u32 [#allocation18], 4
          %s548 = int_to_ptr.vmem [resolvable:$true] %s547
          %550 = dma.hbm_to_vmem [thread:$0]  %s11, 32, %s548, [#allocation19]
        $region52: #{decoder_forward.1} parent=11 // pred_fallthru
          _
        // Predicated region
        $region53: #{decoder_forward.1} parent=11 // pred_check
          %p551 = pneg %p316
        $region54: #{decoder_forward.1} parent=11 // pred_check_branch
          %553 = sbr.rel (%p551) target = $region56
        $region55: #{decoder_forward.1} parent=11 // pred_region
          %s555 = ssub.s32 32, 32
          %556 = vsyncadd [#allocation19], %s555
          %s558 = sshll.u32 [#allocation20], 4
          %s559 = int_to_ptr.vmem [resolvable:$true] %s558
          %561 = dma.hbm_to_vmem [thread:$0]  %s12, 32, %s559, [#allocation19]
        $region56: #{decoder_forward.1} parent=11 // pred_fallthru
          _
        // Predicated region
        $region57: #{decoder_forward.1} parent=11 // pred_check
          %p562 = pneg %p337
        $region58: #{decoder_forward.1} parent=11 // pred_check_branch
          %564 = sbr.rel (%p562) target = $region60
        $region59: #{decoder_forward.1} parent=11 // pred_region
          _
        $region60: #{decoder_forward.1} parent=11 // pred_fallthru
          _
        // Predicated region
        $region61: #{decoder_forward.1} parent=11 // pred_check
          %p565 = pneg %p358
        $region62: #{decoder_forward.1} parent=11 // pred_check_branch
          %567 = sbr.rel (%p565) target = $region64
        $region63: #{decoder_forward.1} parent=11 // pred_region
          %s569 = ssub.s32 16, 16
          %570 = vsyncadd [#allocation22], %s569
          %s572 = sshll.u32 [#allocation21], 4
          %s573 = int_to_ptr.vmem [resolvable:$true] %s572
          %575 = dma.hbm_to_vmem [thread:$0]  %s14, 16, %s573, [#allocation22]
        $region64: #{decoder_forward.1} parent=11 // pred_fallthru
          _
        // Predicated region
        $region65: #{decoder_forward.1} parent=11 // pred_check
          %p576 = pneg %p379
        $region66: #{decoder_forward.1} parent=11 // pred_check_branch
          %578 = sbr.rel (%p576) target = $region68
        $region67: #{decoder_forward.1} parent=11 // pred_region
          %s580 = ssub.s32 16, 16
          %581 = vsyncadd [#allocation22], %s580
          %s583 = sshll.u32 [#allocation23], 4
          %s584 = int_to_ptr.vmem [resolvable:$true] %s583
          %586 = dma.hbm_to_vmem [thread:$0]  %s15, 16, %s584, [#allocation22]
        $region68: #{decoder_forward.1} parent=11 // pred_fallthru
          _
        // Predicated region
        $region69: #{decoder_forward.1} parent=11 // pred_check
          %p587 = pneg %p400
        $region70: #{decoder_forward.1} parent=11 // pred_check_branch
          %589 = sbr.rel (%p587) target = $region72
        $region71: #{decoder_forward.1} parent=11 // pred_region
          %s591 = ssub.s32 4096, 4096
          %592 = vsyncadd [#allocation25], %s591
          %s593 = sshll.u32 [#allocation24], 4
          %s594 = int_to_ptr.vmem [resolvable:$true] %s593
          %599 = dma.hbm_to_vmem [thread:$0]  %s16, 4096, %s594, [#allocation25], 128, 128, 8
        $region72: #{decoder_forward.1} parent=11 // pred_fallthru
          _
      $region12: #{decoder_forward.1} parent=5 // pred_fallthru
        _
      %p600 = scmp.lt.s32.totalorder %s33, 2
      // Predicated region
      $region73: #{decoder_forward.1} parent=5 // pred_check
        %p601 = pneg %p600
      $region74: #{decoder_forward.1} parent=5 // pred_check_branch
        %603 = sbr.rel (%p601) target = $region76
      $region75: #{decoder_forward.1} parent=5 // pred_region
        // Predicated region
        $region77: #{decoder_forward.1} parent=75 // pred_check
          %p604 = pneg %p53
        $region78: #{decoder_forward.1} parent=75 // pred_check_branch
          %606 = sbr.rel (%p604) target = $region80
        $region79: #{decoder_forward.1} parent=75 // pred_region
          %s607 = sand.u32 %s43, 1
          %s608 = scalar_lea.sflag [#allocation5], %s607
          %s609 = sand.u32 %s43, 1
          %s610 = smul.addr %s609, 512
          %s611 = scalar_lea.vmem [#allocation4], %s610
          %s613 = ssub.s32 8192, 8192
          %614 = vsyncadd %s608, %s613
          %s615 = smul.addr %s33, 64
          %s616 = smul.addr %s615, 128
          %s617 = scalar_lea.hbm %s0, %s616
          %s618 = sshll.u32 %s611, 4
          %s619 = int_to_ptr.vmem [resolvable:$true] %s618
          %624 = dma.hbm_to_vmem [thread:$0]  %s617, 8192, %s619, %s608, 256, 256, 16
        $region80: #{decoder_forward.1} parent=75 // pred_fallthru
          _
        // Predicated region
        $region81: #{decoder_forward.1} parent=75 // pred_check
          %p625 = pneg %p79
        $region82: #{decoder_forward.1} parent=75 // pred_check_branch
          %627 = sbr.rel (%p625) target = $region84
        $region83: #{decoder_forward.1} parent=75 // pred_region
          %p628 = scmp.lt.s32.totalorder %s33, 1
          %s629 = scalar_select %p628, %s33, 1
          %s630 = smul.addr %s629, 4
          %s631 = smul.addr %s630, 8
          %s632 = scalar_lea.vmem %s1, %s631
        $region84: #{decoder_forward.1} parent=75 // pred_fallthru
          _
      $region76: #{decoder_forward.1} parent=5 // pred_fallthru
        _
      %p633 = scmp.le.s32.totalorder 1, %s33
      %p634 = scmp.lt.s32.totalorder %s33, 3
      %p635 = pnand %p633, %p634
      %p636 = pneg %p635
      // Predicated region
      $region85: #{decoder_forward.1} parent=5 // pred_check
        _
      $region86: #{decoder_forward.1} parent=5 // pred_check_branch
        %638 = sbr.rel (%p635) target = $region88
      $region87: #{decoder_forward.1} parent=5 // pred_region
        %s639 = ssub.s32 %s33, 1
        %s640 = sand.u32 %s46, 1
        %s641 = scalar_lea.sflag [#allocation5], %s640
        %s642 = sand.u32 %s46, 1
        %s643 = smul.addr %s642, 512
        %s644 = scalar_lea.vmem [#allocation4], %s643
        // Predicated region
        $region89: #{decoder_forward.1} parent=87 // pred_check
          %p645 = pneg %p59
        $region90: #{decoder_forward.1} parent=87 // pred_check_branch
          %647 = sbr.rel (%p645) target = $region92
        $region91: #{decoder_forward.1} parent=87 // pred_region
          %648 = dma.done %s641, 8192
        $region92: #{decoder_forward.1} parent=87 // pred_fallthru
          _
        // Predicated region
        $region93: #{decoder_forward.1} parent=87 // pred_check
          %p649 = pneg %p127
        $region94: #{decoder_forward.1} parent=87 // pred_check_branch
          %651 = sbr.rel (%p649) target = $region96
        $region95: #{decoder_forward.1} parent=87 // pred_region
          %652 = dma.done [#allocation7], 16
        $region96: #{decoder_forward.1} parent=87 // pred_fallthru
          _
        // Predicated region
        $region97: #{decoder_forward.1} parent=87 // pred_check
          %p653 = pneg %p148
        $region98: #{decoder_forward.1} parent=87 // pred_check_branch
          %655 = sbr.rel (%p653) target = $region100
        $region99: #{decoder_forward.1} parent=87 // pred_region
          %656 = dma.done [#allocation7], 16
        $region100: #{decoder_forward.1} parent=87 // pred_fallthru
          _
        // Predicated region
        $region101: #{decoder_forward.1} parent=87 // pred_check
          %p657 = pneg %p169
        $region102: #{decoder_forward.1} parent=87 // pred_check_branch
          %659 = sbr.rel (%p657) target = $region104
        $region103: #{decoder_forward.1} parent=87 // pred_region
          %660 = dma.done [#allocation10], 18432
        $region104: #{decoder_forward.1} parent=87 // pred_fallthru
          _
        // Predicated region
        $region105: #{decoder_forward.1} parent=87 // pred_check
          %p661 = pneg %p190
        $region106: #{decoder_forward.1} parent=87 // pred_check_branch
          %663 = sbr.rel (%p661) target = $region108
        $region107: #{decoder_forward.1} parent=87 // pred_region
          %664 = dma.done [#allocation10], 1024
        $region108: #{decoder_forward.1} parent=87 // pred_fallthru
          _
        // Predicated region
        $region109: #{decoder_forward.1} parent=87 // pred_check
          %p665 = pneg %p211
        $region110: #{decoder_forward.1} parent=87 // pred_check_branch
          %667 = sbr.rel (%p665) target = $region112
        $region111: #{decoder_forward.1} parent=87 // pred_region
          %668 = dma.done [#allocation13], 43776
        $region112: #{decoder_forward.1} parent=87 // pred_fallthru
          _
        // Predicated region
        $region113: #{decoder_forward.1} parent=87 // pred_check
          %p669 = pneg %p232
        $region114: #{decoder_forward.1} parent=87 // pred_check_branch
          %671 = sbr.rel (%p669) target = $region116
        $region115: #{decoder_forward.1} parent=87 // pred_region
          %672 = dma.done [#allocation13], 32
        $region116: #{decoder_forward.1} parent=87 // pred_fallthru
          _
        // Predicated region
        $region117: #{decoder_forward.1} parent=87 // pred_check
          %p673 = pneg %p253
        $region118: #{decoder_forward.1} parent=87 // pred_check_branch
          %675 = sbr.rel (%p673) target = $region120
        $region119: #{decoder_forward.1} parent=87 // pred_region
          %676 = dma.done [#allocation16], 32
        $region120: #{decoder_forward.1} parent=87 // pred_fallthru
          _
        // Predicated region
        $region121: #{decoder_forward.1} parent=87 // pred_check
          %p677 = pneg %p274
        $region122: #{decoder_forward.1} parent=87 // pred_check_branch
          %679 = sbr.rel (%p677) target = $region124
        $region123: #{decoder_forward.1} parent=87 // pred_region
          %680 = dma.done [#allocation16], 36864
        $region124: #{decoder_forward.1} parent=87 // pred_fallthru
          _
        // Predicated region
        $region125: #{decoder_forward.1} parent=87 // pred_check
          %p681 = pneg %p295
        $region126: #{decoder_forward.1} parent=87 // pred_check_branch
          %683 = sbr.rel (%p681) target = $region128
        $region127: #{decoder_forward.1} parent=87 // pred_region
          %684 = dma.done [#allocation19], 32
        $region128: #{decoder_forward.1} parent=87 // pred_fallthru
          _
        // Predicated region
        $region129: #{decoder_forward.1} parent=87 // pred_check
          %p685 = pneg %p316
        $region130: #{decoder_forward.1} parent=87 // pred_check_branch
          %687 = sbr.rel (%p685) target = $region132
        $region131: #{decoder_forward.1} parent=87 // pred_region
          %688 = dma.done [#allocation19], 32
        $region132: #{decoder_forward.1} parent=87 // pred_fallthru
          _
        // Predicated region
        $region133: #{decoder_forward.1} parent=87 // pred_check
          %p689 = pneg %p358
        $region134: #{decoder_forward.1} parent=87 // pred_check_branch
          %691 = sbr.rel (%p689) target = $region136
        $region135: #{decoder_forward.1} parent=87 // pred_region
          %692 = dma.done [#allocation22], 16
        $region136: #{decoder_forward.1} parent=87 // pred_fallthru
          _
        // Predicated region
        $region137: #{decoder_forward.1} parent=87 // pred_check
          %p693 = pneg %p379
        $region138: #{decoder_forward.1} parent=87 // pred_check_branch
          %695 = sbr.rel (%p693) target = $region140
        $region139: #{decoder_forward.1} parent=87 // pred_region
          %696 = dma.done [#allocation22], 16
        $region140: #{decoder_forward.1} parent=87 // pred_fallthru
          _
        // Predicated region
        $region141: #{decoder_forward.1} parent=87 // pred_check
          %p697 = pneg %p400
        $region142: #{decoder_forward.1} parent=87 // pred_check_branch
          %699 = sbr.rel (%p697) target = $region144
        $region143: #{decoder_forward.1} parent=87 // pred_region
          %700 = dma.done [#allocation25], 4096
        $region144: #{decoder_forward.1} parent=87 // pred_fallthru
          _
        %s701 = sand.u32 %s46, 1
        %s702 = scalar_lea.sflag [#allocation5], %s701
        %s703 = sand.u32 %s46, 1
        %s704 = smul.addr %s703, 512
        %s705 = scalar_lea.vmem [#allocation4], %s704
        %p706 = pneg %p59
        %p707 = pneg %p56
        %p708 = scmp.lt.s32.totalorder %s38, 1
        %s709 = scalar_select %p708, %s38, 1
        %s710 = smul.addr %s709, 4
        %s711 = smul.addr %s710, 8
        %s712 = scalar_lea.vmem %s1, %s711
        %p713 = pneg %p85
        %p714 = pneg %p82
        %p715 = pneg %p106
        %p716 = pneg %p103
        %p717 = pneg %p127
        %p718 = pneg %p124
        %p719 = pneg %p148
        %p720 = pneg %p145
        %p721 = pneg %p169
        %p722 = pneg %p166
        %p723 = pneg %p190
        %p724 = pneg %p187
        %p725 = pneg %p211
        %p726 = pneg %p208
        %p727 = pneg %p232
        %p728 = pneg %p229
        %p729 = pneg %p253
        %p730 = pneg %p250
        %p731 = pneg %p274
        %p732 = pneg %p271
        %p733 = pneg %p295
        %p734 = pneg %p292
        %p735 = pneg %p316
        %p736 = pneg %p313
        %p737 = pneg %p337
        %p738 = pneg %p334
        %p739 = pneg %p358
        %p740 = pneg %p355
        %p741 = pneg %p379
        %p742 = pneg %p376
        %p743 = pneg %p400
        %p744 = pneg %p397
        %p745 = pneg %p426
        %p746 = pneg %p423
        %p747 = scmp.lt.s32.totalorder %s38, 1
        %s748 = scalar_select %p747, %s38, 1
        %s749 = smul.addr %s748, 32
        %s750 = smul.addr %s749, 8
        %s751 = scalar_lea.vmem %s17, %s750
        %p752 = scmp.lt.s32.totalorder %s38, 1
        %s753 = scalar_select %p752, %s38, 1
        %s754 = smul.addr %s753, 4
        %s755 = smul.addr %s754, 8
        %s756 = scalar_lea.vmem %s1, %s755
        %p757 = scmp.lt.s32.totalorder %s38, 1
        %s758 = scalar_select %p757, %s38, 1
        %s759 = smul.addr %s758, 32
        %s760 = smul.addr %s759, 8
        %s761 = scalar_lea.vmem %s17, %s760
        %v763 = vld [vmem:[%s644] sm:$0xff]
        %v764 = vld [vmem:[%s644 + $0x8] sm:$0xff]
        %v765 = vld [vmem:[%s644 + $0x10] sm:$0xff]
        %v766 = vld [vmem:[%s644 + $0x18] sm:$0xff]
        %v767 = vld [vmem:[%s644 + $0x20] sm:$0xff]
        %v768 = vld [vmem:[%s644 + $0x28] sm:$0xff]
        %v769 = vld [vmem:[%s644 + $0x30] sm:$0xff]
        %v770 = vld [vmem:[%s644 + $0x38] sm:$0xff]
        %v771 = vld [vmem:[%s644 + $0x40] sm:$0xff]
        %v772 = vld [vmem:[%s644 + $0x48] sm:$0xff]
        %v773 = vld [vmem:[%s644 + $0x50] sm:$0xff]
        %v774 = vld [vmem:[%s644 + $0x58] sm:$0xff]
        %v775 = vld [vmem:[%s644 + $0x60] sm:$0xff]
        %v776 = vld [vmem:[%s644 + $0x68] sm:$0xff]
        %v777 = vld [vmem:[%s644 + $0x70] sm:$0xff]
        %v778 = vld [vmem:[%s644 + $0x78] sm:$0xff]
        %v779 = vld [vmem:[%s644 + $0x80] sm:$0xff]
        %v780 = vld [vmem:[%s644 + $0x88] sm:$0xff]
        %v781 = vld [vmem:[%s644 + $0x90] sm:$0xff]
        %v782 = vld [vmem:[%s644 + $0x98] sm:$0xff]
        %v783 = vld [vmem:[%s644 + $0xa0] sm:$0xff]
        %v784 = vld [vmem:[%s644 + $0xa8] sm:$0xff]
        %v785 = vld [vmem:[%s644 + $0xb0] sm:$0xff]
        %v786 = vld [vmem:[%s644 + $0xb8] sm:$0xff]
        %v787 = vld [vmem:[%s644 + $0xc0] sm:$0xff]
        %v788 = vld [vmem:[%s644 + $0xc8] sm:$0xff]
        %v789 = vld [vmem:[%s644 + $0xd0] sm:$0xff]
        %v790 = vld [vmem:[%s644 + $0xd8] sm:$0xff]
        %v791 = vld [vmem:[%s644 + $0xe0] sm:$0xff]
        %v792 = vld [vmem:[%s644 + $0xe8] sm:$0xff]
        %v793 = vld [vmem:[%s644 + $0xf0] sm:$0xff]
        %v794 = vld [vmem:[%s644 + $0xf8] sm:$0xff]
        %v795 = vld [vmem:[%s644 + $0x100] sm:$0xff]
        %v796 = vld [vmem:[%s644 + $0x108] sm:$0xff]
        %v797 = vld [vmem:[%s644 + $0x110] sm:$0xff]
        %v798 = vld [vmem:[%s644 + $0x118] sm:$0xff]
        %v799 = vld [vmem:[%s644 + $0x120] sm:$0xff]
        %v800 = vld [vmem:[%s644 + $0x128] sm:$0xff]
        %v801 = vld [vmem:[%s644 + $0x130] sm:$0xff]
        %v802 = vld [vmem:[%s644 + $0x138] sm:$0xff]
        %v803 = vld [vmem:[%s644 + $0x140] sm:$0xff]
        %v804 = vld [vmem:[%s644 + $0x148] sm:$0xff]
        %v805 = vld [vmem:[%s644 + $0x150] sm:$0xff]
        %v806 = vld [vmem:[%s644 + $0x158] sm:$0xff]
        %v807 = vld [vmem:[%s644 + $0x160] sm:$0xff]
        %v808 = vld [vmem:[%s644 + $0x168] sm:$0xff]
        %v809 = vld [vmem:[%s644 + $0x170] sm:$0xff]
        %v810 = vld [vmem:[%s644 + $0x178] sm:$0xff]
        %v811 = vld [vmem:[%s644 + $0x180] sm:$0xff]
        %v812 = vld [vmem:[%s644 + $0x188] sm:$0xff]
        %v813 = vld [vmem:[%s644 + $0x190] sm:$0xff]
        %v814 = vld [vmem:[%s644 + $0x198] sm:$0xff]
        %v815 = vld [vmem:[%s644 + $0x1a0] sm:$0xff]
        %v816 = vld [vmem:[%s644 + $0x1a8] sm:$0xff]
        %v817 = vld [vmem:[%s644 + $0x1b0] sm:$0xff]
        %v818 = vld [vmem:[%s644 + $0x1b8] sm:$0xff]
        %v819 = vld [vmem:[%s644 + $0x1c0] sm:$0xff]
        %v820 = vld [vmem:[%s644 + $0x1c8] sm:$0xff]
        %v821 = vld [vmem:[%s644 + $0x1d0] sm:$0xff]
        %v822 = vld [vmem:[%s644 + $0x1d8] sm:$0xff]
        %v823 = vld [vmem:[%s644 + $0x1e0] sm:$0xff]
        %v824 = vld [vmem:[%s644 + $0x1e8] sm:$0xff]
        %v825 = vld [vmem:[%s644 + $0x1f0] sm:$0xff]
        %v826 = vld [vmem:[%s644 + $0x1f8] sm:$0xff]
        %v827 = vpack.c.bf16 %v765, %v763
        %v828 = vpack.c.bf16 %v766, %v764
        %v829 = vpack.c.bf16 %v769, %v767
        %v830 = vpack.c.bf16 %v770, %v768
        %v831 = vpack.c.bf16 %v773, %v771
        %v832 = vpack.c.bf16 %v774, %v772
        %v833 = vpack.c.bf16 %v777, %v775
        %v834 = vpack.c.bf16 %v778, %v776
        %v835 = vpack.c.bf16 %v781, %v779
        %v836 = vpack.c.bf16 %v782, %v780
        %v837 = vpack.c.bf16 %v785, %v783
        %v838 = vpack.c.bf16 %v786, %v784
        %v839 = vpack.c.bf16 %v789, %v787
        %v840 = vpack.c.bf16 %v790, %v788
        %v841 = vpack.c.bf16 %v793, %v791
        %v842 = vpack.c.bf16 %v794, %v792
        %v843 = vpack.c.bf16 %v797, %v795
        %v844 = vpack.c.bf16 %v798, %v796
        %v845 = vpack.c.bf16 %v801, %v799
        %v846 = vpack.c.bf16 %v802, %v800
        %v847 = vpack.c.bf16 %v805, %v803
        %v848 = vpack.c.bf16 %v806, %v804
        %v849 = vpack.c.bf16 %v809, %v807
        %v850 = vpack.c.bf16 %v810, %v808
        %v851 = vpack.c.bf16 %v813, %v811
        %v852 = vpack.c.bf16 %v814, %v812
        %v853 = vpack.c.bf16 %v817, %v815
        %v854 = vpack.c.bf16 %v818, %v816
        %v855 = vpack.c.bf16 %v821, %v819
        %v856 = vpack.c.bf16 %v822, %v820
        %v857 = vpack.c.bf16 %v825, %v823
        %v858 = vpack.c.bf16 %v826, %v824
        %v859 = vld [vmem:[%s2] sm:$0xf]
        %v860 = vld [vmem:[%s2 + $0x4] sm:$0xf]
        %v861 = vld [vmem:[%s2 + $0x8] sm:$0xf]
        %v862 = vld [vmem:[%s2 + $0xc] sm:$0xf]
        %v863 = vld [vmem:[%s2 + $0x10] sm:$0xf]
        %v864 = vld [vmem:[%s2 + $0x14] sm:$0xf]
        %v865 = vld [vmem:[%s2 + $0x18] sm:$0xf]
        %v866 = vld [vmem:[%s2 + $0x1c] sm:$0xf]
        %v867 = vld [vmem:[%s2 + $0x20] sm:$0xf]
        %v868 = vld [vmem:[%s2 + $0x24] sm:$0xf]
        %v869 = vld [vmem:[%s2 + $0x28] sm:$0xf]
        %v870 = vld [vmem:[%s2 + $0x2c] sm:$0xf]
        %v871 = vld [vmem:[%s2 + $0x30] sm:$0xf]
        %v872 = vld [vmem:[%s2 + $0x34] sm:$0xf]
        %v873 = vld [vmem:[%s2 + $0x38] sm:$0xf]
        %v874 = vld [vmem:[%s2 + $0x3c] sm:$0xf]
        %v875 = vld [vmem:[%s2 + $0x40] sm:$0xf]
        %v876 = vld [vmem:[%s2 + $0x44] sm:$0xf]
        %v877 = vld [vmem:[%s2 + $0x48] sm:$0xf]
        %v878 = vld [vmem:[%s2 + $0x4c] sm:$0xf]
        %v879 = vld [vmem:[%s2 + $0x50] sm:$0xf]
        %v880 = vld [vmem:[%s2 + $0x54] sm:$0xf]
        %v881 = vld [vmem:[%s2 + $0x58] sm:$0xf]
        %v882 = vld [vmem:[%s2 + $0x5c] sm:$0xf]
        %v883 = vld [vmem:[%s2 + $0x60] sm:$0xf]
        %v884 = vld [vmem:[%s2 + $0x64] sm:$0xf]
        %v885 = vld [vmem:[%s2 + $0x68] sm:$0xf]
        %v886 = vld [vmem:[%s2 + $0x6c] sm:$0xf]
        %v887 = vld [vmem:[%s2 + $0x70] sm:$0xf]
        %v888 = vld [vmem:[%s2 + $0x74] sm:$0xf]
        %v889 = vld [vmem:[%s2 + $0x78] sm:$0xf]
        %v890 = vld [vmem:[%s2 + $0x7c] sm:$0xf]
        %v923 = vunpack.c.l.b16 %v859
        %v924 = vunpack.c.l.b16 %v860
        %v925 = vunpack.c.l.b16 %v861
        %v926 = vunpack.c.l.b16 %v862
        %v927 = vunpack.c.l.b16 %v863
        %v928 = vunpack.c.l.b16 %v864
        %v929 = vunpack.c.l.b16 %v865
        %v930 = vunpack.c.l.b16 %v866
        %v931 = vunpack.c.l.b16 %v867
        %v932 = vunpack.c.l.b16 %v868
        %v933 = vunpack.c.l.b16 %v869
        %v934 = vunpack.c.l.b16 %v870
        %v935 = vunpack.c.l.b16 %v871
        %v936 = vunpack.c.l.b16 %v872
        %v937 = vunpack.c.l.b16 %v873
        %v938 = vunpack.c.l.b16 %v874
        %v939 = vunpack.c.l.b16 %v875
        %v940 = vunpack.c.l.b16 %v876
        %v941 = vunpack.c.l.b16 %v877
        %v942 = vunpack.c.l.b16 %v878
        %v943 = vunpack.c.l.b16 %v879
        %v944 = vunpack.c.l.b16 %v880
        %v945 = vunpack.c.l.b16 %v881
        %v946 = vunpack.c.l.b16 %v882
        %v947 = vunpack.c.l.b16 %v883
        %v948 = vunpack.c.l.b16 %v884
        %v949 = vunpack.c.l.b16 %v885
        %v950 = vunpack.c.l.b16 %v886
        %v951 = vunpack.c.l.b16 %v887
        %v952 = vunpack.c.l.b16 %v888
        %v953 = vunpack.c.l.b16 %v889
        %v954 = vunpack.c.l.b16 %v890
        %v955 = vpack.c.b16 %v924, %v923
        %v956 = vpack.c.b16 %v926, %v925
        %v957 = vpack.c.b16 %v928, %v927
        %v958 = vpack.c.b16 %v930, %v929
        %v959 = vpack.c.b16 %v932, %v931
        %v960 = vpack.c.b16 %v934, %v933
        %v961 = vpack.c.b16 %v936, %v935
        %v962 = vpack.c.b16 %v938, %v937
        %v963 = vpack.c.b16 %v940, %v939
        %v964 = vpack.c.b16 %v942, %v941
        %v965 = vpack.c.b16 %v944, %v943
        %v966 = vpack.c.b16 %v946, %v945
        %v967 = vpack.c.b16 %v948, %v947
        %v968 = vpack.c.b16 %v950, %v949
        %v969 = vpack.c.b16 %v952, %v951
        %v970 = vpack.c.b16 %v954, %v953
        %987 = vmatprep.subr.bf16.mxu0 0
        %988 = vmatpush1.bf16.msra.mxu0 %v955
        %989 = vmatprep.subr.bf16.mxu0 0
        %990 = vmatpush1.bf16.msra.mxu0 %v956
        %991 = vmatprep.subr.bf16.mxu0 0
        %992 = vmatpush1.bf16.msra.mxu0 %v957
        %993 = vmatprep.subr.bf16.mxu0 0
        %994 = vmatpush1.bf16.msra.mxu0 %v958
        %995 = vmatprep.subr.bf16.mxu0 0
        %996 = vmatpush1.bf16.msra.mxu0 %v959
        %997 = vmatprep.subr.bf16.mxu0 0
        %998 = vmatpush1.bf16.msra.mxu0 %v960
        %999 = vmatprep.subr.bf16.mxu0 0
        %1000 = vmatpush1.bf16.msra.mxu0 %v961
        %1001 = vmatprep.subr.bf16.mxu0 0
        %1002 = vmatpush1.bf16.msra.mxu0 %v962
        %1003 = vmatprep.subr.bf16.mxu0 0
        %1004 = vmatpush1.bf16.msra.mxu0 %v963
        %1005 = vmatprep.subr.bf16.mxu0 0
        %1006 = vmatpush1.bf16.msra.mxu0 %v964
        %1007 = vmatprep.subr.bf16.mxu0 0
        %1008 = vmatpush1.bf16.msra.mxu0 %v965
        %1009 = vmatprep.subr.bf16.mxu0 0
        %1010 = vmatpush1.bf16.msra.mxu0 %v966
        %1011 = vmatprep.subr.bf16.mxu0 0
        %1012 = vmatpush1.bf16.msra.mxu0 %v967
        %1013 = vmatprep.subr.bf16.mxu0 0
        %1014 = vmatpush1.bf16.msra.mxu0 %v968
        %1015 = vmatprep.subr.bf16.mxu0 0
        %1016 = vmatpush1.bf16.msra.mxu0 %v969
        %1017 = vmatprep.subr.bf16.mxu0 0
        %1018 = vmatpush1.bf16.msra.mxu0 %v970
        %1019 = vmatprep.mubr.bf16.mxu0 %v828
        %1020 = vmatmul.mubr.bf16.gmra.mrb[0].mxu0 %v827
        %v1021 = vpop.f32.mrb[0].mxu0
        %v1022 = vadd.f32 0.0, %v1021
        %v1023 = vpop.f32.mrb[0].mxu0
        %v1024 = vpop.f32.mrb[0].mxu0
        %v1025 = vadd.f32 0.0, %v1024
        %v1026 = vpop.f32.mrb[0].mxu0
        %1027 = vmatprep.mubr.bf16.mxu0 %v830
        %1028 = vmatmul.mubr.bf16.gmra.mrb[0].mxu0 %v829
        %v1029 = vpop.f32.mrb[0].mxu0
        %v1030 = vadd.f32 0.0, %v1029
        %v1031 = vpop.f32.mrb[0].mxu0
        %v1032 = vpop.f32.mrb[0].mxu0
        %v1033 = vadd.f32 0.0, %v1032
        %v1034 = vpop.f32.mrb[0].mxu0
        %1035 = vmatprep.mubr.bf16.mxu0 %v832
        %1036 = vmatmul.mubr.bf16.gmra.mrb[0].mxu0 %v831
        %v1037 = vpop.f32.mrb[0].mxu0
        %v1038 = vadd.f32 0.0, %v1037
        %v1039 = vpop.f32.mrb[0].mxu0
        %v1040 = vpop.f32.mrb[0].mxu0
        %v1041 = vadd.f32 0.0, %v1040
        %v1042 = vpop.f32.mrb[0].mxu0
        %1043 = vmatprep.mubr.bf16.mxu0 %v834
        %1044 = vmatmul.mubr.bf16.gmra.mrb[0].mxu0 %v833
        %v1045 = vpop.f32.mrb[0].mxu0
        %v1046 = vadd.f32 0.0, %v1045
        %v1047 = vpop.f32.mrb[0].mxu0
        %v1048 = vpop.f32.mrb[0].mxu0
        %v1049 = vadd.f32 0.0, %v1048
        %v1050 = vpop.f32.mrb[0].mxu0
        %1051 = vmatprep.mubr.bf16.mxu0 %v836
        %1052 = vmatmul.mubr.bf16.gmra.mrb[0].mxu0 %v835
        %v1053 = vpop.f32.mrb[0].mxu0
        %v1054 = vadd.f32 0.0, %v1053
        %v1055 = vpop.f32.mrb[0].mxu0
        %v1056 = vpop.f32.mrb[0].mxu0
        %v1057 = vadd.f32 0.0, %v1056
        %v1058 = vpop.f32.mrb[0].mxu0
        %1059 = vmatprep.mubr.bf16.mxu0 %v838
        %1060 = vmatmul.mubr.bf16.gmra.mrb[0].mxu0 %v837
        %v1061 = vpop.f32.mrb[0].mxu0
        %v1062 = vadd.f32 0.0, %v1061
        %v1063 = vpop.f32.mrb[0].mxu0
        %v1064 = vpop.f32.mrb[0].mxu0
        %v1065 = vadd.f32 0.0, %v1064
        %v1066 = vpop.f32.mrb[0].mxu0
        %1067 = vmatprep.mubr.bf16.mxu0 %v840
        %1068 = vmatmul.mubr.bf16.gmra.mrb[0].mxu0 %v839
        %v1069 = vpop.f32.mrb[0].mxu0
        %v1070 = vadd.f32 0.0, %v1069
        %v1071 = vpop.f32.mrb[0].mxu0
        %v1072 = vpop.f32.mrb[0].mxu0
        %v1073 = vadd.f32 0.0, %v1072
        %v1074 = vpop.f32.mrb[0].mxu0
        %1075 = vmatprep.mubr.bf16.mxu0 %v842
        %1076 = vmatmul.mubr.bf16.gmra.mrb[0].mxu0 %v841
        %v1077 = vpop.f32.mrb[0].mxu0
        %v1078 = vadd.f32 0.0, %v1077
        %v1079 = vpop.f32.mrb[0].mxu0
        %v1080 = vpop.f32.mrb[0].mxu0
        %v1081 = vadd.f32 0.0, %v1080
        %v1082 = vpop.f32.mrb[0].mxu0
        %1083 = vmatprep.mubr.bf16.mxu0 %v844
        %1084 = vmatmul.mubr.bf16.gmra.mrb[0].mxu0 %v843
        %v1085 = vpop.f32.mrb[0].mxu0
        %v1086 = vadd.f32 0.0, %v1085
        %v1087 = vpop.f32.mrb[0].mxu0
        %v1088 = vpop.f32.mrb[0].mxu0
        %v1089 = vadd.f32 0.0, %v1088
        %v1090 = vpop.f32.mrb[0].mxu0
        %1091 = vmatprep.mubr.bf16.mxu0 %v846
        %1092 = vmatmul.mubr.bf16.gmra.mrb[0].mxu0 %v845
        %v1093 = vpop.f32.mrb[0].mxu0
        %v1094 = vadd.f32 0.0, %v1093
        %v1095 = vpop.f32.mrb[0].mxu0
        %v1096 = vpop.f32.mrb[0].mxu0
        %v1097 = vadd.f32 0.0, %v1096
        %v1098 = vpop.f32.mrb[0].mxu0
        %1099 = vmatprep.mubr.bf16.mxu0 %v848
        %1100 = vmatmul.mubr.bf16.gmra.mrb[0].mxu0 %v847
        %v1101 = vpop.f32.mrb[0].mxu0
        %v1102 = vadd.f32 0.0, %v1101
        %v1103 = vpop.f32.mrb[0].mxu0
        %v1104 = vpop.f32.mrb[0].mxu0
        %v1105 = vadd.f32 0.0, %v1104
        %v1106 = vpop.f32.mrb[0].mxu0
        %1107 = vmatprep.mubr.bf16.mxu0 %v850
        %1108 = vmatmul.mubr.bf16.gmra.mrb[0].mxu0 %v849
        %v1109 = vpop.f32.mrb[0].mxu0
        %v1110 = vadd.f32 0.0, %v1109
        %v1111 = vpop.f32.mrb[0].mxu0
        %v1112 = vpop.f32.mrb[0].mxu0
        %v1113 = vadd.f32 0.0, %v1112
        %v1114 = vpop.f32.mrb[0].mxu0
        %1115 = vmatprep.mubr.bf16.mxu0 %v852
        %1116 = vmatmul.mubr.bf16.gmra.mrb[0].mxu0 %v851
        %v1117 = vpop.f32.mrb[0].mxu0
        %v1118 = vadd.f32 0.0, %v1117
        %v1119 = vpop.f32.mrb[0].mxu0
        %v1120 = vpop.f32.mrb[0].mxu0
        %v1121 = vadd.f32 0.0, %v1120
        %v1122 = vpop.f32.mrb[0].mxu0
        %1123 = vmatprep.mubr.bf16.mxu0 %v854
        %1124 = vmatmul.mubr.bf16.gmra.mrb[0].mxu0 %v853
        %v1125 = vpop.f32.mrb[0].mxu0
        %v1126 = vadd.f32 0.0, %v1125
        %v1127 = vpop.f32.mrb[0].mxu0
        %v1128 = vpop.f32.mrb[0].mxu0
        %v1129 = vadd.f32 0.0, %v1128
        %v1130 = vpop.f32.mrb[0].mxu0
        %1131 = vmatprep.mubr.bf16.mxu0 %v856
        %1132 = vmatmul.mubr.bf16.gmra.mrb[0].mxu0 %v855
        %v1133 = vpop.f32.mrb[0].mxu0
        %v1134 = vadd.f32 0.0, %v1133
        %v1135 = vpop.f32.mrb[0].mxu0
        %v1136 = vpop.f32.mrb[0].mxu0
        %v1137 = vadd.f32 0.0, %v1136
        %v1138 = vpop.f32.mrb[0].mxu0
        %1139 = vmatprep.mubr.bf16.mxu0 %v858
        %1140 = vmatmul.mubr.bf16.gmra.mrb[0].mxu0 %v857
        %v1141 = vpop.f32.mrb[0].mxu0
        %v1142 = vadd.f32 0.0, %v1141
        %v1143 = vpop.f32.mrb[0].mxu0
        %v1144 = vpop.f32.mrb[0].mxu0
        %v1145 = vadd.f32 0.0, %v1144
        %v1146 = vpop.f32.mrb[0].mxu0
        %1147 = vdwg.mxu0
        %v1148 = vld [vmem:[#allocation6] sm:$0x1]
        %v1150 = vlaneseq
        %v1151 = vshrl.u32 %v1150, 7
        %v1152 = vsub.s32 0, %v1151
        %v1153 = vrot.slane %v1148, %v1152
        %v1155 = vmul.f32 %v1022, %v1153
        %v1156 = vmul.f32 %v1025, %v1153
        %v1157 = vmul.f32 %v1030, %v1153
        %v1158 = vmul.f32 %v1033, %v1153
        %v1159 = vmul.f32 %v1038, %v1153
        %v1160 = vmul.f32 %v1041, %v1153
        %v1161 = vmul.f32 %v1046, %v1153
        %v1162 = vmul.f32 %v1049, %v1153
        %v1163 = vmul.f32 %v1054, %v1153
        %v1164 = vmul.f32 %v1057, %v1153
        %v1165 = vmul.f32 %v1062, %v1153
        %v1166 = vmul.f32 %v1065, %v1153
        %v1167 = vmul.f32 %v1070, %v1153
        %v1168 = vmul.f32 %v1073, %v1153
        %v1169 = vmul.f32 %v1078, %v1153
        %v1170 = vmul.f32 %v1081, %v1153
        %v1171 = vmul.f32 %v1086, %v1153
        %v1172 = vmul.f32 %v1089, %v1153
        %v1173 = vmul.f32 %v1094, %v1153
        %v1174 = vmul.f32 %v1097, %v1153
        %v1175 = vmul.f32 %v1102, %v1153
        %v1176 = vmul.f32 %v1105, %v1153
        %v1177 = vmul.f32 %v1110, %v1153
        %v1178 = vmul.f32 %v1113, %v1153
        %v1179 = vmul.f32 %v1118, %v1153
        %v1180 = vmul.f32 %v1121, %v1153
        %v1181 = vmul.f32 %v1126, %v1153
        %v1182 = vmul.f32 %v1129, %v1153
        %v1183 = vmul.f32 %v1134, %v1153
        %v1184 = vmul.f32 %v1137, %v1153
        %v1185 = vmul.f32 %v1142, %v1153
        %v1186 = vmul.f32 %v1145, %v1153
        %v1187 = vld [vmem:[#allocation8] sm:$0x1]
        %v1189 = vlaneseq
        %v1190 = vshrl.u32 %v1189, 7
        %v1191 = vsub.s32 0, %v1190
        %v1192 = vrot.slane %v1187, %v1191
        %v1194 = vadd.f32 %v1155, %v1192
        %v1195 = vadd.f32 %v1156, %v1192
        %v1196 = vadd.f32 %v1157, %v1192
        %v1197 = vadd.f32 %v1158, %v1192
        %v1198 = vadd.f32 %v1159, %v1192
        %v1199 = vadd.f32 %v1160, %v1192
        %v1200 = vadd.f32 %v1161, %v1192
        %v1201 = vadd.f32 %v1162, %v1192
        %v1202 = vadd.f32 %v1163, %v1192
        %v1203 = vadd.f32 %v1164, %v1192
        %v1204 = vadd.f32 %v1165, %v1192
        %v1205 = vadd.f32 %v1166, %v1192
        %v1206 = vadd.f32 %v1167, %v1192
        %v1207 = vadd.f32 %v1168, %v1192
        %v1208 = vadd.f32 %v1169, %v1192
        %v1209 = vadd.f32 %v1170, %v1192
        %v1210 = vadd.f32 %v1171, %v1192
        %v1211 = vadd.f32 %v1172, %v1192
        %v1212 = vadd.f32 %v1173, %v1192
        %v1213 = vadd.f32 %v1174, %v1192
        %v1214 = vadd.f32 %v1175, %v1192
        %v1215 = vadd.f32 %v1176, %v1192
        %v1216 = vadd.f32 %v1177, %v1192
        %v1217 = vadd.f32 %v1178, %v1192
        %v1218 = vadd.f32 %v1179, %v1192
        %v1219 = vadd.f32 %v1180, %v1192
        %v1220 = vadd.f32 %v1181, %v1192
        %v1221 = vadd.f32 %v1182, %v1192
        %v1222 = vadd.f32 %v1183, %v1192
        %v1223 = vadd.f32 %v1184, %v1192
        %v1224 = vadd.f32 %v1185, %v1192
        %v1225 = vadd.f32 %v1186, %v1192
        %v1226 = vmax.f32 %v1194, 0.0
        %v1227 = vmax.f32 %v1195, 0.0
        %v1228 = vmax.f32 %v1196, 0.0
        %v1229 = vmax.f32 %v1197, 0.0
        %v1230 = vmax.f32 %v1198, 0.0
        %v1231 = vmax.f32 %v1199, 0.0
        %v1232 = vmax.f32 %v1200, 0.0
        %v1233 = vmax.f32 %v1201, 0.0
        %v1234 = vmax.f32 %v1202, 0.0
        %v1235 = vmax.f32 %v1203, 0.0
        %v1236 = vmax.f32 %v1204, 0.0
        %v1237 = vmax.f32 %v1205, 0.0
        %v1238 = vmax.f32 %v1206, 0.0
        %v1239 = vmax.f32 %v1207, 0.0
        %v1240 = vmax.f32 %v1208, 0.0
        %v1241 = vmax.f32 %v1209, 0.0
        %v1242 = vmax.f32 %v1210, 0.0
        %v1243 = vmax.f32 %v1211, 0.0
        %v1244 = vmax.f32 %v1212, 0.0
        %v1245 = vmax.f32 %v1213, 0.0
        %v1246 = vmax.f32 %v1214, 0.0
        %v1247 = vmax.f32 %v1215, 0.0
        %v1248 = vmax.f32 %v1216, 0.0
        %v1249 = vmax.f32 %v1217, 0.0
        %v1250 = vmax.f32 %v1218, 0.0
        %v1251 = vmax.f32 %v1219, 0.0
        %v1252 = vmax.f32 %v1220, 0.0
        %v1253 = vmax.f32 %v1221, 0.0
        %v1254 = vmax.f32 %v1222, 0.0
        %v1255 = vmax.f32 %v1223, 0.0
        %v1256 = vmax.f32 %v1224, 0.0
        %v1257 = vmax.f32 %v1225, 0.0
        %v1258 = vld [vmem:[#allocation9] sm:$0xff]
        %v1259 = vld [vmem:[#allocation9 + $0x8] sm:$0xff]
        %v1260 = vld [vmem:[#allocation9 + $0x10] sm:$0xff]
        %v1261 = vld [vmem:[#allocation9 + $0x18] sm:$0xff]
        %v1262 = vld [vmem:[#allocation9 + $0x20] sm:$0xff]
        %v1263 = vld [vmem:[#allocation9 + $0x28] sm:$0xff]
        %v1264 = vld [vmem:[#allocation9 + $0x30] sm:$0xff]
        %v1265 = vld [vmem:[#allocation9 + $0x38] sm:$0xff]
        %v1266 = vld [vmem:[#allocation9 + $0x40] sm:$0xff]
        %v1267 = vld [vmem:[#allocation9 + $0x48] sm:$0xff]
        %v1268 = vld [vmem:[#allocation9 + $0x50] sm:$0xff]
        %v1269 = vld [vmem:[#allocation9 + $0x58] sm:$0xff]
        %v1270 = vld [vmem:[#allocation9 + $0x60] sm:$0xff]
        %v1271 = vld [vmem:[#allocation9 + $0x68] sm:$0xff]
        %v1272 = vld [vmem:[#allocation9 + $0x70] sm:$0xff]
        %v1273 = vld [vmem:[#allocation9 + $0x78] sm:$0xff]
        %1274 = vmatprep.subr.mxu0 0.0
        %1275 = vmatpush1.msra.mxu0 %v1226
        %1276 = vmatprep.subr.mxu0 0.0
        %1277 = vmatpush1.msra.mxu0 %v1227
        %1278 = vmatprep.subr.mxu0 0.0
        %1279 = vmatpush1.msra.mxu0 %v1228
        %1280 = vmatprep.subr.mxu0 0.0
        %1281 = vmatpush1.msra.mxu0 %v1229
        %1282 = vmatprep.subr.mxu0 0.0
        %1283 = vmatpush1.msra.mxu0 %v1230
        %1284 = vmatprep.subr.mxu0 0.0
        %1285 = vmatpush1.msra.mxu0 %v1231
        %1286 = vmatprep.subr.mxu0 0.0
        %1287 = vmatpush1.msra.mxu0 %v1232
        %1288 = vmatprep.subr.mxu0 0.0
        %1289 = vmatpush1.msra.mxu0 %v1233
        %1290 = vmatprep.subr.mxu0 0.0
        %1291 = vmatpush1.msra.mxu0 %v1234
        %1292 = vmatprep.subr.mxu0 0.0
        %1293 = vmatpush1.msra.mxu0 %v1235
        %1294 = vmatprep.subr.mxu0 0.0
        %1295 = vmatpush1.msra.mxu0 %v1236
        %1296 = vmatprep.subr.mxu0 0.0
        %1297 = vmatpush1.msra.mxu0 %v1237
        %1298 = vmatprep.subr.mxu0 0.0
        %1299 = vmatpush1.msra.mxu0 %v1238
        %1300 = vmatprep.subr.mxu0 0.0
        %1301 = vmatpush1.msra.mxu0 %v1239
        %1302 = vmatprep.subr.mxu0 0.0
        %1303 = vmatpush1.msra.mxu0 %v1240
        %1304 = vmatprep.subr.mxu0 0.0
        %1305 = vmatpush1.msra.mxu0 %v1241
        %1306 = vmatprep.subr.mxu0 0.0
        %1307 = vmatpush1.msra.mxu0 %v1242
        %1308 = vmatprep.subr.mxu0 0.0
        %1309 = vmatpush1.msra.mxu0 %v1243
        %1310 = vmatprep.subr.mxu0 0.0
        %1311 = vmatpush1.msra.mxu0 %v1244
        %1312 = vmatprep.subr.mxu0 0.0
        %1313 = vmatpush1.msra.mxu0 %v1245
        %1314 = vmatprep.subr.mxu0 0.0
        %1315 = vmatpush1.msra.mxu0 %v1246
        %1316 = vmatprep.subr.mxu0 0.0
        %1317 = vmatpush1.msra.mxu0 %v1247
        %1318 = vmatprep.subr.mxu0 0.0
        %1319 = vmatpush1.msra.mxu0 %v1248
        %1320 = vmatprep.subr.mxu0 0.0
        %1321 = vmatpush1.msra.mxu0 %v1249
        %1322 = vmatprep.subr.mxu0 0.0
        %1323 = vmatpush1.msra.mxu0 %v1250
        %1324 = vmatprep.subr.mxu0 0.0
        %1325 = vmatpush1.msra.mxu0 %v1251
        %1326 = vmatprep.subr.mxu0 0.0
        %1327 = vmatpush1.msra.mxu0 %v1252
        %1328 = vmatprep.subr.mxu0 0.0
        %1329 = vmatpush1.msra.mxu0 %v1253
        %1330 = vmatprep.subr.mxu0 0.0
        %1331 = vmatpush1.msra.mxu0 %v1254
        %1332 = vmatprep.subr.mxu0 0.0
        %1333 = vmatpush1.msra.mxu0 %v1255
        %1334 = vmatprep.subr.mxu0 0.0
        %1335 = vmatpush1.msra.mxu0 %v1256
        %1336 = vmatprep.subr.mxu0 0.0
        %1337 = vmatpush1.msra.mxu0 %v1257
        %1338 = vmatprep.mubr.f32.mxu0 %v1259
        %1339 = vmatmul.mubr.f32.gmra.mrb[0].mxu0 %v1258
        %v1340 = vpop.f32.mrb[0].mxu0
        %v1341 = vadd.f32 0.0, %v1340
        %v1342 = vpop.f32.mrb[0].mxu0
        %1343 = vmatprep.mubr.f32.mxu0 %v1261
        %1344 = vmatmul.mubr.f32.gmra.mrb[0].mxu0 %v1260
        %v1345 = vpop.f32.mrb[0].mxu0
        %v1346 = vadd.f32 0.0, %v1345
        %v1347 = vpop.f32.mrb[0].mxu0
        %1348 = vmatprep.mubr.f32.mxu0 %v1263
        %1349 = vmatmul.mubr.f32.gmra.mrb[0].mxu0 %v1262
        %v1350 = vpop.f32.mrb[0].mxu0
        %v1351 = vadd.f32 0.0, %v1350
        %v1352 = vpop.f32.mrb[0].mxu0
        %1353 = vmatprep.mubr.f32.mxu0 %v1265
        %1354 = vmatmul.mubr.f32.gmra.mrb[0].mxu0 %v1264
        %v1355 = vpop.f32.mrb[0].mxu0
        %v1356 = vadd.f32 0.0, %v1355
        %v1357 = vpop.f32.mrb[0].mxu0
        %1358 = vmatprep.mubr.f32.mxu0 %v1267
        %1359 = vmatmul.mubr.f32.gmra.mrb[0].mxu0 %v1266
        %v1360 = vpop.f32.mrb[0].mxu0
        %v1361 = vadd.f32 0.0, %v1360
        %v1362 = vpop.f32.mrb[0].mxu0
        %1363 = vmatprep.mubr.f32.mxu0 %v1269
        %1364 = vmatmul.mubr.f32.gmra.mrb[0].mxu0 %v1268
        %v1365 = vpop.f32.mrb[0].mxu0
        %v1366 = vadd.f32 0.0, %v1365
        %v1367 = vpop.f32.mrb[0].mxu0
        %1368 = vmatprep.mubr.f32.mxu0 %v1271
        %1369 = vmatmul.mubr.f32.gmra.mrb[0].mxu0 %v1270
        %v1370 = vpop.f32.mrb[0].mxu0
        %v1371 = vadd.f32 0.0, %v1370
        %v1372 = vpop.f32.mrb[0].mxu0
        %1373 = vmatprep.mubr.f32.mxu0 %v1273
        %1374 = vmatmul.mubr.f32.gmra.mrb[0].mxu0 %v1272
        %v1375 = vpop.f32.mrb[0].mxu0
        %v1376 = vadd.f32 0.0, %v1375
        %v1377 = vpop.f32.mrb[0].mxu0
        %1378 = vdwg.mxu0
        %s1379 = scalar_lea.vmem [#allocation9], 128
        %v1380 = vld [vmem:[%s1379] sm:$0xff]
        %v1381 = vld [vmem:[%s1379 + $0x8] sm:$0xff]
        %v1382 = vld [vmem:[%s1379 + $0x10] sm:$0xff]
        %v1383 = vld [vmem:[%s1379 + $0x18] sm:$0xff]
        %v1384 = vld [vmem:[%s1379 + $0x20] sm:$0xff]
        %v1385 = vld [vmem:[%s1379 + $0x28] sm:$0xff]
        %v1386 = vld [vmem:[%s1379 + $0x30] sm:$0xff]
        %v1387 = vld [vmem:[%s1379 + $0x38] sm:$0xff]
        %v1388 = vld [vmem:[%s1379 + $0x40] sm:$0xff]
        %v1389 = vld [vmem:[%s1379 + $0x48] sm:$0xff]
        %v1390 = vld [vmem:[%s1379 + $0x50] sm:$0xff]
        %v1391 = vld [vmem:[%s1379 + $0x58] sm:$0xff]
        %v1392 = vld [vmem:[%s1379 + $0x60] sm:$0xff]
        %v1393 = vld [vmem:[%s1379 + $0x68] sm:$0xff]
        %v1394 = vld [vmem:[%s1379 + $0x70] sm:$0xff]
        %v1395 = vld [vmem:[%s1379 + $0x78] sm:$0xff]
        %1396 = vmatprep.subr.mxu0 0.0
        %1397 = vmatpush1.msra.mxu0 %v1226
        %1398 = vmatprep.subr.mxu0 0.0
        %1399 = vmatpush1.msra.mxu0 %v1227
        %1400 = vmatprep.subr.mxu0 0.0
        %1401 = vmatpush1.msra.mxu0 %v1228
        %1402 = vmatprep.subr.mxu0 0.0
        %1403 = vmatpush1.msra.mxu0 %v1229
        %1404 = vmatprep.subr.mxu0 0.0
        %1405 = vmatpush1.msra.mxu0 %v1230
        %1406 = vmatprep.subr.mxu0 0.0
        %1407 = vmatpush1.msra.mxu0 %v1231
        %1408 = vmatprep.subr.mxu0 0.0
        %1409 = vmatpush1.msra.mxu0 %v1232
        %1410 = vmatprep.subr.mxu0 0.0
        %1411 = vmatpush1.msra.mxu0 %v1233
        %1412 = vmatprep.subr.mxu0 0.0
        %1413 = vmatpush1.msra.mxu0 %v1234
        %1414 = vmatprep.subr.mxu0 0.0
        %1415 = vmatpush1.msra.mxu0 %v1235
        %1416 = vmatprep.subr.mxu0 0.0
        %1417 = vmatpush1.msra.mxu0 %v1236
        %1418 = vmatprep.subr.mxu0 0.0
        %1419 = vmatpush1.msra.mxu0 %v1237
        %1420 = vmatprep.subr.mxu0 0.0
        %1421 = vmatpush1.msra.mxu0 %v1238
        %1422 = vmatprep.subr.mxu0 0.0
        %1423 = vmatpush1.msra.mxu0 %v1239
        %1424 = vmatprep.subr.mxu0 0.0
        %1425 = vmatpush1.msra.mxu0 %v1240
        %1426 = vmatprep.subr.mxu0 0.0
        %1427 = vmatpush1.msra.mxu0 %v1241
        %1428 = vmatprep.subr.mxu0 0.0
        %1429 = vmatpush1.msra.mxu0 %v1242
        %1430 = vmatprep.subr.mxu0 0.0
        %1431 = vmatpush1.msra.mxu0 %v1243
        %1432 = vmatprep.subr.mxu0 0.0
        %1433 = vmatpush1.msra.mxu0 %v1244
        %1434 = vmatprep.subr.mxu0 0.0
        %1435 = vmatpush1.msra.mxu0 %v1245
        %1436 = vmatprep.subr.mxu0 0.0
        %1437 = vmatpush1.msra.mxu0 %v1246
        %1438 = vmatprep.subr.mxu0 0.0
        %1439 = vmatpush1.msra.mxu0 %v1247
        %1440 = vmatprep.subr.mxu0 0.0
        %1441 = vmatpush1.msra.mxu0 %v1248
        %1442 = vmatprep.subr.mxu0 0.0
        %1443 = vmatpush1.msra.mxu0 %v1249
        %1444 = vmatprep.subr.mxu0 0.0
        %1445 = vmatpush1.msra.mxu0 %v1250
        %1446 = vmatprep.subr.mxu0 0.0
        %1447 = vmatpush1.msra.mxu0 %v1251
        %1448 = vmatprep.subr.mxu0 0.0
        %1449 = vmatpush1.msra.mxu0 %v1252
        %1450 = vmatprep.subr.mxu0 0.0
        %1451 = vmatpush1.msra.mxu0 %v1253
        %1452 = vmatprep.subr.mxu0 0.0
        %1453 = vmatpush1.msra.mxu0 %v1254
        %1454 = vmatprep.subr.mxu0 0.0
        %1455 = vmatpush1.msra.mxu0 %v1255
        %1456 = vmatprep.subr.mxu0 0.0
        %1457 = vmatpush1.msra.mxu0 %v1256
        %1458 = vmatprep.subr.mxu0 0.0
        %1459 = vmatpush1.msra.mxu0 %v1257
        %1460 = vmatprep.mubr.f32.mxu0 %v1381
        %1461 = vmatmul.mubr.f32.gmra.mrb[0].mxu0 %v1380
        %v1462 = vpop.f32.mrb[0].mxu0
        %v1463 = vadd.f32 0.0, %v1462
        %v1464 = vpop.f32.mrb[0].mxu0
        %1465 = vmatprep.mubr.f32.mxu0 %v1383
        %1466 = vmatmul.mubr.f32.gmra.mrb[0].mxu0 %v1382
        %v1467 = vpop.f32.mrb[0].mxu0
        %v1468 = vadd.f32 0.0, %v1467
        %v1469 = vpop.f32.mrb[0].mxu0
        %1470 = vmatprep.mubr.f32.mxu0 %v1385
        %1471 = vmatmul.mubr.f32.gmra.mrb[0].mxu0 %v1384
        %v1472 = vpop.f32.mrb[0].mxu0
        %v1473 = vadd.f32 0.0, %v1472
        %v1474 = vpop.f32.mrb[0].mxu0
        %1475 = vmatprep.mubr.f32.mxu0 %v1387
        %1476 = vmatmul.mubr.f32.gmra.mrb[0].mxu0 %v1386
        %v1477 = vpop.f32.mrb[0].mxu0
        %v1478 = vadd.f32 0.0, %v1477
        %v1479 = vpop.f32.mrb[0].mxu0
        %1480 = vmatprep.mubr.f32.mxu0 %v1389
        %1481 = vmatmul.mubr.f32.gmra.mrb[0].mxu0 %v1388
        %v1482 = vpop.f32.mrb[0].mxu0
        %v1483 = vadd.f32 0.0, %v1482
        %v1484 = vpop.f32.mrb[0].mxu0
        %1485 = vmatprep.mubr.f32.mxu0 %v1391
        %1486 = vmatmul.mubr.f32.gmra.mrb[0].mxu0 %v1390
        %v1487 = vpop.f32.mrb[0].mxu0
        %v1488 = vadd.f32 0.0, %v1487
        %v1489 = vpop.f32.mrb[0].mxu0
        %1490 = vmatprep.mubr.f32.mxu0 %v1393
        %1491 = vmatmul.mubr.f32.gmra.mrb[0].mxu0 %v1392
        %v1492 = vpop.f32.mrb[0].mxu0
        %v1493 = vadd.f32 0.0, %v1492
        %v1494 = vpop.f32.mrb[0].mxu0
        %1495 = vmatprep.mubr.f32.mxu0 %v1395
        %1496 = vmatmul.mubr.f32.gmra.mrb[0].mxu0 %v1394
        %v1497 = vpop.f32.mrb[0].mxu0
        %v1498 = vadd.f32 0.0, %v1497
        %v1499 = vpop.f32.mrb[0].mxu0
        %1500 = vdwg.mxu0
        %v1501 = vmax.f32 %v1341, %v1463
        %v1502 = vmax.f32 %v1346, %v1468
        %v1503 = vmax.f32 %v1351, %v1473
        %v1504 = vmax.f32 %v1356, %v1478
        %v1505 = vmax.f32 %v1361, %v1483
        %v1506 = vmax.f32 %v1366, %v1488
        %v1507 = vmax.f32 %v1371, %v1493
        %v1508 = vmax.f32 %v1376, %v1498
        %s1509 = scalar_lea.vmem [#allocation9], 256
        %v1510 = vld [vmem:[%s1509] sm:$0xff]
        %v1511 = vld [vmem:[%s1509 + $0x8] sm:$0xff]
        %v1512 = vld [vmem:[%s1509 + $0x10] sm:$0xff]
        %v1513 = vld [vmem:[%s1509 + $0x18] sm:$0xff]
        %v1514 = vld [vmem:[%s1509 + $0x20] sm:$0xff]
        %v1515 = vld [vmem:[%s1509 + $0x28] sm:$0xff]
        %v1516 = vld [vmem:[%s1509 + $0x30] sm:$0xff]
        %v1517 = vld [vmem:[%s1509 + $0x38] sm:$0xff]
        %v1518 = vld [vmem:[%s1509 + $0x40] sm:$0xff]
        %v1519 = vld [vmem:[%s1509 + $0x48] sm:$0xff]
        %v1520 = vld [vmem:[%s1509 + $0x50] sm:$0xff]
        %v1521 = vld [vmem:[%s1509 + $0x58] sm:$0xff]
        %v1522 = vld [vmem:[%s1509 + $0x60] sm:$0xff]
        %v1523 = vld [vmem:[%s1509 + $0x68] sm:$0xff]
        %v1524 = vld [vmem:[%s1509 + $0x70] sm:$0xff]
        %v1525 = vld [vmem:[%s1509 + $0x78] sm:$0xff]
        %1526 = vmatprep.subr.mxu0 0.0
        %1527 = vmatpush1.msra.mxu0 %v1226
        %1528 = vmatprep.subr.mxu0 0.0
        %1529 = vmatpush1.msra.mxu0 %v1227
        %1530 = vmatprep.subr.mxu0 0.0
        %1531 = vmatpush1.msra.mxu0 %v1228
        %1532 = vmatprep.subr.mxu0 0.0
        %1533 = vmatpush1.msra.mxu0 %v1229
        %1534 = vmatprep.subr.mxu0 0.0
        %1535 = vmatpush1.msra.mxu0 %v1230
        %1536 = vmatprep.subr.mxu0 0.0
        %1537 = vmatpush1.msra.mxu0 %v1231
        %1538 = vmatprep.subr.mxu0 0.0
        %1539 = vmatpush1.msra.mxu0 %v1232
        %1540 = vmatprep.subr.mxu0 0.0
        %1541 = vmatpush1.msra.mxu0 %v1233
        %1542 = vmatprep.subr.mxu0 0.0
        %1543 = vmatpush1.msra.mxu0 %v1234
        %1544 = vmatprep.subr.mxu0 0.0
        %1545 = vmatpush1.msra.mxu0 %v1235
        %1546 = vmatprep.subr.mxu0 0.0
        %1547 = vmatpush1.msra.mxu0 %v1236
        %1548 = vmatprep.subr.mxu0 0.0
        %1549 = vmatpush1.msra.mxu0 %v1237
        %1550 = vmatprep.subr.mxu0 0.0
        %1551 = vmatpush1.msra.mxu0 %v1238
        %1552 = vmatprep.subr.mxu0 0.0
        %1553 = vmatpush1.msra.mxu0 %v1239
        %1554 = vmatprep.subr.mxu0 0.0
        %1555 = vmatpush1.msra.mxu0 %v1240
        %1556 = vmatprep.subr.mxu0 0.0
        %1557 = vmatpush1.msra.mxu0 %v1241
        %1558 = vmatprep.subr.mxu0 0.0
        %1559 = vmatpush1.msra.mxu0 %v1242
        %1560 = vmatprep.subr.mxu0 0.0
        %1561 = vmatpush1.msra.mxu0 %v1243
        %1562 = vmatprep.subr.mxu0 0.0
        %1563 = vmatpush1.msra.mxu0 %v1244
        %1564 = vmatprep.subr.mxu0 0.0
        %1565 = vmatpush1.msra.mxu0 %v1245
        %1566 = vmatprep.subr.mxu0 0.0
        %1567 = vmatpush1.msra.mxu0 %v1246
        %1568 = vmatprep.subr.mxu0 0.0
        %1569 = vmatpush1.msra.mxu0 %v1247
        %1570 = vmatprep.subr.mxu0 0.0
        %1571 = vmatpush1.msra.mxu0 %v1248
        %1572 = vmatprep.subr.mxu0 0.0
        %1573 = vmatpush1.msra.mxu0 %v1249
        %1574 = vmatprep.subr.mxu0 0.0
        %1575 = vmatpush1.msra.mxu0 %v1250
        %1576 = vmatprep.subr.mxu0 0.0
        %1577 = vmatpush1.msra.mxu0 %v1251
        %1578 = vmatprep.subr.mxu0 0.0
        %1579 = vmatpush1.msra.mxu0 %v1252
        %1580 = vmatprep.subr.mxu0 0.0
        %1581 = vmatpush1.msra.mxu0 %v1253
        %1582 = vmatprep.subr.mxu0 0.0
        %1583 = vmatpush1.msra.mxu0 %v1254
        %1584 = vmatprep.subr.mxu0 0.0
        %1585 = vmatpush1.msra.mxu0 %v1255
        %1586 = vmatprep.subr.mxu0 0.0
        %1587 = vmatpush1.msra.mxu0 %v1256
        %1588 = vmatprep.subr.mxu0 0.0
        %1589 = vmatpush1.msra.mxu0 %v1257
        %1590 = vmatprep.mubr.f32.mxu0 %v1511
        %1591 = vmatmul.mubr.f32.gmra.mrb[0].mxu0 %v1510
        %v1592 = vpop.f32.mrb[0].mxu0
        %v1593 = vadd.f32 0.0, %v1592
        %v1594 = vpop.f32.mrb[0].mxu0
        %1595 = vmatprep.mubr.f32.mxu0 %v1513
        %1596 = vmatmul.mubr.f32.gmra.mrb[0].mxu0 %v1512
        %v1597 = vpop.f32.mrb[0].mxu0
        %v1598 = vadd.f32 0.0, %v1597
        %v1599 = vpop.f32.mrb[0].mxu0
        %1600 = vmatprep.mubr.f32.mxu0 %v1515
        %1601 = vmatmul.mubr.f32.gmra.mrb[0].mxu0 %v1514
        %v1602 = vpop.f32.mrb[0].mxu0
        %v1603 = vadd.f32 0.0, %v1602
        %v1604 = vpop.f32.mrb[0].mxu0
        %1605 = vmatprep.mubr.f32.mxu0 %v1517
        %1606 = vmatmul.mubr.f32.gmra.mrb[0].mxu0 %v1516
        %v1607 = vpop.f32.mrb[0].mxu0
        %v1608 = vadd.f32 0.0, %v1607
        %v1609 = vpop.f32.mrb[0].mxu0
        %1610 = vmatprep.mubr.f32.mxu0 %v1519
        %1611 = vmatmul.mubr.f32.gmra.mrb[0].mxu0 %v1518
        %v1612 = vpop.f32.mrb[0].mxu0
        %v1613 = vadd.f32 0.0, %v1612
        %v1614 = vpop.f32.mrb[0].mxu0
        %1615 = vmatprep.mubr.f32.mxu0 %v1521
        %1616 = vmatmul.mubr.f32.gmra.mrb[0].mxu0 %v1520
        %v1617 = vpop.f32.mrb[0].mxu0
        %v1618 = vadd.f32 0.0, %v1617
        %v1619 = vpop.f32.mrb[0].mxu0
        %1620 = vmatprep.mubr.f32.mxu0 %v1523
        %1621 = vmatmul.mubr.f32.gmra.mrb[0].mxu0 %v1522
        %v1622 = vpop.f32.mrb[0].mxu0
        %v1623 = vadd.f32 0.0, %v1622
        %v1624 = vpop.f32.mrb[0].mxu0
        %1625 = vmatprep.mubr.f32.mxu0 %v1525
        %1626 = vmatmul.mubr.f32.gmra.mrb[0].mxu0 %v1524
        %v1627 = vpop.f32.mrb[0].mxu0
        %v1628 = vadd.f32 0.0, %v1627
        %v1629 = vpop.f32.mrb[0].mxu0
        %1630 = vdwg.mxu0
        %v1631 = vmax.f32 %v1501, %v1593
        %v1632 = vmax.f32 %v1502, %v1598
        %v1633 = vmax.f32 %v1503, %v1603
        %v1634 = vmax.f32 %v1504, %v1608
        %v1635 = vmax.f32 %v1505, %v1613
        %v1636 = vmax.f32 %v1506, %v1618
        %v1637 = vmax.f32 %v1507, %v1623
        %v1638 = vmax.f32 %v1508, %v1628
        %s1639 = scalar_lea.vmem [#allocation9], 384
        %v1640 = vld [vmem:[%s1639] sm:$0xff]
        %v1641 = vld [vmem:[%s1639 + $0x8] sm:$0xff]
        %v1642 = vld [vmem:[%s1639 + $0x10] sm:$0xff]
        %v1643 = vld [vmem:[%s1639 + $0x18] sm:$0xff]
        %v1644 = vld [vmem:[%s1639 + $0x20] sm:$0xff]
        %v1645 = vld [vmem:[%s1639 + $0x28] sm:$0xff]
        %v1646 = vld [vmem:[%s1639 + $0x30] sm:$0xff]
        %v1647 = vld [vmem:[%s1639 + $0x38] sm:$0xff]
        %v1648 = vld [vmem:[%s1639 + $0x40] sm:$0xff]
        %v1649 = vld [vmem:[%s1639 + $0x48] sm:$0xff]
        %v1650 = vld [vmem:[%s1639 + $0x50] sm:$0xff]
        %v1651 = vld [vmem:[%s1639 + $0x58] sm:$0xff]
        %v1652 = vld [vmem:[%s1639 + $0x60] sm:$0xff]
        %v1653 = vld [vmem:[%s1639 + $0x68] sm:$0xff]
        %v1654 = vld [vmem:[%s1639 + $0x70] sm:$0xff]
        %v1655 = vld [vmem:[%s1639 + $0x78] sm:$0xff]
        %1656 = vmatprep.subr.mxu0 0.0
        %1657 = vmatpush1.msra.mxu0 %v1226
        %1658 = vmatprep.subr.mxu0 0.0
        %1659 = vmatpush1.msra.mxu0 %v1227
        %1660 = vmatprep.subr.mxu0 0.0
        %1661 = vmatpush1.msra.mxu0 %v1228
        %1662 = vmatprep.subr.mxu0 0.0
        %1663 = vmatpush1.msra.mxu0 %v1229
        %1664 = vmatprep.subr.mxu0 0.0
        %1665 = vmatpush1.msra.mxu0 %v1230
        %1666 = vmatprep.subr.mxu0 0.0
        %1667 = vmatpush1.msra.mxu0 %v1231
        %1668 = vmatprep.subr.mxu0 0.0
        %1669 = vmatpush1.msra.mxu0 %v1232
        %1670 = vmatprep.subr.mxu0 0.0
        %1671 = vmatpush1.msra.mxu0 %v1233
        %1672 = vmatprep.subr.mxu0 0.0
        %1673 = vmatpush1.msra.mxu0 %v1234
        %1674 = vmatprep.subr.mxu0 0.0
        %1675 = vmatpush1.msra.mxu0 %v1235
        %1676 = vmatprep.subr.mxu0 0.0
        %1677 = vmatpush1.msra.mxu0 %v1236
        %1678 = vmatprep.subr.mxu0 0.0
        %1679 = vmatpush1.msra.mxu0 %v1237
        %1680 = vmatprep.subr.mxu0 0.0
        %1681 = vmatpush1.msra.mxu0 %v1238
        %1682 = vmatprep.subr.mxu0 0.0
        %1683 = vmatpush1.msra.mxu0 %v1239
        %1684 = vmatprep.subr.mxu0 0.0
        %1685 = vmatpush1.msra.mxu0 %v1240
        %1686 = vmatprep.subr.mxu0 0.0
        %1687 = vmatpush1.msra.mxu0 %v1241
        %1688 = vmatprep.subr.mxu0 0.0
        %1689 = vmatpush1.msra.mxu0 %v1242
        %1690 = vmatprep.subr.mxu0 0.0
        %1691 = vmatpush1.msra.mxu0 %v1243
        %1692 = vmatprep.subr.mxu0 0.0
        %1693 = vmatpush1.msra.mxu0 %v1244
        %1694 = vmatprep.subr.mxu0 0.0
        %1695 = vmatpush1.msra.mxu0 %v1245
        %1696 = vmatprep.subr.mxu0 0.0
        %1697 = vmatpush1.msra.mxu0 %v1246
        %1698 = vmatprep.subr.mxu0 0.0
        %1699 = vmatpush1.msra.mxu0 %v1247
        %1700 = vmatprep.subr.mxu0 0.0
        %1701 = vmatpush1.msra.mxu0 %v1248
        %1702 = vmatprep.subr.mxu0 0.0
        %1703 = vmatpush1.msra.mxu0 %v1249
        %1704 = vmatprep.subr.mxu0 0.0
        %1705 = vmatpush1.msra.mxu0 %v1250
        %1706 = vmatprep.subr.mxu0 0.0
        %1707 = vmatpush1.msra.mxu0 %v1251
        %1708 = vmatprep.subr.mxu0 0.0
        %1709 = vmatpush1.msra.mxu0 %v1252
        %1710 = vmatprep.subr.mxu0 0.0
        %1711 = vmatpush1.msra.mxu0 %v1253
        %1712 = vmatprep.subr.mxu0 0.0
        %1713 = vmatpush1.msra.mxu0 %v1254
        %1714 = vmatprep.subr.mxu0 0.0
        %1715 = vmatpush1.msra.mxu0 %v1255
        %1716 = vmatprep.subr.mxu0 0.0
        %1717 = vmatpush1.msra.mxu0 %v1256
        %1718 = vmatprep.subr.mxu0 0.0
        %1719 = vmatpush1.msra.mxu0 %v1257
        %1720 = vmatprep.mubr.f32.mxu0 %v1641
        %1721 = vmatmul.mubr.f32.gmra.mrb[0].mxu0 %v1640
        %v1722 = vpop.f32.mrb[0].mxu0
        %v1723 = vadd.f32 0.0, %v1722
        %v1724 = vpop.f32.mrb[0].mxu0
        %1725 = vmatprep.mubr.f32.mxu0 %v1643
        %1726 = vmatmul.mubr.f32.gmra.mrb[0].mxu0 %v1642
        %v1727 = vpop.f32.mrb[0].mxu0
        %v1728 = vadd.f32 0.0, %v1727
        %v1729 = vpop.f32.mrb[0].mxu0
        %1730 = vmatprep.mubr.f32.mxu0 %v1645
        %1731 = vmatmul.mubr.f32.gmra.mrb[0].mxu0 %v1644
        %v1732 = vpop.f32.mrb[0].mxu0
        %v1733 = vadd.f32 0.0, %v1732
        %v1734 = vpop.f32.mrb[0].mxu0
        %1735 = vmatprep.mubr.f32.mxu0 %v1647
        %1736 = vmatmul.mubr.f32.gmra.mrb[0].mxu0 %v1646
        %v1737 = vpop.f32.mrb[0].mxu0
        %v1738 = vadd.f32 0.0, %v1737
        %v1739 = vpop.f32.mrb[0].mxu0
        %1740 = vmatprep.mubr.f32.mxu0 %v1649
        %1741 = vmatmul.mubr.f32.gmra.mrb[0].mxu0 %v1648
        %v1742 = vpop.f32.mrb[0].mxu0
        %v1743 = vadd.f32 0.0, %v1742
        %v1744 = vpop.f32.mrb[0].mxu0
        %1745 = vmatprep.mubr.f32.mxu0 %v1651
        %1746 = vmatmul.mubr.f32.gmra.mrb[0].mxu0 %v1650
        %v1747 = vpop.f32.mrb[0].mxu0
        %v1748 = vadd.f32 0.0, %v1747
        %v1749 = vpop.f32.mrb[0].mxu0
        %1750 = vmatprep.mubr.f32.mxu0 %v1653
        %1751 = vmatmul.mubr.f32.gmra.mrb[0].mxu0 %v1652
        %v1752 = vpop.f32.mrb[0].mxu0
        %v1753 = vadd.f32 0.0, %v1752
        %v1754 = vpop.f32.mrb[0].mxu0
        %1755 = vmatprep.mubr.f32.mxu0 %v1655
        %1756 = vmatmul.mubr.f32.gmra.mrb[0].mxu0 %v1654
        %v1757 = vpop.f32.mrb[0].mxu0
        %v1758 = vadd.f32 0.0, %v1757
        %v1759 = vpop.f32.mrb[0].mxu0
        %1760 = vdwg.mxu0
        %v1761 = vmax.f32 %v1631, %v1723
        %v1762 = vmax.f32 %v1632, %v1728
        %v1763 = vmax.f32 %v1633, %v1733
        %v1764 = vmax.f32 %v1634, %v1738
        %v1765 = vmax.f32 %v1635, %v1743
        %v1766 = vmax.f32 %v1636, %v1748
        %v1767 = vmax.f32 %v1637, %v1753
        %v1768 = vmax.f32 %v1638, %v1758
        %s1769 = scalar_lea.vmem [#allocation9], 512
        %v1770 = vld [vmem:[%s1769] sm:$0xff]
        %v1771 = vld [vmem:[%s1769 + $0x8] sm:$0xff]
        %v1772 = vld [vmem:[%s1769 + $0x10] sm:$0xff]
        %v1773 = vld [vmem:[%s1769 + $0x18] sm:$0xff]
        %v1774 = vld [vmem:[%s1769 + $0x20] sm:$0xff]
        %v1775 = vld [vmem:[%s1769 + $0x28] sm:$0xff]
        %v1776 = vld [vmem:[%s1769 + $0x30] sm:$0xff]
        %v1777 = vld [vmem:[%s1769 + $0x38] sm:$0xff]
        %v1778 = vld [vmem:[%s1769 + $0x40] sm:$0xff]
        %v1779 = vld [vmem:[%s1769 + $0x48] sm:$0xff]
        %v1780 = vld [vmem:[%s1769 + $0x50] sm:$0xff]
        %v1781 = vld [vmem:[%s1769 + $0x58] sm:$0xff]
        %v1782 = vld [vmem:[%s1769 + $0x60] sm:$0xff]
        %v1783 = vld [vmem:[%s1769 + $0x68] sm:$0xff]
        %v1784 = vld [vmem:[%s1769 + $0x70] sm:$0xff]
        %v1785 = vld [vmem:[%s1769 + $0x78] sm:$0xff]
        %1786 = vmatprep.subr.mxu0 0.0
        %1787 = vmatpush1.msra.mxu0 %v1226
        %1788 = vmatprep.subr.mxu0 0.0
        %1789 = vmatpush1.msra.mxu0 %v1227
        %1790 = vmatprep.subr.mxu0 0.0
        %1791 = vmatpush1.msra.mxu0 %v1228
        %1792 = vmatprep.subr.mxu0 0.0
        %1793 = vmatpush1.msra.mxu0 %v1229
        %1794 = vmatprep.subr.mxu0 0.0
        %1795 = vmatpush1.msra.mxu0 %v1230
        %1796 = vmatprep.subr.mxu0 0.0
        %1797 = vmatpush1.msra.mxu0 %v1231
        %1798 = vmatprep.subr.mxu0 0.0
        %1799 = vmatpush1.msra.mxu0 %v1232
        %1800 = vmatprep.subr.mxu0 0.0
        %1801 = vmatpush1.msra.mxu0 %v1233
        %1802 = vmatprep.subr.mxu0 0.0
        %1803 = vmatpush1.msra.mxu0 %v1234
        %1804 = vmatprep.subr.mxu0 0.0
        %1805 = vmatpush1.msra.mxu0 %v1235
        %1806 = vmatprep.subr.mxu0 0.0
        %1807 = vmatpush1.msra.mxu0 %v1236
        %1808 = vmatprep.subr.mxu0 0.0
        %1809 = vmatpush1.msra.mxu0 %v1237
        %1810 = vmatprep.subr.mxu0 0.0
        %1811 = vmatpush1.msra.mxu0 %v1238
        %1812 = vmatprep.subr.mxu0 0.0
        %1813 = vmatpush1.msra.mxu0 %v1239
        %1814 = vmatprep.subr.mxu0 0.0
        %1815 = vmatpush1.msra.mxu0 %v1240
        %1816 = vmatprep.subr.mxu0 0.0
        %1817 = vmatpush1.msra.mxu0 %v1241
        %1818 = vmatprep.subr.mxu0 0.0
        %1819 = vmatpush1.msra.mxu0 %v1242
        %1820 = vmatprep.subr.mxu0 0.0
        %1821 = vmatpush1.msra.mxu0 %v1243
        %1822 = vmatprep.subr.mxu0 0.0
        %1823 = vmatpush1.msra.mxu0 %v1244
        %1824 = vmatprep.subr.mxu0 0.0
        %1825 = vmatpush1.msra.mxu0 %v1245
        %1826 = vmatprep.subr.mxu0 0.0
        %1827 = vmatpush1.msra.mxu0 %v1246
        %1828 = vmatprep.subr.mxu0 0.0
        %1829 = vmatpush1.msra.mxu0 %v1247
        %1830 = vmatprep.subr.mxu0 0.0
        %1831 = vmatpush1.msra.mxu0 %v1248
        %1832 = vmatprep.subr.mxu0 0.0
        %1833 = vmatpush1.msra.mxu0 %v1249
        %1834 = vmatprep.subr.mxu0 0.0
        %1835 = vmatpush1.msra.mxu0 %v1250
        %1836 = vmatprep.subr.mxu0 0.0
        %1837 = vmatpush1.msra.mxu0 %v1251
        %1838 = vmatprep.subr.mxu0 0.0
        %1839 = vmatpush1.msra.mxu0 %v1252
        %1840 = vmatprep.subr.mxu0 0.0
        %1841 = vmatpush1.msra.mxu0 %v1253
        %1842 = vmatprep.subr.mxu0 0.0
        %1843 = vmatpush1.msra.mxu0 %v1254
        %1844 = vmatprep.subr.mxu0 0.0
        %1845 = vmatpush1.msra.mxu0 %v1255
        %1846 = vmatprep.subr.mxu0 0.0
        %1847 = vmatpush1.msra.mxu0 %v1256
        %1848 = vmatprep.subr.mxu0 0.0
        %1849 = vmatpush1.msra.mxu0 %v1257
        %1850 = vmatprep.mubr.f32.mxu0 %v1771
        %1851 = vmatmul.mubr.f32.gmra.mrb[0].mxu0 %v1770
        %v1852 = vpop.f32.mrb[0].mxu0
        %v1853 = vadd.f32 0.0, %v1852
        %v1854 = vpop.f32.mrb[0].mxu0
        %1855 = vmatprep.mubr.f32.mxu0 %v1773
        %1856 = vmatmul.mubr.f32.gmra.mrb[0].mxu0 %v1772
        %v1857 = vpop.f32.mrb[0].mxu0
        %v1858 = vadd.f32 0.0, %v1857
        %v1859 = vpop.f32.mrb[0].mxu0
        %1860 = vmatprep.mubr.f32.mxu0 %v1775
        %1861 = vmatmul.mubr.f32.gmra.mrb[0].mxu0 %v1774
        %v1862 = vpop.f32.mrb[0].mxu0
        %v1863 = vadd.f32 0.0, %v1862
        %v1864 = vpop.f32.mrb[0].mxu0
        %1865 = vmatprep.mubr.f32.mxu0 %v1777
        %1866 = vmatmul.mubr.f32.gmra.mrb[0].mxu0 %v1776
        %v1867 = vpop.f32.mrb[0].mxu0
        %v1868 = vadd.f32 0.0, %v1867
        %v1869 = vpop.f32.mrb[0].mxu0
        %1870 = vmatprep.mubr.f32.mxu0 %v1779
        %1871 = vmatmul.mubr.f32.gmra.mrb[0].mxu0 %v1778
        %v1872 = vpop.f32.mrb[0].mxu0
        %v1873 = vadd.f32 0.0, %v1872
        %v1874 = vpop.f32.mrb[0].mxu0
        %1875 = vmatprep.mubr.f32.mxu0 %v1781
        %1876 = vmatmul.mubr.f32.gmra.mrb[0].mxu0 %v1780
        %v1877 = vpop.f32.mrb[0].mxu0
        %v1878 = vadd.f32 0.0, %v1877
        %v1879 = vpop.f32.mrb[0].mxu0
        %1880 = vmatprep.mubr.f32.mxu0 %v1783
        %1881 = vmatmul.mubr.f32.gmra.mrb[0].mxu0 %v1782
        %v1882 = vpop.f32.mrb[0].mxu0
        %v1883 = vadd.f32 0.0, %v1882
        %v1884 = vpop.f32.mrb[0].mxu0
        %1885 = vmatprep.mubr.f32.mxu0 %v1785
        %1886 = vmatmul.mubr.f32.gmra.mrb[0].mxu0 %v1784
        %v1887 = vpop.f32.mrb[0].mxu0
        %v1888 = vadd.f32 0.0, %v1887
        %v1889 = vpop.f32.mrb[0].mxu0
        %1890 = vdwg.mxu0
        %v1891 = vmax.f32 %v1761, %v1853
        %v1892 = vmax.f32 %v1762, %v1858
        %v1893 = vmax.f32 %v1763, %v1863
        %v1894 = vmax.f32 %v1764, %v1868
        %v1895 = vmax.f32 %v1765, %v1873
        %v1896 = vmax.f32 %v1766, %v1878
        %v1897 = vmax.f32 %v1767, %v1883
        %v1898 = vmax.f32 %v1768, %v1888
        %s1899 = scalar_lea.vmem [#allocation9], 640
        %v1900 = vld [vmem:[%s1899] sm:$0xff]
        %v1901 = vld [vmem:[%s1899 + $0x8] sm:$0xff]
        %v1902 = vld [vmem:[%s1899 + $0x10] sm:$0xff]
        %v1903 = vld [vmem:[%s1899 + $0x18] sm:$0xff]
        %v1904 = vld [vmem:[%s1899 + $0x20] sm:$0xff]
        %v1905 = vld [vmem:[%s1899 + $0x28] sm:$0xff]
        %v1906 = vld [vmem:[%s1899 + $0x30] sm:$0xff]
        %v1907 = vld [vmem:[%s1899 + $0x38] sm:$0xff]
        %v1908 = vld [vmem:[%s1899 + $0x40] sm:$0xff]
        %v1909 = vld [vmem:[%s1899 + $0x48] sm:$0xff]
        %v1910 = vld [vmem:[%s1899 + $0x50] sm:$0xff]
        %v1911 = vld [vmem:[%s1899 + $0x58] sm:$0xff]
        %v1912 = vld [vmem:[%s1899 + $0x60] sm:$0xff]
        %v1913 = vld [vmem:[%s1899 + $0x68] sm:$0xff]
        %v1914 = vld [vmem:[%s1899 + $0x70] sm:$0xff]
        %v1915 = vld [vmem:[%s1899 + $0x78] sm:$0xff]
        %1916 = vmatprep.subr.mxu0 0.0
        %1917 = vmatpush1.msra.mxu0 %v1226
        %1918 = vmatprep.subr.mxu0 0.0
        %1919 = vmatpush1.msra.mxu0 %v1227
        %1920 = vmatprep.subr.mxu0 0.0
        %1921 = vmatpush1.msra.mxu0 %v1228
        %1922 = vmatprep.subr.mxu0 0.0
        %1923 = vmatpush1.msra.mxu0 %v1229
        %1924 = vmatprep.subr.mxu0 0.0
        %1925 = vmatpush1.msra.mxu0 %v1230
        %1926 = vmatprep.subr.mxu0 0.0
        %1927 = vmatpush1.msra.mxu0 %v1231
        %1928 = vmatprep.subr.mxu0 0.0
        %1929 = vmatpush1.msra.mxu0 %v1232
        %1930 = vmatprep.subr.mxu0 0.0
        %1931 = vmatpush1.msra.mxu0 %v1233
        %1932 = vmatprep.subr.mxu0 0.0
        %1933 = vmatpush1.msra.mxu0 %v1234
        %1934 = vmatprep.subr.mxu0 0.0
        %1935 = vmatpush1.msra.mxu0 %v1235
        %1936 = vmatprep.subr.mxu0 0.0
        %1937 = vmatpush1.msra.mxu0 %v1236
        %1938 = vmatprep.subr.mxu0 0.0
        %1939 = vmatpush1.msra.mxu0 %v1237
        %1940 = vmatprep.subr.mxu0 0.0
        %1941 = vmatpush1.msra.mxu0 %v1238
        %1942 = vmatprep.subr.mxu0 0.0
        %1943 = vmatpush1.msra.mxu0 %v1239
        %1944 = vmatprep.subr.mxu0 0.0
        %1945 = vmatpush1.msra.mxu0 %v1240
        %1946 = vmatprep.subr.mxu0 0.0
        %1947 = vmatpush1.msra.mxu0 %v1241
        %1948 = vmatprep.subr.mxu0 0.0
        %1949 = vmatpush1.msra.mxu0 %v1242
        %1950 = vmatprep.subr.mxu0 0.0
        %1951 = vmatpush1.msra.mxu0 %v1243
        %1952 = vmatprep.subr.mxu0 0.0
        %1953 = vmatpush1.msra.mxu0 %v1244
        %1954 = vmatprep.subr.mxu0 0.0
        %1955 = vmatpush1.msra.mxu0 %v1245
        %1956 = vmatprep.subr.mxu0 0.0
        %1957 = vmatpush1.msra.mxu0 %v1246
        %1958 = vmatprep.subr.mxu0 0.0
        %1959 = vmatpush1.msra.mxu0 %v1247
        %1960 = vmatprep.subr.mxu0 0.0
        %1961 = vmatpush1.msra.mxu0 %v1248
        %1962 = vmatprep.subr.mxu0 0.0
        %1963 = vmatpush1.msra.mxu0 %v1249
        %1964 = vmatprep.subr.mxu0 0.0
        %1965 = vmatpush1.msra.mxu0 %v1250
        %1966 = vmatprep.subr.mxu0 0.0
        %1967 = vmatpush1.msra.mxu0 %v1251
        %1968 = vmatprep.subr.mxu0 0.0
        %1969 = vmatpush1.msra.mxu0 %v1252
        %1970 = vmatprep.subr.mxu0 0.0
        %1971 = vmatpush1.msra.mxu0 %v1253
        %1972 = vmatprep.subr.mxu0 0.0
        %1973 = vmatpush1.msra.mxu0 %v1254
        %1974 = vmatprep.subr.mxu0 0.0
        %1975 = vmatpush1.msra.mxu0 %v1255
        %1976 = vmatprep.subr.mxu0 0.0
        %1977 = vmatpush1.msra.mxu0 %v1256
        %1978 = vmatprep.subr.mxu0 0.0
        %1979 = vmatpush1.msra.mxu0 %v1257
        %1980 = vmatprep.mubr.f32.mxu0 %v1901
        %1981 = vmatmul.mubr.f32.gmra.mrb[0].mxu0 %v1900
        %v1982 = vpop.f32.mrb[0].mxu0
        %v1983 = vadd.f32 0.0, %v1982
        %v1984 = vpop.f32.mrb[0].mxu0
        %1985 = vmatprep.mubr.f32.mxu0 %v1903
        %1986 = vmatmul.mubr.f32.gmra.mrb[0].mxu0 %v1902
        %v1987 = vpop.f32.mrb[0].mxu0
        %v1988 = vadd.f32 0.0, %v1987
        %v1989 = vpop.f32.mrb[0].mxu0
        %1990 = vmatprep.mubr.f32.mxu0 %v1905
        %1991 = vmatmul.mubr.f32.gmra.mrb[0].mxu0 %v1904
        %v1992 = vpop.f32.mrb[0].mxu0
        %v1993 = vadd.f32 0.0, %v1992
        %v1994 = vpop.f32.mrb[0].mxu0
        %1995 = vmatprep.mubr.f32.mxu0 %v1907
        %1996 = vmatmul.mubr.f32.gmra.mrb[0].mxu0 %v1906
        %v1997 = vpop.f32.mrb[0].mxu0
        %v1998 = vadd.f32 0.0, %v1997
        %v1999 = vpop.f32.mrb[0].mxu0
        %2000 = vmatprep.mubr.f32.mxu0 %v1909
        %2001 = vmatmul.mubr.f32.gmra.mrb[0].mxu0 %v1908
        %v2002 = vpop.f32.mrb[0].mxu0
        %v2003 = vadd.f32 0.0, %v2002
        %v2004 = vpop.f32.mrb[0].mxu0
        %2005 = vmatprep.mubr.f32.mxu0 %v1911
        %2006 = vmatmul.mubr.f32.gmra.mrb[0].mxu0 %v1910
        %v2007 = vpop.f32.mrb[0].mxu0
        %v2008 = vadd.f32 0.0, %v2007
        %v2009 = vpop.f32.mrb[0].mxu0
        %2010 = vmatprep.mubr.f32.mxu0 %v1913
        %2011 = vmatmul.mubr.f32.gmra.mrb[0].mxu0 %v1912
        %v2012 = vpop.f32.mrb[0].mxu0
        %v2013 = vadd.f32 0.0, %v2012
        %v2014 = vpop.f32.mrb[0].mxu0
        %2015 = vmatprep.mubr.f32.mxu0 %v1915
        %2016 = vmatmul.mubr.f32.gmra.mrb[0].mxu0 %v1914
        %v2017 = vpop.f32.mrb[0].mxu0
        %v2018 = vadd.f32 0.0, %v2017
        %v2019 = vpop.f32.mrb[0].mxu0
        %2020 = vdwg.mxu0
        %v2021 = vmax.f32 %v1891, %v1983
        %v2022 = vmax.f32 %v1892, %v1988
        %v2023 = vmax.f32 %v1893, %v1993
        %v2024 = vmax.f32 %v1894, %v1998
        %v2025 = vmax.f32 %v1895, %v2003
        %v2026 = vmax.f32 %v1896, %v2008
        %v2027 = vmax.f32 %v1897, %v2013
        %v2028 = vmax.f32 %v1898, %v2018
        %s2029 = scalar_lea.vmem [#allocation9], 768
        %v2030 = vld [vmem:[%s2029] sm:$0xff]
        %v2031 = vld [vmem:[%s2029 + $0x8] sm:$0xff]
        %v2032 = vld [vmem:[%s2029 + $0x10] sm:$0xff]
        %v2033 = vld [vmem:[%s2029 + $0x18] sm:$0xff]
        %v2034 = vld [vmem:[%s2029 + $0x20] sm:$0xff]
        %v2035 = vld [vmem:[%s2029 + $0x28] sm:$0xff]
        %v2036 = vld [vmem:[%s2029 + $0x30] sm:$0xff]
        %v2037 = vld [vmem:[%s2029 + $0x38] sm:$0xff]
        %v2038 = vld [vmem:[%s2029 + $0x40] sm:$0xff]
        %v2039 = vld [vmem:[%s2029 + $0x48] sm:$0xff]
        %v2040 = vld [vmem:[%s2029 + $0x50] sm:$0xff]
        %v2041 = vld [vmem:[%s2029 + $0x58] sm:$0xff]
        %v2042 = vld [vmem:[%s2029 + $0x60] sm:$0xff]
        %v2043 = vld [vmem:[%s2029 + $0x68] sm:$0xff]
        %v2044 = vld [vmem:[%s2029 + $0x70] sm:$0xff]
        %v2045 = vld [vmem:[%s2029 + $0x78] sm:$0xff]
        %2046 = vmatprep.subr.mxu0 0.0
        %2047 = vmatpush1.msra.mxu0 %v1226
        %2048 = vmatprep.subr.mxu0 0.0
        %2049 = vmatpush1.msra.mxu0 %v1227
        %2050 = vmatprep.subr.mxu0 0.0
        %2051 = vmatpush1.msra.mxu0 %v1228
        %2052 = vmatprep.subr.mxu0 0.0
        %2053 = vmatpush1.msra.mxu0 %v1229
        %2054 = vmatprep.subr.mxu0 0.0
        %2055 = vmatpush1.msra.mxu0 %v1230
        %2056 = vmatprep.subr.mxu0 0.0
        %2057 = vmatpush1.msra.mxu0 %v1231
        %2058 = vmatprep.subr.mxu0 0.0
        %2059 = vmatpush1.msra.mxu0 %v1232
        %2060 = vmatprep.subr.mxu0 0.0
        %2061 = vmatpush1.msra.mxu0 %v1233
        %2062 = vmatprep.subr.mxu0 0.0
        %2063 = vmatpush1.msra.mxu0 %v1234
        %2064 = vmatprep.subr.mxu0 0.0
        %2065 = vmatpush1.msra.mxu0 %v1235
        %2066 = vmatprep.subr.mxu0 0.0
        %2067 = vmatpush1.msra.mxu0 %v1236
        %2068 = vmatprep.subr.mxu0 0.0
        %2069 = vmatpush1.msra.mxu0 %v1237
        %2070 = vmatprep.subr.mxu0 0.0
        %2071 = vmatpush1.msra.mxu0 %v1238
        %2072 = vmatprep.subr.mxu0 0.0
        %2073 = vmatpush1.msra.mxu0 %v1239
        %2074 = vmatprep.subr.mxu0 0.0
        %2075 = vmatpush1.msra.mxu0 %v1240
        %2076 = vmatprep.subr.mxu0 0.0
        %2077 = vmatpush1.msra.mxu0 %v1241
        %2078 = vmatprep.subr.mxu0 0.0
        %2079 = vmatpush1.msra.mxu0 %v1242
        %2080 = vmatprep.subr.mxu0 0.0
        %2081 = vmatpush1.msra.mxu0 %v1243
        %2082 = vmatprep.subr.mxu0 0.0
        %2083 = vmatpush1.msra.mxu0 %v1244
        %2084 = vmatprep.subr.mxu0 0.0
        %2085 = vmatpush1.msra.mxu0 %v1245
        %2086 = vmatprep.subr.mxu0 0.0
        %2087 = vmatpush1.msra.mxu0 %v1246
        %2088 = vmatprep.subr.mxu0 0.0
        %2089 = vmatpush1.msra.mxu0 %v1247
        %2090 = vmatprep.subr.mxu0 0.0
        %2091 = vmatpush1.msra.mxu0 %v1248
        %2092 = vmatprep.subr.mxu0 0.0
        %2093 = vmatpush1.msra.mxu0 %v1249
        %2094 = vmatprep.subr.mxu0 0.0
        %2095 = vmatpush1.msra.mxu0 %v1250
        %2096 = vmatprep.subr.mxu0 0.0
        %2097 = vmatpush1.msra.mxu0 %v1251
        %2098 = vmatprep.subr.mxu0 0.0
        %2099 = vmatpush1.msra.mxu0 %v1252
        %2100 = vmatprep.subr.mxu0 0.0
        %2101 = vmatpush1.msra.mxu0 %v1253
        %2102 = vmatprep.subr.mxu0 0.0
        %2103 = vmatpush1.msra.mxu0 %v1254
        %2104 = vmatprep.subr.mxu0 0.0
        %2105 = vmatpush1.msra.mxu0 %v1255
        %2106 = vmatprep.subr.mxu0 0.0
        %2107 = vmatpush1.msra.mxu0 %v1256
        %2108 = vmatprep.subr.mxu0 0.0
        %2109 = vmatpush1.msra.mxu0 %v1257
        %2110 = vmatprep.mubr.f32.mxu0 %v2031
        %2111 = vmatmul.mubr.f32.gmra.mrb[0].mxu0 %v2030
        %v2112 = vpop.f32.mrb[0].mxu0
        %v2113 = vadd.f32 0.0, %v2112
        %v2114 = vpop.f32.mrb[0].mxu0
        %2115 = vmatprep.mubr.f32.mxu0 %v2033
        %2116 = vmatmul.mubr.f32.gmra.mrb[0].mxu0 %v2032
        %v2117 = vpop.f32.mrb[0].mxu0
        %v2118 = vadd.f32 0.0, %v2117
        %v2119 = vpop.f32.mrb[0].mxu0
        %2120 = vmatprep.mubr.f32.mxu0 %v2035
        %2121 = vmatmul.mubr.f32.gmra.mrb[0].mxu0 %v2034
        %v2122 = vpop.f32.mrb[0].mxu0
        %v2123 = vadd.f32 0.0, %v2122
        %v2124 = vpop.f32.mrb[0].mxu0
        %2125 = vmatprep.mubr.f32.mxu0 %v2037
        %2126 = vmatmul.mubr.f32.gmra.mrb[0].mxu0 %v2036
        %v2127 = vpop.f32.mrb[0].mxu0
        %v2128 = vadd.f32 0.0, %v2127
        %v2129 = vpop.f32.mrb[0].mxu0
        %2130 = vmatprep.mubr.f32.mxu0 %v2039
        %2131 = vmatmul.mubr.f32.gmra.mrb[0].mxu0 %v2038
        %v2132 = vpop.f32.mrb[0].mxu0
        %v2133 = vadd.f32 0.0, %v2132
        %v2134 = vpop.f32.mrb[0].mxu0
        %2135 = vmatprep.mubr.f32.mxu0 %v2041
        %2136 = vmatmul.mubr.f32.gmra.mrb[0].mxu0 %v2040
        %v2137 = vpop.f32.mrb[0].mxu0
        %v2138 = vadd.f32 0.0, %v2137
        %v2139 = vpop.f32.mrb[0].mxu0
        %2140 = vmatprep.mubr.f32.mxu0 %v2043
        %2141 = vmatmul.mubr.f32.gmra.mrb[0].mxu0 %v2042
        %v2142 = vpop.f32.mrb[0].mxu0
        %v2143 = vadd.f32 0.0, %v2142
        %v2144 = vpop.f32.mrb[0].mxu0
        %2145 = vmatprep.mubr.f32.mxu0 %v2045
        %2146 = vmatmul.mubr.f32.gmra.mrb[0].mxu0 %v2044
        %v2147 = vpop.f32.mrb[0].mxu0
        %v2148 = vadd.f32 0.0, %v2147
        %v2149 = vpop.f32.mrb[0].mxu0
        %2150 = vdwg.mxu0
        %v2151 = vmax.f32 %v2021, %v2113
        %v2152 = vmax.f32 %v2022, %v2118
        %v2153 = vmax.f32 %v2023, %v2123
        %v2154 = vmax.f32 %v2024, %v2128
        %v2155 = vmax.f32 %v2025, %v2133
        %v2156 = vmax.f32 %v2026, %v2138
        %v2157 = vmax.f32 %v2027, %v2143
        %v2158 = vmax.f32 %v2028, %v2148
        %s2159 = scalar_lea.vmem [#allocation9], 896
        %v2160 = vld [vmem:[%s2159] sm:$0xff]
        %v2161 = vld [vmem:[%s2159 + $0x8] sm:$0xff]
        %v2162 = vld [vmem:[%s2159 + $0x10] sm:$0xff]
        %v2163 = vld [vmem:[%s2159 + $0x18] sm:$0xff]
        %v2164 = vld [vmem:[%s2159 + $0x20] sm:$0xff]
        %v2165 = vld [vmem:[%s2159 + $0x28] sm:$0xff]
        %v2166 = vld [vmem:[%s2159 + $0x30] sm:$0xff]
        %v2167 = vld [vmem:[%s2159 + $0x38] sm:$0xff]
        %v2168 = vld [vmem:[%s2159 + $0x40] sm:$0xff]
        %v2169 = vld [vmem:[%s2159 + $0x48] sm:$0xff]
        %v2170 = vld [vmem:[%s2159 + $0x50] sm:$0xff]
        %v2171 = vld [vmem:[%s2159 + $0x58] sm:$0xff]
        %v2172 = vld [vmem:[%s2159 + $0x60] sm:$0xff]
        %v2173 = vld [vmem:[%s2159 + $0x68] sm:$0xff]
        %v2174 = vld [vmem:[%s2159 + $0x70] sm:$0xff]
        %v2175 = vld [vmem:[%s2159 + $0x78] sm:$0xff]
        %2176 = vmatprep.subr.mxu0 0.0
        %2177 = vmatpush1.msra.mxu0 %v1226
        %2178 = vmatprep.subr.mxu0 0.0
        %2179 = vmatpush1.msra.mxu0 %v1227
        %2180 = vmatprep.subr.mxu0 0.0
        %2181 = vmatpush1.msra.mxu0 %v1228
        %2182 = vmatprep.subr.mxu0 0.0
        %2183 = vmatpush1.msra.mxu0 %v1229
        %2184 = vmatprep.subr.mxu0 0.0
        %2185 = vmatpush1.msra.mxu0 %v1230
        %2186 = vmatprep.subr.mxu0 0.0
        %2187 = vmatpush1.msra.mxu0 %v1231
        %2188 = vmatprep.subr.mxu0 0.0
        %2189 = vmatpush1.msra.mxu0 %v1232
        %2190 = vmatprep.subr.mxu0 0.0
        %2191 = vmatpush1.msra.mxu0 %v1233
        %2192 = vmatprep.subr.mxu0 0.0
        %2193 = vmatpush1.msra.mxu0 %v1234
        %2194 = vmatprep.subr.mxu0 0.0
        %2195 = vmatpush1.msra.mxu0 %v1235
        %2196 = vmatprep.subr.mxu0 0.0
        %2197 = vmatpush1.msra.mxu0 %v1236
        %2198 = vmatprep.subr.mxu0 0.0
        %2199 = vmatpush1.msra.mxu0 %v1237
        %2200 = vmatprep.subr.mxu0 0.0
        %2201 = vmatpush1.msra.mxu0 %v1238
        %2202 = vmatprep.subr.mxu0 0.0
        %2203 = vmatpush1.msra.mxu0 %v1239
        %2204 = vmatprep.subr.mxu0 0.0
        %2205 = vmatpush1.msra.mxu0 %v1240
        %2206 = vmatprep.subr.mxu0 0.0
        %2207 = vmatpush1.msra.mxu0 %v1241
        %2208 = vmatprep.subr.mxu0 0.0
        %2209 = vmatpush1.msra.mxu0 %v1242
        %2210 = vmatprep.subr.mxu0 0.0
        %2211 = vmatpush1.msra.mxu0 %v1243
        %2212 = vmatprep.subr.mxu0 0.0
        %2213 = vmatpush1.msra.mxu0 %v1244
        %2214 = vmatprep.subr.mxu0 0.0
        %2215 = vmatpush1.msra.mxu0 %v1245
        %2216 = vmatprep.subr.mxu0 0.0
        %2217 = vmatpush1.msra.mxu0 %v1246
        %2218 = vmatprep.subr.mxu0 0.0
        %2219 = vmatpush1.msra.mxu0 %v1247
        %2220 = vmatprep.subr.mxu0 0.0
        %2221 = vmatpush1.msra.mxu0 %v1248
        %2222 = vmatprep.subr.mxu0 0.0
        %2223 = vmatpush1.msra.mxu0 %v1249
        %2224 = vmatprep.subr.mxu0 0.0
        %2225 = vmatpush1.msra.mxu0 %v1250
        %2226 = vmatprep.subr.mxu0 0.0
        %2227 = vmatpush1.msra.mxu0 %v1251
        %2228 = vmatprep.subr.mxu0 0.0
        %2229 = vmatpush1.msra.mxu0 %v1252
        %2230 = vmatprep.subr.mxu0 0.0
        %2231 = vmatpush1.msra.mxu0 %v1253
        %2232 = vmatprep.subr.mxu0 0.0
        %2233 = vmatpush1.msra.mxu0 %v1254
        %2234 = vmatprep.subr.mxu0 0.0
        %2235 = vmatpush1.msra.mxu0 %v1255
        %2236 = vmatprep.subr.mxu0 0.0
        %2237 = vmatpush1.msra.mxu0 %v1256
        %2238 = vmatprep.subr.mxu0 0.0
        %2239 = vmatpush1.msra.mxu0 %v1257
        %2240 = vmatprep.mubr.f32.mxu0 %v2161
        %2241 = vmatmul.mubr.f32.gmra.mrb[0].mxu0 %v2160
        %v2242 = vpop.f32.mrb[0].mxu0
        %v2243 = vadd.f32 0.0, %v2242
        %v2244 = vpop.f32.mrb[0].mxu0
        %2245 = vmatprep.mubr.f32.mxu0 %v2163
        %2246 = vmatmul.mubr.f32.gmra.mrb[0].mxu0 %v2162
        %v2247 = vpop.f32.mrb[0].mxu0
        %v2248 = vadd.f32 0.0, %v2247
        %v2249 = vpop.f32.mrb[0].mxu0
        %2250 = vmatprep.mubr.f32.mxu0 %v2165
        %2251 = vmatmul.mubr.f32.gmra.mrb[0].mxu0 %v2164
        %v2252 = vpop.f32.mrb[0].mxu0
        %v2253 = vadd.f32 0.0, %v2252
        %v2254 = vpop.f32.mrb[0].mxu0
        %2255 = vmatprep.mubr.f32.mxu0 %v2167
        %2256 = vmatmul.mubr.f32.gmra.mrb[0].mxu0 %v2166
        %v2257 = vpop.f32.mrb[0].mxu0
        %v2258 = vadd.f32 0.0, %v2257
        %v2259 = vpop.f32.mrb[0].mxu0
        %2260 = vmatprep.mubr.f32.mxu0 %v2169
        %2261 = vmatmul.mubr.f32.gmra.mrb[0].mxu0 %v2168
        %v2262 = vpop.f32.mrb[0].mxu0
        %v2263 = vadd.f32 0.0, %v2262
        %v2264 = vpop.f32.mrb[0].mxu0
        %2265 = vmatprep.mubr.f32.mxu0 %v2171
        %2266 = vmatmul.mubr.f32.gmra.mrb[0].mxu0 %v2170
        %v2267 = vpop.f32.mrb[0].mxu0
        %v2268 = vadd.f32 0.0, %v2267
        %v2269 = vpop.f32.mrb[0].mxu0
        %2270 = vmatprep.mubr.f32.mxu0 %v2173
        %2271 = vmatmul.mubr.f32.gmra.mrb[0].mxu0 %v2172
        %v2272 = vpop.f32.mrb[0].mxu0
        %v2273 = vadd.f32 0.0, %v2272
        %v2274 = vpop.f32.mrb[0].mxu0
        %2275 = vmatprep.mubr.f32.mxu0 %v2175
        %2276 = vmatmul.mubr.f32.gmra.mrb[0].mxu0 %v2174
        %v2277 = vpop.f32.mrb[0].mxu0
        %v2278 = vadd.f32 0.0, %v2277
        %v2279 = vpop.f32.mrb[0].mxu0
        %2280 = vdwg.mxu0
        %v2281 = vmax.f32 %v2151, %v2243
        %v2282 = vmax.f32 %v2152, %v2248
        %v2283 = vmax.f32 %v2153, %v2253
        %v2284 = vmax.f32 %v2154, %v2258
        %v2285 = vmax.f32 %v2155, %v2263
        %v2286 = vmax.f32 %v2156, %v2268
        %v2287 = vmax.f32 %v2157, %v2273
        %v2288 = vmax.f32 %v2158, %v2278
        %s2289 = scalar_lea.vmem [#allocation9], 1024
        %v2290 = vld [vmem:[%s2289] sm:$0xff]
        %v2291 = vld [vmem:[%s2289 + $0x8] sm:$0xff]
        %v2292 = vld [vmem:[%s2289 + $0x10] sm:$0xff]
        %v2293 = vld [vmem:[%s2289 + $0x18] sm:$0xff]
        %v2294 = vld [vmem:[%s2289 + $0x20] sm:$0xff]
        %v2295 = vld [vmem:[%s2289 + $0x28] sm:$0xff]
        %v2296 = vld [vmem:[%s2289 + $0x30] sm:$0xff]
        %v2297 = vld [vmem:[%s2289 + $0x38] sm:$0xff]
        %v2298 = vld [vmem:[%s2289 + $0x40] sm:$0xff]
        %v2299 = vld [vmem:[%s2289 + $0x48] sm:$0xff]
        %v2300 = vld [vmem:[%s2289 + $0x50] sm:$0xff]
        %v2301 = vld [vmem:[%s2289 + $0x58] sm:$0xff]
        %v2302 = vld [vmem:[%s2289 + $0x60] sm:$0xff]
        %v2303 = vld [vmem:[%s2289 + $0x68] sm:$0xff]
        %v2304 = vld [vmem:[%s2289 + $0x70] sm:$0xff]
        %v2305 = vld [vmem:[%s2289 + $0x78] sm:$0xff]
        %2306 = vmatprep.subr.mxu0 0.0
        %2307 = vmatpush1.msra.mxu0 %v1226
        %2308 = vmatprep.subr.mxu0 0.0
        %2309 = vmatpush1.msra.mxu0 %v1227
        %2310 = vmatprep.subr.mxu0 0.0
        %2311 = vmatpush1.msra.mxu0 %v1228
        %2312 = vmatprep.subr.mxu0 0.0
        %2313 = vmatpush1.msra.mxu0 %v1229
        %2314 = vmatprep.subr.mxu0 0.0
        %2315 = vmatpush1.msra.mxu0 %v1230
        %2316 = vmatprep.subr.mxu0 0.0
        %2317 = vmatpush1.msra.mxu0 %v1231
        %2318 = vmatprep.subr.mxu0 0.0
        %2319 = vmatpush1.msra.mxu0 %v1232
        %2320 = vmatprep.subr.mxu0 0.0
        %2321 = vmatpush1.msra.mxu0 %v1233
        %2322 = vmatprep.subr.mxu0 0.0
        %2323 = vmatpush1.msra.mxu0 %v1234
        %2324 = vmatprep.subr.mxu0 0.0
        %2325 = vmatpush1.msra.mxu0 %v1235
        %2326 = vmatprep.subr.mxu0 0.0
        %2327 = vmatpush1.msra.mxu0 %v1236
        %2328 = vmatprep.subr.mxu0 0.0
        %2329 = vmatpush1.msra.mxu0 %v1237
        %2330 = vmatprep.subr.mxu0 0.0
        %2331 = vmatpush1.msra.mxu0 %v1238
        %2332 = vmatprep.subr.mxu0 0.0
        %2333 = vmatpush1.msra.mxu0 %v1239
        %2334 = vmatprep.subr.mxu0 0.0
        %2335 = vmatpush1.msra.mxu0 %v1240
        %2336 = vmatprep.subr.mxu0 0.0
        %2337 = vmatpush1.msra.mxu0 %v1241
        %2338 = vmatprep.subr.mxu0 0.0
        %2339 = vmatpush1.msra.mxu0 %v1242
        %2340 = vmatprep.subr.mxu0 0.0
        %2341 = vmatpush1.msra.mxu0 %v1243
        %2342 = vmatprep.subr.mxu0 0.0
        %2343 = vmatpush1.msra.mxu0 %v1244
        %2344 = vmatprep.subr.mxu0 0.0
        %2345 = vmatpush1.msra.mxu0 %v1245
        %2346 = vmatprep.subr.mxu0 0.0
        %2347 = vmatpush1.msra.mxu0 %v1246
        %2348 = vmatprep.subr.mxu0 0.0
        %2349 = vmatpush1.msra.mxu0 %v1247
        %2350 = vmatprep.subr.mxu0 0.0
        %2351 = vmatpush1.msra.mxu0 %v1248
        %2352 = vmatprep.subr.mxu0 0.0
        %2353 = vmatpush1.msra.mxu0 %v1249
        %2354 = vmatprep.subr.mxu0 0.0
        %2355 = vmatpush1.msra.mxu0 %v1250
        %2356 = vmatprep.subr.mxu0 0.0
        %2357 = vmatpush1.msra.mxu0 %v1251
        %2358 = vmatprep.subr.mxu0 0.0
        %2359 = vmatpush1.msra.mxu0 %v1252
        %2360 = vmatprep.subr.mxu0 0.0
        %2361 = vmatpush1.msra.mxu0 %v1253
        %2362 = vmatprep.subr.mxu0 0.0
        %2363 = vmatpush1.msra.mxu0 %v1254
        %2364 = vmatprep.subr.mxu0 0.0
        %2365 = vmatpush1.msra.mxu0 %v1255
        %2366 = vmatprep.subr.mxu0 0.0
        %2367 = vmatpush1.msra.mxu0 %v1256
        %2368 = vmatprep.subr.mxu0 0.0
        %2369 = vmatpush1.msra.mxu0 %v1257
        %2370 = vmatprep.mubr.f32.mxu0 %v2291
        %2371 = vmatmul.mubr.f32.gmra.mrb[0].mxu0 %v2290
        %v2372 = vpop.f32.mrb[0].mxu0
        %v2373 = vadd.f32 0.0, %v2372
        %v2374 = vpop.f32.mrb[0].mxu0
        %2375 = vmatprep.mubr.f32.mxu0 %v2293
        %2376 = vmatmul.mubr.f32.gmra.mrb[0].mxu0 %v2292
        %v2377 = vpop.f32.mrb[0].mxu0
        %v2378 = vadd.f32 0.0, %v2377
        %v2379 = vpop.f32.mrb[0].mxu0
        %2380 = vmatprep.mubr.f32.mxu0 %v2295
        %2381 = vmatmul.mubr.f32.gmra.mrb[0].mxu0 %v2294
        %v2382 = vpop.f32.mrb[0].mxu0
        %v2383 = vadd.f32 0.0, %v2382
        %v2384 = vpop.f32.mrb[0].mxu0
        %2385 = vmatprep.mubr.f32.mxu0 %v2297
        %2386 = vmatmul.mubr.f32.gmra.mrb[0].mxu0 %v2296
        %v2387 = vpop.f32.mrb[0].mxu0
        %v2388 = vadd.f32 0.0, %v2387
        %v2389 = vpop.f32.mrb[0].mxu0
        %2390 = vmatprep.mubr.f32.mxu0 %v2299
        %2391 = vmatmul.mubr.f32.gmra.mrb[0].mxu0 %v2298
        %v2392 = vpop.f32.mrb[0].mxu0
        %v2393 = vadd.f32 0.0, %v2392
        %v2394 = vpop.f32.mrb[0].mxu0
        %2395 = vmatprep.mubr.f32.mxu0 %v2301
        %2396 = vmatmul.mubr.f32.gmra.mrb[0].mxu0 %v2300
        %v2397 = vpop.f32.mrb[0].mxu0
        %v2398 = vadd.f32 0.0, %v2397
        %v2399 = vpop.f32.mrb[0].mxu0
        %2400 = vmatprep.mubr.f32.mxu0 %v2303
        %2401 = vmatmul.mubr.f32.gmra.mrb[0].mxu0 %v2302
        %v2402 = vpop.f32.mrb[0].mxu0
        %v2403 = vadd.f32 0.0, %v2402
        %v2404 = vpop.f32.mrb[0].mxu0
        %2405 = vmatprep.mubr.f32.mxu0 %v2305
        %2406 = vmatmul.mubr.f32.gmra.mrb[0].mxu0 %v2304
        %v2407 = vpop.f32.mrb[0].mxu0
        %v2408 = vadd.f32 0.0, %v2407
        %v2409 = vpop.f32.mrb[0].mxu0
        %2410 = vdwg.mxu0
        %v2411 = vmax.f32 %v2281, %v2373
        %v2412 = vmax.f32 %v2282, %v2378
        %v2413 = vmax.f32 %v2283, %v2383
        %v2414 = vmax.f32 %v2284, %v2388
        %v2415 = vmax.f32 %v2285, %v2393
        %v2416 = vmax.f32 %v2286, %v2398
        %v2417 = vmax.f32 %v2287, %v2403
        %v2418 = vmax.f32 %v2288, %v2408
        %v2419 = vld [vmem:[#allocation11] sm:$0xff]
        %v2420 = vld [vmem:[#allocation11 + $0x8] sm:$0xff]
        %v2421 = vld [vmem:[#allocation11 + $0x10] sm:$0xff]
        %v2422 = vld [vmem:[#allocation11 + $0x18] sm:$0xff]
        %v2423 = vld [vmem:[#allocation11 + $0x20] sm:$0xff]
        %v2424 = vld [vmem:[#allocation11 + $0x28] sm:$0xff]
        %v2425 = vld [vmem:[#allocation11 + $0x30] sm:$0xff]
        %v2426 = vld [vmem:[#allocation11 + $0x38] sm:$0xff]
        %v2427 = vld [vmem:[%s756] sm:$0xff]
        %v2428 = vld [vmem:[%s756 + $0x8] sm:$0xff]
        %v2429 = vld [vmem:[%s756 + $0x10] sm:$0xff]
        %v2430 = vld [vmem:[%s756 + $0x18] sm:$0xff]
        %vm2431 = vcmask 130048
        %v2433 = vsel %vm2431, %v2419, 0
        %v2436 = vsel %vm2431, %v2420, 0
        %v2439 = vsel %vm2431, %v2421, 0
        %v2442 = vsel %vm2431, %v2422, 0
        %v2445 = vsel %vm2431, %v2423, 0
        %v2448 = vsel %vm2431, %v2424, 0
        %v2451 = vsel %vm2431, %v2425, 0
        %v2454 = vsel %vm2431, %v2426, 0
        %2456 = vmatprep.subr.mxu0 %v2428
        %2457 = vmatpush1.msra.mxu0 %v2427
        %2458 = vmatprep.subr.mxu0 %v2430
        %2459 = vmatpush1.msra.mxu0 %v2429
        %2460 = vmatprep.subr.mxu0 0.0
        %2461 = vmatpush1.msra.mxu0 0.0
        %2462 = vmatprep.subr.mxu0 0.0
        %2463 = vmatpush1.msra.mxu0 0.0
        %2464 = vmatprep.subr.mxu0 0.0
        %2465 = vmatpush1.msra.mxu0 0.0
        %2466 = vmatprep.subr.mxu0 0.0
        %2467 = vmatpush1.msra.mxu0 0.0
        %2468 = vmatprep.subr.mxu0 0.0
        %2469 = vmatpush1.msra.mxu0 0.0
        %2470 = vmatprep.subr.mxu0 0.0
        %2471 = vmatpush1.msra.mxu0 0.0
        %2472 = vmatprep.subr.mxu0 0.0
        %2473 = vmatpush1.msra.mxu0 0.0
        %2474 = vmatprep.subr.mxu0 0.0
        %2475 = vmatpush1.msra.mxu0 0.0
        %2476 = vmatprep.subr.mxu0 0.0
        %2477 = vmatpush1.msra.mxu0 0.0
        %2478 = vmatprep.subr.mxu0 0.0
        %2479 = vmatpush1.msra.mxu0 0.0
        %2480 = vmatprep.subr.mxu0 0.0
        %2481 = vmatpush1.msra.mxu0 0.0
        %2482 = vmatprep.subr.mxu0 0.0
        %2483 = vmatpush1.msra.mxu0 0.0
        %2484 = vmatprep.subr.mxu0 0.0
        %2485 = vmatpush1.msra.mxu0 0.0
        %2486 = vmatprep.subr.mxu0 0.0
        %2487 = vmatpush1.msra.mxu0 0.0
        %2488 = vmatprep.subr.mxu0 0.0
        %2489 = vmatpush1.msra.mxu0 0.0
        %2490 = vmatprep.subr.mxu0 0.0
        %2491 = vmatpush1.msra.mxu0 0.0
        %2492 = vmatprep.subr.mxu0 0.0
        %2493 = vmatpush1.msra.mxu0 0.0
        %2494 = vmatprep.subr.mxu0 0.0
        %2495 = vmatpush1.msra.mxu0 0.0
        %2496 = vmatprep.subr.mxu0 0.0
        %2497 = vmatpush1.msra.mxu0 0.0
        %2498 = vmatprep.subr.mxu0 0.0
        %2499 = vmatpush1.msra.mxu0 0.0
        %2500 = vmatprep.subr.mxu0 0.0
        %2501 = vmatpush1.msra.mxu0 0.0
        %2502 = vmatprep.subr.mxu0 0.0
        %2503 = vmatpush1.msra.mxu0 0.0
        %2504 = vmatprep.subr.mxu0 0.0
        %2505 = vmatpush1.msra.mxu0 0.0
        %2506 = vmatprep.subr.mxu0 0.0
        %2507 = vmatpush1.msra.mxu0 0.0
        %2508 = vmatprep.subr.mxu0 0.0
        %2509 = vmatpush1.msra.mxu0 0.0
        %2510 = vmatprep.subr.mxu0 0.0
        %2511 = vmatpush1.msra.mxu0 0.0
        %2512 = vmatprep.subr.mxu0 0.0
        %2513 = vmatpush1.msra.mxu0 0.0
        %2514 = vmatprep.subr.mxu0 0.0
        %2515 = vmatpush1.msra.mxu0 0.0
        %2516 = vmatprep.subr.mxu0 0.0
        %2517 = vmatpush1.msra.mxu0 0.0
        %2518 = vmatprep.subr.mxu0 0.0
        %2519 = vmatpush1.msra.mxu0 0.0
        %2520 = vmatprep.mubr.f32.mxu0 0.0
        %2521 = vmatmul.mubr.f32.gmra.mrb[0].mxu0 %v2433
        %v2522 = vpop.f32.mrb[0].mxu0
        %v2523 = vadd.f32 0.0, %v2522
        %v2524 = vpop.f32.mrb[0].mxu0
        %v2525 = vadd.f32 0.0, %v2524
        %2526 = vmatprep.mubr.f32.mxu0 0.0
        %2527 = vmatmul.mubr.f32.gmra.mrb[0].mxu0 %v2436
        %v2528 = vpop.f32.mrb[0].mxu0
        %v2529 = vadd.f32 0.0, %v2528
        %v2530 = vpop.f32.mrb[0].mxu0
        %v2531 = vadd.f32 0.0, %v2530
        %2532 = vmatprep.mubr.f32.mxu0 0.0
        %2533 = vmatmul.mubr.f32.gmra.mrb[0].mxu0 %v2439
        %v2534 = vpop.f32.mrb[0].mxu0
        %v2535 = vadd.f32 0.0, %v2534
        %v2536 = vpop.f32.mrb[0].mxu0
        %v2537 = vadd.f32 0.0, %v2536
        %2538 = vmatprep.mubr.f32.mxu0 0.0
        %2539 = vmatmul.mubr.f32.gmra.mrb[0].mxu0 %v2442
        %v2540 = vpop.f32.mrb[0].mxu0
        %v2541 = vadd.f32 0.0, %v2540
        %v2542 = vpop.f32.mrb[0].mxu0
        %v2543 = vadd.f32 0.0, %v2542
        %2544 = vmatprep.mubr.f32.mxu0 0.0
        %2545 = vmatmul.mubr.f32.gmra.mrb[0].mxu0 %v2445
        %v2546 = vpop.f32.mrb[0].mxu0
        %v2547 = vadd.f32 0.0, %v2546
        %v2548 = vpop.f32.mrb[0].mxu0
        %v2549 = vadd.f32 0.0, %v2548
        %2550 = vmatprep.mubr.f32.mxu0 0.0
        %2551 = vmatmul.mubr.f32.gmra.mrb[0].mxu0 %v2448
        %v2552 = vpop.f32.mrb[0].mxu0
        %v2553 = vadd.f32 0.0, %v2552
        %v2554 = vpop.f32.mrb[0].mxu0
        %v2555 = vadd.f32 0.0, %v2554
        %2556 = vmatprep.mubr.f32.mxu0 0.0
        %2557 = vmatmul.mubr.f32.gmra.mrb[0].mxu0 %v2451
        %v2558 = vpop.f32.mrb[0].mxu0
        %v2559 = vadd.f32 0.0, %v2558
        %v2560 = vpop.f32.mrb[0].mxu0
        %v2561 = vadd.f32 0.0, %v2560
        %2562 = vmatprep.mubr.f32.mxu0 0.0
        %2563 = vmatmul.mubr.f32.gmra.mrb[0].mxu0 %v2454
        %v2564 = vpop.f32.mrb[0].mxu0
        %v2565 = vadd.f32 0.0, %v2564
        %v2566 = vpop.f32.mrb[0].mxu0
        %v2567 = vadd.f32 0.0, %v2566
        %2568 = vdwg.mxu0
        %2569 = vst [vmem:[#allocation2] sm:$0xff] %v2523
        %2570 = vst [vmem:[#allocation2 + $0x8] sm:$0xff] %v2525
        %2571 = vst [vmem:[#allocation2 + $0x18] sm:$0xff] %v2529
        %2572 = vst [vmem:[#allocation2 + $0x20] sm:$0xff] %v2531
        %2573 = vst [vmem:[#allocation2 + $0x30] sm:$0xff] %v2535
        %2574 = vst [vmem:[#allocation2 + $0x38] sm:$0xff] %v2537
        %2575 = vst [vmem:[#allocation2 + $0x48] sm:$0xff] %v2541
        %2576 = vst [vmem:[#allocation2 + $0x50] sm:$0xff] %v2543
        %2577 = vst [vmem:[#allocation2 + $0x60] sm:$0xff] %v2547
        %2578 = vst [vmem:[#allocation2 + $0x68] sm:$0xff] %v2549
        %2579 = vst [vmem:[#allocation2 + $0x78] sm:$0xff] %v2553
        %2580 = vst [vmem:[#allocation2 + $0x80] sm:$0xff] %v2555
        %2581 = vst [vmem:[#allocation2 + $0x90] sm:$0xff] %v2559
        %2582 = vst [vmem:[#allocation2 + $0x98] sm:$0xff] %v2561
        %2583 = vst [vmem:[#allocation2 + $0xa8] sm:$0xff] %v2565
        %2584 = vst [vmem:[#allocation2 + $0xb0] sm:$0xff] %v2567
        %vm2585 = vcmask 392192
        %2586 = vst.msk [vmem:[#allocation2 + $0x10] sm:$0xff] %vm2585, %v2411
        %2587 = vst.msk [vmem:[#allocation2 + $0x28] sm:$0xff] %vm2585, %v2412
        %2588 = vst.msk [vmem:[#allocation2 + $0x40] sm:$0xff] %vm2585, %v2413
        %2589 = vst.msk [vmem:[#allocation2 + $0x58] sm:$0xff] %vm2585, %v2414
        %2590 = vst.msk [vmem:[#allocation2 + $0x70] sm:$0xff] %vm2585, %v2415
        %2591 = vst.msk [vmem:[#allocation2 + $0x88] sm:$0xff] %vm2585, %v2416
        %2592 = vst.msk [vmem:[#allocation2 + $0xa0] sm:$0xff] %vm2585, %v2417
        %2593 = vst.msk [vmem:[#allocation2 + $0xb8] sm:$0xff] %vm2585, %v2418
        %2594 = vst [vmem:[#allocation2 + $0xc0] sm:$0xff] 0.0
        %2595 = vst [vmem:[#allocation2 + $0xc8] sm:$0xff] 0.0
        %2596 = vst.msk [vmem:[#allocation2 + $0xd0] sm:$0xff] %vm2585, 0.0
        %2597 = vst [vmem:[#allocation2 + $0xd8] sm:$0xff] 0.0
        %2598 = vst [vmem:[#allocation2 + $0xe0] sm:$0xff] 0.0
        %2599 = vst.msk [vmem:[#allocation2 + $0xe8] sm:$0xff] %vm2585, 0.0
        %2600 = vst [vmem:[#allocation2 + $0xf0] sm:$0xff] 0.0
        %2601 = vst [vmem:[#allocation2 + $0xf8] sm:$0xff] 0.0
        %2602 = vst.msk [vmem:[#allocation2 + $0x100] sm:$0xff] %vm2585, 0.0
        %v2603 = vld [vmem:[#allocation2] sm:$0xff]
        %v2604 = vld [vmem:[#allocation2 + $0x8] sm:$0xff]
        %v2605 = vld [vmem:[#allocation2 + $0x10] sm:$0xff]
        %v2606 = vld [vmem:[#allocation2 + $0x18] sm:$0xff]
        %v2607 = vld [vmem:[#allocation2 + $0x20] sm:$0xff]
        %v2608 = vld [vmem:[#allocation2 + $0x28] sm:$0xff]
        %v2609 = vld [vmem:[#allocation2 + $0x30] sm:$0xff]
        %v2610 = vld [vmem:[#allocation2 + $0x38] sm:$0xff]
        %v2611 = vld [vmem:[#allocation2 + $0x40] sm:$0xff]
        %v2612 = vld [vmem:[#allocation2 + $0x48] sm:$0xff]
        %v2613 = vld [vmem:[#allocation2 + $0x50] sm:$0xff]
        %v2614 = vld [vmem:[#allocation2 + $0x58] sm:$0xff]
        %v2615 = vld [vmem:[#allocation2 + $0x60] sm:$0xff]
        %v2616 = vld [vmem:[#allocation2 + $0x68] sm:$0xff]
        %v2617 = vld [vmem:[#allocation2 + $0x70] sm:$0xff]
        %v2618 = vld [vmem:[#allocation2 + $0x78] sm:$0xff]
        %v2619 = vld [vmem:[#allocation2 + $0x80] sm:$0xff]
        %v2620 = vld [vmem:[#allocation2 + $0x88] sm:$0xff]
        %v2621 = vld [vmem:[#allocation2 + $0x90] sm:$0xff]
        %v2622 = vld [vmem:[#allocation2 + $0x98] sm:$0xff]
        %v2623 = vld [vmem:[#allocation2 + $0xa0] sm:$0xff]
        %v2624 = vld [vmem:[#allocation2 + $0xa8] sm:$0xff]
        %v2625 = vld [vmem:[#allocation2 + $0xb0] sm:$0xff]
        %v2626 = vld [vmem:[#allocation2 + $0xb8] sm:$0xff]
        %v2627 = vpack.c.bf16 %v2606, %v2603
        %v2628 = vpack.c.bf16 %v2607, %v2604
        %v2629 = vpack.c.bf16 %v2608, %v2605
        %v2630 = vpack.c.bf16 %v2612, %v2609
        %v2631 = vpack.c.bf16 %v2613, %v2610
        %v2632 = vpack.c.bf16 %v2614, %v2611
        %v2633 = vpack.c.bf16 %v2618, %v2615
        %v2634 = vpack.c.bf16 %v2619, %v2616
        %v2635 = vpack.c.bf16 %v2620, %v2617
        %v2636 = vpack.c.bf16 %v2624, %v2621
        %v2637 = vpack.c.bf16 %v2625, %v2622
        %v2638 = vpack.c.bf16 %v2626, %v2623
        %v2639 = vld [vmem:[#allocation12] sm:$0xff]
        %v2640 = vld [vmem:[#allocation12 + $0x8] sm:$0xff]
        %v2641 = vld [vmem:[#allocation12 + $0x10] sm:$0xff]
        %v2642 = vld [vmem:[#allocation12 + $0x18] sm:$0xff]
        %v2643 = vld [vmem:[#allocation12 + $0x20] sm:$0xff]
        %v2644 = vld [vmem:[#allocation12 + $0x28] sm:$0xff]
        %v2645 = vld [vmem:[#allocation12 + $0x30] sm:$0xff]
        %v2646 = vld [vmem:[#allocation12 + $0x38] sm:$0xff]
        %v2647 = vld [vmem:[#allocation12 + $0x40] sm:$0xff]
        %v2648 = vld [vmem:[#allocation12 + $0x48] sm:$0xff]
        %v2649 = vld [vmem:[#allocation12 + $0x50] sm:$0xff]
        %v2650 = vld [vmem:[#allocation12 + $0x58] sm:$0xff]
        %v2651 = vld [vmem:[#allocation12 + $0x60] sm:$0xff]
        %v2652 = vld [vmem:[#allocation12 + $0x68] sm:$0xff]
        %v2653 = vld [vmem:[#allocation12 + $0x70] sm:$0xff]
        %v2654 = vld [vmem:[#allocation12 + $0x78] sm:$0xff]
        %v2655 = vld [vmem:[#allocation12 + $0x80] sm:$0xff]
        %v2656 = vld [vmem:[#allocation12 + $0x88] sm:$0xff]
        %v2657 = vld [vmem:[#allocation12 + $0x90] sm:$0xff]
        %v2658 = vld [vmem:[#allocation12 + $0x98] sm:$0xff]
        %v2659 = vld [vmem:[#allocation12 + $0xa0] sm:$0xff]
        %v2660 = vld [vmem:[#allocation12 + $0xa8] sm:$0xff]
        %v2661 = vld [vmem:[#allocation12 + $0xb0] sm:$0xff]
        %v2662 = vld [vmem:[#allocation12 + $0xb8] sm:$0xff]
        %v2663 = vld [vmem:[#allocation12 + $0xc0] sm:$0xff]
        %v2664 = vld [vmem:[#allocation12 + $0xc8] sm:$0xff]
        %v2665 = vld [vmem:[#allocation12 + $0xd0] sm:$0xff]
        %v2666 = vld [vmem:[#allocation12 + $0xd8] sm:$0xff]
        %v2667 = vld [vmem:[#allocation12 + $0xe0] sm:$0xff]
        %v2668 = vld [vmem:[#allocation12 + $0xe8] sm:$0xff]
        %v2669 = vld [vmem:[#allocation12 + $0xf0] sm:$0xff]
        %v2670 = vld [vmem:[#allocation12 + $0xf8] sm:$0xff]
        %v2671 = vld [vmem:[#allocation12 + $0x100] sm:$0xff]
        %v2672 = vld [vmem:[#allocation12 + $0x108] sm:$0xff]
        %v2673 = vld [vmem:[#allocation12 + $0x110] sm:$0xff]
        %v2674 = vld [vmem:[#allocation12 + $0x118] sm:$0xff]
        %v2675 = vld [vmem:[#allocation12 + $0x120] sm:$0xff]
        %v2676 = vld [vmem:[#allocation12 + $0x128] sm:$0xff]
        %v2677 = vld [vmem:[#allocation2] sm:$0xfe]
        %v2678 = vld [vmem:[#allocation2 + $0x8] sm:$0xfe]
        %v2679 = vld [vmem:[#allocation2 + $0x10] sm:$0xfe]
        %v2680 = vld [vmem:[#allocation2 + $0xc0] sm:$0x1]
        %v2681 = vld [vmem:[#allocation2 + $0xc8] sm:$0x1]
        %v2682 = vld [vmem:[#allocation2 + $0xd0] sm:$0x1]
        %v2683 = vpack.c.bf16 %v2606, %v2677
        %v2684 = vpack.c.bf16 %v2607, %v2678
        %v2685 = vpack.c.bf16 %v2608, %v2679
        %v2686 = vpack.c.bf16 %v2680, %v2680
        %v2687 = vpack.c.bf16 %v2681, %v2681
        %v2688 = vpack.c.bf16 %v2682, %v2682
        %s2689 = scalar_lea.vmem [#allocation12], 304
        %v2690 = vld [vmem:[%s2689] sm:$0xff]
        %v2691 = vld [vmem:[%s2689 + $0x8] sm:$0xff]
        %v2692 = vld [vmem:[%s2689 + $0x10] sm:$0xff]
        %v2693 = vld [vmem:[%s2689 + $0x18] sm:$0xff]
        %v2694 = vld [vmem:[%s2689 + $0x20] sm:$0xff]
        %v2695 = vld [vmem:[%s2689 + $0x28] sm:$0xff]
        %v2696 = vld [vmem:[%s2689 + $0x30] sm:$0xff]
        %v2697 = vld [vmem:[%s2689 + $0x38] sm:$0xff]
        %v2698 = vld [vmem:[%s2689 + $0x40] sm:$0xff]
        %v2699 = vld [vmem:[%s2689 + $0x48] sm:$0xff]
        %v2700 = vld [vmem:[%s2689 + $0x50] sm:$0xff]
        %v2701 = vld [vmem:[%s2689 + $0x58] sm:$0xff]
        %v2702 = vld [vmem:[%s2689 + $0x60] sm:$0xff]
        %v2703 = vld [vmem:[%s2689 + $0x68] sm:$0xff]
        %v2704 = vld [vmem:[%s2689 + $0x70] sm:$0xff]
        %v2705 = vld [vmem:[%s2689 + $0x78] sm:$0xff]
        %v2706 = vld [vmem:[%s2689 + $0x80] sm:$0xff]
        %v2707 = vld [vmem:[%s2689 + $0x88] sm:$0xff]
        %v2708 = vld [vmem:[%s2689 + $0x90] sm:$0xff]
        %v2709 = vld [vmem:[%s2689 + $0x98] sm:$0xff]
        %v2710 = vld [vmem:[%s2689 + $0xa0] sm:$0xff]
        %v2711 = vld [vmem:[%s2689 + $0xa8] sm:$0xff]
        %v2712 = vld [vmem:[%s2689 + $0xb0] sm:$0xff]
        %v2713 = vld [vmem:[%s2689 + $0xb8] sm:$0xff]
        %v2714 = vld [vmem:[%s2689 + $0xc0] sm:$0xff]
        %v2715 = vld [vmem:[%s2689 + $0xc8] sm:$0xff]
        %v2716 = vld [vmem:[%s2689 + $0xd0] sm:$0xff]
        %v2717 = vld [vmem:[%s2689 + $0xd8] sm:$0xff]
        %v2718 = vld [vmem:[%s2689 + $0xe0] sm:$0xff]
        %v2719 = vld [vmem:[%s2689 + $0xe8] sm:$0xff]
        %v2720 = vld [vmem:[%s2689 + $0xf0] sm:$0xff]
        %v2721 = vld [vmem:[%s2689 + $0xf8] sm:$0xff]
        %v2722 = vld [vmem:[%s2689 + $0x100] sm:$0xff]
        %v2723 = vld [vmem:[%s2689 + $0x108] sm:$0xff]
        %v2724 = vld [vmem:[%s2689 + $0x110] sm:$0xff]
        %v2725 = vld [vmem:[%s2689 + $0x118] sm:$0xff]
        %v2726 = vld [vmem:[%s2689 + $0x120] sm:$0xff]
        %v2727 = vld [vmem:[%s2689 + $0x128] sm:$0xff]
        %vm2728 = vsmask.f32 7424
        %v2730 = vshrl.u32 %v2683, 16
        %v2732 = vshll.u32 %v2683, 16
        %v2734 = vrot.slane %v2732, 1
        %v2735 = vor.u32 %v2730, %v2734
        %v2737 = vshll.u32 %v2630, 16
        %v2739 = vrot.slane %v2737, 1
        %v2740 = vsel %vm2728, %v2735, %v2739
        %v2742 = vshrl.u32 %v2684, 16
        %v2744 = vshll.u32 %v2684, 16
        %v2746 = vrot.slane %v2744, 1
        %v2747 = vor.u32 %v2742, %v2746
        %v2749 = vshll.u32 %v2631, 16
        %v2751 = vrot.slane %v2749, 1
        %v2752 = vsel %vm2728, %v2747, %v2751
        %v2754 = vshrl.u32 %v2685, 16
        %v2756 = vshll.u32 %v2685, 16
        %v2758 = vrot.slane %v2756, 1
        %v2759 = vor.u32 %v2754, %v2758
        %v2761 = vshll.u32 %v2632, 16
        %v2763 = vrot.slane %v2761, 1
        %v2764 = vsel %vm2728, %v2759, %v2763
        %v2765 = vshrl.u32 %v2630, 16
        %v2767 = vor.u32 %v2765, %v2739
        %v2769 = vshll.u32 %v2633, 16
        %v2771 = vrot.slane %v2769, 1
        %v2772 = vsel %vm2728, %v2767, %v2771
        %v2773 = vshrl.u32 %v2631, 16
        %v2775 = vor.u32 %v2773, %v2751
        %v2777 = vshll.u32 %v2634, 16
        %v2779 = vrot.slane %v2777, 1
        %v2780 = vsel %vm2728, %v2775, %v2779
        %v2781 = vshrl.u32 %v2632, 16
        %v2783 = vor.u32 %v2781, %v2763
        %v2785 = vshll.u32 %v2635, 16
        %v2787 = vrot.slane %v2785, 1
        %v2788 = vsel %vm2728, %v2783, %v2787
        %v2789 = vshrl.u32 %v2633, 16
        %v2791 = vor.u32 %v2789, %v2771
        %v2793 = vshll.u32 %v2636, 16
        %v2795 = vrot.slane %v2793, 1
        %v2796 = vsel %vm2728, %v2791, %v2795
        %v2797 = vshrl.u32 %v2634, 16
        %v2799 = vor.u32 %v2797, %v2779
        %v2801 = vshll.u32 %v2637, 16
        %v2803 = vrot.slane %v2801, 1
        %v2804 = vsel %vm2728, %v2799, %v2803
        %v2805 = vshrl.u32 %v2635, 16
        %v2807 = vor.u32 %v2805, %v2787
        %v2809 = vshll.u32 %v2638, 16
        %v2811 = vrot.slane %v2809, 1
        %v2812 = vsel %vm2728, %v2807, %v2811
        %v2813 = vshrl.u32 %v2636, 16
        %v2815 = vor.u32 %v2813, %v2795
        %v2817 = vshll.u32 %v2686, 16
        %v2819 = vrot.slane %v2817, 1
        %v2820 = vsel %vm2728, %v2815, %v2819
        %v2821 = vshrl.u32 %v2637, 16
        %v2823 = vor.u32 %v2821, %v2803
        %v2825 = vshll.u32 %v2687, 16
        %v2827 = vrot.slane %v2825, 1
        %v2828 = vsel %vm2728, %v2823, %v2827
        %v2829 = vshrl.u32 %v2638, 16
        %v2831 = vor.u32 %v2829, %v2811
        %v2833 = vshll.u32 %v2688, 16
        %v2835 = vrot.slane %v2833, 1
        %v2836 = vsel %vm2728, %v2831, %v2835
        %v2883 = vunpack.c.l.b16 %v2690
        %v2884 = vunpack.c.h.b16 %v2690
        %v2885 = vunpack.c.l.b16 %v2691
        %v2886 = vunpack.c.h.b16 %v2691
        %v2887 = vunpack.c.l.b16 %v2692
        %v2888 = vunpack.c.h.b16 %v2692
        %v2889 = vunpack.c.l.b16 %v2693
        %v2890 = vunpack.c.h.b16 %v2693
        %v2891 = vunpack.c.l.b16 %v2694
        %v2892 = vunpack.c.h.b16 %v2694
        %v2893 = vunpack.c.l.b16 %v2695
        %v2894 = vunpack.c.h.b16 %v2695
        %v2895 = vunpack.c.l.b16 %v2696
        %v2896 = vunpack.c.h.b16 %v2696
        %v2897 = vunpack.c.l.b16 %v2697
        %v2898 = vunpack.c.h.b16 %v2697
        %v2899 = vunpack.c.l.b16 %v2698
        %v2900 = vunpack.c.h.b16 %v2698
        %v2901 = vunpack.c.l.b16 %v2699
        %v2902 = vunpack.c.h.b16 %v2699
        %v2903 = vunpack.c.l.b16 %v2700
        %v2904 = vunpack.c.h.b16 %v2700
        %v2905 = vunpack.c.l.b16 %v2701
        %v2906 = vunpack.c.h.b16 %v2701
        %v2907 = vunpack.c.l.b16 %v2702
        %v2908 = vunpack.c.h.b16 %v2702
        %v2909 = vunpack.c.l.b16 %v2703
        %v2910 = vunpack.c.h.b16 %v2703
        %v2911 = vunpack.c.l.b16 %v2704
        %v2912 = vunpack.c.h.b16 %v2704
        %v2913 = vunpack.c.l.b16 %v2705
        %v2914 = vunpack.c.h.b16 %v2705
        %v2915 = vunpack.c.l.b16 %v2706
        %v2916 = vunpack.c.h.b16 %v2706
        %v2917 = vunpack.c.l.b16 %v2707
        %v2918 = vunpack.c.h.b16 %v2707
        %v2919 = vunpack.c.l.b16 %v2708
        %v2920 = vunpack.c.h.b16 %v2708
        %v2921 = vunpack.c.l.b16 %v2709
        %v2922 = vunpack.c.h.b16 %v2709
        %v2923 = vunpack.c.l.b16 %v2710
        %v2924 = vunpack.c.h.b16 %v2710
        %v2925 = vunpack.c.l.b16 %v2711
        %v2926 = vunpack.c.h.b16 %v2711
        %v2927 = vunpack.c.l.b16 %v2712
        %v2928 = vunpack.c.h.b16 %v2712
        %v2929 = vunpack.c.l.b16 %v2713
        %v2930 = vunpack.c.h.b16 %v2713
        %v2931 = vunpack.c.l.b16 %v2714
        %v2932 = vunpack.c.h.b16 %v2714
        %v2933 = vunpack.c.l.b16 %v2715
        %v2934 = vunpack.c.h.b16 %v2715
        %v2935 = vunpack.c.l.b16 %v2716
        %v2936 = vunpack.c.h.b16 %v2716
        %v2937 = vunpack.c.l.b16 %v2717
        %v2938 = vunpack.c.h.b16 %v2717
        %v2939 = vunpack.c.l.b16 %v2718
        %v2940 = vunpack.c.h.b16 %v2718
        %v2941 = vunpack.c.l.b16 %v2719
        %v2942 = vunpack.c.h.b16 %v2719
        %v2943 = vunpack.c.l.b16 %v2720
        %v2944 = vunpack.c.h.b16 %v2720
        %v2945 = vunpack.c.l.b16 %v2721
        %v2946 = vunpack.c.h.b16 %v2721
        %v2947 = vunpack.c.l.b16 %v2722
        %v2948 = vunpack.c.h.b16 %v2722
        %v2949 = vunpack.c.l.b16 %v2723
        %v2950 = vunpack.c.h.b16 %v2723
        %v2951 = vunpack.c.l.b16 %v2724
        %v2952 = vunpack.c.h.b16 %v2724
        %v2953 = vunpack.c.l.b16 %v2725
        %v2954 = vunpack.c.h.b16 %v2725
        %v2955 = vunpack.c.l.b16 %v2726
        %v2956 = vunpack.c.h.b16 %v2726
        %v2957 = vunpack.c.l.b16 %v2727
        %v2958 = vunpack.c.h.b16 %v2727
        %v2959 = vpack.c.b16 %v2885, %v2883
        %v2960 = vpack.c.b16 %v2886, %v2884
        %v2961 = vpack.c.b16 %v2889, %v2887
        %v2962 = vpack.c.b16 %v2890, %v2888
        %v2963 = vpack.c.b16 %v2893, %v2891
        %v2964 = vpack.c.b16 %v2894, %v2892
        %v2965 = vpack.c.b16 %v2897, %v2895
        %v2966 = vpack.c.b16 %v2898, %v2896
        %v2967 = vpack.c.b16 %v2901, %v2899
        %v2968 = vpack.c.b16 %v2902, %v2900
        %v2969 = vpack.c.b16 %v2905, %v2903
        %v2970 = vpack.c.b16 %v2906, %v2904
        %v2971 = vpack.c.b16 %v2909, %v2907
        %v2972 = vpack.c.b16 %v2910, %v2908
        %v2973 = vpack.c.b16 %v2913, %v2911
        %v2974 = vpack.c.b16 %v2914, %v2912
        %v2975 = vpack.c.b16 %v2917, %v2915
        %v2976 = vpack.c.b16 %v2918, %v2916
        %v2977 = vpack.c.b16 %v2921, %v2919
        %v2978 = vpack.c.b16 %v2922, %v2920
        %v2979 = vpack.c.b16 %v2925, %v2923
        %v2980 = vpack.c.b16 %v2926, %v2924
        %v2981 = vpack.c.b16 %v2929, %v2927
        %v2982 = vpack.c.b16 %v2930, %v2928
        %v2983 = vpack.c.b16 %v2933, %v2931
        %v2984 = vpack.c.b16 %v2934, %v2932
        %v2985 = vpack.c.b16 %v2937, %v2935
        %v2986 = vpack.c.b16 %v2938, %v2936
        %v2987 = vpack.c.b16 %v2941, %v2939
        %v2988 = vpack.c.b16 %v2942, %v2940
        %v2989 = vpack.c.b16 %v2945, %v2943
        %v2990 = vpack.c.b16 %v2946, %v2944
        %v2991 = vpack.c.b16 %v2949, %v2947
        %v2992 = vpack.c.b16 %v2950, %v2948
        %v2993 = vpack.c.b16 %v2953, %v2951
        %v2994 = vpack.c.b16 %v2954, %v2952
        %v2995 = vpack.c.b16 %v2957, %v2955
        %v2996 = vpack.c.b16 %v2958, %v2956
        %v3036 = vsel %vm2585, %v2764, 0
        %v3039 = vsel %vm2585, %v2788, 0
        %v3042 = vsel %vm2585, %v2812, 0
        %v3045 = vsel %vm2585, %v2836, 0
        %3047 = vmatprep.subr.bf16.mxu0 %v2960
        %3048 = vmatpush1.bf16.msra.mxu0 %v2959
        %3049 = vmatprep.subr.bf16.mxu0 %v2962
        %3050 = vmatpush1.bf16.msra.mxu0 %v2961
        %3051 = vmatprep.subr.bf16.mxu0 %v2964
        %3052 = vmatpush1.bf16.msra.mxu0 %v2963
        %3053 = vmatprep.subr.bf16.mxu0 %v2966
        %3054 = vmatpush1.bf16.msra.mxu0 %v2965
        %3055 = vmatprep.subr.bf16.mxu0 %v2968
        %3056 = vmatpush1.bf16.msra.mxu0 %v2967
        %3057 = vmatprep.subr.bf16.mxu0 %v2970
        %3058 = vmatpush1.bf16.msra.mxu0 %v2969
        %3059 = vmatprep.subr.bf16.mxu0 %v2972
        %3060 = vmatpush1.bf16.msra.mxu0 %v2971
        %3061 = vmatprep.subr.bf16.mxu0 %v2974
        %3062 = vmatpush1.bf16.msra.mxu0 %v2973
        %3063 = vmatprep.subr.bf16.mxu0 %v2976
        %3064 = vmatpush1.bf16.msra.mxu0 %v2975
        %3065 = vmatprep.subr.bf16.mxu0 %v2978
        %3066 = vmatpush1.bf16.msra.mxu0 %v2977
        %3067 = vmatprep.subr.bf16.mxu0 %v2980
        %3068 = vmatpush1.bf16.msra.mxu0 %v2979
        %3069 = vmatprep.subr.bf16.mxu0 %v2982
        %3070 = vmatpush1.bf16.msra.mxu0 %v2981
        %3071 = vmatprep.subr.bf16.mxu0 %v2984
        %3072 = vmatpush1.bf16.msra.mxu0 %v2983
        %3073 = vmatprep.subr.bf16.mxu0 %v2986
        %3074 = vmatpush1.bf16.msra.mxu0 %v2985
        %3075 = vmatprep.subr.bf16.mxu0 %v2988
        %3076 = vmatpush1.bf16.msra.mxu0 %v2987
        %3077 = vmatprep.subr.bf16.mxu0 %v2990
        %3078 = vmatpush1.bf16.msra.mxu0 %v2989
        %3079 = vmatprep.mubr.bf16.mxu0 %v2752
        %3080 = vmatmul.mubr.bf16.gmra.mrb[0].mxu0 %v2740
        %v3081 = vpop.f32.mrb[0].mxu0
        %v3082 = vadd.f32 0.0, %v3081
        %v3083 = vpop.f32.mrb[0].mxu0
        %v3084 = vadd.f32 0.0, %v3083
        %v3085 = vpop.f32.mrb[0].mxu0
        %v3086 = vadd.f32 0.0, %v3085
        %v3087 = vpop.f32.mrb[0].mxu0
        %v3088 = vadd.f32 0.0, %v3087
        %3089 = vmatprep.mubr.bf16.mxu0 %v2780
        %3090 = vmatmul.mubr.bf16.gmra.mrb[0].mxu0 %v2772
        %v3091 = vpop.f32.mrb[0].mxu0
        %v3092 = vadd.f32 0.0, %v3091
        %v3093 = vpop.f32.mrb[0].mxu0
        %v3094 = vadd.f32 0.0, %v3093
        %v3095 = vpop.f32.mrb[0].mxu0
        %v3096 = vadd.f32 0.0, %v3095
        %v3097 = vpop.f32.mrb[0].mxu0
        %v3098 = vadd.f32 0.0, %v3097
        %3099 = vmatprep.mubr.bf16.mxu0 %v2804
        %3100 = vmatmul.mubr.bf16.gmra.mrb[0].mxu0 %v2796
        %v3101 = vpop.f32.mrb[0].mxu0
        %v3102 = vadd.f32 0.0, %v3101
        %v3103 = vpop.f32.mrb[0].mxu0
        %v3104 = vadd.f32 0.0, %v3103
        %v3105 = vpop.f32.mrb[0].mxu0
        %v3106 = vadd.f32 0.0, %v3105
        %v3107 = vpop.f32.mrb[0].mxu0
        %v3108 = vadd.f32 0.0, %v3107
        %3109 = vmatprep.mubr.bf16.mxu0 %v2828
        %3110 = vmatmul.mubr.bf16.gmra.mrb[0].mxu0 %v2820
        %v3111 = vpop.f32.mrb[0].mxu0
        %v3112 = vadd.f32 0.0, %v3111
        %v3113 = vpop.f32.mrb[0].mxu0
        %v3114 = vadd.f32 0.0, %v3113
        %v3115 = vpop.f32.mrb[0].mxu0
        %v3116 = vadd.f32 0.0, %v3115
        %v3117 = vpop.f32.mrb[0].mxu0
        %v3118 = vadd.f32 0.0, %v3117
        %3119 = vdwg.mxu0
        %3120 = vmatprep.subr.bf16.mxu0 %v2992
        %3121 = vmatpush1.bf16.msra.mxu0 %v2991
        %3122 = vmatprep.subr.bf16.mxu0 %v2994
        %3123 = vmatpush1.bf16.msra.mxu0 %v2993
        %3124 = vmatprep.subr.bf16.mxu0 %v2996
        %3125 = vmatpush1.bf16.msra.mxu0 %v2995
        %3126 = vmatprep.subr.bf16.mxu0 0
        %3127 = vmatpush1.bf16.msra.mxu0 0
        %3128 = vmatprep.subr.bf16.mxu0 0
        %3129 = vmatpush1.bf16.msra.mxu0 0
        %3130 = vmatprep.subr.bf16.mxu0 0
        %3131 = vmatpush1.bf16.msra.mxu0 0
        %3132 = vmatprep.subr.bf16.mxu0 0
        %3133 = vmatpush1.bf16.msra.mxu0 0
        %3134 = vmatprep.subr.bf16.mxu0 0
        %3135 = vmatpush1.bf16.msra.mxu0 0
        %3136 = vmatprep.subr.bf16.mxu0 0
        %3137 = vmatpush1.bf16.msra.mxu0 0
        %3138 = vmatprep.subr.bf16.mxu0 0
        %3139 = vmatpush1.bf16.msra.mxu0 0
        %3140 = vmatprep.subr.bf16.mxu0 0
        %3141 = vmatpush1.bf16.msra.mxu0 0
        %3142 = vmatprep.subr.bf16.mxu0 0
        %3143 = vmatpush1.bf16.msra.mxu0 0
        %3144 = vmatprep.subr.bf16.mxu0 0
        %3145 = vmatpush1.bf16.msra.mxu0 0
        %3146 = vmatprep.subr.bf16.mxu0 0
        %3147 = vmatpush1.bf16.msra.mxu0 0
        %3148 = vmatprep.subr.bf16.mxu0 0
        %3149 = vmatpush1.bf16.msra.mxu0 0
        %3150 = vmatprep.subr.bf16.mxu0 0
        %3151 = vmatpush1.bf16.msra.mxu0 0
        %3152 = vmatprep.mubr.bf16.mxu0 0
        %3153 = vmatmul.mubr.bf16.gmra.mrb[0].mxu0 %v3036
        %v3154 = vpop.f32.mrb[0].mxu0
        %v3155 = vadd.f32 %v3082, %v3154
        %v3156 = vpop.f32.mrb[0].mxu0
        %v3157 = vadd.f32 %v3084, %v3156
        %v3158 = vpop.f32.mrb[0].mxu0
        %v3159 = vadd.f32 %v3086, %v3158
        %v3160 = vpop.f32.mrb[0].mxu0
        %v3161 = vadd.f32 %v3088, %v3160
        %3162 = vmatprep.mubr.bf16.mxu0 0
        %3163 = vmatmul.mubr.bf16.gmra.mrb[0].mxu0 %v3039
        %v3164 = vpop.f32.mrb[0].mxu0
        %v3165 = vadd.f32 %v3092, %v3164
        %v3166 = vpop.f32.mrb[0].mxu0
        %v3167 = vadd.f32 %v3094, %v3166
        %v3168 = vpop.f32.mrb[0].mxu0
        %v3169 = vadd.f32 %v3096, %v3168
        %v3170 = vpop.f32.mrb[0].mxu0
        %v3171 = vadd.f32 %v3098, %v3170
        %3172 = vmatprep.mubr.bf16.mxu0 0
        %3173 = vmatmul.mubr.bf16.gmra.mrb[0].mxu0 %v3042
        %v3174 = vpop.f32.mrb[0].mxu0
        %v3175 = vadd.f32 %v3102, %v3174
        %v3176 = vpop.f32.mrb[0].mxu0
        %v3177 = vadd.f32 %v3104, %v3176
        %v3178 = vpop.f32.mrb[0].mxu0
        %v3179 = vadd.f32 %v3106, %v3178
        %v3180 = vpop.f32.mrb[0].mxu0
        %v3181 = vadd.f32 %v3108, %v3180
        %3182 = vmatprep.mubr.bf16.mxu0 0
        %3183 = vmatmul.mubr.bf16.gmra.mrb[0].mxu0 %v3045
        %v3184 = vpop.f32.mrb[0].mxu0
        %v3185 = vadd.f32 %v3112, %v3184
        %v3186 = vpop.f32.mrb[0].mxu0
        %v3187 = vadd.f32 %v3114, %v3186
        %v3188 = vpop.f32.mrb[0].mxu0
        %v3189 = vadd.f32 %v3116, %v3188
        %v3190 = vpop.f32.mrb[0].mxu0
        %v3191 = vadd.f32 %v3118, %v3190
        %3192 = vdwg.mxu0
        %v3231 = vunpack.c.l.b16 %v2639
        %v3232 = vunpack.c.h.b16 %v2639
        %v3233 = vunpack.c.l.b16 %v2640
        %v3234 = vunpack.c.h.b16 %v2640
        %v3235 = vunpack.c.l.b16 %v2641
        %v3236 = vunpack.c.h.b16 %v2641
        %v3237 = vunpack.c.l.b16 %v2642
        %v3238 = vunpack.c.h.b16 %v2642
        %v3239 = vunpack.c.l.b16 %v2643
        %v3240 = vunpack.c.h.b16 %v2643
        %v3241 = vunpack.c.l.b16 %v2644
        %v3242 = vunpack.c.h.b16 %v2644
        %v3243 = vunpack.c.l.b16 %v2645
        %v3244 = vunpack.c.h.b16 %v2645
        %v3245 = vunpack.c.l.b16 %v2646
        %v3246 = vunpack.c.h.b16 %v2646
        %v3247 = vunpack.c.l.b16 %v2647
        %v3248 = vunpack.c.h.b16 %v2647
        %v3249 = vunpack.c.l.b16 %v2648
        %v3250 = vunpack.c.h.b16 %v2648
        %v3251 = vunpack.c.l.b16 %v2649
        %v3252 = vunpack.c.h.b16 %v2649
        %v3253 = vunpack.c.l.b16 %v2650
        %v3254 = vunpack.c.h.b16 %v2650
        %v3255 = vunpack.c.l.b16 %v2651
        %v3256 = vunpack.c.h.b16 %v2651
        %v3257 = vunpack.c.l.b16 %v2652
        %v3258 = vunpack.c.h.b16 %v2652
        %v3259 = vunpack.c.l.b16 %v2653
        %v3260 = vunpack.c.h.b16 %v2653
        %v3261 = vunpack.c.l.b16 %v2654
        %v3262 = vunpack.c.h.b16 %v2654
        %v3263 = vunpack.c.l.b16 %v2655
        %v3264 = vunpack.c.h.b16 %v2655
        %v3265 = vunpack.c.l.b16 %v2656
        %v3266 = vunpack.c.h.b16 %v2656
        %v3267 = vunpack.c.l.b16 %v2657
        %v3268 = vunpack.c.h.b16 %v2657
        %v3269 = vunpack.c.l.b16 %v2658
        %v3270 = vunpack.c.h.b16 %v2658
        %v3271 = vunpack.c.l.b16 %v2659
        %v3272 = vunpack.c.h.b16 %v2659
        %v3273 = vunpack.c.l.b16 %v2660
        %v3274 = vunpack.c.h.b16 %v2660
        %v3275 = vunpack.c.l.b16 %v2661
        %v3276 = vunpack.c.h.b16 %v2661
        %v3277 = vunpack.c.l.b16 %v2662
        %v3278 = vunpack.c.h.b16 %v2662
        %v3279 = vunpack.c.l.b16 %v2663
        %v3280 = vunpack.c.h.b16 %v2663
        %v3281 = vunpack.c.l.b16 %v2664
        %v3282 = vunpack.c.h.b16 %v2664
        %v3283 = vunpack.c.l.b16 %v2665
        %v3284 = vunpack.c.h.b16 %v2665
        %v3285 = vunpack.c.l.b16 %v2666
        %v3286 = vunpack.c.h.b16 %v2666
        %v3287 = vunpack.c.l.b16 %v2667
        %v3288 = vunpack.c.h.b16 %v2667
        %v3289 = vunpack.c.l.b16 %v2668
        %v3290 = vunpack.c.h.b16 %v2668
        %v3291 = vunpack.c.l.b16 %v2669
        %v3292 = vunpack.c.h.b16 %v2669
        %v3293 = vunpack.c.l.b16 %v2670
        %v3294 = vunpack.c.h.b16 %v2670
        %v3295 = vunpack.c.l.b16 %v2671
        %v3296 = vunpack.c.h.b16 %v2671
        %v3297 = vunpack.c.l.b16 %v2672
        %v3298 = vunpack.c.h.b16 %v2672
        %v3299 = vunpack.c.l.b16 %v2673
        %v3300 = vunpack.c.h.b16 %v2673
        %v3301 = vunpack.c.l.b16 %v2674
        %v3302 = vunpack.c.h.b16 %v2674
        %v3303 = vunpack.c.l.b16 %v2675
        %v3304 = vunpack.c.h.b16 %v2675
        %v3305 = vunpack.c.l.b16 %v2676
        %v3306 = vunpack.c.h.b16 %v2676
        %v3307 = vpack.c.b16 %v3233, %v3231
        %v3308 = vpack.c.b16 %v3234, %v3232
        %v3309 = vpack.c.b16 %v3237, %v3235
        %v3310 = vpack.c.b16 %v3238, %v3236
        %v3311 = vpack.c.b16 %v3241, %v3239
        %v3312 = vpack.c.b16 %v3242, %v3240
        %v3313 = vpack.c.b16 %v3245, %v3243
        %v3314 = vpack.c.b16 %v3246, %v3244
        %v3315 = vpack.c.b16 %v3249, %v3247
        %v3316 = vpack.c.b16 %v3250, %v3248
        %v3317 = vpack.c.b16 %v3253, %v3251
        %v3318 = vpack.c.b16 %v3254, %v3252
        %v3319 = vpack.c.b16 %v3257, %v3255
        %v3320 = vpack.c.b16 %v3258, %v3256
        %v3321 = vpack.c.b16 %v3261, %v3259
        %v3322 = vpack.c.b16 %v3262, %v3260
        %v3323 = vpack.c.b16 %v3265, %v3263
        %v3324 = vpack.c.b16 %v3266, %v3264
        %v3325 = vpack.c.b16 %v3269, %v3267
        %v3326 = vpack.c.b16 %v3270, %v3268
        %v3327 = vpack.c.b16 %v3273, %v3271
        %v3328 = vpack.c.b16 %v3274, %v3272
        %v3329 = vpack.c.b16 %v3277, %v3275
        %v3330 = vpack.c.b16 %v3278, %v3276
        %v3331 = vpack.c.b16 %v3281, %v3279
        %v3332 = vpack.c.b16 %v3282, %v3280
        %v3333 = vpack.c.b16 %v3285, %v3283
        %v3334 = vpack.c.b16 %v3286, %v3284
        %v3335 = vpack.c.b16 %v3289, %v3287
        %v3336 = vpack.c.b16 %v3290, %v3288
        %v3337 = vpack.c.b16 %v3293, %v3291
        %v3338 = vpack.c.b16 %v3294, %v3292
        %v3339 = vpack.c.b16 %v3297, %v3295
        %v3340 = vpack.c.b16 %v3298, %v3296
        %v3341 = vpack.c.b16 %v3301, %v3299
        %v3342 = vpack.c.b16 %v3302, %v3300
        %v3343 = vpack.c.b16 %v3305, %v3303
        %v3344 = vpack.c.b16 %v3306, %v3304
        %v3384 = vsel %vm2585, %v2629, 0
        %v3386 = vsel %vm2585, %v2632, 0
        %v3388 = vsel %vm2585, %v2635, 0
        %v3390 = vsel %vm2585, %v2638, 0
        %3392 = vmatprep.subr.bf16.mxu0 %v3308
        %3393 = vmatpush1.bf16.msra.mxu0 %v3307
        %3394 = vmatprep.subr.bf16.mxu0 %v3310
        %3395 = vmatpush1.bf16.msra.mxu0 %v3309
        %3396 = vmatprep.subr.bf16.mxu0 %v3312
        %3397 = vmatpush1.bf16.msra.mxu0 %v3311
        %3398 = vmatprep.subr.bf16.mxu0 %v3314
        %3399 = vmatpush1.bf16.msra.mxu0 %v3313
        %3400 = vmatprep.subr.bf16.mxu0 %v3316
        %3401 = vmatpush1.bf16.msra.mxu0 %v3315
        %3402 = vmatprep.subr.bf16.mxu0 %v3318
        %3403 = vmatpush1.bf16.msra.mxu0 %v3317
        %3404 = vmatprep.subr.bf16.mxu0 %v3320
        %3405 = vmatpush1.bf16.msra.mxu0 %v3319
        %3406 = vmatprep.subr.bf16.mxu0 %v3322
        %3407 = vmatpush1.bf16.msra.mxu0 %v3321
        %3408 = vmatprep.subr.bf16.mxu0 %v3324
        %3409 = vmatpush1.bf16.msra.mxu0 %v3323
        %3410 = vmatprep.subr.bf16.mxu0 %v3326
        %3411 = vmatpush1.bf16.msra.mxu0 %v3325
        %3412 = vmatprep.subr.bf16.mxu0 %v3328
        %3413 = vmatpush1.bf16.msra.mxu0 %v3327
        %3414 = vmatprep.subr.bf16.mxu0 %v3330
        %3415 = vmatpush1.bf16.msra.mxu0 %v3329
        %3416 = vmatprep.subr.bf16.mxu0 %v3332
        %3417 = vmatpush1.bf16.msra.mxu0 %v3331
        %3418 = vmatprep.subr.bf16.mxu0 %v3334
        %3419 = vmatpush1.bf16.msra.mxu0 %v3333
        %3420 = vmatprep.subr.bf16.mxu0 %v3336
        %3421 = vmatpush1.bf16.msra.mxu0 %v3335
        %3422 = vmatprep.subr.bf16.mxu0 %v3338
        %3423 = vmatpush1.bf16.msra.mxu0 %v3337
        %3424 = vmatprep.mubr.bf16.mxu0 %v2628
        %3425 = vmatmul.mubr.bf16.gmra.mrb[0].mxu0 %v2627
        %v3426 = vpop.f32.mrb[0].mxu0
        %v3427 = vadd.f32 %v3155, %v3426
        %v3428 = vpop.f32.mrb[0].mxu0
        %v3429 = vadd.f32 %v3157, %v3428
        %v3430 = vpop.f32.mrb[0].mxu0
        %v3431 = vadd.f32 %v3159, %v3430
        %v3432 = vpop.f32.mrb[0].mxu0
        %v3433 = vadd.f32 %v3161, %v3432
        %3434 = vmatprep.mubr.bf16.mxu0 %v2631
        %3435 = vmatmul.mubr.bf16.gmra.mrb[0].mxu0 %v2630
        %v3436 = vpop.f32.mrb[0].mxu0
        %v3437 = vadd.f32 %v3165, %v3436
        %v3438 = vpop.f32.mrb[0].mxu0
        %v3439 = vadd.f32 %v3167, %v3438
        %v3440 = vpop.f32.mrb[0].mxu0
        %v3441 = vadd.f32 %v3169, %v3440
        %v3442 = vpop.f32.mrb[0].mxu0
        %v3443 = vadd.f32 %v3171, %v3442
        %3444 = vmatprep.mubr.bf16.mxu0 %v2634
        %3445 = vmatmul.mubr.bf16.gmra.mrb[0].mxu0 %v2633
        %v3446 = vpop.f32.mrb[0].mxu0
        %v3447 = vadd.f32 %v3175, %v3446
        %v3448 = vpop.f32.mrb[0].mxu0
        %v3449 = vadd.f32 %v3177, %v3448
        %v3450 = vpop.f32.mrb[0].mxu0
        %v3451 = vadd.f32 %v3179, %v3450
        %v3452 = vpop.f32.mrb[0].mxu0
        %v3453 = vadd.f32 %v3181, %v3452
        %3454 = vmatprep.mubr.bf16.mxu0 %v2637
        %3455 = vmatmul.mubr.bf16.gmra.mrb[0].mxu0 %v2636
        %v3456 = vpop.f32.mrb[0].mxu0
        %v3457 = vadd.f32 %v3185, %v3456
        %v3458 = vpop.f32.mrb[0].mxu0
        %v3459 = vadd.f32 %v3187, %v3458
        %v3460 = vpop.f32.mrb[0].mxu0
        %v3461 = vadd.f32 %v3189, %v3460
        %v3462 = vpop.f32.mrb[0].mxu0
        %v3463 = vadd.f32 %v3191, %v3462
        %3464 = vdwg.mxu0
        %3465 = vmatprep.subr.bf16.mxu0 %v3340
        %3466 = vmatpush1.bf16.msra.mxu0 %v3339
        %3467 = vmatprep.subr.bf16.mxu0 %v3342
        %3468 = vmatpush1.bf16.msra.mxu0 %v3341
        %3469 = vmatprep.subr.bf16.mxu0 %v3344
        %3470 = vmatpush1.bf16.msra.mxu0 %v3343
        %3471 = vmatprep.subr.bf16.mxu0 0
        %3472 = vmatpush1.bf16.msra.mxu0 0
        %3473 = vmatprep.subr.bf16.mxu0 0
        %3474 = vmatpush1.bf16.msra.mxu0 0
        %3475 = vmatprep.subr.bf16.mxu0 0
        %3476 = vmatpush1.bf16.msra.mxu0 0
        %3477 = vmatprep.subr.bf16.mxu0 0
        %3478 = vmatpush1.bf16.msra.mxu0 0
        %3479 = vmatprep.subr.bf16.mxu0 0
        %3480 = vmatpush1.bf16.msra.mxu0 0
        %3481 = vmatprep.subr.bf16.mxu0 0
        %3482 = vmatpush1.bf16.msra.mxu0 0
        %3483 = vmatprep.subr.bf16.mxu0 0
        %3484 = vmatpush1.bf16.msra.mxu0 0
        %3485 = vmatprep.subr.bf16.mxu0 0
        %3486 = vmatpush1.bf16.msra.mxu0 0
        %3487 = vmatprep.subr.bf16.mxu0 0
        %3488 = vmatpush1.bf16.msra.mxu0 0
        %3489 = vmatprep.subr.bf16.mxu0 0
        %3490 = vmatpush1.bf16.msra.mxu0 0
        %3491 = vmatprep.subr.bf16.mxu0 0
        %3492 = vmatpush1.bf16.msra.mxu0 0
        %3493 = vmatprep.subr.bf16.mxu0 0
        %3494 = vmatpush1.bf16.msra.mxu0 0
        %3495 = vmatprep.subr.bf16.mxu0 0
        %3496 = vmatpush1.bf16.msra.mxu0 0
        %3497 = vmatprep.mubr.bf16.mxu0 0
        %3498 = vmatmul.mubr.bf16.gmra.mrb[0].mxu0 %v3384
        %v3499 = vpop.f32.mrb[0].mxu0
        %v3500 = vadd.f32 %v3427, %v3499
        %v3501 = vpop.f32.mrb[0].mxu0
        %v3502 = vadd.f32 %v3429, %v3501
        %v3503 = vpop.f32.mrb[0].mxu0
        %v3504 = vadd.f32 %v3431, %v3503
        %v3505 = vpop.f32.mrb[0].mxu0
        %v3506 = vadd.f32 %v3433, %v3505
        %3507 = vmatprep.mubr.bf16.mxu0 0
        %3508 = vmatmul.mubr.bf16.gmra.mrb[0].mxu0 %v3386
        %v3509 = vpop.f32.mrb[0].mxu0
        %v3510 = vadd.f32 %v3437, %v3509
        %v3511 = vpop.f32.mrb[0].mxu0
        %v3512 = vadd.f32 %v3439, %v3511
        %v3513 = vpop.f32.mrb[0].mxu0
        %v3514 = vadd.f32 %v3441, %v3513
        %v3515 = vpop.f32.mrb[0].mxu0
        %v3516 = vadd.f32 %v3443, %v3515
        %3517 = vmatprep.mubr.bf16.mxu0 0
        %3518 = vmatmul.mubr.bf16.gmra.mrb[0].mxu0 %v3388
        %v3519 = vpop.f32.mrb[0].mxu0
        %v3520 = vadd.f32 %v3447, %v3519
        %v3521 = vpop.f32.mrb[0].mxu0
        %v3522 = vadd.f32 %v3449, %v3521
        %v3523 = vpop.f32.mrb[0].mxu0
        %v3524 = vadd.f32 %v3451, %v3523
        %v3525 = vpop.f32.mrb[0].mxu0
        %v3526 = vadd.f32 %v3453, %v3525
        %3527 = vmatprep.mubr.bf16.mxu0 0
        %3528 = vmatmul.mubr.bf16.gmra.mrb[0].mxu0 %v3390
        %v3529 = vpop.f32.mrb[0].mxu0
        %v3530 = vadd.f32 %v3457, %v3529
        %v3531 = vpop.f32.mrb[0].mxu0
        %v3532 = vadd.f32 %v3459, %v3531
        %v3533 = vpop.f32.mrb[0].mxu0
        %v3534 = vadd.f32 %v3461, %v3533
        %v3535 = vpop.f32.mrb[0].mxu0
        %v3536 = vadd.f32 %v3463, %v3535
        %3537 = vdwg.mxu0
        %v3538 = vld [vmem:[#allocation2] sm:$0xfc]
        %v3539 = vld [vmem:[#allocation2 + $0x8] sm:$0xfc]
        %v3540 = vld [vmem:[#allocation2 + $0x10] sm:$0xfc]
        %v3541 = vld [vmem:[#allocation2 + $0xc0] sm:$0x3]
        %v3542 = vld [vmem:[#allocation2 + $0xc8] sm:$0x3]
        %v3543 = vld [vmem:[#allocation2 + $0xd0] sm:$0x3]
        %v3544 = vpack.c.bf16 %v2606, %v3538
        %v3545 = vpack.c.bf16 %v2607, %v3539
        %v3546 = vpack.c.bf16 %v2608, %v3540
        %v3547 = vpack.c.bf16 %v3541, %v3541
        %v3548 = vpack.c.bf16 %v3542, %v3542
        %v3549 = vpack.c.bf16 %v3543, %v3543
        %s3550 = scalar_lea.vmem [#allocation12], 608
        %v3551 = vld [vmem:[%s3550] sm:$0xff]
        %v3552 = vld [vmem:[%s3550 + $0x8] sm:$0xff]
        %v3553 = vld [vmem:[%s3550 + $0x10] sm:$0xff]
        %v3554 = vld [vmem:[%s3550 + $0x18] sm:$0xff]
        %v3555 = vld [vmem:[%s3550 + $0x20] sm:$0xff]
        %v3556 = vld [vmem:[%s3550 + $0x28] sm:$0xff]
        %v3557 = vld [vmem:[%s3550 + $0x30] sm:$0xff]
        %v3558 = vld [vmem:[%s3550 + $0x38] sm:$0xff]
        %v3559 = vld [vmem:[%s3550 + $0x40] sm:$0xff]
        %v3560 = vld [vmem:[%s3550 + $0x48] sm:$0xff]
        %v3561 = vld [vmem:[%s3550 + $0x50] sm:$0xff]
        %v3562 = vld [vmem:[%s3550 + $0x58] sm:$0xff]
        %v3563 = vld [vmem:[%s3550 + $0x60] sm:$0xff]
        %v3564 = vld [vmem:[%s3550 + $0x68] sm:$0xff]
        %v3565 = vld [vmem:[%s3550 + $0x70] sm:$0xff]
        %v3566 = vld [vmem:[%s3550 + $0x78] sm:$0xff]
        %v3567 = vld [vmem:[%s3550 + $0x80] sm:$0xff]
        %v3568 = vld [vmem:[%s3550 + $0x88] sm:$0xff]
        %v3569 = vld [vmem:[%s3550 + $0x90] sm:$0xff]
        %v3570 = vld [vmem:[%s3550 + $0x98] sm:$0xff]
        %v3571 = vld [vmem:[%s3550 + $0xa0] sm:$0xff]
        %v3572 = vld [vmem:[%s3550 + $0xa8] sm:$0xff]
        %v3573 = vld [vmem:[%s3550 + $0xb0] sm:$0xff]
        %v3574 = vld [vmem:[%s3550 + $0xb8] sm:$0xff]
        %v3575 = vld [vmem:[%s3550 + $0xc0] sm:$0xff]
        %v3576 = vld [vmem:[%s3550 + $0xc8] sm:$0xff]
        %v3577 = vld [vmem:[%s3550 + $0xd0] sm:$0xff]
        %v3578 = vld [vmem:[%s3550 + $0xd8] sm:$0xff]
        %v3579 = vld [vmem:[%s3550 + $0xe0] sm:$0xff]
        %v3580 = vld [vmem:[%s3550 + $0xe8] sm:$0xff]
        %v3581 = vld [vmem:[%s3550 + $0xf0] sm:$0xff]
        %v3582 = vld [vmem:[%s3550 + $0xf8] sm:$0xff]
        %v3583 = vld [vmem:[%s3550 + $0x100] sm:$0xff]
        %v3584 = vld [vmem:[%s3550 + $0x108] sm:$0xff]
        %v3585 = vld [vmem:[%s3550 + $0x110] sm:$0xff]
        %v3586 = vld [vmem:[%s3550 + $0x118] sm:$0xff]
        %v3587 = vld [vmem:[%s3550 + $0x120] sm:$0xff]
        %v3588 = vld [vmem:[%s3550 + $0x128] sm:$0xff]
        %vm3604 = vcmask 1046528
        %v3605 = vrot.slane %v3544, 1
        %v3606 = vrot.slane %v2630, 1
        %v3607 = vsel %vm3604, %v3605, %v3606
        %v3608 = vrot.slane %v3545, 1
        %v3609 = vrot.slane %v2631, 1
        %v3610 = vsel %vm3604, %v3608, %v3609
        %v3611 = vrot.slane %v3546, 1
        %v3612 = vrot.slane %v2632, 1
        %v3613 = vsel %vm3604, %v3611, %v3612
        %v3614 = vrot.slane %v2633, 1
        %v3615 = vsel %vm3604, %v3606, %v3614
        %v3616 = vrot.slane %v2634, 1
        %v3617 = vsel %vm3604, %v3609, %v3616
        %v3618 = vrot.slane %v2635, 1
        %v3619 = vsel %vm3604, %v3612, %v3618
        %v3620 = vrot.slane %v2636, 1
        %v3621 = vsel %vm3604, %v3614, %v3620
        %v3622 = vrot.slane %v2637, 1
        %v3623 = vsel %vm3604, %v3616, %v3622
        %v3624 = vrot.slane %v2638, 1
        %v3625 = vsel %vm3604, %v3618, %v3624
        %v3626 = vrot.slane %v3547, 1
        %v3627 = vsel %vm3604, %v3620, %v3626
        %v3628 = vrot.slane %v3548, 1
        %v3629 = vsel %vm3604, %v3622, %v3628
        %v3630 = vrot.slane %v3549, 1
        %v3631 = vsel %vm3604, %v3624, %v3630
        %v3678 = vunpack.c.l.b16 %v3551
        %v3679 = vunpack.c.h.b16 %v3551
        %v3680 = vunpack.c.l.b16 %v3552
        %v3681 = vunpack.c.h.b16 %v3552
        %v3682 = vunpack.c.l.b16 %v3553
        %v3683 = vunpack.c.h.b16 %v3553
        %v3684 = vunpack.c.l.b16 %v3554
        %v3685 = vunpack.c.h.b16 %v3554
        %v3686 = vunpack.c.l.b16 %v3555
        %v3687 = vunpack.c.h.b16 %v3555
        %v3688 = vunpack.c.l.b16 %v3556
        %v3689 = vunpack.c.h.b16 %v3556
        %v3690 = vunpack.c.l.b16 %v3557
        %v3691 = vunpack.c.h.b16 %v3557
        %v3692 = vunpack.c.l.b16 %v3558
        %v3693 = vunpack.c.h.b16 %v3558
        %v3694 = vunpack.c.l.b16 %v3559
        %v3695 = vunpack.c.h.b16 %v3559
        %v3696 = vunpack.c.l.b16 %v3560
        %v3697 = vunpack.c.h.b16 %v3560
        %v3698 = vunpack.c.l.b16 %v3561
        %v3699 = vunpack.c.h.b16 %v3561
        %v3700 = vunpack.c.l.b16 %v3562
        %v3701 = vunpack.c.h.b16 %v3562
        %v3702 = vunpack.c.l.b16 %v3563
        %v3703 = vunpack.c.h.b16 %v3563
        %v3704 = vunpack.c.l.b16 %v3564
        %v3705 = vunpack.c.h.b16 %v3564
        %v3706 = vunpack.c.l.b16 %v3565
        %v3707 = vunpack.c.h.b16 %v3565
        %v3708 = vunpack.c.l.b16 %v3566
        %v3709 = vunpack.c.h.b16 %v3566
        %v3710 = vunpack.c.l.b16 %v3567
        %v3711 = vunpack.c.h.b16 %v3567
        %v3712 = vunpack.c.l.b16 %v3568
        %v3713 = vunpack.c.h.b16 %v3568
        %v3714 = vunpack.c.l.b16 %v3569
        %v3715 = vunpack.c.h.b16 %v3569
        %v3716 = vunpack.c.l.b16 %v3570
        %v3717 = vunpack.c.h.b16 %v3570
        %v3718 = vunpack.c.l.b16 %v3571
        %v3719 = vunpack.c.h.b16 %v3571
        %v3720 = vunpack.c.l.b16 %v3572
        %v3721 = vunpack.c.h.b16 %v3572
        %v3722 = vunpack.c.l.b16 %v3573
        %v3723 = vunpack.c.h.b16 %v3573
        %v3724 = vunpack.c.l.b16 %v3574
        %v3725 = vunpack.c.h.b16 %v3574
        %v3726 = vunpack.c.l.b16 %v3575
        %v3727 = vunpack.c.h.b16 %v3575
        %v3728 = vunpack.c.l.b16 %v3576
        %v3729 = vunpack.c.h.b16 %v3576
        %v3730 = vunpack.c.l.b16 %v3577
        %v3731 = vunpack.c.h.b16 %v3577
        %v3732 = vunpack.c.l.b16 %v3578
        %v3733 = vunpack.c.h.b16 %v3578
        %v3734 = vunpack.c.l.b16 %v3579
        %v3735 = vunpack.c.h.b16 %v3579
        %v3736 = vunpack.c.l.b16 %v3580
        %v3737 = vunpack.c.h.b16 %v3580
        %v3738 = vunpack.c.l.b16 %v3581
        %v3739 = vunpack.c.h.b16 %v3581
        %v3740 = vunpack.c.l.b16 %v3582
        %v3741 = vunpack.c.h.b16 %v3582
        %v3742 = vunpack.c.l.b16 %v3583
        %v3743 = vunpack.c.h.b16 %v3583
        %v3744 = vunpack.c.l.b16 %v3584
        %v3745 = vunpack.c.h.b16 %v3584
        %v3746 = vunpack.c.l.b16 %v3585
        %v3747 = vunpack.c.h.b16 %v3585
        %v3748 = vunpack.c.l.b16 %v3586
        %v3749 = vunpack.c.h.b16 %v3586
        %v3750 = vunpack.c.l.b16 %v3587
        %v3751 = vunpack.c.h.b16 %v3587
        %v3752 = vunpack.c.l.b16 %v3588
        %v3753 = vunpack.c.h.b16 %v3588
        %v3754 = vpack.c.b16 %v3680, %v3678
        %v3755 = vpack.c.b16 %v3681, %v3679
        %v3756 = vpack.c.b16 %v3684, %v3682
        %v3757 = vpack.c.b16 %v3685, %v3683
        %v3758 = vpack.c.b16 %v3688, %v3686
        %v3759 = vpack.c.b16 %v3689, %v3687
        %v3760 = vpack.c.b16 %v3692, %v3690
        %v3761 = vpack.c.b16 %v3693, %v3691
        %v3762 = vpack.c.b16 %v3696, %v3694
        %v3763 = vpack.c.b16 %v3697, %v3695
        %v3764 = vpack.c.b16 %v3700, %v3698
        %v3765 = vpack.c.b16 %v3701, %v3699
        %v3766 = vpack.c.b16 %v3704, %v3702
        %v3767 = vpack.c.b16 %v3705, %v3703
        %v3768 = vpack.c.b16 %v3708, %v3706
        %v3769 = vpack.c.b16 %v3709, %v3707
        %v3770 = vpack.c.b16 %v3712, %v3710
        %v3771 = vpack.c.b16 %v3713, %v3711
        %v3772 = vpack.c.b16 %v3716, %v3714
        %v3773 = vpack.c.b16 %v3717, %v3715
        %v3774 = vpack.c.b16 %v3720, %v3718
        %v3775 = vpack.c.b16 %v3721, %v3719
        %v3776 = vpack.c.b16 %v3724, %v3722
        %v3777 = vpack.c.b16 %v3725, %v3723
        %v3778 = vpack.c.b16 %v3728, %v3726
        %v3779 = vpack.c.b16 %v3729, %v3727
        %v3780 = vpack.c.b16 %v3732, %v3730
        %v3781 = vpack.c.b16 %v3733, %v3731
        %v3782 = vpack.c.b16 %v3736, %v3734
        %v3783 = vpack.c.b16 %v3737, %v3735
        %v3784 = vpack.c.b16 %v3740, %v3738
        %v3785 = vpack.c.b16 %v3741, %v3739
        %v3786 = vpack.c.b16 %v3744, %v3742
        %v3787 = vpack.c.b16 %v3745, %v3743
        %v3788 = vpack.c.b16 %v3748, %v3746
        %v3789 = vpack.c.b16 %v3749, %v3747
        %v3790 = vpack.c.b16 %v3752, %v3750
        %v3791 = vpack.c.b16 %v3753, %v3751
        %v3831 = vsel %vm2585, %v3613, 0
        %v3834 = vsel %vm2585, %v3619, 0
        %v3837 = vsel %vm2585, %v3625, 0
        %v3840 = vsel %vm2585, %v3631, 0
        %3842 = vmatprep.subr.bf16.mxu0 %v3755
        %3843 = vmatpush1.bf16.msra.mxu0 %v3754
        %3844 = vmatprep.subr.bf16.mxu0 %v3757
        %3845 = vmatpush1.bf16.msra.mxu0 %v3756
        %3846 = vmatprep.subr.bf16.mxu0 %v3759
        %3847 = vmatpush1.bf16.msra.mxu0 %v3758
        %3848 = vmatprep.subr.bf16.mxu0 %v3761
        %3849 = vmatpush1.bf16.msra.mxu0 %v3760
        %3850 = vmatprep.subr.bf16.mxu0 %v3763
        %3851 = vmatpush1.bf16.msra.mxu0 %v3762
        %3852 = vmatprep.subr.bf16.mxu0 %v3765
        %3853 = vmatpush1.bf16.msra.mxu0 %v3764
        %3854 = vmatprep.subr.bf16.mxu0 %v3767
        %3855 = vmatpush1.bf16.msra.mxu0 %v3766
        %3856 = vmatprep.subr.bf16.mxu0 %v3769
        %3857 = vmatpush1.bf16.msra.mxu0 %v3768
        %3858 = vmatprep.subr.bf16.mxu0 %v3771
        %3859 = vmatpush1.bf16.msra.mxu0 %v3770
        %3860 = vmatprep.subr.bf16.mxu0 %v3773
        %3861 = vmatpush1.bf16.msra.mxu0 %v3772
        %3862 = vmatprep.subr.bf16.mxu0 %v3775
        %3863 = vmatpush1.bf16.msra.mxu0 %v3774
        %3864 = vmatprep.subr.bf16.mxu0 %v3777
        %3865 = vmatpush1.bf16.msra.mxu0 %v3776
        %3866 = vmatprep.subr.bf16.mxu0 %v3779
        %3867 = vmatpush1.bf16.msra.mxu0 %v3778
        %3868 = vmatprep.subr.bf16.mxu0 %v3781
        %3869 = vmatpush1.bf16.msra.mxu0 %v3780
        %3870 = vmatprep.subr.bf16.mxu0 %v3783
        %3871 = vmatpush1.bf16.msra.mxu0 %v3782
        %3872 = vmatprep.subr.bf16.mxu0 %v3785
        %3873 = vmatpush1.bf16.msra.mxu0 %v3784
        %3874 = vmatprep.mubr.bf16.mxu0 %v3610
        %3875 = vmatmul.mubr.bf16.gmra.mrb[0].mxu0 %v3607
        %v3876 = vpop.f32.mrb[0].mxu0
        %v3877 = vadd.f32 0.0, %v3876
        %v3878 = vpop.f32.mrb[0].mxu0
        %v3879 = vadd.f32 0.0, %v3878
        %v3880 = vpop.f32.mrb[0].mxu0
        %v3881 = vadd.f32 0.0, %v3880
        %v3882 = vpop.f32.mrb[0].mxu0
        %v3883 = vadd.f32 0.0, %v3882
        %3884 = vmatprep.mubr.bf16.mxu0 %v3617
        %3885 = vmatmul.mubr.bf16.gmra.mrb[0].mxu0 %v3615
        %v3886 = vpop.f32.mrb[0].mxu0
        %v3887 = vadd.f32 0.0, %v3886
        %v3888 = vpop.f32.mrb[0].mxu0
        %v3889 = vadd.f32 0.0, %v3888
        %v3890 = vpop.f32.mrb[0].mxu0
        %v3891 = vadd.f32 0.0, %v3890
        %v3892 = vpop.f32.mrb[0].mxu0
        %v3893 = vadd.f32 0.0, %v3892
        %3894 = vmatprep.mubr.bf16.mxu0 %v3623
        %3895 = vmatmul.mubr.bf16.gmra.mrb[0].mxu0 %v3621
        %v3896 = vpop.f32.mrb[0].mxu0
        %v3897 = vadd.f32 0.0, %v3896
        %v3898 = vpop.f32.mrb[0].mxu0
        %v3899 = vadd.f32 0.0, %v3898
        %v3900 = vpop.f32.mrb[0].mxu0
        %v3901 = vadd.f32 0.0, %v3900
        %v3902 = vpop.f32.mrb[0].mxu0
        %v3903 = vadd.f32 0.0, %v3902
        %3904 = vmatprep.mubr.bf16.mxu0 %v3629
        %3905 = vmatmul.mubr.bf16.gmra.mrb[0].mxu0 %v3627
        %v3906 = vpop.f32.mrb[0].mxu0
        %v3907 = vadd.f32 0.0, %v3906
        %v3908 = vpop.f32.mrb[0].mxu0
        %v3909 = vadd.f32 0.0, %v3908
        %v3910 = vpop.f32.mrb[0].mxu0
        %v3911 = vadd.f32 0.0, %v3910
        %v3912 = vpop.f32.mrb[0].mxu0
        %v3913 = vadd.f32 0.0, %v3912
        %3914 = vdwg.mxu0
        %3915 = vmatprep.subr.bf16.mxu0 %v3787
        %3916 = vmatpush1.bf16.msra.mxu0 %v3786
        %3917 = vmatprep.subr.bf16.mxu0 %v3789
        %3918 = vmatpush1.bf16.msra.mxu0 %v3788
        %3919 = vmatprep.subr.bf16.mxu0 %v3791
        %3920 = vmatpush1.bf16.msra.mxu0 %v3790
        %3921 = vmatprep.subr.bf16.mxu0 0
        %3922 = vmatpush1.bf16.msra.mxu0 0
        %3923 = vmatprep.subr.bf16.mxu0 0
        %3924 = vmatpush1.bf16.msra.mxu0 0
        %3925 = vmatprep.subr.bf16.mxu0 0
        %3926 = vmatpush1.bf16.msra.mxu0 0
        %3927 = vmatprep.subr.bf16.mxu0 0
        %3928 = vmatpush1.bf16.msra.mxu0 0
        %3929 = vmatprep.subr.bf16.mxu0 0
        %3930 = vmatpush1.bf16.msra.mxu0 0
        %3931 = vmatprep.subr.bf16.mxu0 0
        %3932 = vmatpush1.bf16.msra.mxu0 0
        %3933 = vmatprep.subr.bf16.mxu0 0
        %3934 = vmatpush1.bf16.msra.mxu0 0
        %3935 = vmatprep.subr.bf16.mxu0 0
        %3936 = vmatpush1.bf16.msra.mxu0 0
        %3937 = vmatprep.subr.bf16.mxu0 0
        %3938 = vmatpush1.bf16.msra.mxu0 0
        %3939 = vmatprep.subr.bf16.mxu0 0
        %3940 = vmatpush1.bf16.msra.mxu0 0
        %3941 = vmatprep.subr.bf16.mxu0 0
        %3942 = vmatpush1.bf16.msra.mxu0 0
        %3943 = vmatprep.subr.bf16.mxu0 0
        %3944 = vmatpush1.bf16.msra.mxu0 0
        %3945 = vmatprep.subr.bf16.mxu0 0
        %3946 = vmatpush1.bf16.msra.mxu0 0
        %3947 = vmatprep.mubr.bf16.mxu0 0
        %3948 = vmatmul.mubr.bf16.gmra.mrb[0].mxu0 %v3831
        %v3949 = vpop.f32.mrb[0].mxu0
        %v3950 = vadd.f32 %v3877, %v3949
        %v3951 = vpop.f32.mrb[0].mxu0
        %v3952 = vadd.f32 %v3879, %v3951
        %v3953 = vpop.f32.mrb[0].mxu0
        %v3954 = vadd.f32 %v3881, %v3953
        %v3955 = vpop.f32.mrb[0].mxu0
        %v3956 = vadd.f32 %v3883, %v3955
        %3957 = vmatprep.mubr.bf16.mxu0 0
        %3958 = vmatmul.mubr.bf16.gmra.mrb[0].mxu0 %v3834
        %v3959 = vpop.f32.mrb[0].mxu0
        %v3960 = vadd.f32 %v3887, %v3959
        %v3961 = vpop.f32.mrb[0].mxu0
        %v3962 = vadd.f32 %v3889, %v3961
        %v3963 = vpop.f32.mrb[0].mxu0
        %v3964 = vadd.f32 %v3891, %v3963
        %v3965 = vpop.f32.mrb[0].mxu0
        %v3966 = vadd.f32 %v3893, %v3965
        %3967 = vmatprep.mubr.bf16.mxu0 0
        %3968 = vmatmul.mubr.bf16.gmra.mrb[0].mxu0 %v3837
        %v3969 = vpop.f32.mrb[0].mxu0
        %v3970 = vadd.f32 %v3897, %v3969
        %v3971 = vpop.f32.mrb[0].mxu0
        %v3972 = vadd.f32 %v3899, %v3971
        %v3973 = vpop.f32.mrb[0].mxu0
        %v3974 = vadd.f32 %v3901, %v3973
        %v3975 = vpop.f32.mrb[0].mxu0
        %v3976 = vadd.f32 %v3903, %v3975
        %3977 = vmatprep.mubr.bf16.mxu0 0
        %3978 = vmatmul.mubr.bf16.gmra.mrb[0].mxu0 %v3840
        %v3979 = vpop.f32.mrb[0].mxu0
        %v3980 = vadd.f32 %v3907, %v3979
        %v3981 = vpop.f32.mrb[0].mxu0
        %v3982 = vadd.f32 %v3909, %v3981
        %v3983 = vpop.f32.mrb[0].mxu0
        %v3984 = vadd.f32 %v3911, %v3983
        %v3985 = vpop.f32.mrb[0].mxu0
        %v3986 = vadd.f32 %v3913, %v3985
        %3987 = vdwg.mxu0
        %v3988 = vadd.f32 %v3500, %v3950
        %v3989 = vadd.f32 %v3502, %v3952
        %v3990 = vadd.f32 %v3504, %v3954
        %v3991 = vadd.f32 %v3506, %v3956
        %v3992 = vadd.f32 %v3510, %v3960
        %v3993 = vadd.f32 %v3512, %v3962
        %v3994 = vadd.f32 %v3514, %v3964
        %v3995 = vadd.f32 %v3516, %v3966
        %v3996 = vadd.f32 %v3520, %v3970
        %v3997 = vadd.f32 %v3522, %v3972
        %v3998 = vadd.f32 %v3524, %v3974
        %v3999 = vadd.f32 %v3526, %v3976
        %v4000 = vadd.f32 %v3530, %v3980
        %v4001 = vadd.f32 %v3532, %v3982
        %v4002 = vadd.f32 %v3534, %v3984
        %v4003 = vadd.f32 %v3536, %v3986
        %v4004 = vld [vmem:[#allocation2 + $0xc0] sm:$0xff]
        %v4005 = vld [vmem:[#allocation2 + $0xc8] sm:$0xff]
        %v4006 = vld [vmem:[#allocation2 + $0xd0] sm:$0xff]
        %v4007 = vpack.c.bf16 %v2609, %v2606
        %v4008 = vpack.c.bf16 %v2610, %v2607
        %v4009 = vpack.c.bf16 %v2611, %v2608
        %v4010 = vpack.c.bf16 %v2615, %v2612
        %v4011 = vpack.c.bf16 %v2616, %v2613
        %v4012 = vpack.c.bf16 %v2617, %v2614
        %v4013 = vpack.c.bf16 %v2621, %v2618
        %v4014 = vpack.c.bf16 %v2622, %v2619
        %v4015 = vpack.c.bf16 %v2623, %v2620
        %v4016 = vpack.c.bf16 %v4004, %v2624
        %v4017 = vpack.c.bf16 %v4005, %v2625
        %v4018 = vpack.c.bf16 %v4006, %v2626
        %s4019 = scalar_lea.vmem [#allocation12], 912
        %v4020 = vld [vmem:[%s4019] sm:$0xff]
        %v4021 = vld [vmem:[%s4019 + $0x8] sm:$0xff]
        %v4022 = vld [vmem:[%s4019 + $0x10] sm:$0xff]
        %v4023 = vld [vmem:[%s4019 + $0x18] sm:$0xff]
        %v4024 = vld [vmem:[%s4019 + $0x20] sm:$0xff]
        %v4025 = vld [vmem:[%s4019 + $0x28] sm:$0xff]
        %v4026 = vld [vmem:[%s4019 + $0x30] sm:$0xff]
        %v4027 = vld [vmem:[%s4019 + $0x38] sm:$0xff]
        %v4028 = vld [vmem:[%s4019 + $0x40] sm:$0xff]
        %v4029 = vld [vmem:[%s4019 + $0x48] sm:$0xff]
        %v4030 = vld [vmem:[%s4019 + $0x50] sm:$0xff]
        %v4031 = vld [vmem:[%s4019 + $0x58] sm:$0xff]
        %v4032 = vld [vmem:[%s4019 + $0x60] sm:$0xff]
        %v4033 = vld [vmem:[%s4019 + $0x68] sm:$0xff]
        %v4034 = vld [vmem:[%s4019 + $0x70] sm:$0xff]
        %v4035 = vld [vmem:[%s4019 + $0x78] sm:$0xff]
        %v4036 = vld [vmem:[%s4019 + $0x80] sm:$0xff]
        %v4037 = vld [vmem:[%s4019 + $0x88] sm:$0xff]
        %v4038 = vld [vmem:[%s4019 + $0x90] sm:$0xff]
        %v4039 = vld [vmem:[%s4019 + $0x98] sm:$0xff]
        %v4040 = vld [vmem:[%s4019 + $0xa0] sm:$0xff]
        %v4041 = vld [vmem:[%s4019 + $0xa8] sm:$0xff]
        %v4042 = vld [vmem:[%s4019 + $0xb0] sm:$0xff]
        %v4043 = vld [vmem:[%s4019 + $0xb8] sm:$0xff]
        %v4044 = vld [vmem:[%s4019 + $0xc0] sm:$0xff]
        %v4045 = vld [vmem:[%s4019 + $0xc8] sm:$0xff]
        %v4046 = vld [vmem:[%s4019 + $0xd0] sm:$0xff]
        %v4047 = vld [vmem:[%s4019 + $0xd8] sm:$0xff]
        %v4048 = vld [vmem:[%s4019 + $0xe0] sm:$0xff]
        %v4049 = vld [vmem:[%s4019 + $0xe8] sm:$0xff]
        %v4050 = vld [vmem:[%s4019 + $0xf0] sm:$0xff]
        %v4051 = vld [vmem:[%s4019 + $0xf8] sm:$0xff]
        %v4052 = vld [vmem:[%s4019 + $0x100] sm:$0xff]
        %v4053 = vld [vmem:[%s4019 + $0x108] sm:$0xff]
        %v4054 = vld [vmem:[%s4019 + $0x110] sm:$0xff]
        %v4055 = vld [vmem:[%s4019 + $0x118] sm:$0xff]
        %v4056 = vld [vmem:[%s4019 + $0x120] sm:$0xff]
        %v4057 = vld [vmem:[%s4019 + $0x128] sm:$0xff]
        %v4096 = vunpack.c.l.b16 %v4020
        %v4097 = vunpack.c.h.b16 %v4020
        %v4098 = vunpack.c.l.b16 %v4021
        %v4099 = vunpack.c.h.b16 %v4021
        %v4100 = vunpack.c.l.b16 %v4022
        %v4101 = vunpack.c.h.b16 %v4022
        %v4102 = vunpack.c.l.b16 %v4023
        %v4103 = vunpack.c.h.b16 %v4023
        %v4104 = vunpack.c.l.b16 %v4024
        %v4105 = vunpack.c.h.b16 %v4024
        %v4106 = vunpack.c.l.b16 %v4025
        %v4107 = vunpack.c.h.b16 %v4025
        %v4108 = vunpack.c.l.b16 %v4026
        %v4109 = vunpack.c.h.b16 %v4026
        %v4110 = vunpack.c.l.b16 %v4027
        %v4111 = vunpack.c.h.b16 %v4027
        %v4112 = vunpack.c.l.b16 %v4028
        %v4113 = vunpack.c.h.b16 %v4028
        %v4114 = vunpack.c.l.b16 %v4029
        %v4115 = vunpack.c.h.b16 %v4029
        %v4116 = vunpack.c.l.b16 %v4030
        %v4117 = vunpack.c.h.b16 %v4030
        %v4118 = vunpack.c.l.b16 %v4031
        %v4119 = vunpack.c.h.b16 %v4031
        %v4120 = vunpack.c.l.b16 %v4032
        %v4121 = vunpack.c.h.b16 %v4032
        %v4122 = vunpack.c.l.b16 %v4033
        %v4123 = vunpack.c.h.b16 %v4033
        %v4124 = vunpack.c.l.b16 %v4034
        %v4125 = vunpack.c.h.b16 %v4034
        %v4126 = vunpack.c.l.b16 %v4035
        %v4127 = vunpack.c.h.b16 %v4035
        %v4128 = vunpack.c.l.b16 %v4036
        %v4129 = vunpack.c.h.b16 %v4036
        %v4130 = vunpack.c.l.b16 %v4037
        %v4131 = vunpack.c.h.b16 %v4037
        %v4132 = vunpack.c.l.b16 %v4038
        %v4133 = vunpack.c.h.b16 %v4038
        %v4134 = vunpack.c.l.b16 %v4039
        %v4135 = vunpack.c.h.b16 %v4039
        %v4136 = vunpack.c.l.b16 %v4040
        %v4137 = vunpack.c.h.b16 %v4040
        %v4138 = vunpack.c.l.b16 %v4041
        %v4139 = vunpack.c.h.b16 %v4041
        %v4140 = vunpack.c.l.b16 %v4042
        %v4141 = vunpack.c.h.b16 %v4042
        %v4142 = vunpack.c.l.b16 %v4043
        %v4143 = vunpack.c.h.b16 %v4043
        %v4144 = vunpack.c.l.b16 %v4044
        %v4145 = vunpack.c.h.b16 %v4044
        %v4146 = vunpack.c.l.b16 %v4045
        %v4147 = vunpack.c.h.b16 %v4045
        %v4148 = vunpack.c.l.b16 %v4046
        %v4149 = vunpack.c.h.b16 %v4046
        %v4150 = vunpack.c.l.b16 %v4047
        %v4151 = vunpack.c.h.b16 %v4047
        %v4152 = vunpack.c.l.b16 %v4048
        %v4153 = vunpack.c.h.b16 %v4048
        %v4154 = vunpack.c.l.b16 %v4049
        %v4155 = vunpack.c.h.b16 %v4049
        %v4156 = vunpack.c.l.b16 %v4050
        %v4157 = vunpack.c.h.b16 %v4050
        %v4158 = vunpack.c.l.b16 %v4051
        %v4159 = vunpack.c.h.b16 %v4051
        %v4160 = vunpack.c.l.b16 %v4052
        %v4161 = vunpack.c.h.b16 %v4052
        %v4162 = vunpack.c.l.b16 %v4053
        %v4163 = vunpack.c.h.b16 %v4053
        %v4164 = vunpack.c.l.b16 %v4054
        %v4165 = vunpack.c.h.b16 %v4054
        %v4166 = vunpack.c.l.b16 %v4055
        %v4167 = vunpack.c.h.b16 %v4055
        %v4168 = vunpack.c.l.b16 %v4056
        %v4169 = vunpack.c.h.b16 %v4056
        %v4170 = vunpack.c.l.b16 %v4057
        %v4171 = vunpack.c.h.b16 %v4057
        %v4172 = vpack.c.b16 %v4098, %v4096
        %v4173 = vpack.c.b16 %v4099, %v4097
        %v4174 = vpack.c.b16 %v4102, %v4100
        %v4175 = vpack.c.b16 %v4103, %v4101
        %v4176 = vpack.c.b16 %v4106, %v4104
        %v4177 = vpack.c.b16 %v4107, %v4105
        %v4178 = vpack.c.b16 %v4110, %v4108
        %v4179 = vpack.c.b16 %v4111, %v4109
        %v4180 = vpack.c.b16 %v4114, %v4112
        %v4181 = vpack.c.b16 %v4115, %v4113
        %v4182 = vpack.c.b16 %v4118, %v4116
        %v4183 = vpack.c.b16 %v4119, %v4117
        %v4184 = vpack.c.b16 %v4122, %v4120
        %v4185 = vpack.c.b16 %v4123, %v4121
        %v4186 = vpack.c.b16 %v4126, %v4124
        %v4187 = vpack.c.b16 %v4127, %v4125
        %v4188 = vpack.c.b16 %v4130, %v4128
        %v4189 = vpack.c.b16 %v4131, %v4129
        %v4190 = vpack.c.b16 %v4134, %v4132
        %v4191 = vpack.c.b16 %v4135, %v4133
        %v4192 = vpack.c.b16 %v4138, %v4136
        %v4193 = vpack.c.b16 %v4139, %v4137
        %v4194 = vpack.c.b16 %v4142, %v4140
        %v4195 = vpack.c.b16 %v4143, %v4141
        %v4196 = vpack.c.b16 %v4146, %v4144
        %v4197 = vpack.c.b16 %v4147, %v4145
        %v4198 = vpack.c.b16 %v4150, %v4148
        %v4199 = vpack.c.b16 %v4151, %v4149
        %v4200 = vpack.c.b16 %v4154, %v4152
        %v4201 = vpack.c.b16 %v4155, %v4153
        %v4202 = vpack.c.b16 %v4158, %v4156
        %v4203 = vpack.c.b16 %v4159, %v4157
        %v4204 = vpack.c.b16 %v4162, %v4160
        %v4205 = vpack.c.b16 %v4163, %v4161
        %v4206 = vpack.c.b16 %v4166, %v4164
        %v4207 = vpack.c.b16 %v4167, %v4165
        %v4208 = vpack.c.b16 %v4170, %v4168
        %v4209 = vpack.c.b16 %v4171, %v4169
        %v4249 = vsel %vm2585, %v4009, 0
        %v4252 = vsel %vm2585, %v4012, 0
        %v4255 = vsel %vm2585, %v4015, 0
        %v4258 = vsel %vm2585, %v4018, 0
        %4260 = vmatprep.subr.bf16.mxu0 %v4173
        %4261 = vmatpush1.bf16.msra.mxu0 %v4172
        %4262 = vmatprep.subr.bf16.mxu0 %v4175
        %4263 = vmatpush1.bf16.msra.mxu0 %v4174
        %4264 = vmatprep.subr.bf16.mxu0 %v4177
        %4265 = vmatpush1.bf16.msra.mxu0 %v4176
        %4266 = vmatprep.subr.bf16.mxu0 %v4179
        %4267 = vmatpush1.bf16.msra.mxu0 %v4178
        %4268 = vmatprep.subr.bf16.mxu0 %v4181
        %4269 = vmatpush1.bf16.msra.mxu0 %v4180
        %4270 = vmatprep.subr.bf16.mxu0 %v4183
        %4271 = vmatpush1.bf16.msra.mxu0 %v4182
        %4272 = vmatprep.subr.bf16.mxu0 %v4185
        %4273 = vmatpush1.bf16.msra.mxu0 %v4184
        %4274 = vmatprep.subr.bf16.mxu0 %v4187
        %4275 = vmatpush1.bf16.msra.mxu0 %v4186
        %4276 = vmatprep.subr.bf16.mxu0 %v4189
        %4277 = vmatpush1.bf16.msra.mxu0 %v4188
        %4278 = vmatprep.subr.bf16.mxu0 %v4191
        %4279 = vmatpush1.bf16.msra.mxu0 %v4190
        %4280 = vmatprep.subr.bf16.mxu0 %v4193
        %4281 = vmatpush1.bf16.msra.mxu0 %v4192
        %4282 = vmatprep.subr.bf16.mxu0 %v4195
        %4283 = vmatpush1.bf16.msra.mxu0 %v4194
        %4284 = vmatprep.subr.bf16.mxu0 %v4197
        %4285 = vmatpush1.bf16.msra.mxu0 %v4196
        %4286 = vmatprep.subr.bf16.mxu0 %v4199
        %4287 = vmatpush1.bf16.msra.mxu0 %v4198
        %4288 = vmatprep.subr.bf16.mxu0 %v4201
        %4289 = vmatpush1.bf16.msra.mxu0 %v4200
        %4290 = vmatprep.subr.bf16.mxu0 %v4203
        %4291 = vmatpush1.bf16.msra.mxu0 %v4202
        %4292 = vmatprep.mubr.bf16.mxu0 %v4008
        %4293 = vmatmul.mubr.bf16.gmra.mrb[0].mxu0 %v4007
        %v4294 = vpop.f32.mrb[0].mxu0
        %v4295 = vadd.f32 0.0, %v4294
        %v4296 = vpop.f32.mrb[0].mxu0
        %v4297 = vadd.f32 0.0, %v4296
        %v4298 = vpop.f32.mrb[0].mxu0
        %v4299 = vadd.f32 0.0, %v4298
        %v4300 = vpop.f32.mrb[0].mxu0
        %v4301 = vadd.f32 0.0, %v4300
        %4302 = vmatprep.mubr.bf16.mxu0 %v4011
        %4303 = vmatmul.mubr.bf16.gmra.mrb[0].mxu0 %v4010
        %v4304 = vpop.f32.mrb[0].mxu0
        %v4305 = vadd.f32 0.0, %v4304
        %v4306 = vpop.f32.mrb[0].mxu0
        %v4307 = vadd.f32 0.0, %v4306
        %v4308 = vpop.f32.mrb[0].mxu0
        %v4309 = vadd.f32 0.0, %v4308
        %v4310 = vpop.f32.mrb[0].mxu0
        %v4311 = vadd.f32 0.0, %v4310
        %4312 = vmatprep.mubr.bf16.mxu0 %v4014
        %4313 = vmatmul.mubr.bf16.gmra.mrb[0].mxu0 %v4013
        %v4314 = vpop.f32.mrb[0].mxu0
        %v4315 = vadd.f32 0.0, %v4314
        %v4316 = vpop.f32.mrb[0].mxu0
        %v4317 = vadd.f32 0.0, %v4316
        %v4318 = vpop.f32.mrb[0].mxu0
        %v4319 = vadd.f32 0.0, %v4318
        %v4320 = vpop.f32.mrb[0].mxu0
        %v4321 = vadd.f32 0.0, %v4320
        %4322 = vmatprep.mubr.bf16.mxu0 %v4017
        %4323 = vmatmul.mubr.bf16.gmra.mrb[0].mxu0 %v4016
        %v4324 = vpop.f32.mrb[0].mxu0
        %v4325 = vadd.f32 0.0, %v4324
        %v4326 = vpop.f32.mrb[0].mxu0
        %v4327 = vadd.f32 0.0, %v4326
        %v4328 = vpop.f32.mrb[0].mxu0
        %v4329 = vadd.f32 0.0, %v4328
        %v4330 = vpop.f32.mrb[0].mxu0
        %v4331 = vadd.f32 0.0, %v4330
        %4332 = vdwg.mxu0
        %4333 = vmatprep.subr.bf16.mxu0 %v4205
        %4334 = vmatpush1.bf16.msra.mxu0 %v4204
        %4335 = vmatprep.subr.bf16.mxu0 %v4207
        %4336 = vmatpush1.bf16.msra.mxu0 %v4206
        %4337 = vmatprep.subr.bf16.mxu0 %v4209
        %4338 = vmatpush1.bf16.msra.mxu0 %v4208
        %4339 = vmatprep.subr.bf16.mxu0 0
        %4340 = vmatpush1.bf16.msra.mxu0 0
        %4341 = vmatprep.subr.bf16.mxu0 0
        %4342 = vmatpush1.bf16.msra.mxu0 0
        %4343 = vmatprep.subr.bf16.mxu0 0
        %4344 = vmatpush1.bf16.msra.mxu0 0
        %4345 = vmatprep.subr.bf16.mxu0 0
        %4346 = vmatpush1.bf16.msra.mxu0 0
        %4347 = vmatprep.subr.bf16.mxu0 0
        %4348 = vmatpush1.bf16.msra.mxu0 0
        %4349 = vmatprep.subr.bf16.mxu0 0
        %4350 = vmatpush1.bf16.msra.mxu0 0
        %4351 = vmatprep.subr.bf16.mxu0 0
        %4352 = vmatpush1.bf16.msra.mxu0 0
        %4353 = vmatprep.subr.bf16.mxu0 0
        %4354 = vmatpush1.bf16.msra.mxu0 0
        %4355 = vmatprep.subr.bf16.mxu0 0
        %4356 = vmatpush1.bf16.msra.mxu0 0
        %4357 = vmatprep.subr.bf16.mxu0 0
        %4358 = vmatpush1.bf16.msra.mxu0 0
        %4359 = vmatprep.subr.bf16.mxu0 0
        %4360 = vmatpush1.bf16.msra.mxu0 0
        %4361 = vmatprep.subr.bf16.mxu0 0
        %4362 = vmatpush1.bf16.msra.mxu0 0
        %4363 = vmatprep.subr.bf16.mxu0 0
        %4364 = vmatpush1.bf16.msra.mxu0 0
        %4365 = vmatprep.mubr.bf16.mxu0 0
        %4366 = vmatmul.mubr.bf16.gmra.mrb[0].mxu0 %v4249
        %v4367 = vpop.f32.mrb[0].mxu0
        %v4368 = vadd.f32 %v4295, %v4367
        %v4369 = vpop.f32.mrb[0].mxu0
        %v4370 = vadd.f32 %v4297, %v4369
        %v4371 = vpop.f32.mrb[0].mxu0
        %v4372 = vadd.f32 %v4299, %v4371
        %v4373 = vpop.f32.mrb[0].mxu0
        %v4374 = vadd.f32 %v4301, %v4373
        %4375 = vmatprep.mubr.bf16.mxu0 0
        %4376 = vmatmul.mubr.bf16.gmra.mrb[0].mxu0 %v4252
        %v4377 = vpop.f32.mrb[0].mxu0
        %v4378 = vadd.f32 %v4305, %v4377
        %v4379 = vpop.f32.mrb[0].mxu0
        %v4380 = vadd.f32 %v4307, %v4379
        %v4381 = vpop.f32.mrb[0].mxu0
        %v4382 = vadd.f32 %v4309, %v4381
        %v4383 = vpop.f32.mrb[0].mxu0
        %v4384 = vadd.f32 %v4311, %v4383
        %4385 = vmatprep.mubr.bf16.mxu0 0
        %4386 = vmatmul.mubr.bf16.gmra.mrb[0].mxu0 %v4255
        %v4387 = vpop.f32.mrb[0].mxu0
        %v4388 = vadd.f32 %v4315, %v4387
        %v4389 = vpop.f32.mrb[0].mxu0
        %v4390 = vadd.f32 %v4317, %v4389
        %v4391 = vpop.f32.mrb[0].mxu0
        %v4392 = vadd.f32 %v4319, %v4391
        %v4393 = vpop.f32.mrb[0].mxu0
        %v4394 = vadd.f32 %v4321, %v4393
        %4395 = vmatprep.mubr.bf16.mxu0 0
        %4396 = vmatmul.mubr.bf16.gmra.mrb[0].mxu0 %v4258
        %v4397 = vpop.f32.mrb[0].mxu0
        %v4398 = vadd.f32 %v4325, %v4397
        %v4399 = vpop.f32.mrb[0].mxu0
        %v4400 = vadd.f32 %v4327, %v4399
        %v4401 = vpop.f32.mrb[0].mxu0
        %v4402 = vadd.f32 %v4329, %v4401
        %v4403 = vpop.f32.mrb[0].mxu0
        %v4404 = vadd.f32 %v4331, %v4403
        %4405 = vdwg.mxu0
        %v4406 = vadd.f32 %v3988, %v4368
        %v4407 = vadd.f32 %v3989, %v4370
        %v4408 = vadd.f32 %v3990, %v4372
        %v4409 = vadd.f32 %v3991, %v4374
        %v4410 = vadd.f32 %v3992, %v4378
        %v4411 = vadd.f32 %v3993, %v4380
        %v4412 = vadd.f32 %v3994, %v4382
        %v4413 = vadd.f32 %v3995, %v4384
        %v4414 = vadd.f32 %v3996, %v4388
        %v4415 = vadd.f32 %v3997, %v4390
        %v4416 = vadd.f32 %v3998, %v4392
        %v4417 = vadd.f32 %v3999, %v4394
        %v4418 = vadd.f32 %v4000, %v4398
        %v4419 = vadd.f32 %v4001, %v4400
        %v4420 = vadd.f32 %v4002, %v4402
        %v4421 = vadd.f32 %v4003, %v4404
        %v4422 = vld [vmem:[#allocation2 + $0x18] sm:$0xfe]
        %v4423 = vld [vmem:[#allocation2 + $0x20] sm:$0xfe]
        %v4424 = vld [vmem:[#allocation2 + $0x28] sm:$0xfe]
        %v4425 = vld [vmem:[#allocation2 + $0x30] sm:$0xff]
        %v4426 = vld [vmem:[#allocation2 + $0x38] sm:$0xff]
        %v4427 = vld [vmem:[#allocation2 + $0x40] sm:$0xff]
        %v4428 = vld [vmem:[#allocation2 + $0x48] sm:$0xff]
        %v4429 = vld [vmem:[#allocation2 + $0x50] sm:$0xff]
        %v4430 = vld [vmem:[#allocation2 + $0x58] sm:$0xff]
        %v4431 = vld [vmem:[#allocation2 + $0x60] sm:$0xff]
        %v4432 = vld [vmem:[#allocation2 + $0x68] sm:$0xff]
        %v4433 = vld [vmem:[#allocation2 + $0x70] sm:$0xff]
        %v4434 = vld [vmem:[#allocation2 + $0x78] sm:$0xff]
        %v4435 = vld [vmem:[#allocation2 + $0x80] sm:$0xff]
        %v4436 = vld [vmem:[#allocation2 + $0x88] sm:$0xff]
        %v4437 = vld [vmem:[#allocation2 + $0x90] sm:$0xff]
        %v4438 = vld [vmem:[#allocation2 + $0x98] sm:$0xff]
        %v4439 = vld [vmem:[#allocation2 + $0xa0] sm:$0xff]
        %v4440 = vld [vmem:[#allocation2 + $0xa8] sm:$0xff]
        %v4441 = vld [vmem:[#allocation2 + $0xb0] sm:$0xff]
        %v4442 = vld [vmem:[#allocation2 + $0xb8] sm:$0xff]
        %v4443 = vld [vmem:[#allocation2 + $0xc0] sm:$0xff]
        %v4444 = vld [vmem:[#allocation2 + $0xc8] sm:$0xff]
        %v4445 = vld [vmem:[#allocation2 + $0xd0] sm:$0xff]
        %v4446 = vld [vmem:[#allocation2 + $0xd8] sm:$0x1]
        %v4447 = vld [vmem:[#allocation2 + $0xe0] sm:$0x1]
        %v4448 = vld [vmem:[#allocation2 + $0xe8] sm:$0x1]
        %v4449 = vpack.c.bf16 %v4425, %v4422
        %v4450 = vpack.c.bf16 %v4426, %v4423
        %v4451 = vpack.c.bf16 %v4427, %v4424
        %v4452 = vpack.c.bf16 %v4431, %v4428
        %v4453 = vpack.c.bf16 %v4432, %v4429
        %v4454 = vpack.c.bf16 %v4433, %v4430
        %v4455 = vpack.c.bf16 %v4437, %v4434
        %v4456 = vpack.c.bf16 %v4438, %v4435
        %v4457 = vpack.c.bf16 %v4439, %v4436
        %v4458 = vpack.c.bf16 %v4443, %v4440
        %v4459 = vpack.c.bf16 %v4444, %v4441
        %v4460 = vpack.c.bf16 %v4445, %v4442
        %v4461 = vpack.c.bf16 %v4446, %v4446
        %v4462 = vpack.c.bf16 %v4447, %v4447
        %v4463 = vpack.c.bf16 %v4448, %v4448
        %s4464 = scalar_lea.vmem [#allocation12], 1216
        %v4465 = vld [vmem:[%s4464] sm:$0xff]
        %v4466 = vld [vmem:[%s4464 + $0x8] sm:$0xff]
        %v4467 = vld [vmem:[%s4464 + $0x10] sm:$0xff]
        %v4468 = vld [vmem:[%s4464 + $0x18] sm:$0xff]
        %v4469 = vld [vmem:[%s4464 + $0x20] sm:$0xff]
        %v4470 = vld [vmem:[%s4464 + $0x28] sm:$0xff]
        %v4471 = vld [vmem:[%s4464 + $0x30] sm:$0xff]
        %v4472 = vld [vmem:[%s4464 + $0x38] sm:$0xff]
        %v4473 = vld [vmem:[%s4464 + $0x40] sm:$0xff]
        %v4474 = vld [vmem:[%s4464 + $0x48] sm:$0xff]
        %v4475 = vld [vmem:[%s4464 + $0x50] sm:$0xff]
        %v4476 = vld [vmem:[%s4464 + $0x58] sm:$0xff]
        %v4477 = vld [vmem:[%s4464 + $0x60] sm:$0xff]
        %v4478 = vld [vmem:[%s4464 + $0x68] sm:$0xff]
        %v4479 = vld [vmem:[%s4464 + $0x70] sm:$0xff]
        %v4480 = vld [vmem:[%s4464 + $0x78] sm:$0xff]
        %v4481 = vld [vmem:[%s4464 + $0x80] sm:$0xff]
        %v4482 = vld [vmem:[%s4464 + $0x88] sm:$0xff]
        %v4483 = vld [vmem:[%s4464 + $0x90] sm:$0xff]
        %v4484 = vld [vmem:[%s4464 + $0x98] sm:$0xff]
        %v4485 = vld [vmem:[%s4464 + $0xa0] sm:$0xff]
        %v4486 = vld [vmem:[%s4464 + $0xa8] sm:$0xff]
        %v4487 = vld [vmem:[%s4464 + $0xb0] sm:$0xff]
        %v4488 = vld [vmem:[%s4464 + $0xb8] sm:$0xff]
        %v4489 = vld [vmem:[%s4464 + $0xc0] sm:$0xff]
        %v4490 = vld [vmem:[%s4464 + $0xc8] sm:$0xff]
        %v4491 = vld [vmem:[%s4464 + $0xd0] sm:$0xff]
        %v4492 = vld [vmem:[%s4464 + $0xd8] sm:$0xff]
        %v4493 = vld [vmem:[%s4464 + $0xe0] sm:$0xff]
        %v4494 = vld [vmem:[%s4464 + $0xe8] sm:$0xff]
        %v4495 = vld [vmem:[%s4464 + $0xf0] sm:$0xff]
        %v4496 = vld [vmem:[%s4464 + $0xf8] sm:$0xff]
        %v4497 = vld [vmem:[%s4464 + $0x100] sm:$0xff]
        %v4498 = vld [vmem:[%s4464 + $0x108] sm:$0xff]
        %v4499 = vld [vmem:[%s4464 + $0x110] sm:$0xff]
        %v4500 = vld [vmem:[%s4464 + $0x118] sm:$0xff]
        %v4501 = vld [vmem:[%s4464 + $0x120] sm:$0xff]
        %v4502 = vld [vmem:[%s4464 + $0x128] sm:$0xff]
        %v4504 = vshrl.u32 %v4449, 16
        %v4506 = vshll.u32 %v4449, 16
        %v4508 = vrot.slane %v4506, 1
        %v4509 = vor.u32 %v4504, %v4508
        %v4511 = vshll.u32 %v4452, 16
        %v4513 = vrot.slane %v4511, 1
        %v4514 = vsel %vm2728, %v4509, %v4513
        %v4516 = vshrl.u32 %v4450, 16
        %v4518 = vshll.u32 %v4450, 16
        %v4520 = vrot.slane %v4518, 1
        %v4521 = vor.u32 %v4516, %v4520
        %v4523 = vshll.u32 %v4453, 16
        %v4525 = vrot.slane %v4523, 1
        %v4526 = vsel %vm2728, %v4521, %v4525
        %v4528 = vshrl.u32 %v4451, 16
        %v4530 = vshll.u32 %v4451, 16
        %v4532 = vrot.slane %v4530, 1
        %v4533 = vor.u32 %v4528, %v4532
        %v4535 = vshll.u32 %v4454, 16
        %v4537 = vrot.slane %v4535, 1
        %v4538 = vsel %vm2728, %v4533, %v4537
        %v4539 = vshrl.u32 %v4452, 16
        %v4541 = vor.u32 %v4539, %v4513
        %v4543 = vshll.u32 %v4455, 16
        %v4545 = vrot.slane %v4543, 1
        %v4546 = vsel %vm2728, %v4541, %v4545
        %v4547 = vshrl.u32 %v4453, 16
        %v4549 = vor.u32 %v4547, %v4525
        %v4551 = vshll.u32 %v4456, 16
        %v4553 = vrot.slane %v4551, 1
        %v4554 = vsel %vm2728, %v4549, %v4553
        %v4555 = vshrl.u32 %v4454, 16
        %v4557 = vor.u32 %v4555, %v4537
        %v4559 = vshll.u32 %v4457, 16
        %v4561 = vrot.slane %v4559, 1
        %v4562 = vsel %vm2728, %v4557, %v4561
        %v4563 = vshrl.u32 %v4455, 16
        %v4565 = vor.u32 %v4563, %v4545
        %v4567 = vshll.u32 %v4458, 16
        %v4569 = vrot.slane %v4567, 1
        %v4570 = vsel %vm2728, %v4565, %v4569
        %v4571 = vshrl.u32 %v4456, 16
        %v4573 = vor.u32 %v4571, %v4553
        %v4575 = vshll.u32 %v4459, 16
        %v4577 = vrot.slane %v4575, 1
        %v4578 = vsel %vm2728, %v4573, %v4577
        %v4579 = vshrl.u32 %v4457, 16
        %v4581 = vor.u32 %v4579, %v4561
        %v4583 = vshll.u32 %v4460, 16
        %v4585 = vrot.slane %v4583, 1
        %v4586 = vsel %vm2728, %v4581, %v4585
        %v4587 = vshrl.u32 %v4458, 16
        %v4589 = vor.u32 %v4587, %v4569
        %v4591 = vshll.u32 %v4461, 16
        %v4593 = vrot.slane %v4591, 1
        %v4594 = vsel %vm2728, %v4589, %v4593
        %v4595 = vshrl.u32 %v4459, 16
        %v4597 = vor.u32 %v4595, %v4577
        %v4599 = vshll.u32 %v4462, 16
        %v4601 = vrot.slane %v4599, 1
        %v4602 = vsel %vm2728, %v4597, %v4601
        %v4603 = vshrl.u32 %v4460, 16
        %v4605 = vor.u32 %v4603, %v4585
        %v4607 = vshll.u32 %v4463, 16
        %v4609 = vrot.slane %v4607, 1
        %v4610 = vsel %vm2728, %v4605, %v4609
        %v4657 = vunpack.c.l.b16 %v4465
        %v4658 = vunpack.c.h.b16 %v4465
        %v4659 = vunpack.c.l.b16 %v4466
        %v4660 = vunpack.c.h.b16 %v4466
        %v4661 = vunpack.c.l.b16 %v4467
        %v4662 = vunpack.c.h.b16 %v4467
        %v4663 = vunpack.c.l.b16 %v4468
        %v4664 = vunpack.c.h.b16 %v4468
        %v4665 = vunpack.c.l.b16 %v4469
        %v4666 = vunpack.c.h.b16 %v4469
        %v4667 = vunpack.c.l.b16 %v4470
        %v4668 = vunpack.c.h.b16 %v4470
        %v4669 = vunpack.c.l.b16 %v4471
        %v4670 = vunpack.c.h.b16 %v4471
        %v4671 = vunpack.c.l.b16 %v4472
        %v4672 = vunpack.c.h.b16 %v4472
        %v4673 = vunpack.c.l.b16 %v4473
        %v4674 = vunpack.c.h.b16 %v4473
        %v4675 = vunpack.c.l.b16 %v4474
        %v4676 = vunpack.c.h.b16 %v4474
        %v4677 = vunpack.c.l.b16 %v4475
        %v4678 = vunpack.c.h.b16 %v4475
        %v4679 = vunpack.c.l.b16 %v4476
        %v4680 = vunpack.c.h.b16 %v4476
        %v4681 = vunpack.c.l.b16 %v4477
        %v4682 = vunpack.c.h.b16 %v4477
        %v4683 = vunpack.c.l.b16 %v4478
        %v4684 = vunpack.c.h.b16 %v4478
        %v4685 = vunpack.c.l.b16 %v4479
        %v4686 = vunpack.c.h.b16 %v4479
        %v4687 = vunpack.c.l.b16 %v4480
        %v4688 = vunpack.c.h.b16 %v4480
        %v4689 = vunpack.c.l.b16 %v4481
        %v4690 = vunpack.c.h.b16 %v4481
        %v4691 = vunpack.c.l.b16 %v4482
        %v4692 = vunpack.c.h.b16 %v4482
        %v4693 = vunpack.c.l.b16 %v4483
        %v4694 = vunpack.c.h.b16 %v4483
        %v4695 = vunpack.c.l.b16 %v4484
        %v4696 = vunpack.c.h.b16 %v4484
        %v4697 = vunpack.c.l.b16 %v4485
        %v4698 = vunpack.c.h.b16 %v4485
        %v4699 = vunpack.c.l.b16 %v4486
        %v4700 = vunpack.c.h.b16 %v4486
        %v4701 = vunpack.c.l.b16 %v4487
        %v4702 = vunpack.c.h.b16 %v4487
        %v4703 = vunpack.c.l.b16 %v4488
        %v4704 = vunpack.c.h.b16 %v4488
        %v4705 = vunpack.c.l.b16 %v4489
        %v4706 = vunpack.c.h.b16 %v4489
        %v4707 = vunpack.c.l.b16 %v4490
        %v4708 = vunpack.c.h.b16 %v4490
        %v4709 = vunpack.c.l.b16 %v4491
        %v4710 = vunpack.c.h.b16 %v4491
        %v4711 = vunpack.c.l.b16 %v4492
        %v4712 = vunpack.c.h.b16 %v4492
        %v4713 = vunpack.c.l.b16 %v4493
        %v4714 = vunpack.c.h.b16 %v4493
        %v4715 = vunpack.c.l.b16 %v4494
        %v4716 = vunpack.c.h.b16 %v4494
        %v4717 = vunpack.c.l.b16 %v4495
        %v4718 = vunpack.c.h.b16 %v4495
        %v4719 = vunpack.c.l.b16 %v4496
        %v4720 = vunpack.c.h.b16 %v4496
        %v4721 = vunpack.c.l.b16 %v4497
        %v4722 = vunpack.c.h.b16 %v4497
        %v4723 = vunpack.c.l.b16 %v4498
        %v4724 = vunpack.c.h.b16 %v4498
        %v4725 = vunpack.c.l.b16 %v4499
        %v4726 = vunpack.c.h.b16 %v4499
        %v4727 = vunpack.c.l.b16 %v4500
        %v4728 = vunpack.c.h.b16 %v4500
        %v4729 = vunpack.c.l.b16 %v4501
        %v4730 = vunpack.c.h.b16 %v4501
        %v4731 = vunpack.c.l.b16 %v4502
        %v4732 = vunpack.c.h.b16 %v4502
        %v4733 = vpack.c.b16 %v4659, %v4657
        %v4734 = vpack.c.b16 %v4660, %v4658
        %v4735 = vpack.c.b16 %v4663, %v4661
        %v4736 = vpack.c.b16 %v4664, %v4662
        %v4737 = vpack.c.b16 %v4667, %v4665
        %v4738 = vpack.c.b16 %v4668, %v4666
        %v4739 = vpack.c.b16 %v4671, %v4669
        %v4740 = vpack.c.b16 %v4672, %v4670
        %v4741 = vpack.c.b16 %v4675, %v4673
        %v4742 = vpack.c.b16 %v4676, %v4674
        %v4743 = vpack.c.b16 %v4679, %v4677
        %v4744 = vpack.c.b16 %v4680, %v4678
        %v4745 = vpack.c.b16 %v4683, %v4681
        %v4746 = vpack.c.b16 %v4684, %v4682
        %v4747 = vpack.c.b16 %v4687, %v4685
        %v4748 = vpack.c.b16 %v4688, %v4686
        %v4749 = vpack.c.b16 %v4691, %v4689
        %v4750 = vpack.c.b16 %v4692, %v4690
        %v4751 = vpack.c.b16 %v4695, %v4693
        %v4752 = vpack.c.b16 %v4696, %v4694
        %v4753 = vpack.c.b16 %v4699, %v4697
        %v4754 = vpack.c.b16 %v4700, %v4698
        %v4755 = vpack.c.b16 %v4703, %v4701
        %v4756 = vpack.c.b16 %v4704, %v4702
        %v4757 = vpack.c.b16 %v4707, %v4705
        %v4758 = vpack.c.b16 %v4708, %v4706
        %v4759 = vpack.c.b16 %v4711, %v4709
        %v4760 = vpack.c.b16 %v4712, %v4710
        %v4761 = vpack.c.b16 %v4715, %v4713
        %v4762 = vpack.c.b16 %v4716, %v4714
        %v4763 = vpack.c.b16 %v4719, %v4717
        %v4764 = vpack.c.b16 %v4720, %v4718
        %v4765 = vpack.c.b16 %v4723, %v4721
        %v4766 = vpack.c.b16 %v4724, %v4722
        %v4767 = vpack.c.b16 %v4727, %v4725
        %v4768 = vpack.c.b16 %v4728, %v4726
        %v4769 = vpack.c.b16 %v4731, %v4729
        %v4770 = vpack.c.b16 %v4732, %v4730
        %v4810 = vsel %vm2585, %v4538, 0
        %v4813 = vsel %vm2585, %v4562, 0
        %v4816 = vsel %vm2585, %v4586, 0
        %v4819 = vsel %vm2585, %v4610, 0
        %4821 = vmatprep.subr.bf16.mxu0 %v4734
        %4822 = vmatpush1.bf16.msra.mxu0 %v4733
        %4823 = vmatprep.subr.bf16.mxu0 %v4736
        %4824 = vmatpush1.bf16.msra.mxu0 %v4735
        %4825 = vmatprep.subr.bf16.mxu0 %v4738
        %4826 = vmatpush1.bf16.msra.mxu0 %v4737
        %4827 = vmatprep.subr.bf16.mxu0 %v4740
        %4828 = vmatpush1.bf16.msra.mxu0 %v4739
        %4829 = vmatprep.subr.bf16.mxu0 %v4742
        %4830 = vmatpush1.bf16.msra.mxu0 %v4741
        %4831 = vmatprep.subr.bf16.mxu0 %v4744
        %4832 = vmatpush1.bf16.msra.mxu0 %v4743
        %4833 = vmatprep.subr.bf16.mxu0 %v4746
        %4834 = vmatpush1.bf16.msra.mxu0 %v4745
        %4835 = vmatprep.subr.bf16.mxu0 %v4748
        %4836 = vmatpush1.bf16.msra.mxu0 %v4747
        %4837 = vmatprep.subr.bf16.mxu0 %v4750
        %4838 = vmatpush1.bf16.msra.mxu0 %v4749
        %4839 = vmatprep.subr.bf16.mxu0 %v4752
        %4840 = vmatpush1.bf16.msra.mxu0 %v4751
        %4841 = vmatprep.subr.bf16.mxu0 %v4754
        %4842 = vmatpush1.bf16.msra.mxu0 %v4753
        %4843 = vmatprep.subr.bf16.mxu0 %v4756
        %4844 = vmatpush1.bf16.msra.mxu0 %v4755
        %4845 = vmatprep.subr.bf16.mxu0 %v4758
        %4846 = vmatpush1.bf16.msra.mxu0 %v4757
        %4847 = vmatprep.subr.bf16.mxu0 %v4760
        %4848 = vmatpush1.bf16.msra.mxu0 %v4759
        %4849 = vmatprep.subr.bf16.mxu0 %v4762
        %4850 = vmatpush1.bf16.msra.mxu0 %v4761
        %4851 = vmatprep.subr.bf16.mxu0 %v4764
        %4852 = vmatpush1.bf16.msra.mxu0 %v4763
        %4853 = vmatprep.mubr.bf16.mxu0 %v4526
        %4854 = vmatmul.mubr.bf16.gmra.mrb[0].mxu0 %v4514
        %v4855 = vpop.f32.mrb[0].mxu0
        %v4856 = vadd.f32 0.0, %v4855
        %v4857 = vpop.f32.mrb[0].mxu0
        %v4858 = vadd.f32 0.0, %v4857
        %v4859 = vpop.f32.mrb[0].mxu0
        %v4860 = vadd.f32 0.0, %v4859
        %v4861 = vpop.f32.mrb[0].mxu0
        %v4862 = vadd.f32 0.0, %v4861
        %4863 = vmatprep.mubr.bf16.mxu0 %v4554
        %4864 = vmatmul.mubr.bf16.gmra.mrb[0].mxu0 %v4546
        %v4865 = vpop.f32.mrb[0].mxu0
        %v4866 = vadd.f32 0.0, %v4865
        %v4867 = vpop.f32.mrb[0].mxu0
        %v4868 = vadd.f32 0.0, %v4867
        %v4869 = vpop.f32.mrb[0].mxu0
        %v4870 = vadd.f32 0.0, %v4869
        %v4871 = vpop.f32.mrb[0].mxu0
        %v4872 = vadd.f32 0.0, %v4871
        %4873 = vmatprep.mubr.bf16.mxu0 %v4578
        %4874 = vmatmul.mubr.bf16.gmra.mrb[0].mxu0 %v4570
        %v4875 = vpop.f32.mrb[0].mxu0
        %v4876 = vadd.f32 0.0, %v4875
        %v4877 = vpop.f32.mrb[0].mxu0
        %v4878 = vadd.f32 0.0, %v4877
        %v4879 = vpop.f32.mrb[0].mxu0
        %v4880 = vadd.f32 0.0, %v4879
        %v4881 = vpop.f32.mrb[0].mxu0
        %v4882 = vadd.f32 0.0, %v4881
        %4883 = vmatprep.mubr.bf16.mxu0 %v4602
        %4884 = vmatmul.mubr.bf16.gmra.mrb[0].mxu0 %v4594
        %v4885 = vpop.f32.mrb[0].mxu0
        %v4886 = vadd.f32 0.0, %v4885
        %v4887 = vpop.f32.mrb[0].mxu0
        %v4888 = vadd.f32 0.0, %v4887
        %v4889 = vpop.f32.mrb[0].mxu0
        %v4890 = vadd.f32 0.0, %v4889
        %v4891 = vpop.f32.mrb[0].mxu0
        %v4892 = vadd.f32 0.0, %v4891
        %4893 = vdwg.mxu0
        %4894 = vmatprep.subr.bf16.mxu0 %v4766
        %4895 = vmatpush1.bf16.msra.mxu0 %v4765
        %4896 = vmatprep.subr.bf16.mxu0 %v4768
        %4897 = vmatpush1.bf16.msra.mxu0 %v4767
        %4898 = vmatprep.subr.bf16.mxu0 %v4770
        %4899 = vmatpush1.bf16.msra.mxu0 %v4769
        %4900 = vmatprep.subr.bf16.mxu0 0
        %4901 = vmatpush1.bf16.msra.mxu0 0
        %4902 = vmatprep.subr.bf16.mxu0 0
        %4903 = vmatpush1.bf16.msra.mxu0 0
        %4904 = vmatprep.subr.bf16.mxu0 0
        %4905 = vmatpush1.bf16.msra.mxu0 0
        %4906 = vmatprep.subr.bf16.mxu0 0
        %4907 = vmatpush1.bf16.msra.mxu0 0
        %4908 = vmatprep.subr.bf16.mxu0 0
        %4909 = vmatpush1.bf16.msra.mxu0 0
        %4910 = vmatprep.subr.bf16.mxu0 0
        %4911 = vmatpush1.bf16.msra.mxu0 0
        %4912 = vmatprep.subr.bf16.mxu0 0
        %4913 = vmatpush1.bf16.msra.mxu0 0
        %4914 = vmatprep.subr.bf16.mxu0 0
        %4915 = vmatpush1.bf16.msra.mxu0 0
        %4916 = vmatprep.subr.bf16.mxu0 0
        %4917 = vmatpush1.bf16.msra.mxu0 0
        %4918 = vmatprep.subr.bf16.mxu0 0
        %4919 = vmatpush1.bf16.msra.mxu0 0
        %4920 = vmatprep.subr.bf16.mxu0 0
        %4921 = vmatpush1.bf16.msra.mxu0 0
        %4922 = vmatprep.subr.bf16.mxu0 0
        %4923 = vmatpush1.bf16.msra.mxu0 0
        %4924 = vmatprep.subr.bf16.mxu0 0
        %4925 = vmatpush1.bf16.msra.mxu0 0
        %4926 = vmatprep.mubr.bf16.mxu0 0
        %4927 = vmatmul.mubr.bf16.gmra.mrb[0].mxu0 %v4810
        %v4928 = vpop.f32.mrb[0].mxu0
        %v4929 = vadd.f32 %v4856, %v4928
        %v4930 = vpop.f32.mrb[0].mxu0
        %v4931 = vadd.f32 %v4858, %v4930
        %v4932 = vpop.f32.mrb[0].mxu0
        %v4933 = vadd.f32 %v4860, %v4932
        %v4934 = vpop.f32.mrb[0].mxu0
        %v4935 = vadd.f32 %v4862, %v4934
        %4936 = vmatprep.mubr.bf16.mxu0 0
        %4937 = vmatmul.mubr.bf16.gmra.mrb[0].mxu0 %v4813
        %v4938 = vpop.f32.mrb[0].mxu0
        %v4939 = vadd.f32 %v4866, %v4938
        %v4940 = vpop.f32.mrb[0].mxu0
        %v4941 = vadd.f32 %v4868, %v4940
        %v4942 = vpop.f32.mrb[0].mxu0
        %v4943 = vadd.f32 %v4870, %v4942
        %v4944 = vpop.f32.mrb[0].mxu0
        %v4945 = vadd.f32 %v4872, %v4944
        %4946 = vmatprep.mubr.bf16.mxu0 0
        %4947 = vmatmul.mubr.bf16.gmra.mrb[0].mxu0 %v4816
        %v4948 = vpop.f32.mrb[0].mxu0
        %v4949 = vadd.f32 %v4876, %v4948
        %v4950 = vpop.f32.mrb[0].mxu0
        %v4951 = vadd.f32 %v4878, %v4950
        %v4952 = vpop.f32.mrb[0].mxu0
        %v4953 = vadd.f32 %v4880, %v4952
        %v4954 = vpop.f32.mrb[0].mxu0
        %v4955 = vadd.f32 %v4882, %v4954
        %4956 = vmatprep.mubr.bf16.mxu0 0
        %4957 = vmatmul.mubr.bf16.gmra.mrb[0].mxu0 %v4819
        %v4958 = vpop.f32.mrb[0].mxu0
        %v4959 = vadd.f32 %v4886, %v4958
        %v4960 = vpop.f32.mrb[0].mxu0
        %v4961 = vadd.f32 %v4888, %v4960
        %v4962 = vpop.f32.mrb[0].mxu0
        %v4963 = vadd.f32 %v4890, %v4962
        %v4964 = vpop.f32.mrb[0].mxu0
        %v4965 = vadd.f32 %v4892, %v4964
        %4966 = vdwg.mxu0
        %v4967 = vadd.f32 %v4406, %v4929
        %v4968 = vadd.f32 %v4407, %v4931
        %v4969 = vadd.f32 %v4408, %v4933
        %v4970 = vadd.f32 %v4409, %v4935
        %v4971 = vadd.f32 %v4410, %v4939
        %v4972 = vadd.f32 %v4411, %v4941
        %v4973 = vadd.f32 %v4412, %v4943
        %v4974 = vadd.f32 %v4413, %v4945
        %v4975 = vadd.f32 %v4414, %v4949
        %v4976 = vadd.f32 %v4415, %v4951
        %v4977 = vadd.f32 %v4416, %v4953
        %v4978 = vadd.f32 %v4417, %v4955
        %v4979 = vadd.f32 %v4418, %v4959
        %v4980 = vadd.f32 %v4419, %v4961
        %v4981 = vadd.f32 %v4420, %v4963
        %v4982 = vadd.f32 %v4421, %v4965
        %v4983 = vld [vmem:[#allocation2 + $0x18] sm:$0xfc]
        %v4984 = vld [vmem:[#allocation2 + $0x20] sm:$0xfc]
        %v4985 = vld [vmem:[#allocation2 + $0x28] sm:$0xfc]
        %v4986 = vld [vmem:[#allocation2 + $0xd8] sm:$0x3]
        %v4987 = vld [vmem:[#allocation2 + $0xe0] sm:$0x3]
        %v4988 = vld [vmem:[#allocation2 + $0xe8] sm:$0x3]
        %v4989 = vpack.c.bf16 %v4425, %v4983
        %v4990 = vpack.c.bf16 %v4426, %v4984
        %v4991 = vpack.c.bf16 %v4427, %v4985
        %v4992 = vpack.c.bf16 %v4986, %v4986
        %v4993 = vpack.c.bf16 %v4987, %v4987
        %v4994 = vpack.c.bf16 %v4988, %v4988
        %s4995 = scalar_lea.vmem [#allocation12], 1520
        %v4996 = vld [vmem:[%s4995] sm:$0xff]
        %v4997 = vld [vmem:[%s4995 + $0x8] sm:$0xff]
        %v4998 = vld [vmem:[%s4995 + $0x10] sm:$0xff]
        %v4999 = vld [vmem:[%s4995 + $0x18] sm:$0xff]
        %v5000 = vld [vmem:[%s4995 + $0x20] sm:$0xff]
        %v5001 = vld [vmem:[%s4995 + $0x28] sm:$0xff]
        %v5002 = vld [vmem:[%s4995 + $0x30] sm:$0xff]
        %v5003 = vld [vmem:[%s4995 + $0x38] sm:$0xff]
        %v5004 = vld [vmem:[%s4995 + $0x40] sm:$0xff]
        %v5005 = vld [vmem:[%s4995 + $0x48] sm:$0xff]
        %v5006 = vld [vmem:[%s4995 + $0x50] sm:$0xff]
        %v5007 = vld [vmem:[%s4995 + $0x58] sm:$0xff]
        %v5008 = vld [vmem:[%s4995 + $0x60] sm:$0xff]
        %v5009 = vld [vmem:[%s4995 + $0x68] sm:$0xff]
        %v5010 = vld [vmem:[%s4995 + $0x70] sm:$0xff]
        %v5011 = vld [vmem:[%s4995 + $0x78] sm:$0xff]
        %v5012 = vld [vmem:[%s4995 + $0x80] sm:$0xff]
        %v5013 = vld [vmem:[%s4995 + $0x88] sm:$0xff]
        %v5014 = vld [vmem:[%s4995 + $0x90] sm:$0xff]
        %v5015 = vld [vmem:[%s4995 + $0x98] sm:$0xff]
        %v5016 = vld [vmem:[%s4995 + $0xa0] sm:$0xff]
        %v5017 = vld [vmem:[%s4995 + $0xa8] sm:$0xff]
        %v5018 = vld [vmem:[%s4995 + $0xb0] sm:$0xff]
        %v5019 = vld [vmem:[%s4995 + $0xb8] sm:$0xff]
        %v5020 = vld [vmem:[%s4995 + $0xc0] sm:$0xff]
        %v5021 = vld [vmem:[%s4995 + $0xc8] sm:$0xff]
        %v5022 = vld [vmem:[%s4995 + $0xd0] sm:$0xff]
        %v5023 = vld [vmem:[%s4995 + $0xd8] sm:$0xff]
        %v5024 = vld [vmem:[%s4995 + $0xe0] sm:$0xff]
        %v5025 = vld [vmem:[%s4995 + $0xe8] sm:$0xff]
        %v5026 = vld [vmem:[%s4995 + $0xf0] sm:$0xff]
        %v5027 = vld [vmem:[%s4995 + $0xf8] sm:$0xff]
        %v5028 = vld [vmem:[%s4995 + $0x100] sm:$0xff]
        %v5029 = vld [vmem:[%s4995 + $0x108] sm:$0xff]
        %v5030 = vld [vmem:[%s4995 + $0x110] sm:$0xff]
        %v5031 = vld [vmem:[%s4995 + $0x118] sm:$0xff]
        %v5032 = vld [vmem:[%s4995 + $0x120] sm:$0xff]
        %v5033 = vld [vmem:[%s4995 + $0x128] sm:$0xff]
        %v5049 = vrot.slane %v4989, 1
        %v5050 = vrot.slane %v4452, 1
        %v5051 = vsel %vm3604, %v5049, %v5050
        %v5052 = vrot.slane %v4990, 1
        %v5053 = vrot.slane %v4453, 1
        %v5054 = vsel %vm3604, %v5052, %v5053
        %v5055 = vrot.slane %v4991, 1
        %v5056 = vrot.slane %v4454, 1
        %v5057 = vsel %vm3604, %v5055, %v5056
        %v5058 = vrot.slane %v4455, 1
        %v5059 = vsel %vm3604, %v5050, %v5058
        %v5060 = vrot.slane %v4456, 1
        %v5061 = vsel %vm3604, %v5053, %v5060
        %v5062 = vrot.slane %v4457, 1
        %v5063 = vsel %vm3604, %v5056, %v5062
        %v5064 = vrot.slane %v4458, 1
        %v5065 = vsel %vm3604, %v5058, %v5064
        %v5066 = vrot.slane %v4459, 1
        %v5067 = vsel %vm3604, %v5060, %v5066
        %v5068 = vrot.slane %v4460, 1
        %v5069 = vsel %vm3604, %v5062, %v5068
        %v5070 = vrot.slane %v4992, 1
        %v5071 = vsel %vm3604, %v5064, %v5070
        %v5072 = vrot.slane %v4993, 1
        %v5073 = vsel %vm3604, %v5066, %v5072
        %v5074 = vrot.slane %v4994, 1
        %v5075 = vsel %vm3604, %v5068, %v5074
        %v5122 = vunpack.c.l.b16 %v4996
        %v5123 = vunpack.c.h.b16 %v4996
        %v5124 = vunpack.c.l.b16 %v4997
        %v5125 = vunpack.c.h.b16 %v4997
        %v5126 = vunpack.c.l.b16 %v4998
        %v5127 = vunpack.c.h.b16 %v4998
        %v5128 = vunpack.c.l.b16 %v4999
        %v5129 = vunpack.c.h.b16 %v4999
        %v5130 = vunpack.c.l.b16 %v5000
        %v5131 = vunpack.c.h.b16 %v5000
        %v5132 = vunpack.c.l.b16 %v5001
        %v5133 = vunpack.c.h.b16 %v5001
        %v5134 = vunpack.c.l.b16 %v5002
        %v5135 = vunpack.c.h.b16 %v5002
        %v5136 = vunpack.c.l.b16 %v5003
        %v5137 = vunpack.c.h.b16 %v5003
        %v5138 = vunpack.c.l.b16 %v5004
        %v5139 = vunpack.c.h.b16 %v5004
        %v5140 = vunpack.c.l.b16 %v5005
        %v5141 = vunpack.c.h.b16 %v5005
        %v5142 = vunpack.c.l.b16 %v5006
        %v5143 = vunpack.c.h.b16 %v5006
        %v5144 = vunpack.c.l.b16 %v5007
        %v5145 = vunpack.c.h.b16 %v5007
        %v5146 = vunpack.c.l.b16 %v5008
        %v5147 = vunpack.c.h.b16 %v5008
        %v5148 = vunpack.c.l.b16 %v5009
        %v5149 = vunpack.c.h.b16 %v5009
        %v5150 = vunpack.c.l.b16 %v5010
        %v5151 = vunpack.c.h.b16 %v5010
        %v5152 = vunpack.c.l.b16 %v5011
        %v5153 = vunpack.c.h.b16 %v5011
        %v5154 = vunpack.c.l.b16 %v5012
        %v5155 = vunpack.c.h.b16 %v5012
        %v5156 = vunpack.c.l.b16 %v5013
        %v5157 = vunpack.c.h.b16 %v5013
        %v5158 = vunpack.c.l.b16 %v5014
        %v5159 = vunpack.c.h.b16 %v5014
        %v5160 = vunpack.c.l.b16 %v5015
        %v5161 = vunpack.c.h.b16 %v5015
        %v5162 = vunpack.c.l.b16 %v5016
        %v5163 = vunpack.c.h.b16 %v5016
        %v5164 = vunpack.c.l.b16 %v5017
        %v5165 = vunpack.c.h.b16 %v5017
        %v5166 = vunpack.c.l.b16 %v5018
        %v5167 = vunpack.c.h.b16 %v5018
        %v5168 = vunpack.c.l.b16 %v5019
        %v5169 = vunpack.c.h.b16 %v5019
        %v5170 = vunpack.c.l.b16 %v5020
        %v5171 = vunpack.c.h.b16 %v5020
        %v5172 = vunpack.c.l.b16 %v5021
        %v5173 = vunpack.c.h.b16 %v5021
        %v5174 = vunpack.c.l.b16 %v5022
        %v5175 = vunpack.c.h.b16 %v5022
        %v5176 = vunpack.c.l.b16 %v5023
        %v5177 = vunpack.c.h.b16 %v5023
        %v5178 = vunpack.c.l.b16 %v5024
        %v5179 = vunpack.c.h.b16 %v5024
        %v5180 = vunpack.c.l.b16 %v5025
        %v5181 = vunpack.c.h.b16 %v5025
        %v5182 = vunpack.c.l.b16 %v5026
        %v5183 = vunpack.c.h.b16 %v5026
        %v5184 = vunpack.c.l.b16 %v5027
        %v5185 = vunpack.c.h.b16 %v5027
        %v5186 = vunpack.c.l.b16 %v5028
        %v5187 = vunpack.c.h.b16 %v5028
        %v5188 = vunpack.c.l.b16 %v5029
        %v5189 = vunpack.c.h.b16 %v5029
        %v5190 = vunpack.c.l.b16 %v5030
        %v5191 = vunpack.c.h.b16 %v5030
        %v5192 = vunpack.c.l.b16 %v5031
        %v5193 = vunpack.c.h.b16 %v5031
        %v5194 = vunpack.c.l.b16 %v5032
        %v5195 = vunpack.c.h.b16 %v5032
        %v5196 = vunpack.c.l.b16 %v5033
        %v5197 = vunpack.c.h.b16 %v5033
        %v5198 = vpack.c.b16 %v5124, %v5122
        %v5199 = vpack.c.b16 %v5125, %v5123
        %v5200 = vpack.c.b16 %v5128, %v5126
        %v5201 = vpack.c.b16 %v5129, %v5127
        %v5202 = vpack.c.b16 %v5132, %v5130
        %v5203 = vpack.c.b16 %v5133, %v5131
        %v5204 = vpack.c.b16 %v5136, %v5134
        %v5205 = vpack.c.b16 %v5137, %v5135
        %v5206 = vpack.c.b16 %v5140, %v5138
        %v5207 = vpack.c.b16 %v5141, %v5139
        %v5208 = vpack.c.b16 %v5144, %v5142
        %v5209 = vpack.c.b16 %v5145, %v5143
        %v5210 = vpack.c.b16 %v5148, %v5146
        %v5211 = vpack.c.b16 %v5149, %v5147
        %v5212 = vpack.c.b16 %v5152, %v5150
        %v5213 = vpack.c.b16 %v5153, %v5151
        %v5214 = vpack.c.b16 %v5156, %v5154
        %v5215 = vpack.c.b16 %v5157, %v5155
        %v5216 = vpack.c.b16 %v5160, %v5158
        %v5217 = vpack.c.b16 %v5161, %v5159
        %v5218 = vpack.c.b16 %v5164, %v5162
        %v5219 = vpack.c.b16 %v5165, %v5163
        %v5220 = vpack.c.b16 %v5168, %v5166
        %v5221 = vpack.c.b16 %v5169, %v5167
        %v5222 = vpack.c.b16 %v5172, %v5170
        %v5223 = vpack.c.b16 %v5173, %v5171
        %v5224 = vpack.c.b16 %v5176, %v5174
        %v5225 = vpack.c.b16 %v5177, %v5175
        %v5226 = vpack.c.b16 %v5180, %v5178
        %v5227 = vpack.c.b16 %v5181, %v5179
        %v5228 = vpack.c.b16 %v5184, %v5182
        %v5229 = vpack.c.b16 %v5185, %v5183
        %v5230 = vpack.c.b16 %v5188, %v5186
        %v5231 = vpack.c.b16 %v5189, %v5187
        %v5232 = vpack.c.b16 %v5192, %v5190
        %v5233 = vpack.c.b16 %v5193, %v5191
        %v5234 = vpack.c.b16 %v5196, %v5194
        %v5235 = vpack.c.b16 %v5197, %v5195
        %v5275 = vsel %vm2585, %v5057, 0
        %v5278 = vsel %vm2585, %v5063, 0
        %v5281 = vsel %vm2585, %v5069, 0
        %v5284 = vsel %vm2585, %v5075, 0
        %5286 = vmatprep.subr.bf16.mxu0 %v5199
        %5287 = vmatpush1.bf16.msra.mxu0 %v5198
        %5288 = vmatprep.subr.bf16.mxu0 %v5201
        %5289 = vmatpush1.bf16.msra.mxu0 %v5200
        %5290 = vmatprep.subr.bf16.mxu0 %v5203
        %5291 = vmatpush1.bf16.msra.mxu0 %v5202
        %5292 = vmatprep.subr.bf16.mxu0 %v5205
        %5293 = vmatpush1.bf16.msra.mxu0 %v5204
        %5294 = vmatprep.subr.bf16.mxu0 %v5207
        %5295 = vmatpush1.bf16.msra.mxu0 %v5206
        %5296 = vmatprep.subr.bf16.mxu0 %v5209
        %5297 = vmatpush1.bf16.msra.mxu0 %v5208
        %5298 = vmatprep.subr.bf16.mxu0 %v5211
        %5299 = vmatpush1.bf16.msra.mxu0 %v5210
        %5300 = vmatprep.subr.bf16.mxu0 %v5213
        %5301 = vmatpush1.bf16.msra.mxu0 %v5212
        %5302 = vmatprep.subr.bf16.mxu0 %v5215
        %5303 = vmatpush1.bf16.msra.mxu0 %v5214
        %5304 = vmatprep.subr.bf16.mxu0 %v5217
        %5305 = vmatpush1.bf16.msra.mxu0 %v5216
        %5306 = vmatprep.subr.bf16.mxu0 %v5219
        %5307 = vmatpush1.bf16.msra.mxu0 %v5218
        %5308 = vmatprep.subr.bf16.mxu0 %v5221
        %5309 = vmatpush1.bf16.msra.mxu0 %v5220
        %5310 = vmatprep.subr.bf16.mxu0 %v5223
        %5311 = vmatpush1.bf16.msra.mxu0 %v5222
        %5312 = vmatprep.subr.bf16.mxu0 %v5225
        %5313 = vmatpush1.bf16.msra.mxu0 %v5224
        %5314 = vmatprep.subr.bf16.mxu0 %v5227
        %5315 = vmatpush1.bf16.msra.mxu0 %v5226
        %5316 = vmatprep.subr.bf16.mxu0 %v5229
        %5317 = vmatpush1.bf16.msra.mxu0 %v5228
        %5318 = vmatprep.mubr.bf16.mxu0 %v5054
        %5319 = vmatmul.mubr.bf16.gmra.mrb[0].mxu0 %v5051
        %v5320 = vpop.f32.mrb[0].mxu0
        %v5321 = vadd.f32 0.0, %v5320
        %v5322 = vpop.f32.mrb[0].mxu0
        %v5323 = vadd.f32 0.0, %v5322
        %v5324 = vpop.f32.mrb[0].mxu0
        %v5325 = vadd.f32 0.0, %v5324
        %v5326 = vpop.f32.mrb[0].mxu0
        %v5327 = vadd.f32 0.0, %v5326
        %5328 = vmatprep.mubr.bf16.mxu0 %v5061
        %5329 = vmatmul.mubr.bf16.gmra.mrb[0].mxu0 %v5059
        %v5330 = vpop.f32.mrb[0].mxu0
        %v5331 = vadd.f32 0.0, %v5330
        %v5332 = vpop.f32.mrb[0].mxu0
        %v5333 = vadd.f32 0.0, %v5332
        %v5334 = vpop.f32.mrb[0].mxu0
        %v5335 = vadd.f32 0.0, %v5334
        %v5336 = vpop.f32.mrb[0].mxu0
        %v5337 = vadd.f32 0.0, %v5336
        %5338 = vmatprep.mubr.bf16.mxu0 %v5067
        %5339 = vmatmul.mubr.bf16.gmra.mrb[0].mxu0 %v5065
        %v5340 = vpop.f32.mrb[0].mxu0
        %v5341 = vadd.f32 0.0, %v5340
        %v5342 = vpop.f32.mrb[0].mxu0
        %v5343 = vadd.f32 0.0, %v5342
        %v5344 = vpop.f32.mrb[0].mxu0
        %v5345 = vadd.f32 0.0, %v5344
        %v5346 = vpop.f32.mrb[0].mxu0
        %v5347 = vadd.f32 0.0, %v5346
        %5348 = vmatprep.mubr.bf16.mxu0 %v5073
        %5349 = vmatmul.mubr.bf16.gmra.mrb[0].mxu0 %v5071
        %v5350 = vpop.f32.mrb[0].mxu0
        %v5351 = vadd.f32 0.0, %v5350
        %v5352 = vpop.f32.mrb[0].mxu0
        %v5353 = vadd.f32 0.0, %v5352
        %v5354 = vpop.f32.mrb[0].mxu0
        %v5355 = vadd.f32 0.0, %v5354
        %v5356 = vpop.f32.mrb[0].mxu0
        %v5357 = vadd.f32 0.0, %v5356
        %5358 = vdwg.mxu0
        %5359 = vmatprep.subr.bf16.mxu0 %v5231
        %5360 = vmatpush1.bf16.msra.mxu0 %v5230
        %5361 = vmatprep.subr.bf16.mxu0 %v5233
        %5362 = vmatpush1.bf16.msra.mxu0 %v5232
        %5363 = vmatprep.subr.bf16.mxu0 %v5235
        %5364 = vmatpush1.bf16.msra.mxu0 %v5234
        %5365 = vmatprep.subr.bf16.mxu0 0
        %5366 = vmatpush1.bf16.msra.mxu0 0
        %5367 = vmatprep.subr.bf16.mxu0 0
        %5368 = vmatpush1.bf16.msra.mxu0 0
        %5369 = vmatprep.subr.bf16.mxu0 0
        %5370 = vmatpush1.bf16.msra.mxu0 0
        %5371 = vmatprep.subr.bf16.mxu0 0
        %5372 = vmatpush1.bf16.msra.mxu0 0
        %5373 = vmatprep.subr.bf16.mxu0 0
        %5374 = vmatpush1.bf16.msra.mxu0 0
        %5375 = vmatprep.subr.bf16.mxu0 0
        %5376 = vmatpush1.bf16.msra.mxu0 0
        %5377 = vmatprep.subr.bf16.mxu0 0
        %5378 = vmatpush1.bf16.msra.mxu0 0
        %5379 = vmatprep.subr.bf16.mxu0 0
        %5380 = vmatpush1.bf16.msra.mxu0 0
        %5381 = vmatprep.subr.bf16.mxu0 0
        %5382 = vmatpush1.bf16.msra.mxu0 0
        %5383 = vmatprep.subr.bf16.mxu0 0
        %5384 = vmatpush1.bf16.msra.mxu0 0
        %5385 = vmatprep.subr.bf16.mxu0 0
        %5386 = vmatpush1.bf16.msra.mxu0 0
        %5387 = vmatprep.subr.bf16.mxu0 0
        %5388 = vmatpush1.bf16.msra.mxu0 0
        %5389 = vmatprep.subr.bf16.mxu0 0
        %5390 = vmatpush1.bf16.msra.mxu0 0
        %5391 = vmatprep.mubr.bf16.mxu0 0
        %5392 = vmatmul.mubr.bf16.gmra.mrb[0].mxu0 %v5275
        %v5393 = vpop.f32.mrb[0].mxu0
        %v5394 = vadd.f32 %v5321, %v5393
        %v5395 = vpop.f32.mrb[0].mxu0
        %v5396 = vadd.f32 %v5323, %v5395
        %v5397 = vpop.f32.mrb[0].mxu0
        %v5398 = vadd.f32 %v5325, %v5397
        %v5399 = vpop.f32.mrb[0].mxu0
        %v5400 = vadd.f32 %v5327, %v5399
        %5401 = vmatprep.mubr.bf16.mxu0 0
        %5402 = vmatmul.mubr.bf16.gmra.mrb[0].mxu0 %v5278
        %v5403 = vpop.f32.mrb[0].mxu0
        %v5404 = vadd.f32 %v5331, %v5403
        %v5405 = vpop.f32.mrb[0].mxu0
        %v5406 = vadd.f32 %v5333, %v5405
        %v5407 = vpop.f32.mrb[0].mxu0
        %v5408 = vadd.f32 %v5335, %v5407
        %v5409 = vpop.f32.mrb[0].mxu0
        %v5410 = vadd.f32 %v5337, %v5409
        %5411 = vmatprep.mubr.bf16.mxu0 0
        %5412 = vmatmul.mubr.bf16.gmra.mrb[0].mxu0 %v5281
        %v5413 = vpop.f32.mrb[0].mxu0
        %v5414 = vadd.f32 %v5341, %v5413
        %v5415 = vpop.f32.mrb[0].mxu0
        %v5416 = vadd.f32 %v5343, %v5415
        %v5417 = vpop.f32.mrb[0].mxu0
        %v5418 = vadd.f32 %v5345, %v5417
        %v5419 = vpop.f32.mrb[0].mxu0
        %v5420 = vadd.f32 %v5347, %v5419
        %5421 = vmatprep.mubr.bf16.mxu0 0
        %5422 = vmatmul.mubr.bf16.gmra.mrb[0].mxu0 %v5284
        %v5423 = vpop.f32.mrb[0].mxu0
        %v5424 = vadd.f32 %v5351, %v5423
        %v5425 = vpop.f32.mrb[0].mxu0
        %v5426 = vadd.f32 %v5353, %v5425
        %v5427 = vpop.f32.mrb[0].mxu0
        %v5428 = vadd.f32 %v5355, %v5427
        %v5429 = vpop.f32.mrb[0].mxu0
        %v5430 = vadd.f32 %v5357, %v5429
        %5431 = vdwg.mxu0
        %v5432 = vadd.f32 %v4967, %v5394
        %v5433 = vadd.f32 %v4968, %v5396
        %v5434 = vadd.f32 %v4969, %v5398
        %v5435 = vadd.f32 %v4970, %v5400
        %v5436 = vadd.f32 %v4971, %v5404
        %v5437 = vadd.f32 %v4972, %v5406
        %v5438 = vadd.f32 %v4973, %v5408
        %v5439 = vadd.f32 %v4974, %v5410
        %v5440 = vadd.f32 %v4975, %v5414
        %v5441 = vadd.f32 %v4976, %v5416
        %v5442 = vadd.f32 %v4977, %v5418
        %v5443 = vadd.f32 %v4978, %v5420
        %v5444 = vadd.f32 %v4979, %v5424
        %v5445 = vadd.f32 %v4980, %v5426
        %v5446 = vadd.f32 %v4981, %v5428
        %v5447 = vadd.f32 %v4982, %v5430
        %v5448 = vld [vmem:[#allocation2 + $0xd8] sm:$0xff]
        %v5449 = vld [vmem:[#allocation2 + $0xe0] sm:$0xff]
        %v5450 = vld [vmem:[#allocation2 + $0xe8] sm:$0xff]
        %v5451 = vpack.c.bf16 %v4428, %v4425
        %v5452 = vpack.c.bf16 %v4429, %v4426
        %v5453 = vpack.c.bf16 %v4430, %v4427
        %v5454 = vpack.c.bf16 %v4434, %v4431
        %v5455 = vpack.c.bf16 %v4435, %v4432
        %v5456 = vpack.c.bf16 %v4436, %v4433
        %v5457 = vpack.c.bf16 %v4440, %v4437
        %v5458 = vpack.c.bf16 %v4441, %v4438
        %v5459 = vpack.c.bf16 %v4442, %v4439
        %v5460 = vpack.c.bf16 %v5448, %v4443
        %v5461 = vpack.c.bf16 %v5449, %v4444
        %v5462 = vpack.c.bf16 %v5450, %v4445
        %s5463 = scalar_lea.vmem [#allocation12], 1824
        %v5464 = vld [vmem:[%s5463] sm:$0xff]
        %v5465 = vld [vmem:[%s5463 + $0x8] sm:$0xff]
        %v5466 = vld [vmem:[%s5463 + $0x10] sm:$0xff]
        %v5467 = vld [vmem:[%s5463 + $0x18] sm:$0xff]
        %v5468 = vld [vmem:[%s5463 + $0x20] sm:$0xff]
        %v5469 = vld [vmem:[%s5463 + $0x28] sm:$0xff]
        %v5470 = vld [vmem:[%s5463 + $0x30] sm:$0xff]
        %v5471 = vld [vmem:[%s5463 + $0x38] sm:$0xff]
        %v5472 = vld [vmem:[%s5463 + $0x40] sm:$0xff]
        %v5473 = vld [vmem:[%s5463 + $0x48] sm:$0xff]
        %v5474 = vld [vmem:[%s5463 + $0x50] sm:$0xff]
        %v5475 = vld [vmem:[%s5463 + $0x58] sm:$0xff]
        %v5476 = vld [vmem:[%s5463 + $0x60] sm:$0xff]
        %v5477 = vld [vmem:[%s5463 + $0x68] sm:$0xff]
        %v5478 = vld [vmem:[%s5463 + $0x70] sm:$0xff]
        %v5479 = vld [vmem:[%s5463 + $0x78] sm:$0xff]
        %v5480 = vld [vmem:[%s5463 + $0x80] sm:$0xff]
        %v5481 = vld [vmem:[%s5463 + $0x88] sm:$0xff]
        %v5482 = vld [vmem:[%s5463 + $0x90] sm:$0xff]
        %v5483 = vld [vmem:[%s5463 + $0x98] sm:$0xff]
        %v5484 = vld [vmem:[%s5463 + $0xa0] sm:$0xff]
        %v5485 = vld [vmem:[%s5463 + $0xa8] sm:$0xff]
        %v5486 = vld [vmem:[%s5463 + $0xb0] sm:$0xff]
        %v5487 = vld [vmem:[%s5463 + $0xb8] sm:$0xff]
        %v5488 = vld [vmem:[%s5463 + $0xc0] sm:$0xff]
        %v5489 = vld [vmem:[%s5463 + $0xc8] sm:$0xff]
        %v5490 = vld [vmem:[%s5463 + $0xd0] sm:$0xff]
        %v5491 = vld [vmem:[%s5463 + $0xd8] sm:$0xff]
        %v5492 = vld [vmem:[%s5463 + $0xe0] sm:$0xff]
        %v5493 = vld [vmem:[%s5463 + $0xe8] sm:$0xff]
        %v5494 = vld [vmem:[%s5463 + $0xf0] sm:$0xff]
        %v5495 = vld [vmem:[%s5463 + $0xf8] sm:$0xff]
        %v5496 = vld [vmem:[%s5463 + $0x100] sm:$0xff]
        %v5497 = vld [vmem:[%s5463 + $0x108] sm:$0xff]
        %v5498 = vld [vmem:[%s5463 + $0x110] sm:$0xff]
        %v5499 = vld [vmem:[%s5463 + $0x118] sm:$0xff]
        %v5500 = vld [vmem:[%s5463 + $0x120] sm:$0xff]
        %v5501 = vld [vmem:[%s5463 + $0x128] sm:$0xff]
        %v5540 = vunpack.c.l.b16 %v5464
        %v5541 = vunpack.c.h.b16 %v5464
        %v5542 = vunpack.c.l.b16 %v5465
        %v5543 = vunpack.c.h.b16 %v5465
        %v5544 = vunpack.c.l.b16 %v5466
        %v5545 = vunpack.c.h.b16 %v5466
        %v5546 = vunpack.c.l.b16 %v5467
        %v5547 = vunpack.c.h.b16 %v5467
        %v5548 = vunpack.c.l.b16 %v5468
        %v5549 = vunpack.c.h.b16 %v5468
        %v5550 = vunpack.c.l.b16 %v5469
        %v5551 = vunpack.c.h.b16 %v5469
        %v5552 = vunpack.c.l.b16 %v5470
        %v5553 = vunpack.c.h.b16 %v5470
        %v5554 = vunpack.c.l.b16 %v5471
        %v5555 = vunpack.c.h.b16 %v5471
        %v5556 = vunpack.c.l.b16 %v5472
        %v5557 = vunpack.c.h.b16 %v5472
        %v5558 = vunpack.c.l.b16 %v5473
        %v5559 = vunpack.c.h.b16 %v5473
        %v5560 = vunpack.c.l.b16 %v5474
        %v5561 = vunpack.c.h.b16 %v5474
        %v5562 = vunpack.c.l.b16 %v5475
        %v5563 = vunpack.c.h.b16 %v5475
        %v5564 = vunpack.c.l.b16 %v5476
        %v5565 = vunpack.c.h.b16 %v5476
        %v5566 = vunpack.c.l.b16 %v5477
        %v5567 = vunpack.c.h.b16 %v5477
        %v5568 = vunpack.c.l.b16 %v5478
        %v5569 = vunpack.c.h.b16 %v5478
        %v5570 = vunpack.c.l.b16 %v5479
        %v5571 = vunpack.c.h.b16 %v5479
        %v5572 = vunpack.c.l.b16 %v5480
        %v5573 = vunpack.c.h.b16 %v5480
        %v5574 = vunpack.c.l.b16 %v5481
        %v5575 = vunpack.c.h.b16 %v5481
        %v5576 = vunpack.c.l.b16 %v5482
        %v5577 = vunpack.c.h.b16 %v5482
        %v5578 = vunpack.c.l.b16 %v5483
        %v5579 = vunpack.c.h.b16 %v5483
        %v5580 = vunpack.c.l.b16 %v5484
        %v5581 = vunpack.c.h.b16 %v5484
        %v5582 = vunpack.c.l.b16 %v5485
        %v5583 = vunpack.c.h.b16 %v5485
        %v5584 = vunpack.c.l.b16 %v5486
        %v5585 = vunpack.c.h.b16 %v5486
        %v5586 = vunpack.c.l.b16 %v5487
        %v5587 = vunpack.c.h.b16 %v5487
        %v5588 = vunpack.c.l.b16 %v5488
        %v5589 = vunpack.c.h.b16 %v5488
        %v5590 = vunpack.c.l.b16 %v5489
        %v5591 = vunpack.c.h.b16 %v5489
        %v5592 = vunpack.c.l.b16 %v5490
        %v5593 = vunpack.c.h.b16 %v5490
        %v5594 = vunpack.c.l.b16 %v5491
        %v5595 = vunpack.c.h.b16 %v5491
        %v5596 = vunpack.c.l.b16 %v5492
        %v5597 = vunpack.c.h.b16 %v5492
        %v5598 = vunpack.c.l.b16 %v5493
        %v5599 = vunpack.c.h.b16 %v5493
        %v5600 = vunpack.c.l.b16 %v5494
        %v5601 = vunpack.c.h.b16 %v5494
        %v5602 = vunpack.c.l.b16 %v5495
        %v5603 = vunpack.c.h.b16 %v5495
        %v5604 = vunpack.c.l.b16 %v5496
        %v5605 = vunpack.c.h.b16 %v5496
        %v5606 = vunpack.c.l.b16 %v5497
        %v5607 = vunpack.c.h.b16 %v5497
        %v5608 = vunpack.c.l.b16 %v5498
        %v5609 = vunpack.c.h.b16 %v5498
        %v5610 = vunpack.c.l.b16 %v5499
        %v5611 = vunpack.c.h.b16 %v5499
        %v5612 = vunpack.c.l.b16 %v5500
        %v5613 = vunpack.c.h.b16 %v5500
        %v5614 = vunpack.c.l.b16 %v5501
        %v5615 = vunpack.c.h.b16 %v5501
        %v5616 = vpack.c.b16 %v5542, %v5540
        %v5617 = vpack.c.b16 %v5543, %v5541
        %v5618 = vpack.c.b16 %v5546, %v5544
        %v5619 = vpack.c.b16 %v5547, %v5545
        %v5620 = vpack.c.b16 %v5550, %v5548
        %v5621 = vpack.c.b16 %v5551, %v5549
        %v5622 = vpack.c.b16 %v5554, %v5552
        %v5623 = vpack.c.b16 %v5555, %v5553
        %v5624 = vpack.c.b16 %v5558, %v5556
        %v5625 = vpack.c.b16 %v5559, %v5557
        %v5626 = vpack.c.b16 %v5562, %v5560
        %v5627 = vpack.c.b16 %v5563, %v5561
        %v5628 = vpack.c.b16 %v5566, %v5564
        %v5629 = vpack.c.b16 %v5567, %v5565
        %v5630 = vpack.c.b16 %v5570, %v5568
        %v5631 = vpack.c.b16 %v5571, %v5569
        %v5632 = vpack.c.b16 %v5574, %v5572
        %v5633 = vpack.c.b16 %v5575, %v5573
        %v5634 = vpack.c.b16 %v5578, %v5576
        %v5635 = vpack.c.b16 %v5579, %v5577
        %v5636 = vpack.c.b16 %v5582, %v5580
        %v5637 = vpack.c.b16 %v5583, %v5581
        %v5638 = vpack.c.b16 %v5586, %v5584
        %v5639 = vpack.c.b16 %v5587, %v5585
        %v5640 = vpack.c.b16 %v5590, %v5588
        %v5641 = vpack.c.b16 %v5591, %v5589
        %v5642 = vpack.c.b16 %v5594, %v5592
        %v5643 = vpack.c.b16 %v5595, %v5593
        %v5644 = vpack.c.b16 %v5598, %v5596
        %v5645 = vpack.c.b16 %v5599, %v5597
        %v5646 = vpack.c.b16 %v5602, %v5600
        %v5647 = vpack.c.b16 %v5603, %v5601
        %v5648 = vpack.c.b16 %v5606, %v5604
        %v5649 = vpack.c.b16 %v5607, %v5605
        %v5650 = vpack.c.b16 %v5610, %v5608
        %v5651 = vpack.c.b16 %v5611, %v5609
        %v5652 = vpack.c.b16 %v5614, %v5612
        %v5653 = vpack.c.b16 %v5615, %v5613
        %v5693 = vsel %vm2585, %v5453, 0
        %v5696 = vsel %vm2585, %v5456, 0
        %v5699 = vsel %vm2585, %v5459, 0
        %v5702 = vsel %vm2585, %v5462, 0
        %5704 = vmatprep.subr.bf16.mxu0 %v5617
        %5705 = vmatpush1.bf16.msra.mxu0 %v5616
        %5706 = vmatprep.subr.bf16.mxu0 %v5619
        %5707 = vmatpush1.bf16.msra.mxu0 %v5618
        %5708 = vmatprep.subr.bf16.mxu0 %v5621
        %5709 = vmatpush1.bf16.msra.mxu0 %v5620
        %5710 = vmatprep.subr.bf16.mxu0 %v5623
        %5711 = vmatpush1.bf16.msra.mxu0 %v5622
        %5712 = vmatprep.subr.bf16.mxu0 %v5625
        %5713 = vmatpush1.bf16.msra.mxu0 %v5624
        %5714 = vmatprep.subr.bf16.mxu0 %v5627
        %5715 = vmatpush1.bf16.msra.mxu0 %v5626
        %5716 = vmatprep.subr.bf16.mxu0 %v5629
        %5717 = vmatpush1.bf16.msra.mxu0 %v5628
        %5718 = vmatprep.subr.bf16.mxu0 %v5631
        %5719 = vmatpush1.bf16.msra.mxu0 %v5630
        %5720 = vmatprep.subr.bf16.mxu0 %v5633
        %5721 = vmatpush1.bf16.msra.mxu0 %v5632
        %5722 = vmatprep.subr.bf16.mxu0 %v5635
        %5723 = vmatpush1.bf16.msra.mxu0 %v5634
        %5724 = vmatprep.subr.bf16.mxu0 %v5637
        %5725 = vmatpush1.bf16.msra.mxu0 %v5636
        %5726 = vmatprep.subr.bf16.mxu0 %v5639
        %5727 = vmatpush1.bf16.msra.mxu0 %v5638
        %5728 = vmatprep.subr.bf16.mxu0 %v5641
        %5729 = vmatpush1.bf16.msra.mxu0 %v5640
        %5730 = vmatprep.subr.bf16.mxu0 %v5643
        %5731 = vmatpush1.bf16.msra.mxu0 %v5642
        %5732 = vmatprep.subr.bf16.mxu0 %v5645
        %5733 = vmatpush1.bf16.msra.mxu0 %v5644
        %5734 = vmatprep.subr.bf16.mxu0 %v5647
        %5735 = vmatpush1.bf16.msra.mxu0 %v5646
        %5736 = vmatprep.mubr.bf16.mxu0 %v5452
        %5737 = vmatmul.mubr.bf16.gmra.mrb[0].mxu0 %v5451
        %v5738 = vpop.f32.mrb[0].mxu0
        %v5739 = vadd.f32 0.0, %v5738
        %v5740 = vpop.f32.mrb[0].mxu0
        %v5741 = vadd.f32 0.0, %v5740
        %v5742 = vpop.f32.mrb[0].mxu0
        %v5743 = vadd.f32 0.0, %v5742
        %v5744 = vpop.f32.mrb[0].mxu0
        %v5745 = vadd.f32 0.0, %v5744
        %5746 = vmatprep.mubr.bf16.mxu0 %v5455
        %5747 = vmatmul.mubr.bf16.gmra.mrb[0].mxu0 %v5454
        %v5748 = vpop.f32.mrb[0].mxu0
        %v5749 = vadd.f32 0.0, %v5748
        %v5750 = vpop.f32.mrb[0].mxu0
        %v5751 = vadd.f32 0.0, %v5750
        %v5752 = vpop.f32.mrb[0].mxu0
        %v5753 = vadd.f32 0.0, %v5752
        %v5754 = vpop.f32.mrb[0].mxu0
        %v5755 = vadd.f32 0.0, %v5754
        %5756 = vmatprep.mubr.bf16.mxu0 %v5458
        %5757 = vmatmul.mubr.bf16.gmra.mrb[0].mxu0 %v5457
        %v5758 = vpop.f32.mrb[0].mxu0
        %v5759 = vadd.f32 0.0, %v5758
        %v5760 = vpop.f32.mrb[0].mxu0
        %v5761 = vadd.f32 0.0, %v5760
        %v5762 = vpop.f32.mrb[0].mxu0
        %v5763 = vadd.f32 0.0, %v5762
        %v5764 = vpop.f32.mrb[0].mxu0
        %v5765 = vadd.f32 0.0, %v5764
        %5766 = vmatprep.mubr.bf16.mxu0 %v5461
        %5767 = vmatmul.mubr.bf16.gmra.mrb[0].mxu0 %v5460
        %v5768 = vpop.f32.mrb[0].mxu0
        %v5769 = vadd.f32 0.0, %v5768
        %v5770 = vpop.f32.mrb[0].mxu0
        %v5771 = vadd.f32 0.0, %v5770
        %v5772 = vpop.f32.mrb[0].mxu0
        %v5773 = vadd.f32 0.0, %v5772
        %v5774 = vpop.f32.mrb[0].mxu0
        %v5775 = vadd.f32 0.0, %v5774
        %5776 = vdwg.mxu0
        %5777 = vmatprep.subr.bf16.mxu0 %v5649
        %5778 = vmatpush1.bf16.msra.mxu0 %v5648
        %5779 = vmatprep.subr.bf16.mxu0 %v5651
        %5780 = vmatpush1.bf16.msra.mxu0 %v5650
        %5781 = vmatprep.subr.bf16.mxu0 %v5653
        %5782 = vmatpush1.bf16.msra.mxu0 %v5652
        %5783 = vmatprep.subr.bf16.mxu0 0
        %5784 = vmatpush1.bf16.msra.mxu0 0
        %5785 = vmatprep.subr.bf16.mxu0 0
        %5786 = vmatpush1.bf16.msra.mxu0 0
        %5787 = vmatprep.subr.bf16.mxu0 0
        %5788 = vmatpush1.bf16.msra.mxu0 0
        %5789 = vmatprep.subr.bf16.mxu0 0
        %5790 = vmatpush1.bf16.msra.mxu0 0
        %5791 = vmatprep.subr.bf16.mxu0 0
        %5792 = vmatpush1.bf16.msra.mxu0 0
        %5793 = vmatprep.subr.bf16.mxu0 0
        %5794 = vmatpush1.bf16.msra.mxu0 0
        %5795 = vmatprep.subr.bf16.mxu0 0
        %5796 = vmatpush1.bf16.msra.mxu0 0
        %5797 = vmatprep.subr.bf16.mxu0 0
        %5798 = vmatpush1.bf16.msra.mxu0 0
        %5799 = vmatprep.subr.bf16.mxu0 0
        %5800 = vmatpush1.bf16.msra.mxu0 0
        %5801 = vmatprep.subr.bf16.mxu0 0
        %5802 = vmatpush1.bf16.msra.mxu0 0
        %5803 = vmatprep.subr.bf16.mxu0 0
        %5804 = vmatpush1.bf16.msra.mxu0 0
        %5805 = vmatprep.subr.bf16.mxu0 0
        %5806 = vmatpush1.bf16.msra.mxu0 0
        %5807 = vmatprep.subr.bf16.mxu0 0
        %5808 = vmatpush1.bf16.msra.mxu0 0
        %5809 = vmatprep.mubr.bf16.mxu0 0
        %5810 = vmatmul.mubr.bf16.gmra.mrb[0].mxu0 %v5693
        %v5811 = vpop.f32.mrb[0].mxu0
        %v5812 = vadd.f32 %v5739, %v5811
        %v5813 = vpop.f32.mrb[0].mxu0
        %v5814 = vadd.f32 %v5741, %v5813
        %v5815 = vpop.f32.mrb[0].mxu0
        %v5816 = vadd.f32 %v5743, %v5815
        %v5817 = vpop.f32.mrb[0].mxu0
        %v5818 = vadd.f32 %v5745, %v5817
        %5819 = vmatprep.mubr.bf16.mxu0 0
        %5820 = vmatmul.mubr.bf16.gmra.mrb[0].mxu0 %v5696
        %v5821 = vpop.f32.mrb[0].mxu0
        %v5822 = vadd.f32 %v5749, %v5821
        %v5823 = vpop.f32.mrb[0].mxu0
        %v5824 = vadd.f32 %v5751, %v5823
        %v5825 = vpop.f32.mrb[0].mxu0
        %v5826 = vadd.f32 %v5753, %v5825
        %v5827 = vpop.f32.mrb[0].mxu0
        %v5828 = vadd.f32 %v5755, %v5827
        %5829 = vmatprep.mubr.bf16.mxu0 0
        %5830 = vmatmul.mubr.bf16.gmra.mrb[0].mxu0 %v5699
        %v5831 = vpop.f32.mrb[0].mxu0
        %v5832 = vadd.f32 %v5759, %v5831
        %v5833 = vpop.f32.mrb[0].mxu0
        %v5834 = vadd.f32 %v5761, %v5833
        %v5835 = vpop.f32.mrb[0].mxu0
        %v5836 = vadd.f32 %v5763, %v5835
        %v5837 = vpop.f32.mrb[0].mxu0
        %v5838 = vadd.f32 %v5765, %v5837
        %5839 = vmatprep.mubr.bf16.mxu0 0
        %5840 = vmatmul.mubr.bf16.gmra.mrb[0].mxu0 %v5702
        %v5841 = vpop.f32.mrb[0].mxu0
        %v5842 = vadd.f32 %v5769, %v5841
        %v5843 = vpop.f32.mrb[0].mxu0
        %v5844 = vadd.f32 %v5771, %v5843
        %v5845 = vpop.f32.mrb[0].mxu0
        %v5846 = vadd.f32 %v5773, %v5845
        %v5847 = vpop.f32.mrb[0].mxu0
        %v5848 = vadd.f32 %v5775, %v5847
        %5849 = vdwg.mxu0
        %v5850 = vadd.f32 %v5432, %v5812
        %v5851 = vadd.f32 %v5433, %v5814
        %v5852 = vadd.f32 %v5434, %v5816
        %v5853 = vadd.f32 %v5435, %v5818
        %v5854 = vadd.f32 %v5436, %v5822
        %v5855 = vadd.f32 %v5437, %v5824
        %v5856 = vadd.f32 %v5438, %v5826
        %v5857 = vadd.f32 %v5439, %v5828
        %v5858 = vadd.f32 %v5440, %v5832
        %v5859 = vadd.f32 %v5441, %v5834
        %v5860 = vadd.f32 %v5442, %v5836
        %v5861 = vadd.f32 %v5443, %v5838
        %v5862 = vadd.f32 %v5444, %v5842
        %v5863 = vadd.f32 %v5445, %v5844
        %v5864 = vadd.f32 %v5446, %v5846
        %v5865 = vadd.f32 %v5447, %v5848
        %v5866 = vld [vmem:[#allocation2 + $0x30] sm:$0xfe]
        %v5867 = vld [vmem:[#allocation2 + $0x38] sm:$0xfe]
        %v5868 = vld [vmem:[#allocation2 + $0x40] sm:$0xfe]
        %v5869 = vld [vmem:[#allocation2 + $0x48] sm:$0xff]
        %v5870 = vld [vmem:[#allocation2 + $0x50] sm:$0xff]
        %v5871 = vld [vmem:[#allocation2 + $0x58] sm:$0xff]
        %v5872 = vld [vmem:[#allocation2 + $0x60] sm:$0xff]
        %v5873 = vld [vmem:[#allocation2 + $0x68] sm:$0xff]
        %v5874 = vld [vmem:[#allocation2 + $0x70] sm:$0xff]
        %v5875 = vld [vmem:[#allocation2 + $0x78] sm:$0xff]
        %v5876 = vld [vmem:[#allocation2 + $0x80] sm:$0xff]
        %v5877 = vld [vmem:[#allocation2 + $0x88] sm:$0xff]
        %v5878 = vld [vmem:[#allocation2 + $0x90] sm:$0xff]
        %v5879 = vld [vmem:[#allocation2 + $0x98] sm:$0xff]
        %v5880 = vld [vmem:[#allocation2 + $0xa0] sm:$0xff]
        %v5881 = vld [vmem:[#allocation2 + $0xa8] sm:$0xff]
        %v5882 = vld [vmem:[#allocation2 + $0xb0] sm:$0xff]
        %v5883 = vld [vmem:[#allocation2 + $0xb8] sm:$0xff]
        %v5884 = vld [vmem:[#allocation2 + $0xc0] sm:$0xff]
        %v5885 = vld [vmem:[#allocation2 + $0xc8] sm:$0xff]
        %v5886 = vld [vmem:[#allocation2 + $0xd0] sm:$0xff]
        %v5887 = vld [vmem:[#allocation2 + $0xd8] sm:$0xff]
        %v5888 = vld [vmem:[#allocation2 + $0xe0] sm:$0xff]
        %v5889 = vld [vmem:[#allocation2 + $0xe8] sm:$0xff]
        %v5890 = vld [vmem:[#allocation2 + $0xf0] sm:$0x1]
        %v5891 = vld [vmem:[#allocation2 + $0xf8] sm:$0x1]
        %v5892 = vld [vmem:[#allocation2 + $0x100] sm:$0x1]
        %v5893 = vpack.c.bf16 %v5869, %v5866
        %v5894 = vpack.c.bf16 %v5870, %v5867
        %v5895 = vpack.c.bf16 %v5871, %v5868
        %v5896 = vpack.c.bf16 %v5875, %v5872
        %v5897 = vpack.c.bf16 %v5876, %v5873
        %v5898 = vpack.c.bf16 %v5877, %v5874
        %v5899 = vpack.c.bf16 %v5881, %v5878
        %v5900 = vpack.c.bf16 %v5882, %v5879
        %v5901 = vpack.c.bf16 %v5883, %v5880
        %v5902 = vpack.c.bf16 %v5887, %v5884
        %v5903 = vpack.c.bf16 %v5888, %v5885
        %v5904 = vpack.c.bf16 %v5889, %v5886
        %v5905 = vpack.c.bf16 %v5890, %v5890
        %v5906 = vpack.c.bf16 %v5891, %v5891
        %v5907 = vpack.c.bf16 %v5892, %v5892
        %s5908 = scalar_lea.vmem [#allocation12], 2128
        %v5909 = vld [vmem:[%s5908] sm:$0xff]
        %v5910 = vld [vmem:[%s5908 + $0x8] sm:$0xff]
        %v5911 = vld [vmem:[%s5908 + $0x10] sm:$0xff]
        %v5912 = vld [vmem:[%s5908 + $0x18] sm:$0xff]
        %v5913 = vld [vmem:[%s5908 + $0x20] sm:$0xff]
        %v5914 = vld [vmem:[%s5908 + $0x28] sm:$0xff]
        %v5915 = vld [vmem:[%s5908 + $0x30] sm:$0xff]
        %v5916 = vld [vmem:[%s5908 + $0x38] sm:$0xff]
        %v5917 = vld [vmem:[%s5908 + $0x40] sm:$0xff]
        %v5918 = vld [vmem:[%s5908 + $0x48] sm:$0xff]
        %v5919 = vld [vmem:[%s5908 + $0x50] sm:$0xff]
        %v5920 = vld [vmem:[%s5908 + $0x58] sm:$0xff]
        %v5921 = vld [vmem:[%s5908 + $0x60] sm:$0xff]
        %v5922 = vld [vmem:[%s5908 + $0x68] sm:$0xff]
        %v5923 = vld [vmem:[%s5908 + $0x70] sm:$0xff]
        %v5924 = vld [vmem:[%s5908 + $0x78] sm:$0xff]
        %v5925 = vld [vmem:[%s5908 + $0x80] sm:$0xff]
        %v5926 = vld [vmem:[%s5908 + $0x88] sm:$0xff]
        %v5927 = vld [vmem:[%s5908 + $0x90] sm:$0xff]
        %v5928 = vld [vmem:[%s5908 + $0x98] sm:$0xff]
        %v5929 = vld [vmem:[%s5908 + $0xa0] sm:$0xff]
        %v5930 = vld [vmem:[%s5908 + $0xa8] sm:$0xff]
        %v5931 = vld [vmem:[%s5908 + $0xb0] sm:$0xff]
        %v5932 = vld [vmem:[%s5908 + $0xb8] sm:$0xff]
        %v5933 = vld [vmem:[%s5908 + $0xc0] sm:$0xff]
        %v5934 = vld [vmem:[%s5908 + $0xc8] sm:$0xff]
        %v5935 = vld [vmem:[%s5908 + $0xd0] sm:$0xff]
        %v5936 = vld [vmem:[%s5908 + $0xd8] sm:$0xff]
        %v5937 = vld [vmem:[%s5908 + $0xe0] sm:$0xff]
        %v5938 = vld [vmem:[%s5908 + $0xe8] sm:$0xff]
        %v5939 = vld [vmem:[%s5908 + $0xf0] sm:$0xff]
        %v5940 = vld [vmem:[%s5908 + $0xf8] sm:$0xff]
        %v5941 = vld [vmem:[%s5908 + $0x100] sm:$0xff]
        %v5942 = vld [vmem:[%s5908 + $0x108] sm:$0xff]
        %v5943 = vld [vmem:[%s5908 + $0x110] sm:$0xff]
        %v5944 = vld [vmem:[%s5908 + $0x118] sm:$0xff]
        %v5945 = vld [vmem:[%s5908 + $0x120] sm:$0xff]
        %v5946 = vld [vmem:[%s5908 + $0x128] sm:$0xff]
        %v5948 = vshrl.u32 %v5893, 16
        %v5950 = vshll.u32 %v5893, 16
        %v5952 = vrot.slane %v5950, 1
        %v5953 = vor.u32 %v5948, %v5952
        %v5955 = vshll.u32 %v5896, 16
        %v5957 = vrot.slane %v5955, 1
        %v5958 = vsel %vm2728, %v5953, %v5957
        %v5960 = vshrl.u32 %v5894, 16
        %v5962 = vshll.u32 %v5894, 16
        %v5964 = vrot.slane %v5962, 1
        %v5965 = vor.u32 %v5960, %v5964
        %v5967 = vshll.u32 %v5897, 16
        %v5969 = vrot.slane %v5967, 1
        %v5970 = vsel %vm2728, %v5965, %v5969
        %v5972 = vshrl.u32 %v5895, 16
        %v5974 = vshll.u32 %v5895, 16
        %v5976 = vrot.slane %v5974, 1
        %v5977 = vor.u32 %v5972, %v5976
        %v5979 = vshll.u32 %v5898, 16
        %v5981 = vrot.slane %v5979, 1
        %v5982 = vsel %vm2728, %v5977, %v5981
        %v5983 = vshrl.u32 %v5896, 16
        %v5985 = vor.u32 %v5983, %v5957
        %v5987 = vshll.u32 %v5899, 16
        %v5989 = vrot.slane %v5987, 1
        %v5990 = vsel %vm2728, %v5985, %v5989
        %v5991 = vshrl.u32 %v5897, 16
        %v5993 = vor.u32 %v5991, %v5969
        %v5995 = vshll.u32 %v5900, 16
        %v5997 = vrot.slane %v5995, 1
        %v5998 = vsel %vm2728, %v5993, %v5997
        %v5999 = vshrl.u32 %v5898, 16
        %v6001 = vor.u32 %v5999, %v5981
        %v6003 = vshll.u32 %v5901, 16
        %v6005 = vrot.slane %v6003, 1
        %v6006 = vsel %vm2728, %v6001, %v6005
        %v6007 = vshrl.u32 %v5899, 16
        %v6009 = vor.u32 %v6007, %v5989
        %v6011 = vshll.u32 %v5902, 16
        %v6013 = vrot.slane %v6011, 1
        %v6014 = vsel %vm2728, %v6009, %v6013
        %v6015 = vshrl.u32 %v5900, 16
        %v6017 = vor.u32 %v6015, %v5997
        %v6019 = vshll.u32 %v5903, 16
        %v6021 = vrot.slane %v6019, 1
        %v6022 = vsel %vm2728, %v6017, %v6021
        %v6023 = vshrl.u32 %v5901, 16
        %v6025 = vor.u32 %v6023, %v6005
        %v6027 = vshll.u32 %v5904, 16
        %v6029 = vrot.slane %v6027, 1
        %v6030 = vsel %vm2728, %v6025, %v6029
        %v6031 = vshrl.u32 %v5902, 16
        %v6033 = vor.u32 %v6031, %v6013
        %v6035 = vshll.u32 %v5905, 16
        %v6037 = vrot.slane %v6035, 1
        %v6038 = vsel %vm2728, %v6033, %v6037
        %v6039 = vshrl.u32 %v5903, 16
        %v6041 = vor.u32 %v6039, %v6021
        %v6043 = vshll.u32 %v5906, 16
        %v6045 = vrot.slane %v6043, 1
        %v6046 = vsel %vm2728, %v6041, %v6045
        %v6047 = vshrl.u32 %v5904, 16
        %v6049 = vor.u32 %v6047, %v6029
        %v6051 = vshll.u32 %v5907, 16
        %v6053 = vrot.slane %v6051, 1
        %v6054 = vsel %vm2728, %v6049, %v6053
        %v6101 = vunpack.c.l.b16 %v5909
        %v6102 = vunpack.c.h.b16 %v5909
        %v6103 = vunpack.c.l.b16 %v5910
        %v6104 = vunpack.c.h.b16 %v5910
        %v6105 = vunpack.c.l.b16 %v5911
        %v6106 = vunpack.c.h.b16 %v5911
        %v6107 = vunpack.c.l.b16 %v5912
        %v6108 = vunpack.c.h.b16 %v5912
        %v6109 = vunpack.c.l.b16 %v5913
        %v6110 = vunpack.c.h.b16 %v5913
        %v6111 = vunpack.c.l.b16 %v5914
        %v6112 = vunpack.c.h.b16 %v5914
        %v6113 = vunpack.c.l.b16 %v5915
        %v6114 = vunpack.c.h.b16 %v5915
        %v6115 = vunpack.c.l.b16 %v5916
        %v6116 = vunpack.c.h.b16 %v5916
        %v6117 = vunpack.c.l.b16 %v5917
        %v6118 = vunpack.c.h.b16 %v5917
        %v6119 = vunpack.c.l.b16 %v5918
        %v6120 = vunpack.c.h.b16 %v5918
        %v6121 = vunpack.c.l.b16 %v5919
        %v6122 = vunpack.c.h.b16 %v5919
        %v6123 = vunpack.c.l.b16 %v5920
        %v6124 = vunpack.c.h.b16 %v5920
        %v6125 = vunpack.c.l.b16 %v5921
        %v6126 = vunpack.c.h.b16 %v5921
        %v6127 = vunpack.c.l.b16 %v5922
        %v6128 = vunpack.c.h.b16 %v5922
        %v6129 = vunpack.c.l.b16 %v5923
        %v6130 = vunpack.c.h.b16 %v5923
        %v6131 = vunpack.c.l.b16 %v5924
        %v6132 = vunpack.c.h.b16 %v5924
        %v6133 = vunpack.c.l.b16 %v5925
        %v6134 = vunpack.c.h.b16 %v5925
        %v6135 = vunpack.c.l.b16 %v5926
        %v6136 = vunpack.c.h.b16 %v5926
        %v6137 = vunpack.c.l.b16 %v5927
        %v6138 = vunpack.c.h.b16 %v5927
        %v6139 = vunpack.c.l.b16 %v5928
        %v6140 = vunpack.c.h.b16 %v5928
        %v6141 = vunpack.c.l.b16 %v5929
        %v6142 = vunpack.c.h.b16 %v5929
        %v6143 = vunpack.c.l.b16 %v5930
        %v6144 = vunpack.c.h.b16 %v5930
        %v6145 = vunpack.c.l.b16 %v5931
        %v6146 = vunpack.c.h.b16 %v5931
        %v6147 = vunpack.c.l.b16 %v5932
        %v6148 = vunpack.c.h.b16 %v5932
        %v6149 = vunpack.c.l.b16 %v5933
        %v6150 = vunpack.c.h.b16 %v5933
        %v6151 = vunpack.c.l.b16 %v5934
        %v6152 = vunpack.c.h.b16 %v5934
        %v6153 = vunpack.c.l.b16 %v5935
        %v6154 = vunpack.c.h.b16 %v5935
        %v6155 = vunpack.c.l.b16 %v5936
        %v6156 = vunpack.c.h.b16 %v5936
        %v6157 = vunpack.c.l.b16 %v5937
        %v6158 = vunpack.c.h.b16 %v5937
        %v6159 = vunpack.c.l.b16 %v5938
        %v6160 = vunpack.c.h.b16 %v5938
        %v6161 = vunpack.c.l.b16 %v5939
        %v6162 = vunpack.c.h.b16 %v5939
        %v6163 = vunpack.c.l.b16 %v5940
        %v6164 = vunpack.c.h.b16 %v5940
        %v6165 = vunpack.c.l.b16 %v5941
        %v6166 = vunpack.c.h.b16 %v5941
        %v6167 = vunpack.c.l.b16 %v5942
        %v6168 = vunpack.c.h.b16 %v5942
        %v6169 = vunpack.c.l.b16 %v5943
        %v6170 = vunpack.c.h.b16 %v5943
        %v6171 = vunpack.c.l.b16 %v5944
        %v6172 = vunpack.c.h.b16 %v5944
        %v6173 = vunpack.c.l.b16 %v5945
        %v6174 = vunpack.c.h.b16 %v5945
        %v6175 = vunpack.c.l.b16 %v5946
        %v6176 = vunpack.c.h.b16 %v5946
        %v6177 = vpack.c.b16 %v6103, %v6101
        %v6178 = vpack.c.b16 %v6104, %v6102
        %v6179 = vpack.c.b16 %v6107, %v6105
        %v6180 = vpack.c.b16 %v6108, %v6106
        %v6181 = vpack.c.b16 %v6111, %v6109
        %v6182 = vpack.c.b16 %v6112, %v6110
        %v6183 = vpack.c.b16 %v6115, %v6113
        %v6184 = vpack.c.b16 %v6116, %v6114
        %v6185 = vpack.c.b16 %v6119, %v6117
        %v6186 = vpack.c.b16 %v6120, %v6118
        %v6187 = vpack.c.b16 %v6123, %v6121
        %v6188 = vpack.c.b16 %v6124, %v6122
        %v6189 = vpack.c.b16 %v6127, %v6125
        %v6190 = vpack.c.b16 %v6128, %v6126
        %v6191 = vpack.c.b16 %v6131, %v6129
        %v6192 = vpack.c.b16 %v6132, %v6130
        %v6193 = vpack.c.b16 %v6135, %v6133
        %v6194 = vpack.c.b16 %v6136, %v6134
        %v6195 = vpack.c.b16 %v6139, %v6137
        %v6196 = vpack.c.b16 %v6140, %v6138
        %v6197 = vpack.c.b16 %v6143, %v6141
        %v6198 = vpack.c.b16 %v6144, %v6142
        %v6199 = vpack.c.b16 %v6147, %v6145
        %v6200 = vpack.c.b16 %v6148, %v6146
        %v6201 = vpack.c.b16 %v6151, %v6149
        %v6202 = vpack.c.b16 %v6152, %v6150
        %v6203 = vpack.c.b16 %v6155, %v6153
        %v6204 = vpack.c.b16 %v6156, %v6154
        %v6205 = vpack.c.b16 %v6159, %v6157
        %v6206 = vpack.c.b16 %v6160, %v6158
        %v6207 = vpack.c.b16 %v6163, %v6161
        %v6208 = vpack.c.b16 %v6164, %v6162
        %v6209 = vpack.c.b16 %v6167, %v6165
        %v6210 = vpack.c.b16 %v6168, %v6166
        %v6211 = vpack.c.b16 %v6171, %v6169
        %v6212 = vpack.c.b16 %v6172, %v6170
        %v6213 = vpack.c.b16 %v6175, %v6173
        %v6214 = vpack.c.b16 %v6176, %v6174
        %v6254 = vsel %vm2585, %v5982, 0
        %v6257 = vsel %vm2585, %v6006, 0
        %v6260 = vsel %vm2585, %v6030, 0
        %v6263 = vsel %vm2585, %v6054, 0
        %6265 = vmatprep.subr.bf16.mxu0 %v6178
        %6266 = vmatpush1.bf16.msra.mxu0 %v6177
        %6267 = vmatprep.subr.bf16.mxu0 %v6180
        %6268 = vmatpush1.bf16.msra.mxu0 %v6179
        %6269 = vmatprep.subr.bf16.mxu0 %v6182
        %6270 = vmatpush1.bf16.msra.mxu0 %v6181
        %6271 = vmatprep.subr.bf16.mxu0 %v6184
        %6272 = vmatpush1.bf16.msra.mxu0 %v6183
        %6273 = vmatprep.subr.bf16.mxu0 %v6186
        %6274 = vmatpush1.bf16.msra.mxu0 %v6185
        %6275 = vmatprep.subr.bf16.mxu0 %v6188
        %6276 = vmatpush1.bf16.msra.mxu0 %v6187
        %6277 = vmatprep.subr.bf16.mxu0 %v6190
        %6278 = vmatpush1.bf16.msra.mxu0 %v6189
        %6279 = vmatprep.subr.bf16.mxu0 %v6192
        %6280 = vmatpush1.bf16.msra.mxu0 %v6191
        %6281 = vmatprep.subr.bf16.mxu0 %v6194
        %6282 = vmatpush1.bf16.msra.mxu0 %v6193
        %6283 = vmatprep.subr.bf16.mxu0 %v6196
        %6284 = vmatpush1.bf16.msra.mxu0 %v6195
        %6285 = vmatprep.subr.bf16.mxu0 %v6198
        %6286 = vmatpush1.bf16.msra.mxu0 %v6197
        %6287 = vmatprep.subr.bf16.mxu0 %v6200
        %6288 = vmatpush1.bf16.msra.mxu0 %v6199
        %6289 = vmatprep.subr.bf16.mxu0 %v6202
        %6290 = vmatpush1.bf16.msra.mxu0 %v6201
        %6291 = vmatprep.subr.bf16.mxu0 %v6204
        %6292 = vmatpush1.bf16.msra.mxu0 %v6203
        %6293 = vmatprep.subr.bf16.mxu0 %v6206
        %6294 = vmatpush1.bf16.msra.mxu0 %v6205
        %6295 = vmatprep.subr.bf16.mxu0 %v6208
        %6296 = vmatpush1.bf16.msra.mxu0 %v6207
        %6297 = vmatprep.mubr.bf16.mxu0 %v5970
        %6298 = vmatmul.mubr.bf16.gmra.mrb[0].mxu0 %v5958
        %v6299 = vpop.f32.mrb[0].mxu0
        %v6300 = vadd.f32 0.0, %v6299
        %v6301 = vpop.f32.mrb[0].mxu0
        %v6302 = vadd.f32 0.0, %v6301
        %v6303 = vpop.f32.mrb[0].mxu0
        %v6304 = vadd.f32 0.0, %v6303
        %v6305 = vpop.f32.mrb[0].mxu0
        %v6306 = vadd.f32 0.0, %v6305
        %6307 = vmatprep.mubr.bf16.mxu0 %v5998
        %6308 = vmatmul.mubr.bf16.gmra.mrb[0].mxu0 %v5990
        %v6309 = vpop.f32.mrb[0].mxu0
        %v6310 = vadd.f32 0.0, %v6309
        %v6311 = vpop.f32.mrb[0].mxu0
        %v6312 = vadd.f32 0.0, %v6311
        %v6313 = vpop.f32.mrb[0].mxu0
        %v6314 = vadd.f32 0.0, %v6313
        %v6315 = vpop.f32.mrb[0].mxu0
        %v6316 = vadd.f32 0.0, %v6315
        %6317 = vmatprep.mubr.bf16.mxu0 %v6022
        %6318 = vmatmul.mubr.bf16.gmra.mrb[0].mxu0 %v6014
        %v6319 = vpop.f32.mrb[0].mxu0
        %v6320 = vadd.f32 0.0, %v6319
        %v6321 = vpop.f32.mrb[0].mxu0
        %v6322 = vadd.f32 0.0, %v6321
        %v6323 = vpop.f32.mrb[0].mxu0
        %v6324 = vadd.f32 0.0, %v6323
        %v6325 = vpop.f32.mrb[0].mxu0
        %v6326 = vadd.f32 0.0, %v6325
        %6327 = vmatprep.mubr.bf16.mxu0 %v6046
        %6328 = vmatmul.mubr.bf16.gmra.mrb[0].mxu0 %v6038
        %v6329 = vpop.f32.mrb[0].mxu0
        %v6330 = vadd.f32 0.0, %v6329
        %v6331 = vpop.f32.mrb[0].mxu0
        %v6332 = vadd.f32 0.0, %v6331
        %v6333 = vpop.f32.mrb[0].mxu0
        %v6334 = vadd.f32 0.0, %v6333
        %v6335 = vpop.f32.mrb[0].mxu0
        %v6336 = vadd.f32 0.0, %v6335
        %6337 = vdwg.mxu0
        %6338 = vmatprep.subr.bf16.mxu0 %v6210
        %6339 = vmatpush1.bf16.msra.mxu0 %v6209
        %6340 = vmatprep.subr.bf16.mxu0 %v6212
        %6341 = vmatpush1.bf16.msra.mxu0 %v6211
        %6342 = vmatprep.subr.bf16.mxu0 %v6214
        %6343 = vmatpush1.bf16.msra.mxu0 %v6213
        %6344 = vmatprep.subr.bf16.mxu0 0
        %6345 = vmatpush1.bf16.msra.mxu0 0
        %6346 = vmatprep.subr.bf16.mxu0 0
        %6347 = vmatpush1.bf16.msra.mxu0 0
        %6348 = vmatprep.subr.bf16.mxu0 0
        %6349 = vmatpush1.bf16.msra.mxu0 0
        %6350 = vmatprep.subr.bf16.mxu0 0
        %6351 = vmatpush1.bf16.msra.mxu0 0
        %6352 = vmatprep.subr.bf16.mxu0 0
        %6353 = vmatpush1.bf16.msra.mxu0 0
        %6354 = vmatprep.subr.bf16.mxu0 0
        %6355 = vmatpush1.bf16.msra.mxu0 0
        %6356 = vmatprep.subr.bf16.mxu0 0
        %6357 = vmatpush1.bf16.msra.mxu0 0
        %6358 = vmatprep.subr.bf16.mxu0 0
        %6359 = vmatpush1.bf16.msra.mxu0 0
        %6360 = vmatprep.subr.bf16.mxu0 0
        %6361 = vmatpush1.bf16.msra.mxu0 0
        %6362 = vmatprep.subr.bf16.mxu0 0
        %6363 = vmatpush1.bf16.msra.mxu0 0
        %6364 = vmatprep.subr.bf16.mxu0 0
        %6365 = vmatpush1.bf16.msra.mxu0 0
        %6366 = vmatprep.subr.bf16.mxu0 0
        %6367 = vmatpush1.bf16.msra.mxu0 0
        %6368 = vmatprep.subr.bf16.mxu0 0
        %6369 = vmatpush1.bf16.msra.mxu0 0
        %6370 = vmatprep.mubr.bf16.mxu0 0
        %6371 = vmatmul.mubr.bf16.gmra.mrb[0].mxu0 %v6254
        %v6372 = vpop.f32.mrb[0].mxu0
        %v6373 = vadd.f32 %v6300, %v6372
        %v6374 = vpop.f32.mrb[0].mxu0
        %v6375 = vadd.f32 %v6302, %v6374
        %v6376 = vpop.f32.mrb[0].mxu0
        %v6377 = vadd.f32 %v6304, %v6376
        %v6378 = vpop.f32.mrb[0].mxu0
        %v6379 = vadd.f32 %v6306, %v6378
        %6380 = vmatprep.mubr.bf16.mxu0 0
        %6381 = vmatmul.mubr.bf16.gmra.mrb[0].mxu0 %v6257
        %v6382 = vpop.f32.mrb[0].mxu0
        %v6383 = vadd.f32 %v6310, %v6382
        %v6384 = vpop.f32.mrb[0].mxu0
        %v6385 = vadd.f32 %v6312, %v6384
        %v6386 = vpop.f32.mrb[0].mxu0
        %v6387 = vadd.f32 %v6314, %v6386
        %v6388 = vpop.f32.mrb[0].mxu0
        %v6389 = vadd.f32 %v6316, %v6388
        %6390 = vmatprep.mubr.bf16.mxu0 0
        %6391 = vmatmul.mubr.bf16.gmra.mrb[0].mxu0 %v6260
        %v6392 = vpop.f32.mrb[0].mxu0
        %v6393 = vadd.f32 %v6320, %v6392
        %v6394 = vpop.f32.mrb[0].mxu0
        %v6395 = vadd.f32 %v6322, %v6394
        %v6396 = vpop.f32.mrb[0].mxu0
        %v6397 = vadd.f32 %v6324, %v6396
        %v6398 = vpop.f32.mrb[0].mxu0
        %v6399 = vadd.f32 %v6326, %v6398
        %6400 = vmatprep.mubr.bf16.mxu0 0
        %6401 = vmatmul.mubr.bf16.gmra.mrb[0].mxu0 %v6263
        %v6402 = vpop.f32.mrb[0].mxu0
        %v6403 = vadd.f32 %v6330, %v6402
        %v6404 = vpop.f32.mrb[0].mxu0
        %v6405 = vadd.f32 %v6332, %v6404
        %v6406 = vpop.f32.mrb[0].mxu0
        %v6407 = vadd.f32 %v6334, %v6406
        %v6408 = vpop.f32.mrb[0].mxu0
        %v6409 = vadd.f32 %v6336, %v6408
        %6410 = vdwg.mxu0
        %v6411 = vadd.f32 %v5850, %v6373
        %v6412 = vadd.f32 %v5851, %v6375
        %v6413 = vadd.f32 %v5852, %v6377
        %v6414 = vadd.f32 %v5853, %v6379
        %v6415 = vadd.f32 %v5854, %v6383
        %v6416 = vadd.f32 %v5855, %v6385
        %v6417 = vadd.f32 %v5856, %v6387
        %v6418 = vadd.f32 %v5857, %v6389
        %v6419 = vadd.f32 %v5858, %v6393
        %v6420 = vadd.f32 %v5859, %v6395
        %v6421 = vadd.f32 %v5860, %v6397
        %v6422 = vadd.f32 %v5861, %v6399
        %v6423 = vadd.f32 %v5862, %v6403
        %v6424 = vadd.f32 %v5863, %v6405
        %v6425 = vadd.f32 %v5864, %v6407
        %v6426 = vadd.f32 %v5865, %v6409
        %v6427 = vld [vmem:[#allocation2 + $0x30] sm:$0xfc]
        %v6428 = vld [vmem:[#allocation2 + $0x38] sm:$0xfc]
        %v6429 = vld [vmem:[#allocation2 + $0x40] sm:$0xfc]
        %v6430 = vld [vmem:[#allocation2 + $0xf0] sm:$0x3]
        %v6431 = vld [vmem:[#allocation2 + $0xf8] sm:$0x3]
        %v6432 = vld [vmem:[#allocation2 + $0x100] sm:$0x3]
        %v6433 = vpack.c.bf16 %v5869, %v6427
        %v6434 = vpack.c.bf16 %v5870, %v6428
        %v6435 = vpack.c.bf16 %v5871, %v6429
        %v6436 = vpack.c.bf16 %v6430, %v6430
        %v6437 = vpack.c.bf16 %v6431, %v6431
        %v6438 = vpack.c.bf16 %v6432, %v6432
        %s6439 = scalar_lea.vmem [#allocation12], 2432
        %v6440 = vld [vmem:[%s6439] sm:$0xff]
        %v6441 = vld [vmem:[%s6439 + $0x8] sm:$0xff]
        %v6442 = vld [vmem:[%s6439 + $0x10] sm:$0xff]
        %v6443 = vld [vmem:[%s6439 + $0x18] sm:$0xff]
        %v6444 = vld [vmem:[%s6439 + $0x20] sm:$0xff]
        %v6445 = vld [vmem:[%s6439 + $0x28] sm:$0xff]
        %v6446 = vld [vmem:[%s6439 + $0x30] sm:$0xff]
        %v6447 = vld [vmem:[%s6439 + $0x38] sm:$0xff]
        %v6448 = vld [vmem:[%s6439 + $0x40] sm:$0xff]
        %v6449 = vld [vmem:[%s6439 + $0x48] sm:$0xff]
        %v6450 = vld [vmem:[%s6439 + $0x50] sm:$0xff]
        %v6451 = vld [vmem:[%s6439 + $0x58] sm:$0xff]
        %v6452 = vld [vmem:[%s6439 + $0x60] sm:$0xff]
        %v6453 = vld [vmem:[%s6439 + $0x68] sm:$0xff]
        %v6454 = vld [vmem:[%s6439 + $0x70] sm:$0xff]
        %v6455 = vld [vmem:[%s6439 + $0x78] sm:$0xff]
        %v6456 = vld [vmem:[%s6439 + $0x80] sm:$0xff]
        %v6457 = vld [vmem:[%s6439 + $0x88] sm:$0xff]
        %v6458 = vld [vmem:[%s6439 + $0x90] sm:$0xff]
        %v6459 = vld [vmem:[%s6439 + $0x98] sm:$0xff]
        %v6460 = vld [vmem:[%s6439 + $0xa0] sm:$0xff]
        %v6461 = vld [vmem:[%s6439 + $0xa8] sm:$0xff]
        %v6462 = vld [vmem:[%s6439 + $0xb0] sm:$0xff]
        %v6463 = vld [vmem:[%s6439 + $0xb8] sm:$0xff]
        %v6464 = vld [vmem:[%s6439 + $0xc0] sm:$0xff]
        %v6465 = vld [vmem:[%s6439 + $0xc8] sm:$0xff]
        %v6466 = vld [vmem:[%s6439 + $0xd0] sm:$0xff]
        %v6467 = vld [vmem:[%s6439 + $0xd8] sm:$0xff]
        %v6468 = vld [vmem:[%s6439 + $0xe0] sm:$0xff]
        %v6469 = vld [vmem:[%s6439 + $0xe8] sm:$0xff]
        %v6470 = vld [vmem:[%s6439 + $0xf0] sm:$0xff]
        %v6471 = vld [vmem:[%s6439 + $0xf8] sm:$0xff]
        %v6472 = vld [vmem:[%s6439 + $0x100] sm:$0xff]
        %v6473 = vld [vmem:[%s6439 + $0x108] sm:$0xff]
        %v6474 = vld [vmem:[%s6439 + $0x110] sm:$0xff]
        %v6475 = vld [vmem:[%s6439 + $0x118] sm:$0xff]
        %v6476 = vld [vmem:[%s6439 + $0x120] sm:$0xff]
        %v6477 = vld [vmem:[%s6439 + $0x128] sm:$0xff]
        %v6493 = vrot.slane %v6433, 1
        %v6494 = vrot.slane %v5896, 1
        %v6495 = vsel %vm3604, %v6493, %v6494
        %v6496 = vrot.slane %v6434, 1
        %v6497 = vrot.slane %v5897, 1
        %v6498 = vsel %vm3604, %v6496, %v6497
        %v6499 = vrot.slane %v6435, 1
        %v6500 = vrot.slane %v5898, 1
        %v6501 = vsel %vm3604, %v6499, %v6500
        %v6502 = vrot.slane %v5899, 1
        %v6503 = vsel %vm3604, %v6494, %v6502
        %v6504 = vrot.slane %v5900, 1
        %v6505 = vsel %vm3604, %v6497, %v6504
        %v6506 = vrot.slane %v5901, 1
        %v6507 = vsel %vm3604, %v6500, %v6506
        %v6508 = vrot.slane %v5902, 1
        %v6509 = vsel %vm3604, %v6502, %v6508
        %v6510 = vrot.slane %v5903, 1
        %v6511 = vsel %vm3604, %v6504, %v6510
        %v6512 = vrot.slane %v5904, 1
        %v6513 = vsel %vm3604, %v6506, %v6512
        %v6514 = vrot.slane %v6436, 1
        %v6515 = vsel %vm3604, %v6508, %v6514
        %v6516 = vrot.slane %v6437, 1
        %v6517 = vsel %vm3604, %v6510, %v6516
        %v6518 = vrot.slane %v6438, 1
        %v6519 = vsel %vm3604, %v6512, %v6518
        %v6566 = vunpack.c.l.b16 %v6440
        %v6567 = vunpack.c.h.b16 %v6440
        %v6568 = vunpack.c.l.b16 %v6441
        %v6569 = vunpack.c.h.b16 %v6441
        %v6570 = vunpack.c.l.b16 %v6442
        %v6571 = vunpack.c.h.b16 %v6442
        %v6572 = vunpack.c.l.b16 %v6443
        %v6573 = vunpack.c.h.b16 %v6443
        %v6574 = vunpack.c.l.b16 %v6444
        %v6575 = vunpack.c.h.b16 %v6444
        %v6576 = vunpack.c.l.b16 %v6445
        %v6577 = vunpack.c.h.b16 %v6445
        %v6578 = vunpack.c.l.b16 %v6446
        %v6579 = vunpack.c.h.b16 %v6446
        %v6580 = vunpack.c.l.b16 %v6447
        %v6581 = vunpack.c.h.b16 %v6447
        %v6582 = vunpack.c.l.b16 %v6448
        %v6583 = vunpack.c.h.b16 %v6448
        %v6584 = vunpack.c.l.b16 %v6449
        %v6585 = vunpack.c.h.b16 %v6449
        %v6586 = vunpack.c.l.b16 %v6450
        %v6587 = vunpack.c.h.b16 %v6450
        %v6588 = vunpack.c.l.b16 %v6451
        %v6589 = vunpack.c.h.b16 %v6451
        %v6590 = vunpack.c.l.b16 %v6452
        %v6591 = vunpack.c.h.b16 %v6452
        %v6592 = vunpack.c.l.b16 %v6453
        %v6593 = vunpack.c.h.b16 %v6453
        %v6594 = vunpack.c.l.b16 %v6454
        %v6595 = vunpack.c.h.b16 %v6454
        %v6596 = vunpack.c.l.b16 %v6455
        %v6597 = vunpack.c.h.b16 %v6455
        %v6598 = vunpack.c.l.b16 %v6456
        %v6599 = vunpack.c.h.b16 %v6456
        %v6600 = vunpack.c.l.b16 %v6457
        %v6601 = vunpack.c.h.b16 %v6457
        %v6602 = vunpack.c.l.b16 %v6458
        %v6603 = vunpack.c.h.b16 %v6458
        %v6604 = vunpack.c.l.b16 %v6459
        %v6605 = vunpack.c.h.b16 %v6459
        %v6606 = vunpack.c.l.b16 %v6460
        %v6607 = vunpack.c.h.b16 %v6460
        %v6608 = vunpack.c.l.b16 %v6461
        %v6609 = vunpack.c.h.b16 %v6461
        %v6610 = vunpack.c.l.b16 %v6462
        %v6611 = vunpack.c.h.b16 %v6462
        %v6612 = vunpack.c.l.b16 %v6463
        %v6613 = vunpack.c.h.b16 %v6463
        %v6614 = vunpack.c.l.b16 %v6464
        %v6615 = vunpack.c.h.b16 %v6464
        %v6616 = vunpack.c.l.b16 %v6465
        %v6617 = vunpack.c.h.b16 %v6465
        %v6618 = vunpack.c.l.b16 %v6466
        %v6619 = vunpack.c.h.b16 %v6466
        %v6620 = vunpack.c.l.b16 %v6467
        %v6621 = vunpack.c.h.b16 %v6467
        %v6622 = vunpack.c.l.b16 %v6468
        %v6623 = vunpack.c.h.b16 %v6468
        %v6624 = vunpack.c.l.b16 %v6469
        %v6625 = vunpack.c.h.b16 %v6469
        %v6626 = vunpack.c.l.b16 %v6470
        %v6627 = vunpack.c.h.b16 %v6470
        %v6628 = vunpack.c.l.b16 %v6471
        %v6629 = vunpack.c.h.b16 %v6471
        %v6630 = vunpack.c.l.b16 %v6472
        %v6631 = vunpack.c.h.b16 %v6472
        %v6632 = vunpack.c.l.b16 %v6473
        %v6633 = vunpack.c.h.b16 %v6473
        %v6634 = vunpack.c.l.b16 %v6474
        %v6635 = vunpack.c.h.b16 %v6474
        %v6636 = vunpack.c.l.b16 %v6475
        %v6637 = vunpack.c.h.b16 %v6475
        %v6638 = vunpack.c.l.b16 %v6476
        %v6639 = vunpack.c.h.b16 %v6476
        %v6640 = vunpack.c.l.b16 %v6477
        %v6641 = vunpack.c.h.b16 %v6477
        %v6642 = vpack.c.b16 %v6568, %v6566
        %v6643 = vpack.c.b16 %v6569, %v6567
        %v6644 = vpack.c.b16 %v6572, %v6570
        %v6645 = vpack.c.b16 %v6573, %v6571
        %v6646 = vpack.c.b16 %v6576, %v6574
        %v6647 = vpack.c.b16 %v6577, %v6575
        %v6648 = vpack.c.b16 %v6580, %v6578
        %v6649 = vpack.c.b16 %v6581, %v6579
        %v6650 = vpack.c.b16 %v6584, %v6582
        %v6651 = vpack.c.b16 %v6585, %v6583
        %v6652 = vpack.c.b16 %v6588, %v6586
        %v6653 = vpack.c.b16 %v6589, %v6587
        %v6654 = vpack.c.b16 %v6592, %v6590
        %v6655 = vpack.c.b16 %v6593, %v6591
        %v6656 = vpack.c.b16 %v6596, %v6594
        %v6657 = vpack.c.b16 %v6597, %v6595
        %v6658 = vpack.c.b16 %v6600, %v6598
        %v6659 = vpack.c.b16 %v6601, %v6599
        %v6660 = vpack.c.b16 %v6604, %v6602
        %v6661 = vpack.c.b16 %v6605, %v6603
        %v6662 = vpack.c.b16 %v6608, %v6606
        %v6663 = vpack.c.b16 %v6609, %v6607
        %v6664 = vpack.c.b16 %v6612, %v6610
        %v6665 = vpack.c.b16 %v6613, %v6611
        %v6666 = vpack.c.b16 %v6616, %v6614
        %v6667 = vpack.c.b16 %v6617, %v6615
        %v6668 = vpack.c.b16 %v6620, %v6618
        %v6669 = vpack.c.b16 %v6621, %v6619
        %v6670 = vpack.c.b16 %v6624, %v6622
        %v6671 = vpack.c.b16 %v6625, %v6623
        %v6672 = vpack.c.b16 %v6628, %v6626
        %v6673 = vpack.c.b16 %v6629, %v6627
        %v6674 = vpack.c.b16 %v6632, %v6630
        %v6675 = vpack.c.b16 %v6633, %v6631
        %v6676 = vpack.c.b16 %v6636, %v6634
        %v6677 = vpack.c.b16 %v6637, %v6635
        %v6678 = vpack.c.b16 %v6640, %v6638
        %v6679 = vpack.c.b16 %v6641, %v6639
        %v6719 = vsel %vm2585, %v6501, 0
        %v6722 = vsel %vm2585, %v6507, 0
        %v6725 = vsel %vm2585, %v6513, 0
        %v6728 = vsel %vm2585, %v6519, 0
        %6730 = vmatprep.subr.bf16.mxu0 %v6643
        %6731 = vmatpush1.bf16.msra.mxu0 %v6642
        %6732 = vmatprep.subr.bf16.mxu0 %v6645
        %6733 = vmatpush1.bf16.msra.mxu0 %v6644
        %6734 = vmatprep.subr.bf16.mxu0 %v6647
        %6735 = vmatpush1.bf16.msra.mxu0 %v6646
        %6736 = vmatprep.subr.bf16.mxu0 %v6649
        %6737 = vmatpush1.bf16.msra.mxu0 %v6648
        %6738 = vmatprep.subr.bf16.mxu0 %v6651
        %6739 = vmatpush1.bf16.msra.mxu0 %v6650
        %6740 = vmatprep.subr.bf16.mxu0 %v6653
        %6741 = vmatpush1.bf16.msra.mxu0 %v6652
        %6742 = vmatprep.subr.bf16.mxu0 %v6655
        %6743 = vmatpush1.bf16.msra.mxu0 %v6654
        %6744 = vmatprep.subr.bf16.mxu0 %v6657
        %6745 = vmatpush1.bf16.msra.mxu0 %v6656
        %6746 = vmatprep.subr.bf16.mxu0 %v6659
        %6747 = vmatpush1.bf16.msra.mxu0 %v6658
        %6748 = vmatprep.subr.bf16.mxu0 %v6661
        %6749 = vmatpush1.bf16.msra.mxu0 %v6660
        %6750 = vmatprep.subr.bf16.mxu0 %v6663
        %6751 = vmatpush1.bf16.msra.mxu0 %v6662
        %6752 = vmatprep.subr.bf16.mxu0 %v6665
        %6753 = vmatpush1.bf16.msra.mxu0 %v6664
        %6754 = vmatprep.subr.bf16.mxu0 %v6667
        %6755 = vmatpush1.bf16.msra.mxu0 %v6666
        %6756 = vmatprep.subr.bf16.mxu0 %v6669
        %6757 = vmatpush1.bf16.msra.mxu0 %v6668
        %6758 = vmatprep.subr.bf16.mxu0 %v6671
        %6759 = vmatpush1.bf16.msra.mxu0 %v6670
        %6760 = vmatprep.subr.bf16.mxu0 %v6673
        %6761 = vmatpush1.bf16.msra.mxu0 %v6672
        %6762 = vmatprep.mubr.bf16.mxu0 %v6498
        %6763 = vmatmul.mubr.bf16.gmra.mrb[0].mxu0 %v6495
        %v6764 = vpop.f32.mrb[0].mxu0
        %v6765 = vadd.f32 0.0, %v6764
        %v6766 = vpop.f32.mrb[0].mxu0
        %v6767 = vadd.f32 0.0, %v6766
        %v6768 = vpop.f32.mrb[0].mxu0
        %v6769 = vadd.f32 0.0, %v6768
        %v6770 = vpop.f32.mrb[0].mxu0
        %v6771 = vadd.f32 0.0, %v6770
        %6772 = vmatprep.mubr.bf16.mxu0 %v6505
        %6773 = vmatmul.mubr.bf16.gmra.mrb[0].mxu0 %v6503
        %v6774 = vpop.f32.mrb[0].mxu0
        %v6775 = vadd.f32 0.0, %v6774
        %v6776 = vpop.f32.mrb[0].mxu0
        %v6777 = vadd.f32 0.0, %v6776
        %v6778 = vpop.f32.mrb[0].mxu0
        %v6779 = vadd.f32 0.0, %v6778
        %v6780 = vpop.f32.mrb[0].mxu0
        %v6781 = vadd.f32 0.0, %v6780
        %6782 = vmatprep.mubr.bf16.mxu0 %v6511
        %6783 = vmatmul.mubr.bf16.gmra.mrb[0].mxu0 %v6509
        %v6784 = vpop.f32.mrb[0].mxu0
        %v6785 = vadd.f32 0.0, %v6784
        %v6786 = vpop.f32.mrb[0].mxu0
        %v6787 = vadd.f32 0.0, %v6786
        %v6788 = vpop.f32.mrb[0].mxu0
        %v6789 = vadd.f32 0.0, %v6788
        %v6790 = vpop.f32.mrb[0].mxu0
        %v6791 = vadd.f32 0.0, %v6790
        %6792 = vmatprep.mubr.bf16.mxu0 %v6517
        %6793 = vmatmul.mubr.bf16.gmra.mrb[0].mxu0 %v6515
        %v6794 = vpop.f32.mrb[0].mxu0
        %v6795 = vadd.f32 0.0, %v6794
        %v6796 = vpop.f32.mrb[0].mxu0
        %v6797 = vadd.f32 0.0, %v6796
        %v6798 = vpop.f32.mrb[0].mxu0
        %v6799 = vadd.f32 0.0, %v6798
        %v6800 = vpop.f32.mrb[0].mxu0
        %v6801 = vadd.f32 0.0, %v6800
        %6802 = vdwg.mxu0
        %6803 = vmatprep.subr.bf16.mxu0 %v6675
        %6804 = vmatpush1.bf16.msra.mxu0 %v6674
        %6805 = vmatprep.subr.bf16.mxu0 %v6677
        %6806 = vmatpush1.bf16.msra.mxu0 %v6676
        %6807 = vmatprep.subr.bf16.mxu0 %v6679
        %6808 = vmatpush1.bf16.msra.mxu0 %v6678
        %6809 = vmatprep.subr.bf16.mxu0 0
        %6810 = vmatpush1.bf16.msra.mxu0 0
        %6811 = vmatprep.subr.bf16.mxu0 0
        %6812 = vmatpush1.bf16.msra.mxu0 0
        %6813 = vmatprep.subr.bf16.mxu0 0
        %6814 = vmatpush1.bf16.msra.mxu0 0
        %6815 = vmatprep.subr.bf16.mxu0 0
        %6816 = vmatpush1.bf16.msra.mxu0 0
        %6817 = vmatprep.subr.bf16.mxu0 0
        %6818 = vmatpush1.bf16.msra.mxu0 0
        %6819 = vmatprep.subr.bf16.mxu0 0
        %6820 = vmatpush1.bf16.msra.mxu0 0
        %6821 = vmatprep.subr.bf16.mxu0 0
        %6822 = vmatpush1.bf16.msra.mxu0 0
        %6823 = vmatprep.subr.bf16.mxu0 0
        %6824 = vmatpush1.bf16.msra.mxu0 0
        %6825 = vmatprep.subr.bf16.mxu0 0
        %6826 = vmatpush1.bf16.msra.mxu0 0
        %6827 = vmatprep.subr.bf16.mxu0 0
        %6828 = vmatpush1.bf16.msra.mxu0 0
        %6829 = vmatprep.subr.bf16.mxu0 0
        %6830 = vmatpush1.bf16.msra.mxu0 0
        %6831 = vmatprep.subr.bf16.mxu0 0
        %6832 = vmatpush1.bf16.msra.mxu0 0
        %6833 = vmatprep.subr.bf16.mxu0 0
        %6834 = vmatpush1.bf16.msra.mxu0 0
        %6835 = vmatprep.mubr.bf16.mxu0 0
        %6836 = vmatmul.mubr.bf16.gmra.mrb[0].mxu0 %v6719
        %v6837 = vpop.f32.mrb[0].mxu0
        %v6838 = vadd.f32 %v6765, %v6837
        %v6839 = vpop.f32.mrb[0].mxu0
        %v6840 = vadd.f32 %v6767, %v6839
        %v6841 = vpop.f32.mrb[0].mxu0
        %v6842 = vadd.f32 %v6769, %v6841
        %v6843 = vpop.f32.mrb[0].mxu0
        %v6844 = vadd.f32 %v6771, %v6843
        %6845 = vmatprep.mubr.bf16.mxu0 0
        %6846 = vmatmul.mubr.bf16.gmra.mrb[0].mxu0 %v6722
        %v6847 = vpop.f32.mrb[0].mxu0
        %v6848 = vadd.f32 %v6775, %v6847
        %v6849 = vpop.f32.mrb[0].mxu0
        %v6850 = vadd.f32 %v6777, %v6849
        %v6851 = vpop.f32.mrb[0].mxu0
        %v6852 = vadd.f32 %v6779, %v6851
        %v6853 = vpop.f32.mrb[0].mxu0
        %v6854 = vadd.f32 %v6781, %v6853
        %6855 = vmatprep.mubr.bf16.mxu0 0
        %6856 = vmatmul.mubr.bf16.gmra.mrb[0].mxu0 %v6725
        %v6857 = vpop.f32.mrb[0].mxu0
        %v6858 = vadd.f32 %v6785, %v6857
        %v6859 = vpop.f32.mrb[0].mxu0
        %v6860 = vadd.f32 %v6787, %v6859
        %v6861 = vpop.f32.mrb[0].mxu0
        %v6862 = vadd.f32 %v6789, %v6861
        %v6863 = vpop.f32.mrb[0].mxu0
        %v6864 = vadd.f32 %v6791, %v6863
        %6865 = vmatprep.mubr.bf16.mxu0 0
        %6866 = vmatmul.mubr.bf16.gmra.mrb[0].mxu0 %v6728
        %v6867 = vpop.f32.mrb[0].mxu0
        %v6868 = vadd.f32 %v6795, %v6867
        %v6869 = vpop.f32.mrb[0].mxu0
        %v6870 = vadd.f32 %v6797, %v6869
        %v6871 = vpop.f32.mrb[0].mxu0
        %v6872 = vadd.f32 %v6799, %v6871
        %v6873 = vpop.f32.mrb[0].mxu0
        %v6874 = vadd.f32 %v6801, %v6873
        %6875 = vdwg.mxu0
        %v6876 = vadd.f32 %v6411, %v6838
        %v6877 = vadd.f32 %v6412, %v6840
        %v6878 = vadd.f32 %v6413, %v6842
        %v6879 = vadd.f32 %v6414, %v6844
        %v6880 = vadd.f32 %v6415, %v6848
        %v6881 = vadd.f32 %v6416, %v6850
        %v6882 = vadd.f32 %v6417, %v6852
        %v6883 = vadd.f32 %v6418, %v6854
        %v6884 = vadd.f32 %v6419, %v6858
        %v6885 = vadd.f32 %v6420, %v6860
        %v6886 = vadd.f32 %v6421, %v6862
        %v6887 = vadd.f32 %v6422, %v6864
        %v6888 = vadd.f32 %v6423, %v6868
        %v6889 = vadd.f32 %v6424, %v6870
        %v6890 = vadd.f32 %v6425, %v6872
        %v6891 = vadd.f32 %v6426, %v6874
        %v6892 = vld [vmem:[#allocation14] sm:$0x3]
        %v6894 = vlaneseq
        %v6895 = vshrl.u32 %v6894, 7
        %v6896 = vsub.s32 0, %v6895
        %v6897 = vrot.slane %v6892, %v6896
        %v6898 = vlaneseq
        %v6899 = vshrl.u32 %v6898, 7
        %v6900 = vsub.s32 1, %v6899
        %v6901 = vrot.slane %v6892, %v6900
        %v6904 = vmul.f32 %v6876, %v6897
        %v6905 = vmul.f32 %v6877, %v6901
        %v6906 = vmul.f32 %v6878, %v6897
        %v6907 = vmul.f32 %v6879, %v6901
        %v6908 = vmul.f32 %v6880, %v6897
        %v6909 = vmul.f32 %v6881, %v6901
        %v6910 = vmul.f32 %v6882, %v6897
        %v6911 = vmul.f32 %v6883, %v6901
        %v6912 = vmul.f32 %v6884, %v6897
        %v6913 = vmul.f32 %v6885, %v6901
        %v6914 = vmul.f32 %v6886, %v6897
        %v6915 = vmul.f32 %v6887, %v6901
        %v6916 = vmul.f32 %v6888, %v6897
        %v6917 = vmul.f32 %v6889, %v6901
        %v6918 = vmul.f32 %v6890, %v6897
        %v6919 = vmul.f32 %v6891, %v6901
        %v6920 = vld [vmem:[#allocation15] sm:$0x3]
        %v6922 = vlaneseq
        %v6923 = vshrl.u32 %v6922, 7
        %v6924 = vsub.s32 0, %v6923
        %v6925 = vrot.slane %v6920, %v6924
        %v6926 = vlaneseq
        %v6927 = vshrl.u32 %v6926, 7
        %v6928 = vsub.s32 1, %v6927
        %v6929 = vrot.slane %v6920, %v6928
        %v6932 = vadd.f32 %v6904, %v6925
        %v6933 = vadd.f32 %v6905, %v6929
        %v6934 = vadd.f32 %v6906, %v6925
        %v6935 = vadd.f32 %v6907, %v6929
        %v6936 = vadd.f32 %v6908, %v6925
        %v6937 = vadd.f32 %v6909, %v6929
        %v6938 = vadd.f32 %v6910, %v6925
        %v6939 = vadd.f32 %v6911, %v6929
        %v6940 = vadd.f32 %v6912, %v6925
        %v6941 = vadd.f32 %v6913, %v6929
        %v6942 = vadd.f32 %v6914, %v6925
        %v6943 = vadd.f32 %v6915, %v6929
        %v6944 = vadd.f32 %v6916, %v6925
        %v6945 = vadd.f32 %v6917, %v6929
        %v6946 = vadd.f32 %v6918, %v6925
        %v6947 = vadd.f32 %v6919, %v6929
        %v6948 = vmax.f32 %v6932, 0.0
        %v6949 = vmax.f32 %v6933, 0.0
        %v6950 = vmax.f32 %v6934, 0.0
        %v6951 = vmax.f32 %v6935, 0.0
        %v6952 = vmax.f32 %v6936, 0.0
        %v6953 = vmax.f32 %v6937, 0.0
        %v6954 = vmax.f32 %v6938, 0.0
        %v6955 = vmax.f32 %v6939, 0.0
        %v6956 = vmax.f32 %v6940, 0.0
        %v6957 = vmax.f32 %v6941, 0.0
        %v6958 = vmax.f32 %v6942, 0.0
        %v6959 = vmax.f32 %v6943, 0.0
        %v6960 = vmax.f32 %v6944, 0.0
        %v6961 = vmax.f32 %v6945, 0.0
        %v6962 = vmax.f32 %v6946, 0.0
        %v6963 = vmax.f32 %v6947, 0.0
        %6964 = vst [vmem:[#allocation3] sm:$0xff] %v6948
        %6965 = vst [vmem:[#allocation3 + $0x8] sm:$0xff] %v6949
        %6966 = vst [vmem:[#allocation3 + $0x10] sm:$0xff] %v6950
        %6967 = vst [vmem:[#allocation3 + $0x18] sm:$0xff] %v6951
        %6968 = vst [vmem:[#allocation3 + $0x20] sm:$0xff] %v6952
        %6969 = vst [vmem:[#allocation3 + $0x28] sm:$0xff] %v6953
        %6970 = vst [vmem:[#allocation3 + $0x30] sm:$0xff] %v6954
        %6971 = vst [vmem:[#allocation3 + $0x38] sm:$0xff] %v6955
        %6972 = vst [vmem:[#allocation3 + $0x40] sm:$0xff] %v6956
        %6973 = vst [vmem:[#allocation3 + $0x48] sm:$0xff] %v6957
        %6974 = vst [vmem:[#allocation3 + $0x50] sm:$0xff] %v6958
        %6975 = vst [vmem:[#allocation3 + $0x58] sm:$0xff] %v6959
        %6976 = vst [vmem:[#allocation3 + $0x60] sm:$0xff] %v6960
        %6977 = vst [vmem:[#allocation3 + $0x68] sm:$0xff] %v6961
        %6978 = vst [vmem:[#allocation3 + $0x70] sm:$0xff] %v6962
        %6979 = vst [vmem:[#allocation3 + $0x78] sm:$0xff] %v6963
        %6980 = vst [vmem:[#allocation3 + $0x80] sm:$0xff] 0.0
        %6981 = vst [vmem:[#allocation3 + $0x88] sm:$0xff] 0.0
        %6982 = vst [vmem:[#allocation3 + $0x90] sm:$0xff] 0.0
        %6983 = vst [vmem:[#allocation3 + $0x98] sm:$0xff] 0.0
        %6984 = vst [vmem:[#allocation3 + $0xa0] sm:$0xff] 0.0
        %6985 = vst [vmem:[#allocation3 + $0xa8] sm:$0xff] 0.0
        %v6986 = vld [vmem:[#allocation3] sm:$0xff]
        %v6987 = vld [vmem:[#allocation3 + $0x8] sm:$0xff]
        %v6988 = vld [vmem:[#allocation3 + $0x10] sm:$0xff]
        %v6989 = vld [vmem:[#allocation3 + $0x18] sm:$0xff]
        %v6990 = vld [vmem:[#allocation3 + $0x20] sm:$0xff]
        %v6991 = vld [vmem:[#allocation3 + $0x28] sm:$0xff]
        %v6992 = vld [vmem:[#allocation3 + $0x30] sm:$0xff]
        %v6993 = vld [vmem:[#allocation3 + $0x38] sm:$0xff]
        %v6994 = vld [vmem:[#allocation3 + $0x40] sm:$0xff]
        %v6995 = vld [vmem:[#allocation3 + $0x48] sm:$0xff]
        %v6996 = vld [vmem:[#allocation3 + $0x50] sm:$0xff]
        %v6997 = vld [vmem:[#allocation3 + $0x58] sm:$0xff]
        %v6998 = vld [vmem:[#allocation3 + $0x60] sm:$0xff]
        %v6999 = vld [vmem:[#allocation3 + $0x68] sm:$0xff]
        %v7000 = vld [vmem:[#allocation3 + $0x70] sm:$0xff]
        %v7001 = vld [vmem:[#allocation3 + $0x78] sm:$0xff]
        %v7002 = vpack.c.bf16 %v6988, %v6986
        %v7003 = vpack.c.bf16 %v6989, %v6987
        %v7004 = vpack.c.bf16 %v6992, %v6990
        %v7005 = vpack.c.bf16 %v6993, %v6991
        %v7006 = vpack.c.bf16 %v6996, %v6994
        %v7007 = vpack.c.bf16 %v6997, %v6995
        %v7008 = vpack.c.bf16 %v7000, %v6998
        %v7009 = vpack.c.bf16 %v7001, %v6999
        %v7010 = vld [vmem:[#allocation17] sm:$0xff]
        %v7011 = vld [vmem:[#allocation17 + $0x8] sm:$0xff]
        %v7012 = vld [vmem:[#allocation17 + $0x10] sm:$0xff]
        %v7013 = vld [vmem:[#allocation17 + $0x18] sm:$0xff]
        %v7014 = vld [vmem:[#allocation17 + $0x20] sm:$0xff]
        %v7015 = vld [vmem:[#allocation17 + $0x28] sm:$0xff]
        %v7016 = vld [vmem:[#allocation17 + $0x30] sm:$0xff]
        %v7017 = vld [vmem:[#allocation17 + $0x38] sm:$0xff]
        %v7018 = vld [vmem:[#allocation17 + $0x40] sm:$0xff]
        %v7019 = vld [vmem:[#allocation17 + $0x48] sm:$0xff]
        %v7020 = vld [vmem:[#allocation17 + $0x50] sm:$0xff]
        %v7021 = vld [vmem:[#allocation17 + $0x58] sm:$0xff]
        %v7022 = vld [vmem:[#allocation17 + $0x60] sm:$0xff]
        %v7023 = vld [vmem:[#allocation17 + $0x68] sm:$0xff]
        %v7024 = vld [vmem:[#allocation17 + $0x70] sm:$0xff]
        %v7025 = vld [vmem:[#allocation17 + $0x78] sm:$0xff]
        %v7026 = vld [vmem:[#allocation17 + $0x80] sm:$0xff]
        %v7027 = vld [vmem:[#allocation17 + $0x88] sm:$0xff]
        %v7028 = vld [vmem:[#allocation17 + $0x90] sm:$0xff]
        %v7029 = vld [vmem:[#allocation17 + $0x98] sm:$0xff]
        %v7030 = vld [vmem:[#allocation17 + $0xa0] sm:$0xff]
        %v7031 = vld [vmem:[#allocation17 + $0xa8] sm:$0xff]
        %v7032 = vld [vmem:[#allocation17 + $0xb0] sm:$0xff]
        %v7033 = vld [vmem:[#allocation17 + $0xb8] sm:$0xff]
        %v7034 = vld [vmem:[#allocation17 + $0xc0] sm:$0xff]
        %v7035 = vld [vmem:[#allocation17 + $0xc8] sm:$0xff]
        %v7036 = vld [vmem:[#allocation17 + $0xd0] sm:$0xff]
        %v7037 = vld [vmem:[#allocation17 + $0xd8] sm:$0xff]
        %v7038 = vld [vmem:[#allocation17 + $0xe0] sm:$0xff]
        %v7039 = vld [vmem:[#allocation17 + $0xe8] sm:$0xff]
        %v7040 = vld [vmem:[#allocation17 + $0xf0] sm:$0xff]
        %v7041 = vld [vmem:[#allocation17 + $0xf8] sm:$0xff]
        %v7042 = vld [vmem:[#allocation3] sm:$0xfe]
        %v7043 = vld [vmem:[#allocation3 + $0x8] sm:$0xfe]
        %v7044 = vld [vmem:[#allocation3 + $0x80] sm:$0x1]
        %v7045 = vld [vmem:[#allocation3 + $0x88] sm:$0x1]
        %v7046 = vpack.c.bf16 %v6988, %v7042
        %v7047 = vpack.c.bf16 %v6989, %v7043
        %v7048 = vpack.c.bf16 %v7044, %v7044
        %v7049 = vpack.c.bf16 %v7045, %v7045
        %s7050 = scalar_lea.vmem [#allocation17], 256
        %v7051 = vld [vmem:[%s7050] sm:$0xff]
        %v7052 = vld [vmem:[%s7050 + $0x8] sm:$0xff]
        %v7053 = vld [vmem:[%s7050 + $0x10] sm:$0xff]
        %v7054 = vld [vmem:[%s7050 + $0x18] sm:$0xff]
        %v7055 = vld [vmem:[%s7050 + $0x20] sm:$0xff]
        %v7056 = vld [vmem:[%s7050 + $0x28] sm:$0xff]
        %v7057 = vld [vmem:[%s7050 + $0x30] sm:$0xff]
        %v7058 = vld [vmem:[%s7050 + $0x38] sm:$0xff]
        %v7059 = vld [vmem:[%s7050 + $0x40] sm:$0xff]
        %v7060 = vld [vmem:[%s7050 + $0x48] sm:$0xff]
        %v7061 = vld [vmem:[%s7050 + $0x50] sm:$0xff]
        %v7062 = vld [vmem:[%s7050 + $0x58] sm:$0xff]
        %v7063 = vld [vmem:[%s7050 + $0x60] sm:$0xff]
        %v7064 = vld [vmem:[%s7050 + $0x68] sm:$0xff]
        %v7065 = vld [vmem:[%s7050 + $0x70] sm:$0xff]
        %v7066 = vld [vmem:[%s7050 + $0x78] sm:$0xff]
        %v7067 = vld [vmem:[%s7050 + $0x80] sm:$0xff]
        %v7068 = vld [vmem:[%s7050 + $0x88] sm:$0xff]
        %v7069 = vld [vmem:[%s7050 + $0x90] sm:$0xff]
        %v7070 = vld [vmem:[%s7050 + $0x98] sm:$0xff]
        %v7071 = vld [vmem:[%s7050 + $0xa0] sm:$0xff]
        %v7072 = vld [vmem:[%s7050 + $0xa8] sm:$0xff]
        %v7073 = vld [vmem:[%s7050 + $0xb0] sm:$0xff]
        %v7074 = vld [vmem:[%s7050 + $0xb8] sm:$0xff]
        %v7075 = vld [vmem:[%s7050 + $0xc0] sm:$0xff]
        %v7076 = vld [vmem:[%s7050 + $0xc8] sm:$0xff]
        %v7077 = vld [vmem:[%s7050 + $0xd0] sm:$0xff]
        %v7078 = vld [vmem:[%s7050 + $0xd8] sm:$0xff]
        %v7079 = vld [vmem:[%s7050 + $0xe0] sm:$0xff]
        %v7080 = vld [vmem:[%s7050 + $0xe8] sm:$0xff]
        %v7081 = vld [vmem:[%s7050 + $0xf0] sm:$0xff]
        %v7082 = vld [vmem:[%s7050 + $0xf8] sm:$0xff]
        %v7084 = vshrl.u32 %v7046, 16
        %v7086 = vshll.u32 %v7046, 16
        %v7088 = vrot.slane %v7086, 1
        %v7089 = vor.u32 %v7084, %v7088
        %v7091 = vshll.u32 %v7004, 16
        %v7093 = vrot.slane %v7091, 1
        %v7094 = vsel %vm2728, %v7089, %v7093
        %v7096 = vshrl.u32 %v7047, 16
        %v7098 = vshll.u32 %v7047, 16
        %v7100 = vrot.slane %v7098, 1
        %v7101 = vor.u32 %v7096, %v7100
        %v7103 = vshll.u32 %v7005, 16
        %v7105 = vrot.slane %v7103, 1
        %v7106 = vsel %vm2728, %v7101, %v7105
        %v7107 = vshrl.u32 %v7004, 16
        %v7109 = vor.u32 %v7107, %v7093
        %v7111 = vshll.u32 %v7006, 16
        %v7113 = vrot.slane %v7111, 1
        %v7114 = vsel %vm2728, %v7109, %v7113
        %v7115 = vshrl.u32 %v7005, 16
        %v7117 = vor.u32 %v7115, %v7105
        %v7119 = vshll.u32 %v7007, 16
        %v7121 = vrot.slane %v7119, 1
        %v7122 = vsel %vm2728, %v7117, %v7121
        %v7123 = vshrl.u32 %v7006, 16
        %v7125 = vor.u32 %v7123, %v7113
        %v7127 = vshll.u32 %v7008, 16
        %v7129 = vrot.slane %v7127, 1
        %v7130 = vsel %vm2728, %v7125, %v7129
        %v7131 = vshrl.u32 %v7007, 16
        %v7133 = vor.u32 %v7131, %v7121
        %v7135 = vshll.u32 %v7009, 16
        %v7137 = vrot.slane %v7135, 1
        %v7138 = vsel %vm2728, %v7133, %v7137
        %v7139 = vshrl.u32 %v7008, 16
        %v7141 = vor.u32 %v7139, %v7129
        %v7143 = vshll.u32 %v7048, 16
        %v7145 = vrot.slane %v7143, 1
        %v7146 = vsel %vm2728, %v7141, %v7145
        %v7147 = vshrl.u32 %v7009, 16
        %v7149 = vor.u32 %v7147, %v7137
        %v7151 = vshll.u32 %v7049, 16
        %v7153 = vrot.slane %v7151, 1
        %v7154 = vsel %vm2728, %v7149, %v7153
        %v7195 = vunpack.c.l.b16 %v7051
        %v7196 = vunpack.c.h.b16 %v7051
        %v7197 = vunpack.c.l.b16 %v7052
        %v7198 = vunpack.c.h.b16 %v7052
        %v7199 = vunpack.c.l.b16 %v7053
        %v7200 = vunpack.c.h.b16 %v7053
        %v7201 = vunpack.c.l.b16 %v7054
        %v7202 = vunpack.c.h.b16 %v7054
        %v7203 = vunpack.c.l.b16 %v7055
        %v7204 = vunpack.c.h.b16 %v7055
        %v7205 = vunpack.c.l.b16 %v7056
        %v7206 = vunpack.c.h.b16 %v7056
        %v7207 = vunpack.c.l.b16 %v7057
        %v7208 = vunpack.c.h.b16 %v7057
        %v7209 = vunpack.c.l.b16 %v7058
        %v7210 = vunpack.c.h.b16 %v7058
        %v7211 = vunpack.c.l.b16 %v7059
        %v7212 = vunpack.c.h.b16 %v7059
        %v7213 = vunpack.c.l.b16 %v7060
        %v7214 = vunpack.c.h.b16 %v7060
        %v7215 = vunpack.c.l.b16 %v7061
        %v7216 = vunpack.c.h.b16 %v7061
        %v7217 = vunpack.c.l.b16 %v7062
        %v7218 = vunpack.c.h.b16 %v7062
        %v7219 = vunpack.c.l.b16 %v7063
        %v7220 = vunpack.c.h.b16 %v7063
        %v7221 = vunpack.c.l.b16 %v7064
        %v7222 = vunpack.c.h.b16 %v7064
        %v7223 = vunpack.c.l.b16 %v7065
        %v7224 = vunpack.c.h.b16 %v7065
        %v7225 = vunpack.c.l.b16 %v7066
        %v7226 = vunpack.c.h.b16 %v7066
        %v7227 = vunpack.c.l.b16 %v7067
        %v7228 = vunpack.c.h.b16 %v7067
        %v7229 = vunpack.c.l.b16 %v7068
        %v7230 = vunpack.c.h.b16 %v7068
        %v7231 = vunpack.c.l.b16 %v7069
        %v7232 = vunpack.c.h.b16 %v7069
        %v7233 = vunpack.c.l.b16 %v7070
        %v7234 = vunpack.c.h.b16 %v7070
        %v7235 = vunpack.c.l.b16 %v7071
        %v7236 = vunpack.c.h.b16 %v7071
        %v7237 = vunpack.c.l.b16 %v7072
        %v7238 = vunpack.c.h.b16 %v7072
        %v7239 = vunpack.c.l.b16 %v7073
        %v7240 = vunpack.c.h.b16 %v7073
        %v7241 = vunpack.c.l.b16 %v7074
        %v7242 = vunpack.c.h.b16 %v7074
        %v7243 = vunpack.c.l.b16 %v7075
        %v7244 = vunpack.c.h.b16 %v7075
        %v7245 = vunpack.c.l.b16 %v7076
        %v7246 = vunpack.c.h.b16 %v7076
        %v7247 = vunpack.c.l.b16 %v7077
        %v7248 = vunpack.c.h.b16 %v7077
        %v7249 = vunpack.c.l.b16 %v7078
        %v7250 = vunpack.c.h.b16 %v7078
        %v7251 = vunpack.c.l.b16 %v7079
        %v7252 = vunpack.c.h.b16 %v7079
        %v7253 = vunpack.c.l.b16 %v7080
        %v7254 = vunpack.c.h.b16 %v7080
        %v7255 = vunpack.c.l.b16 %v7081
        %v7256 = vunpack.c.h.b16 %v7081
        %v7257 = vunpack.c.l.b16 %v7082
        %v7258 = vunpack.c.h.b16 %v7082
        %v7259 = vpack.c.b16 %v7197, %v7195
        %v7260 = vpack.c.b16 %v7198, %v7196
        %v7261 = vpack.c.b16 %v7201, %v7199
        %v7262 = vpack.c.b16 %v7202, %v7200
        %v7263 = vpack.c.b16 %v7205, %v7203
        %v7264 = vpack.c.b16 %v7206, %v7204
        %v7265 = vpack.c.b16 %v7209, %v7207
        %v7266 = vpack.c.b16 %v7210, %v7208
        %v7267 = vpack.c.b16 %v7213, %v7211
        %v7268 = vpack.c.b16 %v7214, %v7212
        %v7269 = vpack.c.b16 %v7217, %v7215
        %v7270 = vpack.c.b16 %v7218, %v7216
        %v7271 = vpack.c.b16 %v7221, %v7219
        %v7272 = vpack.c.b16 %v7222, %v7220
        %v7273 = vpack.c.b16 %v7225, %v7223
        %v7274 = vpack.c.b16 %v7226, %v7224
        %v7275 = vpack.c.b16 %v7229, %v7227
        %v7276 = vpack.c.b16 %v7230, %v7228
        %v7277 = vpack.c.b16 %v7233, %v7231
        %v7278 = vpack.c.b16 %v7234, %v7232
        %v7279 = vpack.c.b16 %v7237, %v7235
        %v7280 = vpack.c.b16 %v7238, %v7236
        %v7281 = vpack.c.b16 %v7241, %v7239
        %v7282 = vpack.c.b16 %v7242, %v7240
        %v7283 = vpack.c.b16 %v7245, %v7243
        %v7284 = vpack.c.b16 %v7246, %v7244
        %v7285 = vpack.c.b16 %v7249, %v7247
        %v7286 = vpack.c.b16 %v7250, %v7248
        %v7287 = vpack.c.b16 %v7253, %v7251
        %v7288 = vpack.c.b16 %v7254, %v7252
        %v7289 = vpack.c.b16 %v7257, %v7255
        %v7290 = vpack.c.b16 %v7258, %v7256
        %7323 = vmatprep.subr.bf16.mxu0 %v7260
        %7324 = vmatpush1.bf16.msra.mxu0 %v7259
        %7325 = vmatprep.subr.bf16.mxu0 %v7262
        %7326 = vmatpush1.bf16.msra.mxu0 %v7261
        %7327 = vmatprep.subr.bf16.mxu0 %v7264
        %7328 = vmatpush1.bf16.msra.mxu0 %v7263
        %7329 = vmatprep.subr.bf16.mxu0 %v7266
        %7330 = vmatpush1.bf16.msra.mxu0 %v7265
        %7331 = vmatprep.subr.bf16.mxu0 %v7268
        %7332 = vmatpush1.bf16.msra.mxu0 %v7267
        %7333 = vmatprep.subr.bf16.mxu0 %v7270
        %7334 = vmatpush1.bf16.msra.mxu0 %v7269
        %7335 = vmatprep.subr.bf16.mxu0 %v7272
        %7336 = vmatpush1.bf16.msra.mxu0 %v7271
        %7337 = vmatprep.subr.bf16.mxu0 %v7274
        %7338 = vmatpush1.bf16.msra.mxu0 %v7273
        %7339 = vmatprep.subr.bf16.mxu0 %v7276
        %7340 = vmatpush1.bf16.msra.mxu0 %v7275
        %7341 = vmatprep.subr.bf16.mxu0 %v7278
        %7342 = vmatpush1.bf16.msra.mxu0 %v7277
        %7343 = vmatprep.subr.bf16.mxu0 %v7280
        %7344 = vmatpush1.bf16.msra.mxu0 %v7279
        %7345 = vmatprep.subr.bf16.mxu0 %v7282
        %7346 = vmatpush1.bf16.msra.mxu0 %v7281
        %7347 = vmatprep.subr.bf16.mxu0 %v7284
        %7348 = vmatpush1.bf16.msra.mxu0 %v7283
        %7349 = vmatprep.subr.bf16.mxu0 %v7286
        %7350 = vmatpush1.bf16.msra.mxu0 %v7285
        %7351 = vmatprep.subr.bf16.mxu0 %v7288
        %7352 = vmatpush1.bf16.msra.mxu0 %v7287
        %7353 = vmatprep.subr.bf16.mxu0 %v7290
        %7354 = vmatpush1.bf16.msra.mxu0 %v7289
        %7355 = vmatprep.mubr.bf16.mxu0 %v7106
        %7356 = vmatmul.mubr.bf16.gmra.mrb[0].mxu0 %v7094
        %v7357 = vpop.f32.mrb[0].mxu0
        %v7358 = vadd.f32 0.0, %v7357
        %v7359 = vpop.f32.mrb[0].mxu0
        %v7360 = vadd.f32 0.0, %v7359
        %v7361 = vpop.f32.mrb[0].mxu0
        %v7362 = vadd.f32 0.0, %v7361
        %v7363 = vpop.f32.mrb[0].mxu0
        %v7364 = vadd.f32 0.0, %v7363
        %7365 = vmatprep.mubr.bf16.mxu0 %v7122
        %7366 = vmatmul.mubr.bf16.gmra.mrb[0].mxu0 %v7114
        %v7367 = vpop.f32.mrb[0].mxu0
        %v7368 = vadd.f32 0.0, %v7367
        %v7369 = vpop.f32.mrb[0].mxu0
        %v7370 = vadd.f32 0.0, %v7369
        %v7371 = vpop.f32.mrb[0].mxu0
        %v7372 = vadd.f32 0.0, %v7371
        %v7373 = vpop.f32.mrb[0].mxu0
        %v7374 = vadd.f32 0.0, %v7373
        %7375 = vmatprep.mubr.bf16.mxu0 %v7138
        %7376 = vmatmul.mubr.bf16.gmra.mrb[0].mxu0 %v7130
        %v7377 = vpop.f32.mrb[0].mxu0
        %v7378 = vadd.f32 0.0, %v7377
        %v7379 = vpop.f32.mrb[0].mxu0
        %v7380 = vadd.f32 0.0, %v7379
        %v7381 = vpop.f32.mrb[0].mxu0
        %v7382 = vadd.f32 0.0, %v7381
        %v7383 = vpop.f32.mrb[0].mxu0
        %v7384 = vadd.f32 0.0, %v7383
        %7385 = vmatprep.mubr.bf16.mxu0 %v7154
        %7386 = vmatmul.mubr.bf16.gmra.mrb[0].mxu0 %v7146
        %v7387 = vpop.f32.mrb[0].mxu0
        %v7388 = vadd.f32 0.0, %v7387
        %v7389 = vpop.f32.mrb[0].mxu0
        %v7390 = vadd.f32 0.0, %v7389
        %v7391 = vpop.f32.mrb[0].mxu0
        %v7392 = vadd.f32 0.0, %v7391
        %v7393 = vpop.f32.mrb[0].mxu0
        %v7394 = vadd.f32 0.0, %v7393
        %7395 = vdwg.mxu0
        %v7428 = vunpack.c.l.b16 %v7010
        %v7429 = vunpack.c.h.b16 %v7010
        %v7430 = vunpack.c.l.b16 %v7011
        %v7431 = vunpack.c.h.b16 %v7011
        %v7432 = vunpack.c.l.b16 %v7012
        %v7433 = vunpack.c.h.b16 %v7012
        %v7434 = vunpack.c.l.b16 %v7013
        %v7435 = vunpack.c.h.b16 %v7013
        %v7436 = vunpack.c.l.b16 %v7014
        %v7437 = vunpack.c.h.b16 %v7014
        %v7438 = vunpack.c.l.b16 %v7015
        %v7439 = vunpack.c.h.b16 %v7015
        %v7440 = vunpack.c.l.b16 %v7016
        %v7441 = vunpack.c.h.b16 %v7016
        %v7442 = vunpack.c.l.b16 %v7017
        %v7443 = vunpack.c.h.b16 %v7017
        %v7444 = vunpack.c.l.b16 %v7018
        %v7445 = vunpack.c.h.b16 %v7018
        %v7446 = vunpack.c.l.b16 %v7019
        %v7447 = vunpack.c.h.b16 %v7019
        %v7448 = vunpack.c.l.b16 %v7020
        %v7449 = vunpack.c.h.b16 %v7020
        %v7450 = vunpack.c.l.b16 %v7021
        %v7451 = vunpack.c.h.b16 %v7021
        %v7452 = vunpack.c.l.b16 %v7022
        %v7453 = vunpack.c.h.b16 %v7022
        %v7454 = vunpack.c.l.b16 %v7023
        %v7455 = vunpack.c.h.b16 %v7023
        %v7456 = vunpack.c.l.b16 %v7024
        %v7457 = vunpack.c.h.b16 %v7024
        %v7458 = vunpack.c.l.b16 %v7025
        %v7459 = vunpack.c.h.b16 %v7025
        %v7460 = vunpack.c.l.b16 %v7026
        %v7461 = vunpack.c.h.b16 %v7026
        %v7462 = vunpack.c.l.b16 %v7027
        %v7463 = vunpack.c.h.b16 %v7027
        %v7464 = vunpack.c.l.b16 %v7028
        %v7465 = vunpack.c.h.b16 %v7028
        %v7466 = vunpack.c.l.b16 %v7029
        %v7467 = vunpack.c.h.b16 %v7029
        %v7468 = vunpack.c.l.b16 %v7030
        %v7469 = vunpack.c.h.b16 %v7030
        %v7470 = vunpack.c.l.b16 %v7031
        %v7471 = vunpack.c.h.b16 %v7031
        %v7472 = vunpack.c.l.b16 %v7032
        %v7473 = vunpack.c.h.b16 %v7032
        %v7474 = vunpack.c.l.b16 %v7033
        %v7475 = vunpack.c.h.b16 %v7033
        %v7476 = vunpack.c.l.b16 %v7034
        %v7477 = vunpack.c.h.b16 %v7034
        %v7478 = vunpack.c.l.b16 %v7035
        %v7479 = vunpack.c.h.b16 %v7035
        %v7480 = vunpack.c.l.b16 %v7036
        %v7481 = vunpack.c.h.b16 %v7036
        %v7482 = vunpack.c.l.b16 %v7037
        %v7483 = vunpack.c.h.b16 %v7037
        %v7484 = vunpack.c.l.b16 %v7038
        %v7485 = vunpack.c.h.b16 %v7038
        %v7486 = vunpack.c.l.b16 %v7039
        %v7487 = vunpack.c.h.b16 %v7039
        %v7488 = vunpack.c.l.b16 %v7040
        %v7489 = vunpack.c.h.b16 %v7040
        %v7490 = vunpack.c.l.b16 %v7041
        %v7491 = vunpack.c.h.b16 %v7041
        %v7492 = vpack.c.b16 %v7430, %v7428
        %v7493 = vpack.c.b16 %v7431, %v7429
        %v7494 = vpack.c.b16 %v7434, %v7432
        %v7495 = vpack.c.b16 %v7435, %v7433
        %v7496 = vpack.c.b16 %v7438, %v7436
        %v7497 = vpack.c.b16 %v7439, %v7437
        %v7498 = vpack.c.b16 %v7442, %v7440
        %v7499 = vpack.c.b16 %v7443, %v7441
        %v7500 = vpack.c.b16 %v7446, %v7444
        %v7501 = vpack.c.b16 %v7447, %v7445
        %v7502 = vpack.c.b16 %v7450, %v7448
        %v7503 = vpack.c.b16 %v7451, %v7449
        %v7504 = vpack.c.b16 %v7454, %v7452
        %v7505 = vpack.c.b16 %v7455, %v7453
        %v7506 = vpack.c.b16 %v7458, %v7456
        %v7507 = vpack.c.b16 %v7459, %v7457
        %v7508 = vpack.c.b16 %v7462, %v7460
        %v7509 = vpack.c.b16 %v7463, %v7461
        %v7510 = vpack.c.b16 %v7466, %v7464
        %v7511 = vpack.c.b16 %v7467, %v7465
        %v7512 = vpack.c.b16 %v7470, %v7468
        %v7513 = vpack.c.b16 %v7471, %v7469
        %v7514 = vpack.c.b16 %v7474, %v7472
        %v7515 = vpack.c.b16 %v7475, %v7473
        %v7516 = vpack.c.b16 %v7478, %v7476
        %v7517 = vpack.c.b16 %v7479, %v7477
        %v7518 = vpack.c.b16 %v7482, %v7480
        %v7519 = vpack.c.b16 %v7483, %v7481
        %v7520 = vpack.c.b16 %v7486, %v7484
        %v7521 = vpack.c.b16 %v7487, %v7485
        %v7522 = vpack.c.b16 %v7490, %v7488
        %v7523 = vpack.c.b16 %v7491, %v7489
        %7556 = vmatprep.subr.bf16.mxu0 %v7493
        %7557 = vmatpush1.bf16.msra.mxu0 %v7492
        %7558 = vmatprep.subr.bf16.mxu0 %v7495
        %7559 = vmatpush1.bf16.msra.mxu0 %v7494
        %7560 = vmatprep.subr.bf16.mxu0 %v7497
        %7561 = vmatpush1.bf16.msra.mxu0 %v7496
        %7562 = vmatprep.subr.bf16.mxu0 %v7499
        %7563 = vmatpush1.bf16.msra.mxu0 %v7498
        %7564 = vmatprep.subr.bf16.mxu0 %v7501
        %7565 = vmatpush1.bf16.msra.mxu0 %v7500
        %7566 = vmatprep.subr.bf16.mxu0 %v7503
        %7567 = vmatpush1.bf16.msra.mxu0 %v7502
        %7568 = vmatprep.subr.bf16.mxu0 %v7505
        %7569 = vmatpush1.bf16.msra.mxu0 %v7504
        %7570 = vmatprep.subr.bf16.mxu0 %v7507
        %7571 = vmatpush1.bf16.msra.mxu0 %v7506
        %7572 = vmatprep.subr.bf16.mxu0 %v7509
        %7573 = vmatpush1.bf16.msra.mxu0 %v7508
        %7574 = vmatprep.subr.bf16.mxu0 %v7511
        %7575 = vmatpush1.bf16.msra.mxu0 %v7510
        %7576 = vmatprep.subr.bf16.mxu0 %v7513
        %7577 = vmatpush1.bf16.msra.mxu0 %v7512
        %7578 = vmatprep.subr.bf16.mxu0 %v7515
        %7579 = vmatpush1.bf16.msra.mxu0 %v7514
        %7580 = vmatprep.subr.bf16.mxu0 %v7517
        %7581 = vmatpush1.bf16.msra.mxu0 %v7516
        %7582 = vmatprep.subr.bf16.mxu0 %v7519
        %7583 = vmatpush1.bf16.msra.mxu0 %v7518
        %7584 = vmatprep.subr.bf16.mxu0 %v7521
        %7585 = vmatpush1.bf16.msra.mxu0 %v7520
        %7586 = vmatprep.subr.bf16.mxu0 %v7523
        %7587 = vmatpush1.bf16.msra.mxu0 %v7522
        %7588 = vmatprep.mubr.bf16.mxu0 %v7003
        %7589 = vmatmul.mubr.bf16.gmra.mrb[0].mxu0 %v7002
        %v7590 = vpop.f32.mrb[0].mxu0
        %v7591 = vadd.f32 %v7358, %v7590
        %v7592 = vpop.f32.mrb[0].mxu0
        %v7593 = vadd.f32 %v7360, %v7592
        %v7594 = vpop.f32.mrb[0].mxu0
        %v7595 = vadd.f32 %v7362, %v7594
        %v7596 = vpop.f32.mrb[0].mxu0
        %v7597 = vadd.f32 %v7364, %v7596
        %7598 = vmatprep.mubr.bf16.mxu0 %v7005
        %7599 = vmatmul.mubr.bf16.gmra.mrb[0].mxu0 %v7004
        %v7600 = vpop.f32.mrb[0].mxu0
        %v7601 = vadd.f32 %v7368, %v7600
        %v7602 = vpop.f32.mrb[0].mxu0
        %v7603 = vadd.f32 %v7370, %v7602
        %v7604 = vpop.f32.mrb[0].mxu0
        %v7605 = vadd.f32 %v7372, %v7604
        %v7606 = vpop.f32.mrb[0].mxu0
        %v7607 = vadd.f32 %v7374, %v7606
        %7608 = vmatprep.mubr.bf16.mxu0 %v7007
        %7609 = vmatmul.mubr.bf16.gmra.mrb[0].mxu0 %v7006
        %v7610 = vpop.f32.mrb[0].mxu0
        %v7611 = vadd.f32 %v7378, %v7610
        %v7612 = vpop.f32.mrb[0].mxu0
        %v7613 = vadd.f32 %v7380, %v7612
        %v7614 = vpop.f32.mrb[0].mxu0
        %v7615 = vadd.f32 %v7382, %v7614
        %v7616 = vpop.f32.mrb[0].mxu0
        %v7617 = vadd.f32 %v7384, %v7616
        %7618 = vmatprep.mubr.bf16.mxu0 %v7009
        %7619 = vmatmul.mubr.bf16.gmra.mrb[0].mxu0 %v7008
        %v7620 = vpop.f32.mrb[0].mxu0
        %v7621 = vadd.f32 %v7388, %v7620
        %v7622 = vpop.f32.mrb[0].mxu0
        %v7623 = vadd.f32 %v7390, %v7622
        %v7624 = vpop.f32.mrb[0].mxu0
        %v7625 = vadd.f32 %v7392, %v7624
        %v7626 = vpop.f32.mrb[0].mxu0
        %v7627 = vadd.f32 %v7394, %v7626
        %7628 = vdwg.mxu0
        %v7629 = vld [vmem:[#allocation3] sm:$0xfc]
        %v7630 = vld [vmem:[#allocation3 + $0x8] sm:$0xfc]
        %v7631 = vld [vmem:[#allocation3 + $0x80] sm:$0x3]
        %v7632 = vld [vmem:[#allocation3 + $0x88] sm:$0x3]
        %v7633 = vpack.c.bf16 %v6988, %v7629
        %v7634 = vpack.c.bf16 %v6989, %v7630
        %v7635 = vpack.c.bf16 %v7631, %v7631
        %v7636 = vpack.c.bf16 %v7632, %v7632
        %s7637 = scalar_lea.vmem [#allocation17], 512
        %v7638 = vld [vmem:[%s7637] sm:$0xff]
        %v7639 = vld [vmem:[%s7637 + $0x8] sm:$0xff]
        %v7640 = vld [vmem:[%s7637 + $0x10] sm:$0xff]
        %v7641 = vld [vmem:[%s7637 + $0x18] sm:$0xff]
        %v7642 = vld [vmem:[%s7637 + $0x20] sm:$0xff]
        %v7643 = vld [vmem:[%s7637 + $0x28] sm:$0xff]
        %v7644 = vld [vmem:[%s7637 + $0x30] sm:$0xff]
        %v7645 = vld [vmem:[%s7637 + $0x38] sm:$0xff]
        %v7646 = vld [vmem:[%s7637 + $0x40] sm:$0xff]
        %v7647 = vld [vmem:[%s7637 + $0x48] sm:$0xff]
        %v7648 = vld [vmem:[%s7637 + $0x50] sm:$0xff]
        %v7649 = vld [vmem:[%s7637 + $0x58] sm:$0xff]
        %v7650 = vld [vmem:[%s7637 + $0x60] sm:$0xff]
        %v7651 = vld [vmem:[%s7637 + $0x68] sm:$0xff]
        %v7652 = vld [vmem:[%s7637 + $0x70] sm:$0xff]
        %v7653 = vld [vmem:[%s7637 + $0x78] sm:$0xff]
        %v7654 = vld [vmem:[%s7637 + $0x80] sm:$0xff]
        %v7655 = vld [vmem:[%s7637 + $0x88] sm:$0xff]
        %v7656 = vld [vmem:[%s7637 + $0x90] sm:$0xff]
        %v7657 = vld [vmem:[%s7637 + $0x98] sm:$0xff]
        %v7658 = vld [vmem:[%s7637 + $0xa0] sm:$0xff]
        %v7659 = vld [vmem:[%s7637 + $0xa8] sm:$0xff]
        %v7660 = vld [vmem:[%s7637 + $0xb0] sm:$0xff]
        %v7661 = vld [vmem:[%s7637 + $0xb8] sm:$0xff]
        %v7662 = vld [vmem:[%s7637 + $0xc0] sm:$0xff]
        %v7663 = vld [vmem:[%s7637 + $0xc8] sm:$0xff]
        %v7664 = vld [vmem:[%s7637 + $0xd0] sm:$0xff]
        %v7665 = vld [vmem:[%s7637 + $0xd8] sm:$0xff]
        %v7666 = vld [vmem:[%s7637 + $0xe0] sm:$0xff]
        %v7667 = vld [vmem:[%s7637 + $0xe8] sm:$0xff]
        %v7668 = vld [vmem:[%s7637 + $0xf0] sm:$0xff]
        %v7669 = vld [vmem:[%s7637 + $0xf8] sm:$0xff]
        %v7680 = vrot.slane %v7633, 1
        %v7681 = vrot.slane %v7004, 1
        %v7682 = vsel %vm3604, %v7680, %v7681
        %v7683 = vrot.slane %v7634, 1
        %v7684 = vrot.slane %v7005, 1
        %v7685 = vsel %vm3604, %v7683, %v7684
        %v7686 = vrot.slane %v7006, 1
        %v7687 = vsel %vm3604, %v7681, %v7686
        %v7688 = vrot.slane %v7007, 1
        %v7689 = vsel %vm3604, %v7684, %v7688
        %v7690 = vrot.slane %v7008, 1
        %v7691 = vsel %vm3604, %v7686, %v7690
        %v7692 = vrot.slane %v7009, 1
        %v7693 = vsel %vm3604, %v7688, %v7692
        %v7694 = vrot.slane %v7635, 1
        %v7695 = vsel %vm3604, %v7690, %v7694
        %v7696 = vrot.slane %v7636, 1
        %v7697 = vsel %vm3604, %v7692, %v7696
        %v7738 = vunpack.c.l.b16 %v7638
        %v7739 = vunpack.c.h.b16 %v7638
        %v7740 = vunpack.c.l.b16 %v7639
        %v7741 = vunpack.c.h.b16 %v7639
        %v7742 = vunpack.c.l.b16 %v7640
        %v7743 = vunpack.c.h.b16 %v7640
        %v7744 = vunpack.c.l.b16 %v7641
        %v7745 = vunpack.c.h.b16 %v7641
        %v7746 = vunpack.c.l.b16 %v7642
        %v7747 = vunpack.c.h.b16 %v7642
        %v7748 = vunpack.c.l.b16 %v7643
        %v7749 = vunpack.c.h.b16 %v7643
        %v7750 = vunpack.c.l.b16 %v7644
        %v7751 = vunpack.c.h.b16 %v7644
        %v7752 = vunpack.c.l.b16 %v7645
        %v7753 = vunpack.c.h.b16 %v7645
        %v7754 = vunpack.c.l.b16 %v7646
        %v7755 = vunpack.c.h.b16 %v7646
        %v7756 = vunpack.c.l.b16 %v7647
        %v7757 = vunpack.c.h.b16 %v7647
        %v7758 = vunpack.c.l.b16 %v7648
        %v7759 = vunpack.c.h.b16 %v7648
        %v7760 = vunpack.c.l.b16 %v7649
        %v7761 = vunpack.c.h.b16 %v7649
        %v7762 = vunpack.c.l.b16 %v7650
        %v7763 = vunpack.c.h.b16 %v7650
        %v7764 = vunpack.c.l.b16 %v7651
        %v7765 = vunpack.c.h.b16 %v7651
        %v7766 = vunpack.c.l.b16 %v7652
        %v7767 = vunpack.c.h.b16 %v7652
        %v7768 = vunpack.c.l.b16 %v7653
        %v7769 = vunpack.c.h.b16 %v7653
        %v7770 = vunpack.c.l.b16 %v7654
        %v7771 = vunpack.c.h.b16 %v7654
        %v7772 = vunpack.c.l.b16 %v7655
        %v7773 = vunpack.c.h.b16 %v7655
        %v7774 = vunpack.c.l.b16 %v7656
        %v7775 = vunpack.c.h.b16 %v7656
        %v7776 = vunpack.c.l.b16 %v7657
        %v7777 = vunpack.c.h.b16 %v7657
        %v7778 = vunpack.c.l.b16 %v7658
        %v7779 = vunpack.c.h.b16 %v7658
        %v7780 = vunpack.c.l.b16 %v7659
        %v7781 = vunpack.c.h.b16 %v7659
        %v7782 = vunpack.c.l.b16 %v7660
        %v7783 = vunpack.c.h.b16 %v7660
        %v7784 = vunpack.c.l.b16 %v7661
        %v7785 = vunpack.c.h.b16 %v7661
        %v7786 = vunpack.c.l.b16 %v7662
        %v7787 = vunpack.c.h.b16 %v7662
        %v7788 = vunpack.c.l.b16 %v7663
        %v7789 = vunpack.c.h.b16 %v7663
        %v7790 = vunpack.c.l.b16 %v7664
        %v7791 = vunpack.c.h.b16 %v7664
        %v7792 = vunpack.c.l.b16 %v7665
        %v7793 = vunpack.c.h.b16 %v7665
        %v7794 = vunpack.c.l.b16 %v7666
        %v7795 = vunpack.c.h.b16 %v7666
        %v7796 = vunpack.c.l.b16 %v7667
        %v7797 = vunpack.c.h.b16 %v7667
        %v7798 = vunpack.c.l.b16 %v7668
        %v7799 = vunpack.c.h.b16 %v7668
        %v7800 = vunpack.c.l.b16 %v7669
        %v7801 = vunpack.c.h.b16 %v7669
        %v7802 = vpack.c.b16 %v7740, %v7738
        %v7803 = vpack.c.b16 %v7741, %v7739
        %v7804 = vpack.c.b16 %v7744, %v7742
        %v7805 = vpack.c.b16 %v7745, %v7743
        %v7806 = vpack.c.b16 %v7748, %v7746
        %v7807 = vpack.c.b16 %v7749, %v7747
        %v7808 = vpack.c.b16 %v7752, %v7750
        %v7809 = vpack.c.b16 %v7753, %v7751
        %v7810 = vpack.c.b16 %v7756, %v7754
        %v7811 = vpack.c.b16 %v7757, %v7755
        %v7812 = vpack.c.b16 %v7760, %v7758
        %v7813 = vpack.c.b16 %v7761, %v7759
        %v7814 = vpack.c.b16 %v7764, %v7762
        %v7815 = vpack.c.b16 %v7765, %v7763
        %v7816 = vpack.c.b16 %v7768, %v7766
        %v7817 = vpack.c.b16 %v7769, %v7767
        %v7818 = vpack.c.b16 %v7772, %v7770
        %v7819 = vpack.c.b16 %v7773, %v7771
        %v7820 = vpack.c.b16 %v7776, %v7774
        %v7821 = vpack.c.b16 %v7777, %v7775
        %v7822 = vpack.c.b16 %v7780, %v7778
        %v7823 = vpack.c.b16 %v7781, %v7779
        %v7824 = vpack.c.b16 %v7784, %v7782
        %v7825 = vpack.c.b16 %v7785, %v7783
        %v7826 = vpack.c.b16 %v7788, %v7786
        %v7827 = vpack.c.b16 %v7789, %v7787
        %v7828 = vpack.c.b16 %v7792, %v7790
        %v7829 = vpack.c.b16 %v7793, %v7791
        %v7830 = vpack.c.b16 %v7796, %v7794
        %v7831 = vpack.c.b16 %v7797, %v7795
        %v7832 = vpack.c.b16 %v7800, %v7798
        %v7833 = vpack.c.b16 %v7801, %v7799
        %7866 = vmatprep.subr.bf16.mxu0 %v7803
        %7867 = vmatpush1.bf16.msra.mxu0 %v7802
        %7868 = vmatprep.subr.bf16.mxu0 %v7805
        %7869 = vmatpush1.bf16.msra.mxu0 %v7804
        %7870 = vmatprep.subr.bf16.mxu0 %v7807
        %7871 = vmatpush1.bf16.msra.mxu0 %v7806
        %7872 = vmatprep.subr.bf16.mxu0 %v7809
        %7873 = vmatpush1.bf16.msra.mxu0 %v7808
        %7874 = vmatprep.subr.bf16.mxu0 %v7811
        %7875 = vmatpush1.bf16.msra.mxu0 %v7810
        %7876 = vmatprep.subr.bf16.mxu0 %v7813
        %7877 = vmatpush1.bf16.msra.mxu0 %v7812
        %7878 = vmatprep.subr.bf16.mxu0 %v7815
        %7879 = vmatpush1.bf16.msra.mxu0 %v7814
        %7880 = vmatprep.subr.bf16.mxu0 %v7817
        %7881 = vmatpush1.bf16.msra.mxu0 %v7816
        %7882 = vmatprep.subr.bf16.mxu0 %v7819
        %7883 = vmatpush1.bf16.msra.mxu0 %v7818
        %7884 = vmatprep.subr.bf16.mxu0 %v7821
        %7885 = vmatpush1.bf16.msra.mxu0 %v7820
        %7886 = vmatprep.subr.bf16.mxu0 %v7823
        %7887 = vmatpush1.bf16.msra.mxu0 %v7822
        %7888 = vmatprep.subr.bf16.mxu0 %v7825
        %7889 = vmatpush1.bf16.msra.mxu0 %v7824
        %7890 = vmatprep.subr.bf16.mxu0 %v7827
        %7891 = vmatpush1.bf16.msra.mxu0 %v7826
        %7892 = vmatprep.subr.bf16.mxu0 %v7829
        %7893 = vmatpush1.bf16.msra.mxu0 %v7828
        %7894 = vmatprep.subr.bf16.mxu0 %v7831
        %7895 = vmatpush1.bf16.msra.mxu0 %v7830
        %7896 = vmatprep.subr.bf16.mxu0 %v7833
        %7897 = vmatpush1.bf16.msra.mxu0 %v7832
        %7898 = vmatprep.mubr.bf16.mxu0 %v7685
        %7899 = vmatmul.mubr.bf16.gmra.mrb[0].mxu0 %v7682
        %v7900 = vpop.f32.mrb[0].mxu0
        %v7901 = vadd.f32 0.0, %v7900
        %v7902 = vpop.f32.mrb[0].mxu0
        %v7903 = vadd.f32 0.0, %v7902
        %v7904 = vpop.f32.mrb[0].mxu0
        %v7905 = vadd.f32 0.0, %v7904
        %v7906 = vpop.f32.mrb[0].mxu0
        %v7907 = vadd.f32 0.0, %v7906
        %7908 = vmatprep.mubr.bf16.mxu0 %v7689
        %7909 = vmatmul.mubr.bf16.gmra.mrb[0].mxu0 %v7687
        %v7910 = vpop.f32.mrb[0].mxu0
        %v7911 = vadd.f32 0.0, %v7910
        %v7912 = vpop.f32.mrb[0].mxu0
        %v7913 = vadd.f32 0.0, %v7912
        %v7914 = vpop.f32.mrb[0].mxu0
        %v7915 = vadd.f32 0.0, %v7914
        %v7916 = vpop.f32.mrb[0].mxu0
        %v7917 = vadd.f32 0.0, %v7916
        %7918 = vmatprep.mubr.bf16.mxu0 %v7693
        %7919 = vmatmul.mubr.bf16.gmra.mrb[0].mxu0 %v7691
        %v7920 = vpop.f32.mrb[0].mxu0
        %v7921 = vadd.f32 0.0, %v7920
        %v7922 = vpop.f32.mrb[0].mxu0
        %v7923 = vadd.f32 0.0, %v7922
        %v7924 = vpop.f32.mrb[0].mxu0
        %v7925 = vadd.f32 0.0, %v7924
        %v7926 = vpop.f32.mrb[0].mxu0
        %v7927 = vadd.f32 0.0, %v7926
        %7928 = vmatprep.mubr.bf16.mxu0 %v7697
        %7929 = vmatmul.mubr.bf16.gmra.mrb[0].mxu0 %v7695
        %v7930 = vpop.f32.mrb[0].mxu0
        %v7931 = vadd.f32 0.0, %v7930
        %v7932 = vpop.f32.mrb[0].mxu0
        %v7933 = vadd.f32 0.0, %v7932
        %v7934 = vpop.f32.mrb[0].mxu0
        %v7935 = vadd.f32 0.0, %v7934
        %v7936 = vpop.f32.mrb[0].mxu0
        %v7937 = vadd.f32 0.0, %v7936
        %7938 = vdwg.mxu0
        %v7939 = vadd.f32 %v7591, %v7901
        %v7940 = vadd.f32 %v7593, %v7903
        %v7941 = vadd.f32 %v7595, %v7905
        %v7942 = vadd.f32 %v7597, %v7907
        %v7943 = vadd.f32 %v7601, %v7911
        %v7944 = vadd.f32 %v7603, %v7913
        %v7945 = vadd.f32 %v7605, %v7915
        %v7946 = vadd.f32 %v7607, %v7917
        %v7947 = vadd.f32 %v7611, %v7921
        %v7948 = vadd.f32 %v7613, %v7923
        %v7949 = vadd.f32 %v7615, %v7925
        %v7950 = vadd.f32 %v7617, %v7927
        %v7951 = vadd.f32 %v7621, %v7931
        %v7952 = vadd.f32 %v7623, %v7933
        %v7953 = vadd.f32 %v7625, %v7935
        %v7954 = vadd.f32 %v7627, %v7937
        %v7955 = vld [vmem:[#allocation3 + $0x80] sm:$0xff]
        %v7956 = vld [vmem:[#allocation3 + $0x88] sm:$0xff]
        %v7957 = vpack.c.bf16 %v6990, %v6988
        %v7958 = vpack.c.bf16 %v6991, %v6989
        %v7959 = vpack.c.bf16 %v6994, %v6992
        %v7960 = vpack.c.bf16 %v6995, %v6993
        %v7961 = vpack.c.bf16 %v6998, %v6996
        %v7962 = vpack.c.bf16 %v6999, %v6997
        %v7963 = vpack.c.bf16 %v7955, %v7000
        %v7964 = vpack.c.bf16 %v7956, %v7001
        %s7965 = scalar_lea.vmem [#allocation17], 768
        %v7966 = vld [vmem:[%s7965] sm:$0xff]
        %v7967 = vld [vmem:[%s7965 + $0x8] sm:$0xff]
        %v7968 = vld [vmem:[%s7965 + $0x10] sm:$0xff]
        %v7969 = vld [vmem:[%s7965 + $0x18] sm:$0xff]
        %v7970 = vld [vmem:[%s7965 + $0x20] sm:$0xff]
        %v7971 = vld [vmem:[%s7965 + $0x28] sm:$0xff]
        %v7972 = vld [vmem:[%s7965 + $0x30] sm:$0xff]
        %v7973 = vld [vmem:[%s7965 + $0x38] sm:$0xff]
        %v7974 = vld [vmem:[%s7965 + $0x40] sm:$0xff]
        %v7975 = vld [vmem:[%s7965 + $0x48] sm:$0xff]
        %v7976 = vld [vmem:[%s7965 + $0x50] sm:$0xff]
        %v7977 = vld [vmem:[%s7965 + $0x58] sm:$0xff]
        %v7978 = vld [vmem:[%s7965 + $0x60] sm:$0xff]
        %v7979 = vld [vmem:[%s7965 + $0x68] sm:$0xff]
        %v7980 = vld [vmem:[%s7965 + $0x70] sm:$0xff]
        %v7981 = vld [vmem:[%s7965 + $0x78] sm:$0xff]
        %v7982 = vld [vmem:[%s7965 + $0x80] sm:$0xff]
        %v7983 = vld [vmem:[%s7965 + $0x88] sm:$0xff]
        %v7984 = vld [vmem:[%s7965 + $0x90] sm:$0xff]
        %v7985 = vld [vmem:[%s7965 + $0x98] sm:$0xff]
        %v7986 = vld [vmem:[%s7965 + $0xa0] sm:$0xff]
        %v7987 = vld [vmem:[%s7965 + $0xa8] sm:$0xff]
        %v7988 = vld [vmem:[%s7965 + $0xb0] sm:$0xff]
        %v7989 = vld [vmem:[%s7965 + $0xb8] sm:$0xff]
        %v7990 = vld [vmem:[%s7965 + $0xc0] sm:$0xff]
        %v7991 = vld [vmem:[%s7965 + $0xc8] sm:$0xff]
        %v7992 = vld [vmem:[%s7965 + $0xd0] sm:$0xff]
        %v7993 = vld [vmem:[%s7965 + $0xd8] sm:$0xff]
        %v7994 = vld [vmem:[%s7965 + $0xe0] sm:$0xff]
        %v7995 = vld [vmem:[%s7965 + $0xe8] sm:$0xff]
        %v7996 = vld [vmem:[%s7965 + $0xf0] sm:$0xff]
        %v7997 = vld [vmem:[%s7965 + $0xf8] sm:$0xff]
        %v8030 = vunpack.c.l.b16 %v7966
        %v8031 = vunpack.c.h.b16 %v7966
        %v8032 = vunpack.c.l.b16 %v7967
        %v8033 = vunpack.c.h.b16 %v7967
        %v8034 = vunpack.c.l.b16 %v7968
        %v8035 = vunpack.c.h.b16 %v7968
        %v8036 = vunpack.c.l.b16 %v7969
        %v8037 = vunpack.c.h.b16 %v7969
        %v8038 = vunpack.c.l.b16 %v7970
        %v8039 = vunpack.c.h.b16 %v7970
        %v8040 = vunpack.c.l.b16 %v7971
        %v8041 = vunpack.c.h.b16 %v7971
        %v8042 = vunpack.c.l.b16 %v7972
        %v8043 = vunpack.c.h.b16 %v7972
        %v8044 = vunpack.c.l.b16 %v7973
        %v8045 = vunpack.c.h.b16 %v7973
        %v8046 = vunpack.c.l.b16 %v7974
        %v8047 = vunpack.c.h.b16 %v7974
        %v8048 = vunpack.c.l.b16 %v7975
        %v8049 = vunpack.c.h.b16 %v7975
        %v8050 = vunpack.c.l.b16 %v7976
        %v8051 = vunpack.c.h.b16 %v7976
        %v8052 = vunpack.c.l.b16 %v7977
        %v8053 = vunpack.c.h.b16 %v7977
        %v8054 = vunpack.c.l.b16 %v7978
        %v8055 = vunpack.c.h.b16 %v7978
        %v8056 = vunpack.c.l.b16 %v7979
        %v8057 = vunpack.c.h.b16 %v7979
        %v8058 = vunpack.c.l.b16 %v7980
        %v8059 = vunpack.c.h.b16 %v7980
        %v8060 = vunpack.c.l.b16 %v7981
        %v8061 = vunpack.c.h.b16 %v7981
        %v8062 = vunpack.c.l.b16 %v7982
        %v8063 = vunpack.c.h.b16 %v7982
        %v8064 = vunpack.c.l.b16 %v7983
        %v8065 = vunpack.c.h.b16 %v7983
        %v8066 = vunpack.c.l.b16 %v7984
        %v8067 = vunpack.c.h.b16 %v7984
        %v8068 = vunpack.c.l.b16 %v7985
        %v8069 = vunpack.c.h.b16 %v7985
        %v8070 = vunpack.c.l.b16 %v7986
        %v8071 = vunpack.c.h.b16 %v7986
        %v8072 = vunpack.c.l.b16 %v7987
        %v8073 = vunpack.c.h.b16 %v7987
        %v8074 = vunpack.c.l.b16 %v7988
        %v8075 = vunpack.c.h.b16 %v7988
        %v8076 = vunpack.c.l.b16 %v7989
        %v8077 = vunpack.c.h.b16 %v7989
        %v8078 = vunpack.c.l.b16 %v7990
        %v8079 = vunpack.c.h.b16 %v7990
        %v8080 = vunpack.c.l.b16 %v7991
        %v8081 = vunpack.c.h.b16 %v7991
        %v8082 = vunpack.c.l.b16 %v7992
        %v8083 = vunpack.c.h.b16 %v7992
        %v8084 = vunpack.c.l.b16 %v7993
        %v8085 = vunpack.c.h.b16 %v7993
        %v8086 = vunpack.c.l.b16 %v7994
        %v8087 = vunpack.c.h.b16 %v7994
        %v8088 = vunpack.c.l.b16 %v7995
        %v8089 = vunpack.c.h.b16 %v7995
        %v8090 = vunpack.c.l.b16 %v7996
        %v8091 = vunpack.c.h.b16 %v7996
        %v8092 = vunpack.c.l.b16 %v7997
        %v8093 = vunpack.c.h.b16 %v7997
        %v8094 = vpack.c.b16 %v8032, %v8030
        %v8095 = vpack.c.b16 %v8033, %v8031
        %v8096 = vpack.c.b16 %v8036, %v8034
        %v8097 = vpack.c.b16 %v8037, %v8035
        %v8098 = vpack.c.b16 %v8040, %v8038
        %v8099 = vpack.c.b16 %v8041, %v8039
        %v8100 = vpack.c.b16 %v8044, %v8042
        %v8101 = vpack.c.b16 %v8045, %v8043
        %v8102 = vpack.c.b16 %v8048, %v8046
        %v8103 = vpack.c.b16 %v8049, %v8047
        %v8104 = vpack.c.b16 %v8052, %v8050
        %v8105 = vpack.c.b16 %v8053, %v8051
        %v8106 = vpack.c.b16 %v8056, %v8054
        %v8107 = vpack.c.b16 %v8057, %v8055
        %v8108 = vpack.c.b16 %v8060, %v8058
        %v8109 = vpack.c.b16 %v8061, %v8059
        %v8110 = vpack.c.b16 %v8064, %v8062
        %v8111 = vpack.c.b16 %v8065, %v8063
        %v8112 = vpack.c.b16 %v8068, %v8066
        %v8113 = vpack.c.b16 %v8069, %v8067
        %v8114 = vpack.c.b16 %v8072, %v8070
        %v8115 = vpack.c.b16 %v8073, %v8071
        %v8116 = vpack.c.b16 %v8076, %v8074
        %v8117 = vpack.c.b16 %v8077, %v8075
        %v8118 = vpack.c.b16 %v8080, %v8078
        %v8119 = vpack.c.b16 %v8081, %v8079
        %v8120 = vpack.c.b16 %v8084, %v8082
        %v8121 = vpack.c.b16 %v8085, %v8083
        %v8122 = vpack.c.b16 %v8088, %v8086
        %v8123 = vpack.c.b16 %v8089, %v8087
        %v8124 = vpack.c.b16 %v8092, %v8090
        %v8125 = vpack.c.b16 %v8093, %v8091
        %8158 = vmatprep.subr.bf16.mxu0 %v8095
        %8159 = vmatpush1.bf16.msra.mxu0 %v8094
        %8160 = vmatprep.subr.bf16.mxu0 %v8097
        %8161 = vmatpush1.bf16.msra.mxu0 %v8096
        %8162 = vmatprep.subr.bf16.mxu0 %v8099
        %8163 = vmatpush1.bf16.msra.mxu0 %v8098
        %8164 = vmatprep.subr.bf16.mxu0 %v8101
        %8165 = vmatpush1.bf16.msra.mxu0 %v8100
        %8166 = vmatprep.subr.bf16.mxu0 %v8103
        %8167 = vmatpush1.bf16.msra.mxu0 %v8102
        %8168 = vmatprep.subr.bf16.mxu0 %v8105
        %8169 = vmatpush1.bf16.msra.mxu0 %v8104
        %8170 = vmatprep.subr.bf16.mxu0 %v8107
        %8171 = vmatpush1.bf16.msra.mxu0 %v8106
        %8172 = vmatprep.subr.bf16.mxu0 %v8109
        %8173 = vmatpush1.bf16.msra.mxu0 %v8108
        %8174 = vmatprep.subr.bf16.mxu0 %v8111
        %8175 = vmatpush1.bf16.msra.mxu0 %v8110
        %8176 = vmatprep.subr.bf16.mxu0 %v8113
        %8177 = vmatpush1.bf16.msra.mxu0 %v8112
        %8178 = vmatprep.subr.bf16.mxu0 %v8115
        %8179 = vmatpush1.bf16.msra.mxu0 %v8114
        %8180 = vmatprep.subr.bf16.mxu0 %v8117
        %8181 = vmatpush1.bf16.msra.mxu0 %v8116
        %8182 = vmatprep.subr.bf16.mxu0 %v8119
        %8183 = vmatpush1.bf16.msra.mxu0 %v8118
        %8184 = vmatprep.subr.bf16.mxu0 %v8121
        %8185 = vmatpush1.bf16.msra.mxu0 %v8120
        %8186 = vmatprep.subr.bf16.mxu0 %v8123
        %8187 = vmatpush1.bf16.msra.mxu0 %v8122
        %8188 = vmatprep.subr.bf16.mxu0 %v8125
        %8189 = vmatpush1.bf16.msra.mxu0 %v8124
        %8190 = vmatprep.mubr.bf16.mxu0 %v7958
        %8191 = vmatmul.mubr.bf16.gmra.mrb[0].mxu0 %v7957
        %v8192 = vpop.f32.mrb[0].mxu0
        %v8193 = vadd.f32 0.0, %v8192
        %v8194 = vpop.f32.mrb[0].mxu0
        %v8195 = vadd.f32 0.0, %v8194
        %v8196 = vpop.f32.mrb[0].mxu0
        %v8197 = vadd.f32 0.0, %v8196
        %v8198 = vpop.f32.mrb[0].mxu0
        %v8199 = vadd.f32 0.0, %v8198
        %8200 = vmatprep.mubr.bf16.mxu0 %v7960
        %8201 = vmatmul.mubr.bf16.gmra.mrb[0].mxu0 %v7959
        %v8202 = vpop.f32.mrb[0].mxu0
        %v8203 = vadd.f32 0.0, %v8202
        %v8204 = vpop.f32.mrb[0].mxu0
        %v8205 = vadd.f32 0.0, %v8204
        %v8206 = vpop.f32.mrb[0].mxu0
        %v8207 = vadd.f32 0.0, %v8206
        %v8208 = vpop.f32.mrb[0].mxu0
        %v8209 = vadd.f32 0.0, %v8208
        %8210 = vmatprep.mubr.bf16.mxu0 %v7962
        %8211 = vmatmul.mubr.bf16.gmra.mrb[0].mxu0 %v7961
        %v8212 = vpop.f32.mrb[0].mxu0
        %v8213 = vadd.f32 0.0, %v8212
        %v8214 = vpop.f32.mrb[0].mxu0
        %v8215 = vadd.f32 0.0, %v8214
        %v8216 = vpop.f32.mrb[0].mxu0
        %v8217 = vadd.f32 0.0, %v8216
        %v8218 = vpop.f32.mrb[0].mxu0
        %v8219 = vadd.f32 0.0, %v8218
        %8220 = vmatprep.mubr.bf16.mxu0 %v7964
        %8221 = vmatmul.mubr.bf16.gmra.mrb[0].mxu0 %v7963
        %v8222 = vpop.f32.mrb[0].mxu0
        %v8223 = vadd.f32 0.0, %v8222
        %v8224 = vpop.f32.mrb[0].mxu0
        %v8225 = vadd.f32 0.0, %v8224
        %v8226 = vpop.f32.mrb[0].mxu0
        %v8227 = vadd.f32 0.0, %v8226
        %v8228 = vpop.f32.mrb[0].mxu0
        %v8229 = vadd.f32 0.0, %v8228
        %8230 = vdwg.mxu0
        %v8231 = vadd.f32 %v7939, %v8193
        %v8232 = vadd.f32 %v7940, %v8195
        %v8233 = vadd.f32 %v7941, %v8197
        %v8234 = vadd.f32 %v7942, %v8199
        %v8235 = vadd.f32 %v7943, %v8203
        %v8236 = vadd.f32 %v7944, %v8205
        %v8237 = vadd.f32 %v7945, %v8207
        %v8238 = vadd.f32 %v7946, %v8209
        %v8239 = vadd.f32 %v7947, %v8213
        %v8240 = vadd.f32 %v7948, %v8215
        %v8241 = vadd.f32 %v7949, %v8217
        %v8242 = vadd.f32 %v7950, %v8219
        %v8243 = vadd.f32 %v7951, %v8223
        %v8244 = vadd.f32 %v7952, %v8225
        %v8245 = vadd.f32 %v7953, %v8227
        %v8246 = vadd.f32 %v7954, %v8229
        %v8247 = vld [vmem:[#allocation3 + $0x10] sm:$0xfe]
        %v8248 = vld [vmem:[#allocation3 + $0x18] sm:$0xfe]
        %v8249 = vld [vmem:[#allocation3 + $0x20] sm:$0xff]
        %v8250 = vld [vmem:[#allocation3 + $0x28] sm:$0xff]
        %v8251 = vld [vmem:[#allocation3 + $0x30] sm:$0xff]
        %v8252 = vld [vmem:[#allocation3 + $0x38] sm:$0xff]
        %v8253 = vld [vmem:[#allocation3 + $0x40] sm:$0xff]
        %v8254 = vld [vmem:[#allocation3 + $0x48] sm:$0xff]
        %v8255 = vld [vmem:[#allocation3 + $0x50] sm:$0xff]
        %v8256 = vld [vmem:[#allocation3 + $0x58] sm:$0xff]
        %v8257 = vld [vmem:[#allocation3 + $0x60] sm:$0xff]
        %v8258 = vld [vmem:[#allocation3 + $0x68] sm:$0xff]
        %v8259 = vld [vmem:[#allocation3 + $0x70] sm:$0xff]
        %v8260 = vld [vmem:[#allocation3 + $0x78] sm:$0xff]
        %v8261 = vld [vmem:[#allocation3 + $0x80] sm:$0xff]
        %v8262 = vld [vmem:[#allocation3 + $0x88] sm:$0xff]
        %v8263 = vld [vmem:[#allocation3 + $0x90] sm:$0x1]
        %v8264 = vld [vmem:[#allocation3 + $0x98] sm:$0x1]
        %v8265 = vpack.c.bf16 %v8249, %v8247
        %v8266 = vpack.c.bf16 %v8250, %v8248
        %v8267 = vpack.c.bf16 %v8253, %v8251
        %v8268 = vpack.c.bf16 %v8254, %v8252
        %v8269 = vpack.c.bf16 %v8257, %v8255
        %v8270 = vpack.c.bf16 %v8258, %v8256
        %v8271 = vpack.c.bf16 %v8261, %v8259
        %v8272 = vpack.c.bf16 %v8262, %v8260
        %v8273 = vpack.c.bf16 %v8263, %v8263
        %v8274 = vpack.c.bf16 %v8264, %v8264
        %s8275 = scalar_lea.vmem [#allocation17], 1024
        %v8276 = vld [vmem:[%s8275] sm:$0xff]
        %v8277 = vld [vmem:[%s8275 + $0x8] sm:$0xff]
        %v8278 = vld [vmem:[%s8275 + $0x10] sm:$0xff]
        %v8279 = vld [vmem:[%s8275 + $0x18] sm:$0xff]
        %v8280 = vld [vmem:[%s8275 + $0x20] sm:$0xff]
        %v8281 = vld [vmem:[%s8275 + $0x28] sm:$0xff]
        %v8282 = vld [vmem:[%s8275 + $0x30] sm:$0xff]
        %v8283 = vld [vmem:[%s8275 + $0x38] sm:$0xff]
        %v8284 = vld [vmem:[%s8275 + $0x40] sm:$0xff]
        %v8285 = vld [vmem:[%s8275 + $0x48] sm:$0xff]
        %v8286 = vld [vmem:[%s8275 + $0x50] sm:$0xff]
        %v8287 = vld [vmem:[%s8275 + $0x58] sm:$0xff]
        %v8288 = vld [vmem:[%s8275 + $0x60] sm:$0xff]
        %v8289 = vld [vmem:[%s8275 + $0x68] sm:$0xff]
        %v8290 = vld [vmem:[%s8275 + $0x70] sm:$0xff]
        %v8291 = vld [vmem:[%s8275 + $0x78] sm:$0xff]
        %v8292 = vld [vmem:[%s8275 + $0x80] sm:$0xff]
        %v8293 = vld [vmem:[%s8275 + $0x88] sm:$0xff]
        %v8294 = vld [vmem:[%s8275 + $0x90] sm:$0xff]
        %v8295 = vld [vmem:[%s8275 + $0x98] sm:$0xff]
        %v8296 = vld [vmem:[%s8275 + $0xa0] sm:$0xff]
        %v8297 = vld [vmem:[%s8275 + $0xa8] sm:$0xff]
        %v8298 = vld [vmem:[%s8275 + $0xb0] sm:$0xff]
        %v8299 = vld [vmem:[%s8275 + $0xb8] sm:$0xff]
        %v8300 = vld [vmem:[%s8275 + $0xc0] sm:$0xff]
        %v8301 = vld [vmem:[%s8275 + $0xc8] sm:$0xff]
        %v8302 = vld [vmem:[%s8275 + $0xd0] sm:$0xff]
        %v8303 = vld [vmem:[%s8275 + $0xd8] sm:$0xff]
        %v8304 = vld [vmem:[%s8275 + $0xe0] sm:$0xff]
        %v8305 = vld [vmem:[%s8275 + $0xe8] sm:$0xff]
        %v8306 = vld [vmem:[%s8275 + $0xf0] sm:$0xff]
        %v8307 = vld [vmem:[%s8275 + $0xf8] sm:$0xff]
        %v8309 = vshrl.u32 %v8265, 16
        %v8311 = vshll.u32 %v8265, 16
        %v8313 = vrot.slane %v8311, 1
        %v8314 = vor.u32 %v8309, %v8313
        %v8316 = vshll.u32 %v8267, 16
        %v8318 = vrot.slane %v8316, 1
        %v8319 = vsel %vm2728, %v8314, %v8318
        %v8321 = vshrl.u32 %v8266, 16
        %v8323 = vshll.u32 %v8266, 16
        %v8325 = vrot.slane %v8323, 1
        %v8326 = vor.u32 %v8321, %v8325
        %v8328 = vshll.u32 %v8268, 16
        %v8330 = vrot.slane %v8328, 1
        %v8331 = vsel %vm2728, %v8326, %v8330
        %v8332 = vshrl.u32 %v8267, 16
        %v8334 = vor.u32 %v8332, %v8318
        %v8336 = vshll.u32 %v8269, 16
        %v8338 = vrot.slane %v8336, 1
        %v8339 = vsel %vm2728, %v8334, %v8338
        %v8340 = vshrl.u32 %v8268, 16
        %v8342 = vor.u32 %v8340, %v8330
        %v8344 = vshll.u32 %v8270, 16
        %v8346 = vrot.slane %v8344, 1
        %v8347 = vsel %vm2728, %v8342, %v8346
        %v8348 = vshrl.u32 %v8269, 16
        %v8350 = vor.u32 %v8348, %v8338
        %v8352 = vshll.u32 %v8271, 16
        %v8354 = vrot.slane %v8352, 1
        %v8355 = vsel %vm2728, %v8350, %v8354
        %v8356 = vshrl.u32 %v8270, 16
        %v8358 = vor.u32 %v8356, %v8346
        %v8360 = vshll.u32 %v8272, 16
        %v8362 = vrot.slane %v8360, 1
        %v8363 = vsel %vm2728, %v8358, %v8362
        %v8364 = vshrl.u32 %v8271, 16
        %v8366 = vor.u32 %v8364, %v8354
        %v8368 = vshll.u32 %v8273, 16
        %v8370 = vrot.slane %v8368, 1
        %v8371 = vsel %vm2728, %v8366, %v8370
        %v8372 = vshrl.u32 %v8272, 16
        %v8374 = vor.u32 %v8372, %v8362
        %v8376 = vshll.u32 %v8274, 16
        %v8378 = vrot.slane %v8376, 1
        %v8379 = vsel %vm2728, %v8374, %v8378
        %v8420 = vunpack.c.l.b16 %v8276
        %v8421 = vunpack.c.h.b16 %v8276
        %v8422 = vunpack.c.l.b16 %v8277
        %v8423 = vunpack.c.h.b16 %v8277
        %v8424 = vunpack.c.l.b16 %v8278
        %v8425 = vunpack.c.h.b16 %v8278
        %v8426 = vunpack.c.l.b16 %v8279
        %v8427 = vunpack.c.h.b16 %v8279
        %v8428 = vunpack.c.l.b16 %v8280
        %v8429 = vunpack.c.h.b16 %v8280
        %v8430 = vunpack.c.l.b16 %v8281
        %v8431 = vunpack.c.h.b16 %v8281
        %v8432 = vunpack.c.l.b16 %v8282
        %v8433 = vunpack.c.h.b16 %v8282
        %v8434 = vunpack.c.l.b16 %v8283
        %v8435 = vunpack.c.h.b16 %v8283
        %v8436 = vunpack.c.l.b16 %v8284
        %v8437 = vunpack.c.h.b16 %v8284
        %v8438 = vunpack.c.l.b16 %v8285
        %v8439 = vunpack.c.h.b16 %v8285
        %v8440 = vunpack.c.l.b16 %v8286
        %v8441 = vunpack.c.h.b16 %v8286
        %v8442 = vunpack.c.l.b16 %v8287
        %v8443 = vunpack.c.h.b16 %v8287
        %v8444 = vunpack.c.l.b16 %v8288
        %v8445 = vunpack.c.h.b16 %v8288
        %v8446 = vunpack.c.l.b16 %v8289
        %v8447 = vunpack.c.h.b16 %v8289
        %v8448 = vunpack.c.l.b16 %v8290
        %v8449 = vunpack.c.h.b16 %v8290
        %v8450 = vunpack.c.l.b16 %v8291
        %v8451 = vunpack.c.h.b16 %v8291
        %v8452 = vunpack.c.l.b16 %v8292
        %v8453 = vunpack.c.h.b16 %v8292
        %v8454 = vunpack.c.l.b16 %v8293
        %v8455 = vunpack.c.h.b16 %v8293
        %v8456 = vunpack.c.l.b16 %v8294
        %v8457 = vunpack.c.h.b16 %v8294
        %v8458 = vunpack.c.l.b16 %v8295
        %v8459 = vunpack.c.h.b16 %v8295
        %v8460 = vunpack.c.l.b16 %v8296
        %v8461 = vunpack.c.h.b16 %v8296
        %v8462 = vunpack.c.l.b16 %v8297
        %v8463 = vunpack.c.h.b16 %v8297
        %v8464 = vunpack.c.l.b16 %v8298
        %v8465 = vunpack.c.h.b16 %v8298
        %v8466 = vunpack.c.l.b16 %v8299
        %v8467 = vunpack.c.h.b16 %v8299
        %v8468 = vunpack.c.l.b16 %v8300
        %v8469 = vunpack.c.h.b16 %v8300
        %v8470 = vunpack.c.l.b16 %v8301
        %v8471 = vunpack.c.h.b16 %v8301
        %v8472 = vunpack.c.l.b16 %v8302
        %v8473 = vunpack.c.h.b16 %v8302
        %v8474 = vunpack.c.l.b16 %v8303
        %v8475 = vunpack.c.h.b16 %v8303
        %v8476 = vunpack.c.l.b16 %v8304
        %v8477 = vunpack.c.h.b16 %v8304
        %v8478 = vunpack.c.l.b16 %v8305
        %v8479 = vunpack.c.h.b16 %v8305
        %v8480 = vunpack.c.l.b16 %v8306
        %v8481 = vunpack.c.h.b16 %v8306
        %v8482 = vunpack.c.l.b16 %v8307
        %v8483 = vunpack.c.h.b16 %v8307
        %v8484 = vpack.c.b16 %v8422, %v8420
        %v8485 = vpack.c.b16 %v8423, %v8421
        %v8486 = vpack.c.b16 %v8426, %v8424
        %v8487 = vpack.c.b16 %v8427, %v8425
        %v8488 = vpack.c.b16 %v8430, %v8428
        %v8489 = vpack.c.b16 %v8431, %v8429
        %v8490 = vpack.c.b16 %v8434, %v8432
        %v8491 = vpack.c.b16 %v8435, %v8433
        %v8492 = vpack.c.b16 %v8438, %v8436
        %v8493 = vpack.c.b16 %v8439, %v8437
        %v8494 = vpack.c.b16 %v8442, %v8440
        %v8495 = vpack.c.b16 %v8443, %v8441
        %v8496 = vpack.c.b16 %v8446, %v8444
        %v8497 = vpack.c.b16 %v8447, %v8445
        %v8498 = vpack.c.b16 %v8450, %v8448
        %v8499 = vpack.c.b16 %v8451, %v8449
        %v8500 = vpack.c.b16 %v8454, %v8452
        %v8501 = vpack.c.b16 %v8455, %v8453
        %v8502 = vpack.c.b16 %v8458, %v8456
        %v8503 = vpack.c.b16 %v8459, %v8457
        %v8504 = vpack.c.b16 %v8462, %v8460
        %v8505 = vpack.c.b16 %v8463, %v8461
        %v8506 = vpack.c.b16 %v8466, %v8464
        %v8507 = vpack.c.b16 %v8467, %v8465
        %v8508 = vpack.c.b16 %v8470, %v8468
        %v8509 = vpack.c.b16 %v8471, %v8469
        %v8510 = vpack.c.b16 %v8474, %v8472
        %v8511 = vpack.c.b16 %v8475, %v8473
        %v8512 = vpack.c.b16 %v8478, %v8476
        %v8513 = vpack.c.b16 %v8479, %v8477
        %v8514 = vpack.c.b16 %v8482, %v8480
        %v8515 = vpack.c.b16 %v8483, %v8481
        %8548 = vmatprep.subr.bf16.mxu0 %v8485
        %8549 = vmatpush1.bf16.msra.mxu0 %v8484
        %8550 = vmatprep.subr.bf16.mxu0 %v8487
        %8551 = vmatpush1.bf16.msra.mxu0 %v8486
        %8552 = vmatprep.subr.bf16.mxu0 %v8489
        %8553 = vmatpush1.bf16.msra.mxu0 %v8488
        %8554 = vmatprep.subr.bf16.mxu0 %v8491
        %8555 = vmatpush1.bf16.msra.mxu0 %v8490
        %8556 = vmatprep.subr.bf16.mxu0 %v8493
        %8557 = vmatpush1.bf16.msra.mxu0 %v8492
        %8558 = vmatprep.subr.bf16.mxu0 %v8495
        %8559 = vmatpush1.bf16.msra.mxu0 %v8494
        %8560 = vmatprep.subr.bf16.mxu0 %v8497
        %8561 = vmatpush1.bf16.msra.mxu0 %v8496
        %8562 = vmatprep.subr.bf16.mxu0 %v8499
        %8563 = vmatpush1.bf16.msra.mxu0 %v8498
        %8564 = vmatprep.subr.bf16.mxu0 %v8501
        %8565 = vmatpush1.bf16.msra.mxu0 %v8500
        %8566 = vmatprep.subr.bf16.mxu0 %v8503
        %8567 = vmatpush1.bf16.msra.mxu0 %v8502
        %8568 = vmatprep.subr.bf16.mxu0 %v8505
        %8569 = vmatpush1.bf16.msra.mxu0 %v8504
        %8570 = vmatprep.subr.bf16.mxu0 %v8507
        %8571 = vmatpush1.bf16.msra.mxu0 %v8506
        %8572 = vmatprep.subr.bf16.mxu0 %v8509
        %8573 = vmatpush1.bf16.msra.mxu0 %v8508
        %8574 = vmatprep.subr.bf16.mxu0 %v8511
        %8575 = vmatpush1.bf16.msra.mxu0 %v8510
        %8576 = vmatprep.subr.bf16.mxu0 %v8513
        %8577 = vmatpush1.bf16.msra.mxu0 %v8512
        %8578 = vmatprep.subr.bf16.mxu0 %v8515
        %8579 = vmatpush1.bf16.msra.mxu0 %v8514
        %8580 = vmatprep.mubr.bf16.mxu0 %v8331
        %8581 = vmatmul.mubr.bf16.gmra.mrb[0].mxu0 %v8319
        %v8582 = vpop.f32.mrb[0].mxu0
        %v8583 = vadd.f32 0.0, %v8582
        %v8584 = vpop.f32.mrb[0].mxu0
        %v8585 = vadd.f32 0.0, %v8584
        %v8586 = vpop.f32.mrb[0].mxu0
        %v8587 = vadd.f32 0.0, %v8586
        %v8588 = vpop.f32.mrb[0].mxu0
        %v8589 = vadd.f32 0.0, %v8588
        %8590 = vmatprep.mubr.bf16.mxu0 %v8347
        %8591 = vmatmul.mubr.bf16.gmra.mrb[0].mxu0 %v8339
        %v8592 = vpop.f32.mrb[0].mxu0
        %v8593 = vadd.f32 0.0, %v8592
        %v8594 = vpop.f32.mrb[0].mxu0
        %v8595 = vadd.f32 0.0, %v8594
        %v8596 = vpop.f32.mrb[0].mxu0
        %v8597 = vadd.f32 0.0, %v8596
        %v8598 = vpop.f32.mrb[0].mxu0
        %v8599 = vadd.f32 0.0, %v8598
        %8600 = vmatprep.mubr.bf16.mxu0 %v8363
        %8601 = vmatmul.mubr.bf16.gmra.mrb[0].mxu0 %v8355
        %v8602 = vpop.f32.mrb[0].mxu0
        %v8603 = vadd.f32 0.0, %v8602
        %v8604 = vpop.f32.mrb[0].mxu0
        %v8605 = vadd.f32 0.0, %v8604
        %v8606 = vpop.f32.mrb[0].mxu0
        %v8607 = vadd.f32 0.0, %v8606
        %v8608 = vpop.f32.mrb[0].mxu0
        %v8609 = vadd.f32 0.0, %v8608
        %8610 = vmatprep.mubr.bf16.mxu0 %v8379
        %8611 = vmatmul.mubr.bf16.gmra.mrb[0].mxu0 %v8371
        %v8612 = vpop.f32.mrb[0].mxu0
        %v8613 = vadd.f32 0.0, %v8612
        %v8614 = vpop.f32.mrb[0].mxu0
        %v8615 = vadd.f32 0.0, %v8614
        %v8616 = vpop.f32.mrb[0].mxu0
        %v8617 = vadd.f32 0.0, %v8616
        %v8618 = vpop.f32.mrb[0].mxu0
        %v8619 = vadd.f32 0.0, %v8618
        %8620 = vdwg.mxu0
        %v8621 = vadd.f32 %v8231, %v8583
        %v8622 = vadd.f32 %v8232, %v8585
        %v8623 = vadd.f32 %v8233, %v8587
        %v8624 = vadd.f32 %v8234, %v8589
        %v8625 = vadd.f32 %v8235, %v8593
        %v8626 = vadd.f32 %v8236, %v8595
        %v8627 = vadd.f32 %v8237, %v8597
        %v8628 = vadd.f32 %v8238, %v8599
        %v8629 = vadd.f32 %v8239, %v8603
        %v8630 = vadd.f32 %v8240, %v8605
        %v8631 = vadd.f32 %v8241, %v8607
        %v8632 = vadd.f32 %v8242, %v8609
        %v8633 = vadd.f32 %v8243, %v8613
        %v8634 = vadd.f32 %v8244, %v8615
        %v8635 = vadd.f32 %v8245, %v8617
        %v8636 = vadd.f32 %v8246, %v8619
        %v8637 = vld [vmem:[#allocation3 + $0x10] sm:$0xfc]
        %v8638 = vld [vmem:[#allocation3 + $0x18] sm:$0xfc]
        %v8639 = vld [vmem:[#allocation3 + $0x90] sm:$0x3]
        %v8640 = vld [vmem:[#allocation3 + $0x98] sm:$0x3]
        %v8641 = vpack.c.bf16 %v8249, %v8637
        %v8642 = vpack.c.bf16 %v8250, %v8638
        %v8643 = vpack.c.bf16 %v8639, %v8639
        %v8644 = vpack.c.bf16 %v8640, %v8640
        %s8645 = scalar_lea.vmem [#allocation17], 1280
        %v8646 = vld [vmem:[%s8645] sm:$0xff]
        %v8647 = vld [vmem:[%s8645 + $0x8] sm:$0xff]
        %v8648 = vld [vmem:[%s8645 + $0x10] sm:$0xff]
        %v8649 = vld [vmem:[%s8645 + $0x18] sm:$0xff]
        %v8650 = vld [vmem:[%s8645 + $0x20] sm:$0xff]
        %v8651 = vld [vmem:[%s8645 + $0x28] sm:$0xff]
        %v8652 = vld [vmem:[%s8645 + $0x30] sm:$0xff]
        %v8653 = vld [vmem:[%s8645 + $0x38] sm:$0xff]
        %v8654 = vld [vmem:[%s8645 + $0x40] sm:$0xff]
        %v8655 = vld [vmem:[%s8645 + $0x48] sm:$0xff]
        %v8656 = vld [vmem:[%s8645 + $0x50] sm:$0xff]
        %v8657 = vld [vmem:[%s8645 + $0x58] sm:$0xff]
        %v8658 = vld [vmem:[%s8645 + $0x60] sm:$0xff]
        %v8659 = vld [vmem:[%s8645 + $0x68] sm:$0xff]
        %v8660 = vld [vmem:[%s8645 + $0x70] sm:$0xff]
        %v8661 = vld [vmem:[%s8645 + $0x78] sm:$0xff]
        %v8662 = vld [vmem:[%s8645 + $0x80] sm:$0xff]
        %v8663 = vld [vmem:[%s8645 + $0x88] sm:$0xff]
        %v8664 = vld [vmem:[%s8645 + $0x90] sm:$0xff]
        %v8665 = vld [vmem:[%s8645 + $0x98] sm:$0xff]
        %v8666 = vld [vmem:[%s8645 + $0xa0] sm:$0xff]
        %v8667 = vld [vmem:[%s8645 + $0xa8] sm:$0xff]
        %v8668 = vld [vmem:[%s8645 + $0xb0] sm:$0xff]
        %v8669 = vld [vmem:[%s8645 + $0xb8] sm:$0xff]
        %v8670 = vld [vmem:[%s8645 + $0xc0] sm:$0xff]
        %v8671 = vld [vmem:[%s8645 + $0xc8] sm:$0xff]
        %v8672 = vld [vmem:[%s8645 + $0xd0] sm:$0xff]
        %v8673 = vld [vmem:[%s8645 + $0xd8] sm:$0xff]
        %v8674 = vld [vmem:[%s8645 + $0xe0] sm:$0xff]
        %v8675 = vld [vmem:[%s8645 + $0xe8] sm:$0xff]
        %v8676 = vld [vmem:[%s8645 + $0xf0] sm:$0xff]
        %v8677 = vld [vmem:[%s8645 + $0xf8] sm:$0xff]
        %v8688 = vrot.slane %v8641, 1
        %v8689 = vrot.slane %v8267, 1
        %v8690 = vsel %vm3604, %v8688, %v8689
        %v8691 = vrot.slane %v8642, 1
        %v8692 = vrot.slane %v8268, 1
        %v8693 = vsel %vm3604, %v8691, %v8692
        %v8694 = vrot.slane %v8269, 1
        %v8695 = vsel %vm3604, %v8689, %v8694
        %v8696 = vrot.slane %v8270, 1
        %v8697 = vsel %vm3604, %v8692, %v8696
        %v8698 = vrot.slane %v8271, 1
        %v8699 = vsel %vm3604, %v8694, %v8698
        %v8700 = vrot.slane %v8272, 1
        %v8701 = vsel %vm3604, %v8696, %v8700
        %v8702 = vrot.slane %v8643, 1
        %v8703 = vsel %vm3604, %v8698, %v8702
        %v8704 = vrot.slane %v8644, 1
        %v8705 = vsel %vm3604, %v8700, %v8704
        %v8746 = vunpack.c.l.b16 %v8646
        %v8747 = vunpack.c.h.b16 %v8646
        %v8748 = vunpack.c.l.b16 %v8647
        %v8749 = vunpack.c.h.b16 %v8647
        %v8750 = vunpack.c.l.b16 %v8648
        %v8751 = vunpack.c.h.b16 %v8648
        %v8752 = vunpack.c.l.b16 %v8649
        %v8753 = vunpack.c.h.b16 %v8649
        %v8754 = vunpack.c.l.b16 %v8650
        %v8755 = vunpack.c.h.b16 %v8650
        %v8756 = vunpack.c.l.b16 %v8651
        %v8757 = vunpack.c.h.b16 %v8651
        %v8758 = vunpack.c.l.b16 %v8652
        %v8759 = vunpack.c.h.b16 %v8652
        %v8760 = vunpack.c.l.b16 %v8653
        %v8761 = vunpack.c.h.b16 %v8653
        %v8762 = vunpack.c.l.b16 %v8654
        %v8763 = vunpack.c.h.b16 %v8654
        %v8764 = vunpack.c.l.b16 %v8655
        %v8765 = vunpack.c.h.b16 %v8655
        %v8766 = vunpack.c.l.b16 %v8656
        %v8767 = vunpack.c.h.b16 %v8656
        %v8768 = vunpack.c.l.b16 %v8657
        %v8769 = vunpack.c.h.b16 %v8657
        %v8770 = vunpack.c.l.b16 %v8658
        %v8771 = vunpack.c.h.b16 %v8658
        %v8772 = vunpack.c.l.b16 %v8659
        %v8773 = vunpack.c.h.b16 %v8659
        %v8774 = vunpack.c.l.b16 %v8660
        %v8775 = vunpack.c.h.b16 %v8660
        %v8776 = vunpack.c.l.b16 %v8661
        %v8777 = vunpack.c.h.b16 %v8661
        %v8778 = vunpack.c.l.b16 %v8662
        %v8779 = vunpack.c.h.b16 %v8662
        %v8780 = vunpack.c.l.b16 %v8663
        %v8781 = vunpack.c.h.b16 %v8663
        %v8782 = vunpack.c.l.b16 %v8664
        %v8783 = vunpack.c.h.b16 %v8664
        %v8784 = vunpack.c.l.b16 %v8665
        %v8785 = vunpack.c.h.b16 %v8665
        %v8786 = vunpack.c.l.b16 %v8666
        %v8787 = vunpack.c.h.b16 %v8666
        %v8788 = vunpack.c.l.b16 %v8667
        %v8789 = vunpack.c.h.b16 %v8667
        %v8790 = vunpack.c.l.b16 %v8668
        %v8791 = vunpack.c.h.b16 %v8668
        %v8792 = vunpack.c.l.b16 %v8669
        %v8793 = vunpack.c.h.b16 %v8669
        %v8794 = vunpack.c.l.b16 %v8670
        %v8795 = vunpack.c.h.b16 %v8670
        %v8796 = vunpack.c.l.b16 %v8671
        %v8797 = vunpack.c.h.b16 %v8671
        %v8798 = vunpack.c.l.b16 %v8672
        %v8799 = vunpack.c.h.b16 %v8672
        %v8800 = vunpack.c.l.b16 %v8673
        %v8801 = vunpack.c.h.b16 %v8673
        %v8802 = vunpack.c.l.b16 %v8674
        %v8803 = vunpack.c.h.b16 %v8674
        %v8804 = vunpack.c.l.b16 %v8675
        %v8805 = vunpack.c.h.b16 %v8675
        %v8806 = vunpack.c.l.b16 %v8676
        %v8807 = vunpack.c.h.b16 %v8676
        %v8808 = vunpack.c.l.b16 %v8677
        %v8809 = vunpack.c.h.b16 %v8677
        %v8810 = vpack.c.b16 %v8748, %v8746
        %v8811 = vpack.c.b16 %v8749, %v8747
        %v8812 = vpack.c.b16 %v8752, %v8750
        %v8813 = vpack.c.b16 %v8753, %v8751
        %v8814 = vpack.c.b16 %v8756, %v8754
        %v8815 = vpack.c.b16 %v8757, %v8755
        %v8816 = vpack.c.b16 %v8760, %v8758
        %v8817 = vpack.c.b16 %v8761, %v8759
        %v8818 = vpack.c.b16 %v8764, %v8762
        %v8819 = vpack.c.b16 %v8765, %v8763
        %v8820 = vpack.c.b16 %v8768, %v8766
        %v8821 = vpack.c.b16 %v8769, %v8767
        %v8822 = vpack.c.b16 %v8772, %v8770
        %v8823 = vpack.c.b16 %v8773, %v8771
        %v8824 = vpack.c.b16 %v8776, %v8774
        %v8825 = vpack.c.b16 %v8777, %v8775
        %v8826 = vpack.c.b16 %v8780, %v8778
        %v8827 = vpack.c.b16 %v8781, %v8779
        %v8828 = vpack.c.b16 %v8784, %v8782
        %v8829 = vpack.c.b16 %v8785, %v8783
        %v8830 = vpack.c.b16 %v8788, %v8786
        %v8831 = vpack.c.b16 %v8789, %v8787
        %v8832 = vpack.c.b16 %v8792, %v8790
        %v8833 = vpack.c.b16 %v8793, %v8791
        %v8834 = vpack.c.b16 %v8796, %v8794
        %v8835 = vpack.c.b16 %v8797, %v8795
        %v8836 = vpack.c.b16 %v8800, %v8798
        %v8837 = vpack.c.b16 %v8801, %v8799
        %v8838 = vpack.c.b16 %v8804, %v8802
        %v8839 = vpack.c.b16 %v8805, %v8803
        %v8840 = vpack.c.b16 %v8808, %v8806
        %v8841 = vpack.c.b16 %v8809, %v8807
        %8874 = vmatprep.subr.bf16.mxu0 %v8811
        %8875 = vmatpush1.bf16.msra.mxu0 %v8810
        %8876 = vmatprep.subr.bf16.mxu0 %v8813
        %8877 = vmatpush1.bf16.msra.mxu0 %v8812
        %8878 = vmatprep.subr.bf16.mxu0 %v8815
        %8879 = vmatpush1.bf16.msra.mxu0 %v8814
        %8880 = vmatprep.subr.bf16.mxu0 %v8817
        %8881 = vmatpush1.bf16.msra.mxu0 %v8816
        %8882 = vmatprep.subr.bf16.mxu0 %v8819
        %8883 = vmatpush1.bf16.msra.mxu0 %v8818
        %8884 = vmatprep.subr.bf16.mxu0 %v8821
        %8885 = vmatpush1.bf16.msra.mxu0 %v8820
        %8886 = vmatprep.subr.bf16.mxu0 %v8823
        %8887 = vmatpush1.bf16.msra.mxu0 %v8822
        %8888 = vmatprep.subr.bf16.mxu0 %v8825
        %8889 = vmatpush1.bf16.msra.mxu0 %v8824
        %8890 = vmatprep.subr.bf16.mxu0 %v8827
        %8891 = vmatpush1.bf16.msra.mxu0 %v8826
        %8892 = vmatprep.subr.bf16.mxu0 %v8829
        %8893 = vmatpush1.bf16.msra.mxu0 %v8828
        %8894 = vmatprep.subr.bf16.mxu0 %v8831
        %8895 = vmatpush1.bf16.msra.mxu0 %v8830
        %8896 = vmatprep.subr.bf16.mxu0 %v8833
        %8897 = vmatpush1.bf16.msra.mxu0 %v8832
        %8898 = vmatprep.subr.bf16.mxu0 %v8835
        %8899 = vmatpush1.bf16.msra.mxu0 %v8834
        %8900 = vmatprep.subr.bf16.mxu0 %v8837
        %8901 = vmatpush1.bf16.msra.mxu0 %v8836
        %8902 = vmatprep.subr.bf16.mxu0 %v8839
        %8903 = vmatpush1.bf16.msra.mxu0 %v8838
        %8904 = vmatprep.subr.bf16.mxu0 %v8841
        %8905 = vmatpush1.bf16.msra.mxu0 %v8840
        %8906 = vmatprep.mubr.bf16.mxu0 %v8693
        %8907 = vmatmul.mubr.bf16.gmra.mrb[0].mxu0 %v8690
        %v8908 = vpop.f32.mrb[0].mxu0
        %v8909 = vadd.f32 0.0, %v8908
        %v8910 = vpop.f32.mrb[0].mxu0
        %v8911 = vadd.f32 0.0, %v8910
        %v8912 = vpop.f32.mrb[0].mxu0
        %v8913 = vadd.f32 0.0, %v8912
        %v8914 = vpop.f32.mrb[0].mxu0
        %v8915 = vadd.f32 0.0, %v8914
        %8916 = vmatprep.mubr.bf16.mxu0 %v8697
        %8917 = vmatmul.mubr.bf16.gmra.mrb[0].mxu0 %v8695
        %v8918 = vpop.f32.mrb[0].mxu0
        %v8919 = vadd.f32 0.0, %v8918
        %v8920 = vpop.f32.mrb[0].mxu0
        %v8921 = vadd.f32 0.0, %v8920
        %v8922 = vpop.f32.mrb[0].mxu0
        %v8923 = vadd.f32 0.0, %v8922
        %v8924 = vpop.f32.mrb[0].mxu0
        %v8925 = vadd.f32 0.0, %v8924
        %8926 = vmatprep.mubr.bf16.mxu0 %v8701
        %8927 = vmatmul.mubr.bf16.gmra.mrb[0].mxu0 %v8699
        %v8928 = vpop.f32.mrb[0].mxu0
        %v8929 = vadd.f32 0.0, %v8928
        %v8930 = vpop.f32.mrb[0].mxu0
        %v8931 = vadd.f32 0.0, %v8930
        %v8932 = vpop.f32.mrb[0].mxu0
        %v8933 = vadd.f32 0.0, %v8932
        %v8934 = vpop.f32.mrb[0].mxu0
        %v8935 = vadd.f32 0.0, %v8934
        %8936 = vmatprep.mubr.bf16.mxu0 %v8705
        %8937 = vmatmul.mubr.bf16.gmra.mrb[0].mxu0 %v8703
        %v8938 = vpop.f32.mrb[0].mxu0
        %v8939 = vadd.f32 0.0, %v8938
        %v8940 = vpop.f32.mrb[0].mxu0
        %v8941 = vadd.f32 0.0, %v8940
        %v8942 = vpop.f32.mrb[0].mxu0
        %v8943 = vadd.f32 0.0, %v8942
        %v8944 = vpop.f32.mrb[0].mxu0
        %v8945 = vadd.f32 0.0, %v8944
        %8946 = vdwg.mxu0
        %v8947 = vadd.f32 %v8621, %v8909
        %v8948 = vadd.f32 %v8622, %v8911
        %v8949 = vadd.f32 %v8623, %v8913
        %v8950 = vadd.f32 %v8624, %v8915
        %v8951 = vadd.f32 %v8625, %v8919
        %v8952 = vadd.f32 %v8626, %v8921
        %v8953 = vadd.f32 %v8627, %v8923
        %v8954 = vadd.f32 %v8628, %v8925
        %v8955 = vadd.f32 %v8629, %v8929
        %v8956 = vadd.f32 %v8630, %v8931
        %v8957 = vadd.f32 %v8631, %v8933
        %v8958 = vadd.f32 %v8632, %v8935
        %v8959 = vadd.f32 %v8633, %v8939
        %v8960 = vadd.f32 %v8634, %v8941
        %v8961 = vadd.f32 %v8635, %v8943
        %v8962 = vadd.f32 %v8636, %v8945
        %v8963 = vld [vmem:[#allocation3 + $0x90] sm:$0xff]
        %v8964 = vld [vmem:[#allocation3 + $0x98] sm:$0xff]
        %v8965 = vpack.c.bf16 %v8251, %v8249
        %v8966 = vpack.c.bf16 %v8252, %v8250
        %v8967 = vpack.c.bf16 %v8255, %v8253
        %v8968 = vpack.c.bf16 %v8256, %v8254
        %v8969 = vpack.c.bf16 %v8259, %v8257
        %v8970 = vpack.c.bf16 %v8260, %v8258
        %v8971 = vpack.c.bf16 %v8963, %v8261
        %v8972 = vpack.c.bf16 %v8964, %v8262
        %s8973 = scalar_lea.vmem [#allocation17], 1536
        %v8974 = vld [vmem:[%s8973] sm:$0xff]
        %v8975 = vld [vmem:[%s8973 + $0x8] sm:$0xff]
        %v8976 = vld [vmem:[%s8973 + $0x10] sm:$0xff]
        %v8977 = vld [vmem:[%s8973 + $0x18] sm:$0xff]
        %v8978 = vld [vmem:[%s8973 + $0x20] sm:$0xff]
        %v8979 = vld [vmem:[%s8973 + $0x28] sm:$0xff]
        %v8980 = vld [vmem:[%s8973 + $0x30] sm:$0xff]
        %v8981 = vld [vmem:[%s8973 + $0x38] sm:$0xff]
        %v8982 = vld [vmem:[%s8973 + $0x40] sm:$0xff]
        %v8983 = vld [vmem:[%s8973 + $0x48] sm:$0xff]
        %v8984 = vld [vmem:[%s8973 + $0x50] sm:$0xff]
        %v8985 = vld [vmem:[%s8973 + $0x58] sm:$0xff]
        %v8986 = vld [vmem:[%s8973 + $0x60] sm:$0xff]
        %v8987 = vld [vmem:[%s8973 + $0x68] sm:$0xff]
        %v8988 = vld [vmem:[%s8973 + $0x70] sm:$0xff]
        %v8989 = vld [vmem:[%s8973 + $0x78] sm:$0xff]
        %v8990 = vld [vmem:[%s8973 + $0x80] sm:$0xff]
        %v8991 = vld [vmem:[%s8973 + $0x88] sm:$0xff]
        %v8992 = vld [vmem:[%s8973 + $0x90] sm:$0xff]
        %v8993 = vld [vmem:[%s8973 + $0x98] sm:$0xff]
        %v8994 = vld [vmem:[%s8973 + $0xa0] sm:$0xff]
        %v8995 = vld [vmem:[%s8973 + $0xa8] sm:$0xff]
        %v8996 = vld [vmem:[%s8973 + $0xb0] sm:$0xff]
        %v8997 = vld [vmem:[%s8973 + $0xb8] sm:$0xff]
        %v8998 = vld [vmem:[%s8973 + $0xc0] sm:$0xff]
        %v8999 = vld [vmem:[%s8973 + $0xc8] sm:$0xff]
        %v9000 = vld [vmem:[%s8973 + $0xd0] sm:$0xff]
        %v9001 = vld [vmem:[%s8973 + $0xd8] sm:$0xff]
        %v9002 = vld [vmem:[%s8973 + $0xe0] sm:$0xff]
        %v9003 = vld [vmem:[%s8973 + $0xe8] sm:$0xff]
        %v9004 = vld [vmem:[%s8973 + $0xf0] sm:$0xff]
        %v9005 = vld [vmem:[%s8973 + $0xf8] sm:$0xff]
        %v9038 = vunpack.c.l.b16 %v8974
        %v9039 = vunpack.c.h.b16 %v8974
        %v9040 = vunpack.c.l.b16 %v8975
        %v9041 = vunpack.c.h.b16 %v8975
        %v9042 = vunpack.c.l.b16 %v8976
        %v9043 = vunpack.c.h.b16 %v8976
        %v9044 = vunpack.c.l.b16 %v8977
        %v9045 = vunpack.c.h.b16 %v8977
        %v9046 = vunpack.c.l.b16 %v8978
        %v9047 = vunpack.c.h.b16 %v8978
        %v9048 = vunpack.c.l.b16 %v8979
        %v9049 = vunpack.c.h.b16 %v8979
        %v9050 = vunpack.c.l.b16 %v8980
        %v9051 = vunpack.c.h.b16 %v8980
        %v9052 = vunpack.c.l.b16 %v8981
        %v9053 = vunpack.c.h.b16 %v8981
        %v9054 = vunpack.c.l.b16 %v8982
        %v9055 = vunpack.c.h.b16 %v8982
        %v9056 = vunpack.c.l.b16 %v8983
        %v9057 = vunpack.c.h.b16 %v8983
        %v9058 = vunpack.c.l.b16 %v8984
        %v9059 = vunpack.c.h.b16 %v8984
        %v9060 = vunpack.c.l.b16 %v8985
        %v9061 = vunpack.c.h.b16 %v8985
        %v9062 = vunpack.c.l.b16 %v8986
        %v9063 = vunpack.c.h.b16 %v8986
        %v9064 = vunpack.c.l.b16 %v8987
        %v9065 = vunpack.c.h.b16 %v8987
        %v9066 = vunpack.c.l.b16 %v8988
        %v9067 = vunpack.c.h.b16 %v8988
        %v9068 = vunpack.c.l.b16 %v8989
        %v9069 = vunpack.c.h.b16 %v8989
        %v9070 = vunpack.c.l.b16 %v8990
        %v9071 = vunpack.c.h.b16 %v8990
        %v9072 = vunpack.c.l.b16 %v8991
        %v9073 = vunpack.c.h.b16 %v8991
        %v9074 = vunpack.c.l.b16 %v8992
        %v9075 = vunpack.c.h.b16 %v8992
        %v9076 = vunpack.c.l.b16 %v8993
        %v9077 = vunpack.c.h.b16 %v8993
        %v9078 = vunpack.c.l.b16 %v8994
        %v9079 = vunpack.c.h.b16 %v8994
        %v9080 = vunpack.c.l.b16 %v8995
        %v9081 = vunpack.c.h.b16 %v8995
        %v9082 = vunpack.c.l.b16 %v8996
        %v9083 = vunpack.c.h.b16 %v8996
        %v9084 = vunpack.c.l.b16 %v8997
        %v9085 = vunpack.c.h.b16 %v8997
        %v9086 = vunpack.c.l.b16 %v8998
        %v9087 = vunpack.c.h.b16 %v8998
        %v9088 = vunpack.c.l.b16 %v8999
        %v9089 = vunpack.c.h.b16 %v8999
        %v9090 = vunpack.c.l.b16 %v9000
        %v9091 = vunpack.c.h.b16 %v9000
        %v9092 = vunpack.c.l.b16 %v9001
        %v9093 = vunpack.c.h.b16 %v9001
        %v9094 = vunpack.c.l.b16 %v9002
        %v9095 = vunpack.c.h.b16 %v9002
        %v9096 = vunpack.c.l.b16 %v9003
        %v9097 = vunpack.c.h.b16 %v9003
        %v9098 = vunpack.c.l.b16 %v9004
        %v9099 = vunpack.c.h.b16 %v9004
        %v9100 = vunpack.c.l.b16 %v9005
        %v9101 = vunpack.c.h.b16 %v9005
        %v9102 = vpack.c.b16 %v9040, %v9038
        %v9103 = vpack.c.b16 %v9041, %v9039
        %v9104 = vpack.c.b16 %v9044, %v9042
        %v9105 = vpack.c.b16 %v9045, %v9043
        %v9106 = vpack.c.b16 %v9048, %v9046
        %v9107 = vpack.c.b16 %v9049, %v9047
        %v9108 = vpack.c.b16 %v9052, %v9050
        %v9109 = vpack.c.b16 %v9053, %v9051
        %v9110 = vpack.c.b16 %v9056, %v9054
        %v9111 = vpack.c.b16 %v9057, %v9055
        %v9112 = vpack.c.b16 %v9060, %v9058
        %v9113 = vpack.c.b16 %v9061, %v9059
        %v9114 = vpack.c.b16 %v9064, %v9062
        %v9115 = vpack.c.b16 %v9065, %v9063
        %v9116 = vpack.c.b16 %v9068, %v9066
        %v9117 = vpack.c.b16 %v9069, %v9067
        %v9118 = vpack.c.b16 %v9072, %v9070
        %v9119 = vpack.c.b16 %v9073, %v9071
        %v9120 = vpack.c.b16 %v9076, %v9074
        %v9121 = vpack.c.b16 %v9077, %v9075
        %v9122 = vpack.c.b16 %v9080, %v9078
        %v9123 = vpack.c.b16 %v9081, %v9079
        %v9124 = vpack.c.b16 %v9084, %v9082
        %v9125 = vpack.c.b16 %v9085, %v9083
        %v9126 = vpack.c.b16 %v9088, %v9086
        %v9127 = vpack.c.b16 %v9089, %v9087
        %v9128 = vpack.c.b16 %v9092, %v9090
        %v9129 = vpack.c.b16 %v9093, %v9091
        %v9130 = vpack.c.b16 %v9096, %v9094
        %v9131 = vpack.c.b16 %v9097, %v9095
        %v9132 = vpack.c.b16 %v9100, %v9098
        %v9133 = vpack.c.b16 %v9101, %v9099
        %9166 = vmatprep.subr.bf16.mxu0 %v9103
        %9167 = vmatpush1.bf16.msra.mxu0 %v9102
        %9168 = vmatprep.subr.bf16.mxu0 %v9105
        %9169 = vmatpush1.bf16.msra.mxu0 %v9104
        %9170 = vmatprep.subr.bf16.mxu0 %v9107
        %9171 = vmatpush1.bf16.msra.mxu0 %v9106
        %9172 = vmatprep.subr.bf16.mxu0 %v9109
        %9173 = vmatpush1.bf16.msra.mxu0 %v9108
        %9174 = vmatprep.subr.bf16.mxu0 %v9111
        %9175 = vmatpush1.bf16.msra.mxu0 %v9110
        %9176 = vmatprep.subr.bf16.mxu0 %v9113
        %9177 = vmatpush1.bf16.msra.mxu0 %v9112
        %9178 = vmatprep.subr.bf16.mxu0 %v9115
        %9179 = vmatpush1.bf16.msra.mxu0 %v9114
        %9180 = vmatprep.subr.bf16.mxu0 %v9117
        %9181 = vmatpush1.bf16.msra.mxu0 %v9116
        %9182 = vmatprep.subr.bf16.mxu0 %v9119
        %9183 = vmatpush1.bf16.msra.mxu0 %v9118
        %9184 = vmatprep.subr.bf16.mxu0 %v9121
        %9185 = vmatpush1.bf16.msra.mxu0 %v9120
        %9186 = vmatprep.subr.bf16.mxu0 %v9123
        %9187 = vmatpush1.bf16.msra.mxu0 %v9122
        %9188 = vmatprep.subr.bf16.mxu0 %v9125
        %9189 = vmatpush1.bf16.msra.mxu0 %v9124
        %9190 = vmatprep.subr.bf16.mxu0 %v9127
        %9191 = vmatpush1.bf16.msra.mxu0 %v9126
        %9192 = vmatprep.subr.bf16.mxu0 %v9129
        %9193 = vmatpush1.bf16.msra.mxu0 %v9128
        %9194 = vmatprep.subr.bf16.mxu0 %v9131
        %9195 = vmatpush1.bf16.msra.mxu0 %v9130
        %9196 = vmatprep.subr.bf16.mxu0 %v9133
        %9197 = vmatpush1.bf16.msra.mxu0 %v9132
        %9198 = vmatprep.mubr.bf16.mxu0 %v8966
        %9199 = vmatmul.mubr.bf16.gmra.mrb[0].mxu0 %v8965
        %v9200 = vpop.f32.mrb[0].mxu0
        %v9201 = vadd.f32 0.0, %v9200
        %v9202 = vpop.f32.mrb[0].mxu0
        %v9203 = vadd.f32 0.0, %v9202
        %v9204 = vpop.f32.mrb[0].mxu0
        %v9205 = vadd.f32 0.0, %v9204
        %v9206 = vpop.f32.mrb[0].mxu0
        %v9207 = vadd.f32 0.0, %v9206
        %9208 = vmatprep.mubr.bf16.mxu0 %v8968
        %9209 = vmatmul.mubr.bf16.gmra.mrb[0].mxu0 %v8967
        %v9210 = vpop.f32.mrb[0].mxu0
        %v9211 = vadd.f32 0.0, %v9210
        %v9212 = vpop.f32.mrb[0].mxu0
        %v9213 = vadd.f32 0.0, %v9212
        %v9214 = vpop.f32.mrb[0].mxu0
        %v9215 = vadd.f32 0.0, %v9214
        %v9216 = vpop.f32.mrb[0].mxu0
        %v9217 = vadd.f32 0.0, %v9216
        %9218 = vmatprep.mubr.bf16.mxu0 %v8970
        %9219 = vmatmul.mubr.bf16.gmra.mrb[0].mxu0 %v8969
        %v9220 = vpop.f32.mrb[0].mxu0
        %v9221 = vadd.f32 0.0, %v9220
        %v9222 = vpop.f32.mrb[0].mxu0
        %v9223 = vadd.f32 0.0, %v9222
        %v9224 = vpop.f32.mrb[0].mxu0
        %v9225 = vadd.f32 0.0, %v9224
        %v9226 = vpop.f32.mrb[0].mxu0
        %v9227 = vadd.f32 0.0, %v9226
        %9228 = vmatprep.mubr.bf16.mxu0 %v8972
        %9229 = vmatmul.mubr.bf16.gmra.mrb[0].mxu0 %v8971
        %v9230 = vpop.f32.mrb[0].mxu0
        %v9231 = vadd.f32 0.0, %v9230
        %v9232 = vpop.f32.mrb[0].mxu0
        %v9233 = vadd.f32 0.0, %v9232
        %v9234 = vpop.f32.mrb[0].mxu0
        %v9235 = vadd.f32 0.0, %v9234
        %v9236 = vpop.f32.mrb[0].mxu0
        %v9237 = vadd.f32 0.0, %v9236
        %9238 = vdwg.mxu0
        %v9239 = vadd.f32 %v8947, %v9201
        %v9240 = vadd.f32 %v8948, %v9203
        %v9241 = vadd.f32 %v8949, %v9205
        %v9242 = vadd.f32 %v8950, %v9207
        %v9243 = vadd.f32 %v8951, %v9211
        %v9244 = vadd.f32 %v8952, %v9213
        %v9245 = vadd.f32 %v8953, %v9215
        %v9246 = vadd.f32 %v8954, %v9217
        %v9247 = vadd.f32 %v8955, %v9221
        %v9248 = vadd.f32 %v8956, %v9223
        %v9249 = vadd.f32 %v8957, %v9225
        %v9250 = vadd.f32 %v8958, %v9227
        %v9251 = vadd.f32 %v8959, %v9231
        %v9252 = vadd.f32 %v8960, %v9233
        %v9253 = vadd.f32 %v8961, %v9235
        %v9254 = vadd.f32 %v8962, %v9237
        %v9255 = vld [vmem:[#allocation3 + $0x20] sm:$0xfe]
        %v9256 = vld [vmem:[#allocation3 + $0x28] sm:$0xfe]
        %v9257 = vld [vmem:[#allocation3 + $0x30] sm:$0xff]
        %v9258 = vld [vmem:[#allocation3 + $0x38] sm:$0xff]
        %v9259 = vld [vmem:[#allocation3 + $0x40] sm:$0xff]
        %v9260 = vld [vmem:[#allocation3 + $0x48] sm:$0xff]
        %v9261 = vld [vmem:[#allocation3 + $0x50] sm:$0xff]
        %v9262 = vld [vmem:[#allocation3 + $0x58] sm:$0xff]
        %v9263 = vld [vmem:[#allocation3 + $0x60] sm:$0xff]
        %v9264 = vld [vmem:[#allocation3 + $0x68] sm:$0xff]
        %v9265 = vld [vmem:[#allocation3 + $0x70] sm:$0xff]
        %v9266 = vld [vmem:[#allocation3 + $0x78] sm:$0xff]
        %v9267 = vld [vmem:[#allocation3 + $0x80] sm:$0xff]
        %v9268 = vld [vmem:[#allocation3 + $0x88] sm:$0xff]
        %v9269 = vld [vmem:[#allocation3 + $0x90] sm:$0xff]
        %v9270 = vld [vmem:[#allocation3 + $0x98] sm:$0xff]
        %v9271 = vld [vmem:[#allocation3 + $0xa0] sm:$0x1]
        %v9272 = vld [vmem:[#allocation3 + $0xa8] sm:$0x1]
        %v9273 = vpack.c.bf16 %v9257, %v9255
        %v9274 = vpack.c.bf16 %v9258, %v9256
        %v9275 = vpack.c.bf16 %v9261, %v9259
        %v9276 = vpack.c.bf16 %v9262, %v9260
        %v9277 = vpack.c.bf16 %v9265, %v9263
        %v9278 = vpack.c.bf16 %v9266, %v9264
        %v9279 = vpack.c.bf16 %v9269, %v9267
        %v9280 = vpack.c.bf16 %v9270, %v9268
        %v9281 = vpack.c.bf16 %v9271, %v9271
        %v9282 = vpack.c.bf16 %v9272, %v9272
        %s9283 = scalar_lea.vmem [#allocation17], 1792
        %v9284 = vld [vmem:[%s9283] sm:$0xff]
        %v9285 = vld [vmem:[%s9283 + $0x8] sm:$0xff]
        %v9286 = vld [vmem:[%s9283 + $0x10] sm:$0xff]
        %v9287 = vld [vmem:[%s9283 + $0x18] sm:$0xff]
        %v9288 = vld [vmem:[%s9283 + $0x20] sm:$0xff]
        %v9289 = vld [vmem:[%s9283 + $0x28] sm:$0xff]
        %v9290 = vld [vmem:[%s9283 + $0x30] sm:$0xff]
        %v9291 = vld [vmem:[%s9283 + $0x38] sm:$0xff]
        %v9292 = vld [vmem:[%s9283 + $0x40] sm:$0xff]
        %v9293 = vld [vmem:[%s9283 + $0x48] sm:$0xff]
        %v9294 = vld [vmem:[%s9283 + $0x50] sm:$0xff]
        %v9295 = vld [vmem:[%s9283 + $0x58] sm:$0xff]
        %v9296 = vld [vmem:[%s9283 + $0x60] sm:$0xff]
        %v9297 = vld [vmem:[%s9283 + $0x68] sm:$0xff]
        %v9298 = vld [vmem:[%s9283 + $0x70] sm:$0xff]
        %v9299 = vld [vmem:[%s9283 + $0x78] sm:$0xff]
        %v9300 = vld [vmem:[%s9283 + $0x80] sm:$0xff]
        %v9301 = vld [vmem:[%s9283 + $0x88] sm:$0xff]
        %v9302 = vld [vmem:[%s9283 + $0x90] sm:$0xff]
        %v9303 = vld [vmem:[%s9283 + $0x98] sm:$0xff]
        %v9304 = vld [vmem:[%s9283 + $0xa0] sm:$0xff]
        %v9305 = vld [vmem:[%s9283 + $0xa8] sm:$0xff]
        %v9306 = vld [vmem:[%s9283 + $0xb0] sm:$0xff]
        %v9307 = vld [vmem:[%s9283 + $0xb8] sm:$0xff]
        %v9308 = vld [vmem:[%s9283 + $0xc0] sm:$0xff]
        %v9309 = vld [vmem:[%s9283 + $0xc8] sm:$0xff]
        %v9310 = vld [vmem:[%s9283 + $0xd0] sm:$0xff]
        %v9311 = vld [vmem:[%s9283 + $0xd8] sm:$0xff]
        %v9312 = vld [vmem:[%s9283 + $0xe0] sm:$0xff]
        %v9313 = vld [vmem:[%s9283 + $0xe8] sm:$0xff]
        %v9314 = vld [vmem:[%s9283 + $0xf0] sm:$0xff]
        %v9315 = vld [vmem:[%s9283 + $0xf8] sm:$0xff]
        %v9317 = vshrl.u32 %v9273, 16
        %v9319 = vshll.u32 %v9273, 16
        %v9321 = vrot.slane %v9319, 1
        %v9322 = vor.u32 %v9317, %v9321
        %v9324 = vshll.u32 %v9275, 16
        %v9326 = vrot.slane %v9324, 1
        %v9327 = vsel %vm2728, %v9322, %v9326
        %v9329 = vshrl.u32 %v9274, 16
        %v9331 = vshll.u32 %v9274, 16
        %v9333 = vrot.slane %v9331, 1
        %v9334 = vor.u32 %v9329, %v9333
        %v9336 = vshll.u32 %v9276, 16
        %v9338 = vrot.slane %v9336, 1
        %v9339 = vsel %vm2728, %v9334, %v9338
        %v9340 = vshrl.u32 %v9275, 16
        %v9342 = vor.u32 %v9340, %v9326
        %v9344 = vshll.u32 %v9277, 16
        %v9346 = vrot.slane %v9344, 1
        %v9347 = vsel %vm2728, %v9342, %v9346
        %v9348 = vshrl.u32 %v9276, 16
        %v9350 = vor.u32 %v9348, %v9338
        %v9352 = vshll.u32 %v9278, 16
        %v9354 = vrot.slane %v9352, 1
        %v9355 = vsel %vm2728, %v9350, %v9354
        %v9356 = vshrl.u32 %v9277, 16
        %v9358 = vor.u32 %v9356, %v9346
        %v9360 = vshll.u32 %v9279, 16
        %v9362 = vrot.slane %v9360, 1
        %v9363 = vsel %vm2728, %v9358, %v9362
        %v9364 = vshrl.u32 %v9278, 16
        %v9366 = vor.u32 %v9364, %v9354
        %v9368 = vshll.u32 %v9280, 16
        %v9370 = vrot.slane %v9368, 1
        %v9371 = vsel %vm2728, %v9366, %v9370
        %v9372 = vshrl.u32 %v9279, 16
        %v9374 = vor.u32 %v9372, %v9362
        %v9376 = vshll.u32 %v9281, 16
        %v9378 = vrot.slane %v9376, 1
        %v9379 = vsel %vm2728, %v9374, %v9378
        %v9380 = vshrl.u32 %v9280, 16
        %v9382 = vor.u32 %v9380, %v9370
        %v9384 = vshll.u32 %v9282, 16
        %v9386 = vrot.slane %v9384, 1
        %v9387 = vsel %vm2728, %v9382, %v9386
        %v9428 = vunpack.c.l.b16 %v9284
        %v9429 = vunpack.c.h.b16 %v9284
        %v9430 = vunpack.c.l.b16 %v9285
        %v9431 = vunpack.c.h.b16 %v9285
        %v9432 = vunpack.c.l.b16 %v9286
        %v9433 = vunpack.c.h.b16 %v9286
        %v9434 = vunpack.c.l.b16 %v9287
        %v9435 = vunpack.c.h.b16 %v9287
        %v9436 = vunpack.c.l.b16 %v9288
        %v9437 = vunpack.c.h.b16 %v9288
        %v9438 = vunpack.c.l.b16 %v9289
        %v9439 = vunpack.c.h.b16 %v9289
        %v9440 = vunpack.c.l.b16 %v9290
        %v9441 = vunpack.c.h.b16 %v9290
        %v9442 = vunpack.c.l.b16 %v9291
        %v9443 = vunpack.c.h.b16 %v9291
        %v9444 = vunpack.c.l.b16 %v9292
        %v9445 = vunpack.c.h.b16 %v9292
        %v9446 = vunpack.c.l.b16 %v9293
        %v9447 = vunpack.c.h.b16 %v9293
        %v9448 = vunpack.c.l.b16 %v9294
        %v9449 = vunpack.c.h.b16 %v9294
        %v9450 = vunpack.c.l.b16 %v9295
        %v9451 = vunpack.c.h.b16 %v9295
        %v9452 = vunpack.c.l.b16 %v9296
        %v9453 = vunpack.c.h.b16 %v9296
        %v9454 = vunpack.c.l.b16 %v9297
        %v9455 = vunpack.c.h.b16 %v9297
        %v9456 = vunpack.c.l.b16 %v9298
        %v9457 = vunpack.c.h.b16 %v9298
        %v9458 = vunpack.c.l.b16 %v9299
        %v9459 = vunpack.c.h.b16 %v9299
        %v9460 = vunpack.c.l.b16 %v9300
        %v9461 = vunpack.c.h.b16 %v9300
        %v9462 = vunpack.c.l.b16 %v9301
        %v9463 = vunpack.c.h.b16 %v9301
        %v9464 = vunpack.c.l.b16 %v9302
        %v9465 = vunpack.c.h.b16 %v9302
        %v9466 = vunpack.c.l.b16 %v9303
        %v9467 = vunpack.c.h.b16 %v9303
        %v9468 = vunpack.c.l.b16 %v9304
        %v9469 = vunpack.c.h.b16 %v9304
        %v9470 = vunpack.c.l.b16 %v9305
        %v9471 = vunpack.c.h.b16 %v9305
        %v9472 = vunpack.c.l.b16 %v9306
        %v9473 = vunpack.c.h.b16 %v9306
        %v9474 = vunpack.c.l.b16 %v9307
        %v9475 = vunpack.c.h.b16 %v9307
        %v9476 = vunpack.c.l.b16 %v9308
        %v9477 = vunpack.c.h.b16 %v9308
        %v9478 = vunpack.c.l.b16 %v9309
        %v9479 = vunpack.c.h.b16 %v9309
        %v9480 = vunpack.c.l.b16 %v9310
        %v9481 = vunpack.c.h.b16 %v9310
        %v9482 = vunpack.c.l.b16 %v9311
        %v9483 = vunpack.c.h.b16 %v9311
        %v9484 = vunpack.c.l.b16 %v9312
        %v9485 = vunpack.c.h.b16 %v9312
        %v9486 = vunpack.c.l.b16 %v9313
        %v9487 = vunpack.c.h.b16 %v9313
        %v9488 = vunpack.c.l.b16 %v9314
        %v9489 = vunpack.c.h.b16 %v9314
        %v9490 = vunpack.c.l.b16 %v9315
        %v9491 = vunpack.c.h.b16 %v9315
        %v9492 = vpack.c.b16 %v9430, %v9428
        %v9493 = vpack.c.b16 %v9431, %v9429
        %v9494 = vpack.c.b16 %v9434, %v9432
        %v9495 = vpack.c.b16 %v9435, %v9433
        %v9496 = vpack.c.b16 %v9438, %v9436
        %v9497 = vpack.c.b16 %v9439, %v9437
        %v9498 = vpack.c.b16 %v9442, %v9440
        %v9499 = vpack.c.b16 %v9443, %v9441
        %v9500 = vpack.c.b16 %v9446, %v9444
        %v9501 = vpack.c.b16 %v9447, %v9445
        %v9502 = vpack.c.b16 %v9450, %v9448
        %v9503 = vpack.c.b16 %v9451, %v9449
        %v9504 = vpack.c.b16 %v9454, %v9452
        %v9505 = vpack.c.b16 %v9455, %v9453
        %v9506 = vpack.c.b16 %v9458, %v9456
        %v9507 = vpack.c.b16 %v9459, %v9457
        %v9508 = vpack.c.b16 %v9462, %v9460
        %v9509 = vpack.c.b16 %v9463, %v9461
        %v9510 = vpack.c.b16 %v9466, %v9464
        %v9511 = vpack.c.b16 %v9467, %v9465
        %v9512 = vpack.c.b16 %v9470, %v9468
        %v9513 = vpack.c.b16 %v9471, %v9469
        %v9514 = vpack.c.b16 %v9474, %v9472
        %v9515 = vpack.c.b16 %v9475, %v9473
        %v9516 = vpack.c.b16 %v9478, %v9476
        %v9517 = vpack.c.b16 %v9479, %v9477
        %v9518 = vpack.c.b16 %v9482, %v9480
        %v9519 = vpack.c.b16 %v9483, %v9481
        %v9520 = vpack.c.b16 %v9486, %v9484
        %v9521 = vpack.c.b16 %v9487, %v9485
        %v9522 = vpack.c.b16 %v9490, %v9488
        %v9523 = vpack.c.b16 %v9491, %v9489
        %9556 = vmatprep.subr.bf16.mxu0 %v9493
        %9557 = vmatpush1.bf16.msra.mxu0 %v9492
        %9558 = vmatprep.subr.bf16.mxu0 %v9495
        %9559 = vmatpush1.bf16.msra.mxu0 %v9494
        %9560 = vmatprep.subr.bf16.mxu0 %v9497
        %9561 = vmatpush1.bf16.msra.mxu0 %v9496
        %9562 = vmatprep.subr.bf16.mxu0 %v9499
        %9563 = vmatpush1.bf16.msra.mxu0 %v9498
        %9564 = vmatprep.subr.bf16.mxu0 %v9501
        %9565 = vmatpush1.bf16.msra.mxu0 %v9500
        %9566 = vmatprep.subr.bf16.mxu0 %v9503
        %9567 = vmatpush1.bf16.msra.mxu0 %v9502
        %9568 = vmatprep.subr.bf16.mxu0 %v9505
        %9569 = vmatpush1.bf16.msra.mxu0 %v9504
        %9570 = vmatprep.subr.bf16.mxu0 %v9507
        %9571 = vmatpush1.bf16.msra.mxu0 %v9506
        %9572 = vmatprep.subr.bf16.mxu0 %v9509
        %9573 = vmatpush1.bf16.msra.mxu0 %v9508
        %9574 = vmatprep.subr.bf16.mxu0 %v9511
        %9575 = vmatpush1.bf16.msra.mxu0 %v9510
        %9576 = vmatprep.subr.bf16.mxu0 %v9513
        %9577 = vmatpush1.bf16.msra.mxu0 %v9512
        %9578 = vmatprep.subr.bf16.mxu0 %v9515
        %9579 = vmatpush1.bf16.msra.mxu0 %v9514
        %9580 = vmatprep.subr.bf16.mxu0 %v9517
        %9581 = vmatpush1.bf16.msra.mxu0 %v9516
        %9582 = vmatprep.subr.bf16.mxu0 %v9519
        %9583 = vmatpush1.bf16.msra.mxu0 %v9518
        %9584 = vmatprep.subr.bf16.mxu0 %v9521
        %9585 = vmatpush1.bf16.msra.mxu0 %v9520
        %9586 = vmatprep.subr.bf16.mxu0 %v9523
        %9587 = vmatpush1.bf16.msra.mxu0 %v9522
        %9588 = vmatprep.mubr.bf16.mxu0 %v9339
        %9589 = vmatmul.mubr.bf16.gmra.mrb[0].mxu0 %v9327
        %v9590 = vpop.f32.mrb[0].mxu0
        %v9591 = vadd.f32 0.0, %v9590
        %v9592 = vpop.f32.mrb[0].mxu0
        %v9593 = vadd.f32 0.0, %v9592
        %v9594 = vpop.f32.mrb[0].mxu0
        %v9595 = vadd.f32 0.0, %v9594
        %v9596 = vpop.f32.mrb[0].mxu0
        %v9597 = vadd.f32 0.0, %v9596
        %9598 = vmatprep.mubr.bf16.mxu0 %v9355
        %9599 = vmatmul.mubr.bf16.gmra.mrb[0].mxu0 %v9347
        %v9600 = vpop.f32.mrb[0].mxu0
        %v9601 = vadd.f32 0.0, %v9600
        %v9602 = vpop.f32.mrb[0].mxu0
        %v9603 = vadd.f32 0.0, %v9602
        %v9604 = vpop.f32.mrb[0].mxu0
        %v9605 = vadd.f32 0.0, %v9604
        %v9606 = vpop.f32.mrb[0].mxu0
        %v9607 = vadd.f32 0.0, %v9606
        %9608 = vmatprep.mubr.bf16.mxu0 %v9371
        %9609 = vmatmul.mubr.bf16.gmra.mrb[0].mxu0 %v9363
        %v9610 = vpop.f32.mrb[0].mxu0
        %v9611 = vadd.f32 0.0, %v9610
        %v9612 = vpop.f32.mrb[0].mxu0
        %v9613 = vadd.f32 0.0, %v9612
        %v9614 = vpop.f32.mrb[0].mxu0
        %v9615 = vadd.f32 0.0, %v9614
        %v9616 = vpop.f32.mrb[0].mxu0
        %v9617 = vadd.f32 0.0, %v9616
        %9618 = vmatprep.mubr.bf16.mxu0 %v9387
        %9619 = vmatmul.mubr.bf16.gmra.mrb[0].mxu0 %v9379
        %v9620 = vpop.f32.mrb[0].mxu0
        %v9621 = vadd.f32 0.0, %v9620
        %v9622 = vpop.f32.mrb[0].mxu0
        %v9623 = vadd.f32 0.0, %v9622
        %v9624 = vpop.f32.mrb[0].mxu0
        %v9625 = vadd.f32 0.0, %v9624
        %v9626 = vpop.f32.mrb[0].mxu0
        %v9627 = vadd.f32 0.0, %v9626
        %9628 = vdwg.mxu0
        %v9629 = vadd.f32 %v9239, %v9591
        %v9630 = vadd.f32 %v9240, %v9593
        %v9631 = vadd.f32 %v9241, %v9595
        %v9632 = vadd.f32 %v9242, %v9597
        %v9633 = vadd.f32 %v9243, %v9601
        %v9634 = vadd.f32 %v9244, %v9603
        %v9635 = vadd.f32 %v9245, %v9605
        %v9636 = vadd.f32 %v9246, %v9607
        %v9637 = vadd.f32 %v9247, %v9611
        %v9638 = vadd.f32 %v9248, %v9613
        %v9639 = vadd.f32 %v9249, %v9615
        %v9640 = vadd.f32 %v9250, %v9617
        %v9641 = vadd.f32 %v9251, %v9621
        %v9642 = vadd.f32 %v9252, %v9623
        %v9643 = vadd.f32 %v9253, %v9625
        %v9644 = vadd.f32 %v9254, %v9627
        %v9645 = vld [vmem:[#allocation3 + $0x20] sm:$0xfc]
        %v9646 = vld [vmem:[#allocation3 + $0x28] sm:$0xfc]
        %v9647 = vld [vmem:[#allocation3 + $0xa0] sm:$0x3]
        %v9648 = vld [vmem:[#allocation3 + $0xa8] sm:$0x3]
        %v9649 = vpack.c.bf16 %v9257, %v9645
        %v9650 = vpack.c.bf16 %v9258, %v9646
        %v9651 = vpack.c.bf16 %v9647, %v9647
        %v9652 = vpack.c.bf16 %v9648, %v9648
        %s9653 = scalar_lea.vmem [#allocation17], 2048
        %v9654 = vld [vmem:[%s9653] sm:$0xff]
        %v9655 = vld [vmem:[%s9653 + $0x8] sm:$0xff]
        %v9656 = vld [vmem:[%s9653 + $0x10] sm:$0xff]
        %v9657 = vld [vmem:[%s9653 + $0x18] sm:$0xff]
        %v9658 = vld [vmem:[%s9653 + $0x20] sm:$0xff]
        %v9659 = vld [vmem:[%s9653 + $0x28] sm:$0xff]
        %v9660 = vld [vmem:[%s9653 + $0x30] sm:$0xff]
        %v9661 = vld [vmem:[%s9653 + $0x38] sm:$0xff]
        %v9662 = vld [vmem:[%s9653 + $0x40] sm:$0xff]
        %v9663 = vld [vmem:[%s9653 + $0x48] sm:$0xff]
        %v9664 = vld [vmem:[%s9653 + $0x50] sm:$0xff]
        %v9665 = vld [vmem:[%s9653 + $0x58] sm:$0xff]
        %v9666 = vld [vmem:[%s9653 + $0x60] sm:$0xff]
        %v9667 = vld [vmem:[%s9653 + $0x68] sm:$0xff]
        %v9668 = vld [vmem:[%s9653 + $0x70] sm:$0xff]
        %v9669 = vld [vmem:[%s9653 + $0x78] sm:$0xff]
        %v9670 = vld [vmem:[%s9653 + $0x80] sm:$0xff]
        %v9671 = vld [vmem:[%s9653 + $0x88] sm:$0xff]
        %v9672 = vld [vmem:[%s9653 + $0x90] sm:$0xff]
        %v9673 = vld [vmem:[%s9653 + $0x98] sm:$0xff]
        %v9674 = vld [vmem:[%s9653 + $0xa0] sm:$0xff]
        %v9675 = vld [vmem:[%s9653 + $0xa8] sm:$0xff]
        %v9676 = vld [vmem:[%s9653 + $0xb0] sm:$0xff]
        %v9677 = vld [vmem:[%s9653 + $0xb8] sm:$0xff]
        %v9678 = vld [vmem:[%s9653 + $0xc0] sm:$0xff]
        %v9679 = vld [vmem:[%s9653 + $0xc8] sm:$0xff]
        %v9680 = vld [vmem:[%s9653 + $0xd0] sm:$0xff]
        %v9681 = vld [vmem:[%s9653 + $0xd8] sm:$0xff]
        %v9682 = vld [vmem:[%s9653 + $0xe0] sm:$0xff]
        %v9683 = vld [vmem:[%s9653 + $0xe8] sm:$0xff]
        %v9684 = vld [vmem:[%s9653 + $0xf0] sm:$0xff]
        %v9685 = vld [vmem:[%s9653 + $0xf8] sm:$0xff]
        %v9696 = vrot.slane %v9649, 1
        %v9697 = vrot.slane %v9275, 1
        %v9698 = vsel %vm3604, %v9696, %v9697
        %v9699 = vrot.slane %v9650, 1
        %v9700 = vrot.slane %v9276, 1
        %v9701 = vsel %vm3604, %v9699, %v9700
        %v9702 = vrot.slane %v9277, 1
        %v9703 = vsel %vm3604, %v9697, %v9702
        %v9704 = vrot.slane %v9278, 1
        %v9705 = vsel %vm3604, %v9700, %v9704
        %v9706 = vrot.slane %v9279, 1
        %v9707 = vsel %vm3604, %v9702, %v9706
        %v9708 = vrot.slane %v9280, 1
        %v9709 = vsel %vm3604, %v9704, %v9708
        %v9710 = vrot.slane %v9651, 1
        %v9711 = vsel %vm3604, %v9706, %v9710
        %v9712 = vrot.slane %v9652, 1
        %v9713 = vsel %vm3604, %v9708, %v9712
        %v9754 = vunpack.c.l.b16 %v9654
        %v9755 = vunpack.c.h.b16 %v9654
        %v9756 = vunpack.c.l.b16 %v9655
        %v9757 = vunpack.c.h.b16 %v9655
        %v9758 = vunpack.c.l.b16 %v9656
        %v9759 = vunpack.c.h.b16 %v9656
        %v9760 = vunpack.c.l.b16 %v9657
        %v9761 = vunpack.c.h.b16 %v9657
        %v9762 = vunpack.c.l.b16 %v9658
        %v9763 = vunpack.c.h.b16 %v9658
        %v9764 = vunpack.c.l.b16 %v9659
        %v9765 = vunpack.c.h.b16 %v9659
        %v9766 = vunpack.c.l.b16 %v9660
        %v9767 = vunpack.c.h.b16 %v9660
        %v9768 = vunpack.c.l.b16 %v9661
        %v9769 = vunpack.c.h.b16 %v9661
        %v9770 = vunpack.c.l.b16 %v9662
        %v9771 = vunpack.c.h.b16 %v9662
        %v9772 = vunpack.c.l.b16 %v9663
        %v9773 = vunpack.c.h.b16 %v9663
        %v9774 = vunpack.c.l.b16 %v9664
        %v9775 = vunpack.c.h.b16 %v9664
        %v9776 = vunpack.c.l.b16 %v9665
        %v9777 = vunpack.c.h.b16 %v9665
        %v9778 = vunpack.c.l.b16 %v9666
        %v9779 = vunpack.c.h.b16 %v9666
        %v9780 = vunpack.c.l.b16 %v9667
        %v9781 = vunpack.c.h.b16 %v9667
        %v9782 = vunpack.c.l.b16 %v9668
        %v9783 = vunpack.c.h.b16 %v9668
        %v9784 = vunpack.c.l.b16 %v9669
        %v9785 = vunpack.c.h.b16 %v9669
        %v9786 = vunpack.c.l.b16 %v9670
        %v9787 = vunpack.c.h.b16 %v9670
        %v9788 = vunpack.c.l.b16 %v9671
        %v9789 = vunpack.c.h.b16 %v9671
        %v9790 = vunpack.c.l.b16 %v9672
        %v9791 = vunpack.c.h.b16 %v9672
        %v9792 = vunpack.c.l.b16 %v9673
        %v9793 = vunpack.c.h.b16 %v9673
        %v9794 = vunpack.c.l.b16 %v9674
        %v9795 = vunpack.c.h.b16 %v9674
        %v9796 = vunpack.c.l.b16 %v9675
        %v9797 = vunpack.c.h.b16 %v9675
        %v9798 = vunpack.c.l.b16 %v9676
        %v9799 = vunpack.c.h.b16 %v9676
        %v9800 = vunpack.c.l.b16 %v9677
        %v9801 = vunpack.c.h.b16 %v9677
        %v9802 = vunpack.c.l.b16 %v9678
        %v9803 = vunpack.c.h.b16 %v9678
        %v9804 = vunpack.c.l.b16 %v9679
        %v9805 = vunpack.c.h.b16 %v9679
        %v9806 = vunpack.c.l.b16 %v9680
        %v9807 = vunpack.c.h.b16 %v9680
        %v9808 = vunpack.c.l.b16 %v9681
        %v9809 = vunpack.c.h.b16 %v9681
        %v9810 = vunpack.c.l.b16 %v9682
        %v9811 = vunpack.c.h.b16 %v9682
        %v9812 = vunpack.c.l.b16 %v9683
        %v9813 = vunpack.c.h.b16 %v9683
        %v9814 = vunpack.c.l.b16 %v9684
        %v9815 = vunpack.c.h.b16 %v9684
        %v9816 = vunpack.c.l.b16 %v9685
        %v9817 = vunpack.c.h.b16 %v9685
        %v9818 = vpack.c.b16 %v9756, %v9754
        %v9819 = vpack.c.b16 %v9757, %v9755
        %v9820 = vpack.c.b16 %v9760, %v9758
        %v9821 = vpack.c.b16 %v9761, %v9759
        %v9822 = vpack.c.b16 %v9764, %v9762
        %v9823 = vpack.c.b16 %v9765, %v9763
        %v9824 = vpack.c.b16 %v9768, %v9766
        %v9825 = vpack.c.b16 %v9769, %v9767
        %v9826 = vpack.c.b16 %v9772, %v9770
        %v9827 = vpack.c.b16 %v9773, %v9771
        %v9828 = vpack.c.b16 %v9776, %v9774
        %v9829 = vpack.c.b16 %v9777, %v9775
        %v9830 = vpack.c.b16 %v9780, %v9778
        %v9831 = vpack.c.b16 %v9781, %v9779
        %v9832 = vpack.c.b16 %v9784, %v9782
        %v9833 = vpack.c.b16 %v9785, %v9783
        %v9834 = vpack.c.b16 %v9788, %v9786
        %v9835 = vpack.c.b16 %v9789, %v9787
        %v9836 = vpack.c.b16 %v9792, %v9790
        %v9837 = vpack.c.b16 %v9793, %v9791
        %v9838 = vpack.c.b16 %v9796, %v9794
        %v9839 = vpack.c.b16 %v9797, %v9795
        %v9840 = vpack.c.b16 %v9800, %v9798
        %v9841 = vpack.c.b16 %v9801, %v9799
        %v9842 = vpack.c.b16 %v9804, %v9802
        %v9843 = vpack.c.b16 %v9805, %v9803
        %v9844 = vpack.c.b16 %v9808, %v9806
        %v9845 = vpack.c.b16 %v9809, %v9807
        %v9846 = vpack.c.b16 %v9812, %v9810
        %v9847 = vpack.c.b16 %v9813, %v9811
        %v9848 = vpack.c.b16 %v9816, %v9814
        %v9849 = vpack.c.b16 %v9817, %v9815
        %9882 = vmatprep.subr.bf16.mxu0 %v9819
        %9883 = vmatpush1.bf16.msra.mxu0 %v9818
        %9884 = vmatprep.subr.bf16.mxu0 %v9821
        %9885 = vmatpush1.bf16.msra.mxu0 %v9820
        %9886 = vmatprep.subr.bf16.mxu0 %v9823
        %9887 = vmatpush1.bf16.msra.mxu0 %v9822
        %9888 = vmatprep.subr.bf16.mxu0 %v9825
        %9889 = vmatpush1.bf16.msra.mxu0 %v9824
        %9890 = vmatprep.subr.bf16.mxu0 %v9827
        %9891 = vmatpush1.bf16.msra.mxu0 %v9826
        %9892 = vmatprep.subr.bf16.mxu0 %v9829
        %9893 = vmatpush1.bf16.msra.mxu0 %v9828
        %9894 = vmatprep.subr.bf16.mxu0 %v9831
        %9895 = vmatpush1.bf16.msra.mxu0 %v9830
        %9896 = vmatprep.subr.bf16.mxu0 %v9833
        %9897 = vmatpush1.bf16.msra.mxu0 %v9832
        %9898 = vmatprep.subr.bf16.mxu0 %v9835
        %9899 = vmatpush1.bf16.msra.mxu0 %v9834
        %9900 = vmatprep.subr.bf16.mxu0 %v9837
        %9901 = vmatpush1.bf16.msra.mxu0 %v9836
        %9902 = vmatprep.subr.bf16.mxu0 %v9839
        %9903 = vmatpush1.bf16.msra.mxu0 %v9838
        %9904 = vmatprep.subr.bf16.mxu0 %v9841
        %9905 = vmatpush1.bf16.msra.mxu0 %v9840
        %9906 = vmatprep.subr.bf16.mxu0 %v9843
        %9907 = vmatpush1.bf16.msra.mxu0 %v9842
        %9908 = vmatprep.subr.bf16.mxu0 %v9845
        %9909 = vmatpush1.bf16.msra.mxu0 %v9844
        %9910 = vmatprep.subr.bf16.mxu0 %v9847
        %9911 = vmatpush1.bf16.msra.mxu0 %v9846
        %9912 = vmatprep.subr.bf16.mxu0 %v9849
        %9913 = vmatpush1.bf16.msra.mxu0 %v9848
        %9914 = vmatprep.mubr.bf16.mxu0 %v9701
        %9915 = vmatmul.mubr.bf16.gmra.mrb[0].mxu0 %v9698
        %v9916 = vpop.f32.mrb[0].mxu0
        %v9917 = vadd.f32 0.0, %v9916
        %v9918 = vpop.f32.mrb[0].mxu0
        %v9919 = vadd.f32 0.0, %v9918
        %v9920 = vpop.f32.mrb[0].mxu0
        %v9921 = vadd.f32 0.0, %v9920
        %v9922 = vpop.f32.mrb[0].mxu0
        %v9923 = vadd.f32 0.0, %v9922
        %9924 = vmatprep.mubr.bf16.mxu0 %v9705
        %9925 = vmatmul.mubr.bf16.gmra.mrb[0].mxu0 %v9703
        %v9926 = vpop.f32.mrb[0].mxu0
        %v9927 = vadd.f32 0.0, %v9926
        %v9928 = vpop.f32.mrb[0].mxu0
        %v9929 = vadd.f32 0.0, %v9928
        %v9930 = vpop.f32.mrb[0].mxu0
        %v9931 = vadd.f32 0.0, %v9930
        %v9932 = vpop.f32.mrb[0].mxu0
        %v9933 = vadd.f32 0.0, %v9932
        %9934 = vmatprep.mubr.bf16.mxu0 %v9709
        %9935 = vmatmul.mubr.bf16.gmra.mrb[0].mxu0 %v9707
        %v9936 = vpop.f32.mrb[0].mxu0
        %v9937 = vadd.f32 0.0, %v9936
        %v9938 = vpop.f32.mrb[0].mxu0
        %v9939 = vadd.f32 0.0, %v9938
        %v9940 = vpop.f32.mrb[0].mxu0
        %v9941 = vadd.f32 0.0, %v9940
        %v9942 = vpop.f32.mrb[0].mxu0
        %v9943 = vadd.f32 0.0, %v9942
        %9944 = vmatprep.mubr.bf16.mxu0 %v9713
        %9945 = vmatmul.mubr.bf16.gmra.mrb[0].mxu0 %v9711
        %v9946 = vpop.f32.mrb[0].mxu0
        %v9947 = vadd.f32 0.0, %v9946
        %v9948 = vpop.f32.mrb[0].mxu0
        %v9949 = vadd.f32 0.0, %v9948
        %v9950 = vpop.f32.mrb[0].mxu0
        %v9951 = vadd.f32 0.0, %v9950
        %v9952 = vpop.f32.mrb[0].mxu0
        %v9953 = vadd.f32 0.0, %v9952
        %9954 = vdwg.mxu0
        %v9955 = vadd.f32 %v9629, %v9917
        %v9956 = vadd.f32 %v9630, %v9919
        %v9957 = vadd.f32 %v9631, %v9921
        %v9958 = vadd.f32 %v9632, %v9923
        %v9959 = vadd.f32 %v9633, %v9927
        %v9960 = vadd.f32 %v9634, %v9929
        %v9961 = vadd.f32 %v9635, %v9931
        %v9962 = vadd.f32 %v9636, %v9933
        %v9963 = vadd.f32 %v9637, %v9937
        %v9964 = vadd.f32 %v9638, %v9939
        %v9965 = vadd.f32 %v9639, %v9941
        %v9966 = vadd.f32 %v9640, %v9943
        %v9967 = vadd.f32 %v9641, %v9947
        %v9968 = vadd.f32 %v9642, %v9949
        %v9969 = vadd.f32 %v9643, %v9951
        %v9970 = vadd.f32 %v9644, %v9953
        %v9971 = vld [vmem:[#allocation18] sm:$0x3]
        %v9973 = vlaneseq
        %v9974 = vshrl.u32 %v9973, 7
        %v9975 = vsub.s32 0, %v9974
        %v9976 = vrot.slane %v9971, %v9975
        %v9977 = vlaneseq
        %v9978 = vshrl.u32 %v9977, 7
        %v9979 = vsub.s32 1, %v9978
        %v9980 = vrot.slane %v9971, %v9979
        %v9983 = vmul.f32 %v9955, %v9976
        %v9984 = vmul.f32 %v9956, %v9980
        %v9985 = vmul.f32 %v9957, %v9976
        %v9986 = vmul.f32 %v9958, %v9980
        %v9987 = vmul.f32 %v9959, %v9976
        %v9988 = vmul.f32 %v9960, %v9980
        %v9989 = vmul.f32 %v9961, %v9976
        %v9990 = vmul.f32 %v9962, %v9980
        %v9991 = vmul.f32 %v9963, %v9976
        %v9992 = vmul.f32 %v9964, %v9980
        %v9993 = vmul.f32 %v9965, %v9976
        %v9994 = vmul.f32 %v9966, %v9980
        %v9995 = vmul.f32 %v9967, %v9976
        %v9996 = vmul.f32 %v9968, %v9980
        %v9997 = vmul.f32 %v9969, %v9976
        %v9998 = vmul.f32 %v9970, %v9980
        %v9999 = vld [vmem:[#allocation20] sm:$0x3]
        %v10001 = vlaneseq
        %v10002 = vshrl.u32 %v10001, 7
        %v10003 = vsub.s32 0, %v10002
        %v10004 = vrot.slane %v9999, %v10003
        %v10005 = vlaneseq
        %v10006 = vshrl.u32 %v10005, 7
        %v10007 = vsub.s32 1, %v10006
        %v10008 = vrot.slane %v9999, %v10007
        %v10011 = vadd.f32 %v9983, %v10004
        %v10012 = vadd.f32 %v9984, %v10008
        %v10013 = vadd.f32 %v9985, %v10004
        %v10014 = vadd.f32 %v9986, %v10008
        %v10015 = vadd.f32 %v9987, %v10004
        %v10016 = vadd.f32 %v9988, %v10008
        %v10017 = vadd.f32 %v9989, %v10004
        %v10018 = vadd.f32 %v9990, %v10008
        %v10019 = vadd.f32 %v9991, %v10004
        %v10020 = vadd.f32 %v9992, %v10008
        %v10021 = vadd.f32 %v9993, %v10004
        %v10022 = vadd.f32 %v9994, %v10008
        %v10023 = vadd.f32 %v9995, %v10004
        %v10024 = vadd.f32 %v9996, %v10008
        %v10025 = vadd.f32 %v9997, %v10004
        %v10026 = vadd.f32 %v9998, %v10008
        %v10027 = vmax.f32 %v10011, 0.0
        %v10028 = vmax.f32 %v10012, 0.0
        %v10029 = vmax.f32 %v10013, 0.0
        %v10030 = vmax.f32 %v10014, 0.0
        %v10031 = vmax.f32 %v10015, 0.0
        %v10032 = vmax.f32 %v10016, 0.0
        %v10033 = vmax.f32 %v10017, 0.0
        %v10034 = vmax.f32 %v10018, 0.0
        %v10035 = vmax.f32 %v10019, 0.0
        %v10036 = vmax.f32 %v10020, 0.0
        %v10037 = vmax.f32 %v10021, 0.0
        %v10038 = vmax.f32 %v10022, 0.0
        %v10039 = vmax.f32 %v10023, 0.0
        %v10040 = vmax.f32 %v10024, 0.0
        %v10041 = vmax.f32 %v10025, 0.0
        %v10042 = vmax.f32 %v10026, 0.0
        %v10043 = vpack.c.bf16 %v10029, %v10027
        %v10044 = vpack.c.bf16 %v10030, %v10028
        %v10045 = vpack.c.bf16 %v10033, %v10031
        %v10046 = vpack.c.bf16 %v10034, %v10032
        %v10047 = vpack.c.bf16 %v10037, %v10035
        %v10048 = vpack.c.bf16 %v10038, %v10036
        %v10049 = vpack.c.bf16 %v10041, %v10039
        %v10050 = vpack.c.bf16 %v10042, %v10040
        %v10051 = vld [vmem:[%s13] sm:$0xf]
        %v10052 = vld [vmem:[%s13 + $0x4] sm:$0xf]
        %v10053 = vld [vmem:[%s13 + $0x8] sm:$0xf]
        %v10054 = vld [vmem:[%s13 + $0xc] sm:$0xf]
        %v10055 = vld [vmem:[%s13 + $0x10] sm:$0xf]
        %v10056 = vld [vmem:[%s13 + $0x14] sm:$0xf]
        %v10057 = vld [vmem:[%s13 + $0x18] sm:$0xf]
        %v10058 = vld [vmem:[%s13 + $0x1c] sm:$0xf]
        %v10059 = vld [vmem:[%s13 + $0x20] sm:$0xf]
        %v10060 = vld [vmem:[%s13 + $0x24] sm:$0xf]
        %v10061 = vld [vmem:[%s13 + $0x28] sm:$0xf]
        %v10062 = vld [vmem:[%s13 + $0x2c] sm:$0xf]
        %v10063 = vld [vmem:[%s13 + $0x30] sm:$0xf]
        %v10064 = vld [vmem:[%s13 + $0x34] sm:$0xf]
        %v10065 = vld [vmem:[%s13 + $0x38] sm:$0xf]
        %v10066 = vld [vmem:[%s13 + $0x3c] sm:$0xf]
        %v10067 = vld [vmem:[%s13 + $0x40] sm:$0xf]
        %v10068 = vld [vmem:[%s13 + $0x44] sm:$0xf]
        %v10069 = vld [vmem:[%s13 + $0x48] sm:$0xf]
        %v10070 = vld [vmem:[%s13 + $0x4c] sm:$0xf]
        %v10071 = vld [vmem:[%s13 + $0x50] sm:$0xf]
        %v10072 = vld [vmem:[%s13 + $0x54] sm:$0xf]
        %v10073 = vld [vmem:[%s13 + $0x58] sm:$0xf]
        %v10074 = vld [vmem:[%s13 + $0x5c] sm:$0xf]
        %v10075 = vld [vmem:[%s13 + $0x60] sm:$0xf]
        %v10076 = vld [vmem:[%s13 + $0x64] sm:$0xf]
        %v10077 = vld [vmem:[%s13 + $0x68] sm:$0xf]
        %v10078 = vld [vmem:[%s13 + $0x6c] sm:$0xf]
        %v10079 = vld [vmem:[%s13 + $0x70] sm:$0xf]
        %v10080 = vld [vmem:[%s13 + $0x74] sm:$0xf]
        %v10081 = vld [vmem:[%s13 + $0x78] sm:$0xf]
        %v10082 = vld [vmem:[%s13 + $0x7c] sm:$0xf]
        %v10115 = vunpack.c.l.b16 %v10051
        %v10116 = vunpack.c.l.b16 %v10052
        %v10117 = vunpack.c.l.b16 %v10053
        %v10118 = vunpack.c.l.b16 %v10054
        %v10119 = vunpack.c.l.b16 %v10055
        %v10120 = vunpack.c.l.b16 %v10056
        %v10121 = vunpack.c.l.b16 %v10057
        %v10122 = vunpack.c.l.b16 %v10058
        %v10123 = vunpack.c.l.b16 %v10059
        %v10124 = vunpack.c.l.b16 %v10060
        %v10125 = vunpack.c.l.b16 %v10061
        %v10126 = vunpack.c.l.b16 %v10062
        %v10127 = vunpack.c.l.b16 %v10063
        %v10128 = vunpack.c.l.b16 %v10064
        %v10129 = vunpack.c.l.b16 %v10065
        %v10130 = vunpack.c.l.b16 %v10066
        %v10131 = vunpack.c.l.b16 %v10067
        %v10132 = vunpack.c.l.b16 %v10068
        %v10133 = vunpack.c.l.b16 %v10069
        %v10134 = vunpack.c.l.b16 %v10070
        %v10135 = vunpack.c.l.b16 %v10071
        %v10136 = vunpack.c.l.b16 %v10072
        %v10137 = vunpack.c.l.b16 %v10073
        %v10138 = vunpack.c.l.b16 %v10074
        %v10139 = vunpack.c.l.b16 %v10075
        %v10140 = vunpack.c.l.b16 %v10076
        %v10141 = vunpack.c.l.b16 %v10077
        %v10142 = vunpack.c.l.b16 %v10078
        %v10143 = vunpack.c.l.b16 %v10079
        %v10144 = vunpack.c.l.b16 %v10080
        %v10145 = vunpack.c.l.b16 %v10081
        %v10146 = vunpack.c.l.b16 %v10082
        %v10147 = vpack.c.b16 %v10116, %v10115
        %v10148 = vpack.c.b16 %v10118, %v10117
        %v10149 = vpack.c.b16 %v10120, %v10119
        %v10150 = vpack.c.b16 %v10122, %v10121
        %v10151 = vpack.c.b16 %v10124, %v10123
        %v10152 = vpack.c.b16 %v10126, %v10125
        %v10153 = vpack.c.b16 %v10128, %v10127
        %v10154 = vpack.c.b16 %v10130, %v10129
        %v10155 = vpack.c.b16 %v10132, %v10131
        %v10156 = vpack.c.b16 %v10134, %v10133
        %v10157 = vpack.c.b16 %v10136, %v10135
        %v10158 = vpack.c.b16 %v10138, %v10137
        %v10159 = vpack.c.b16 %v10140, %v10139
        %v10160 = vpack.c.b16 %v10142, %v10141
        %v10161 = vpack.c.b16 %v10144, %v10143
        %v10162 = vpack.c.b16 %v10146, %v10145
        %10179 = vmatprep.subr.bf16.mxu0 0
        %10180 = vmatpush1.bf16.msra.mxu0 %v10147
        %10181 = vmatprep.subr.bf16.mxu0 0
        %10182 = vmatpush1.bf16.msra.mxu0 %v10148
        %10183 = vmatprep.subr.bf16.mxu0 0
        %10184 = vmatpush1.bf16.msra.mxu0 %v10149
        %10185 = vmatprep.subr.bf16.mxu0 0
        %10186 = vmatpush1.bf16.msra.mxu0 %v10150
        %10187 = vmatprep.subr.bf16.mxu0 0
        %10188 = vmatpush1.bf16.msra.mxu0 %v10151
        %10189 = vmatprep.subr.bf16.mxu0 0
        %10190 = vmatpush1.bf16.msra.mxu0 %v10152
        %10191 = vmatprep.subr.bf16.mxu0 0
        %10192 = vmatpush1.bf16.msra.mxu0 %v10153
        %10193 = vmatprep.subr.bf16.mxu0 0
        %10194 = vmatpush1.bf16.msra.mxu0 %v10154
        %10195 = vmatprep.subr.bf16.mxu0 0
        %10196 = vmatpush1.bf16.msra.mxu0 %v10155
        %10197 = vmatprep.subr.bf16.mxu0 0
        %10198 = vmatpush1.bf16.msra.mxu0 %v10156
        %10199 = vmatprep.subr.bf16.mxu0 0
        %10200 = vmatpush1.bf16.msra.mxu0 %v10157
        %10201 = vmatprep.subr.bf16.mxu0 0
        %10202 = vmatpush1.bf16.msra.mxu0 %v10158
        %10203 = vmatprep.subr.bf16.mxu0 0
        %10204 = vmatpush1.bf16.msra.mxu0 %v10159
        %10205 = vmatprep.subr.bf16.mxu0 0
        %10206 = vmatpush1.bf16.msra.mxu0 %v10160
        %10207 = vmatprep.subr.bf16.mxu0 0
        %10208 = vmatpush1.bf16.msra.mxu0 %v10161
        %10209 = vmatprep.subr.bf16.mxu0 0
        %10210 = vmatpush1.bf16.msra.mxu0 %v10162
        %10211 = vmatprep.mubr.bf16.mxu0 %v10044
        %10212 = vmatmul.mubr.bf16.gmra.mrb[0].mxu0 %v10043
        %v10213 = vpop.f32.mrb[0].mxu0
        %v10214 = vadd.f32 0.0, %v10213
        %v10215 = vpop.f32.mrb[0].mxu0
        %v10216 = vpop.f32.mrb[0].mxu0
        %v10217 = vadd.f32 0.0, %v10216
        %v10218 = vpop.f32.mrb[0].mxu0
        %10219 = vmatprep.mubr.bf16.mxu0 %v10046
        %10220 = vmatmul.mubr.bf16.gmra.mrb[0].mxu0 %v10045
        %v10221 = vpop.f32.mrb[0].mxu0
        %v10222 = vadd.f32 0.0, %v10221
        %v10223 = vpop.f32.mrb[0].mxu0
        %v10224 = vpop.f32.mrb[0].mxu0
        %v10225 = vadd.f32 0.0, %v10224
        %v10226 = vpop.f32.mrb[0].mxu0
        %10227 = vmatprep.mubr.bf16.mxu0 %v10048
        %10228 = vmatmul.mubr.bf16.gmra.mrb[0].mxu0 %v10047
        %v10229 = vpop.f32.mrb[0].mxu0
        %v10230 = vadd.f32 0.0, %v10229
        %v10231 = vpop.f32.mrb[0].mxu0
        %v10232 = vpop.f32.mrb[0].mxu0
        %v10233 = vadd.f32 0.0, %v10232
        %v10234 = vpop.f32.mrb[0].mxu0
        %10235 = vmatprep.mubr.bf16.mxu0 %v10050
        %10236 = vmatmul.mubr.bf16.gmra.mrb[0].mxu0 %v10049
        %v10237 = vpop.f32.mrb[0].mxu0
        %v10238 = vadd.f32 0.0, %v10237
        %v10239 = vpop.f32.mrb[0].mxu0
        %v10240 = vpop.f32.mrb[0].mxu0
        %v10241 = vadd.f32 0.0, %v10240
        %v10242 = vpop.f32.mrb[0].mxu0
        %10243 = vdwg.mxu0
        %v10244 = vld [vmem:[#allocation21] sm:$0x1]
        %v10246 = vlaneseq
        %v10247 = vshrl.u32 %v10246, 7
        %v10248 = vsub.s32 0, %v10247
        %v10249 = vrot.slane %v10244, %v10248
        %v10251 = vmul.f32 %v10214, %v10249
        %v10252 = vmul.f32 %v10217, %v10249
        %v10253 = vmul.f32 %v10222, %v10249
        %v10254 = vmul.f32 %v10225, %v10249
        %v10255 = vmul.f32 %v10230, %v10249
        %v10256 = vmul.f32 %v10233, %v10249
        %v10257 = vmul.f32 %v10238, %v10249
        %v10258 = vmul.f32 %v10241, %v10249
        %v10259 = vld [vmem:[#allocation23] sm:$0x1]
        %v10261 = vlaneseq
        %v10262 = vshrl.u32 %v10261, 7
        %v10263 = vsub.s32 0, %v10262
        %v10264 = vrot.slane %v10259, %v10263
        %v10266 = vadd.f32 %v10251, %v10264
        %v10267 = vadd.f32 %v10252, %v10264
        %v10268 = vadd.f32 %v10253, %v10264
        %v10269 = vadd.f32 %v10254, %v10264
        %v10270 = vadd.f32 %v10255, %v10264
        %v10271 = vadd.f32 %v10256, %v10264
        %v10272 = vadd.f32 %v10257, %v10264
        %v10273 = vadd.f32 %v10258, %v10264
        %v10274 = vmax.f32 %v10266, 0.0
        %v10275 = vmax.f32 %v10267, 0.0
        %v10276 = vmax.f32 %v10268, 0.0
        %v10277 = vmax.f32 %v10269, 0.0
        %v10278 = vmax.f32 %v10270, 0.0
        %v10279 = vmax.f32 %v10271, 0.0
        %v10280 = vmax.f32 %v10272, 0.0
        %v10281 = vmax.f32 %v10273, 0.0
        %v10282 = vld [vmem:[#allocation24] sm:$0xff]
        %v10283 = vld [vmem:[#allocation24 + $0x8] sm:$0xff]
        %v10284 = vld [vmem:[#allocation24 + $0x10] sm:$0xff]
        %v10285 = vld [vmem:[#allocation24 + $0x18] sm:$0xff]
        %v10286 = vld [vmem:[#allocation24 + $0x20] sm:$0xff]
        %v10287 = vld [vmem:[#allocation24 + $0x28] sm:$0xff]
        %v10288 = vld [vmem:[#allocation24 + $0x30] sm:$0xff]
        %v10289 = vld [vmem:[#allocation24 + $0x38] sm:$0xff]
        %v10290 = vld [vmem:[#allocation24 + $0x40] sm:$0xff]
        %v10291 = vld [vmem:[#allocation24 + $0x48] sm:$0xff]
        %v10292 = vld [vmem:[#allocation24 + $0x50] sm:$0xff]
        %v10293 = vld [vmem:[#allocation24 + $0x58] sm:$0xff]
        %v10294 = vld [vmem:[#allocation24 + $0x60] sm:$0xff]
        %v10295 = vld [vmem:[#allocation24 + $0x68] sm:$0xff]
        %v10296 = vld [vmem:[#allocation24 + $0x70] sm:$0xff]
        %v10297 = vld [vmem:[#allocation24 + $0x78] sm:$0xff]
        %v10298 = vld [vmem:[#allocation24 + $0x80] sm:$0xff]
        %v10299 = vld [vmem:[#allocation24 + $0x88] sm:$0xff]
        %v10300 = vld [vmem:[#allocation24 + $0x90] sm:$0xff]
        %v10301 = vld [vmem:[#allocation24 + $0x98] sm:$0xff]
        %v10302 = vld [vmem:[#allocation24 + $0xa0] sm:$0xff]
        %v10303 = vld [vmem:[#allocation24 + $0xa8] sm:$0xff]
        %v10304 = vld [vmem:[#allocation24 + $0xb0] sm:$0xff]
        %v10305 = vld [vmem:[#allocation24 + $0xb8] sm:$0xff]
        %v10306 = vld [vmem:[#allocation24 + $0xc0] sm:$0xff]
        %v10307 = vld [vmem:[#allocation24 + $0xc8] sm:$0xff]
        %v10308 = vld [vmem:[#allocation24 + $0xd0] sm:$0xff]
        %v10309 = vld [vmem:[#allocation24 + $0xd8] sm:$0xff]
        %v10310 = vld [vmem:[#allocation24 + $0xe0] sm:$0xff]
        %v10311 = vld [vmem:[#allocation24 + $0xe8] sm:$0xff]
        %v10312 = vld [vmem:[#allocation24 + $0xf0] sm:$0xff]
        %v10313 = vld [vmem:[#allocation24 + $0xf8] sm:$0xff]
        %vm10314 = vcmask 523264
        %v10316 = vsel %vm10314, %v10282, 0
        %v10319 = vsel %vm10314, %v10283, 0
        %v10322 = vsel %vm10314, %v10284, 0
        %v10325 = vsel %vm10314, %v10285, 0
        %v10328 = vsel %vm10314, %v10286, 0
        %v10331 = vsel %vm10314, %v10287, 0
        %v10334 = vsel %vm10314, %v10288, 0
        %v10337 = vsel %vm10314, %v10289, 0
        %v10340 = vsel %vm10314, %v10290, 0
        %v10343 = vsel %vm10314, %v10291, 0
        %v10346 = vsel %vm10314, %v10292, 0
        %v10349 = vsel %vm10314, %v10293, 0
        %v10352 = vsel %vm10314, %v10294, 0
        %v10355 = vsel %vm10314, %v10295, 0
        %v10358 = vsel %vm10314, %v10296, 0
        %v10361 = vsel %vm10314, %v10297, 0
        %v10364 = vsel %vm10314, %v10298, 0
        %v10367 = vsel %vm10314, %v10299, 0
        %v10370 = vsel %vm10314, %v10300, 0
        %v10373 = vsel %vm10314, %v10301, 0
        %v10376 = vsel %vm10314, %v10302, 0
        %v10379 = vsel %vm10314, %v10303, 0
        %v10382 = vsel %vm10314, %v10304, 0
        %v10385 = vsel %vm10314, %v10305, 0
        %v10388 = vsel %vm10314, %v10306, 0
        %v10391 = vsel %vm10314, %v10307, 0
        %v10394 = vsel %vm10314, %v10308, 0
        %v10397 = vsel %vm10314, %v10309, 0
        %v10400 = vsel %vm10314, %v10310, 0
        %v10403 = vsel %vm10314, %v10311, 0
        %v10406 = vsel %vm10314, %v10312, 0
        %v10409 = vsel %vm10314, %v10313, 0
        %10411 = vmatprep.subr.mxu0 0.0
        %10412 = vmatpush1.msra.mxu0 %v10274
        %10413 = vmatprep.subr.mxu0 0.0
        %10414 = vmatpush1.msra.mxu0 %v10275
        %10415 = vmatprep.subr.mxu0 0.0
        %10416 = vmatpush1.msra.mxu0 %v10276
        %10417 = vmatprep.subr.mxu0 0.0
        %10418 = vmatpush1.msra.mxu0 %v10277
        %10419 = vmatprep.subr.mxu0 0.0
        %10420 = vmatpush1.msra.mxu0 %v10278
        %10421 = vmatprep.subr.mxu0 0.0
        %10422 = vmatpush1.msra.mxu0 %v10279
        %10423 = vmatprep.subr.mxu0 0.0
        %10424 = vmatpush1.msra.mxu0 %v10280
        %10425 = vmatprep.subr.mxu0 0.0
        %10426 = vmatpush1.msra.mxu0 %v10281
        %10427 = vmatprep.subr.mxu0 0.0
        %10428 = vmatpush1.msra.mxu0 0.0
        %10429 = vmatprep.subr.mxu0 0.0
        %10430 = vmatpush1.msra.mxu0 0.0
        %10431 = vmatprep.subr.mxu0 0.0
        %10432 = vmatpush1.msra.mxu0 0.0
        %10433 = vmatprep.subr.mxu0 0.0
        %10434 = vmatpush1.msra.mxu0 0.0
        %10435 = vmatprep.subr.mxu0 0.0
        %10436 = vmatpush1.msra.mxu0 0.0
        %10437 = vmatprep.subr.mxu0 0.0
        %10438 = vmatpush1.msra.mxu0 0.0
        %10439 = vmatprep.subr.mxu0 0.0
        %10440 = vmatpush1.msra.mxu0 0.0
        %10441 = vmatprep.subr.mxu0 0.0
        %10442 = vmatpush1.msra.mxu0 0.0
        %10443 = vmatprep.subr.mxu0 0.0
        %10444 = vmatpush1.msra.mxu0 0.0
        %10445 = vmatprep.subr.mxu0 0.0
        %10446 = vmatpush1.msra.mxu0 0.0
        %10447 = vmatprep.subr.mxu0 0.0
        %10448 = vmatpush1.msra.mxu0 0.0
        %10449 = vmatprep.subr.mxu0 0.0
        %10450 = vmatpush1.msra.mxu0 0.0
        %10451 = vmatprep.subr.mxu0 0.0
        %10452 = vmatpush1.msra.mxu0 0.0
        %10453 = vmatprep.subr.mxu0 0.0
        %10454 = vmatpush1.msra.mxu0 0.0
        %10455 = vmatprep.subr.mxu0 0.0
        %10456 = vmatpush1.msra.mxu0 0.0
        %10457 = vmatprep.subr.mxu0 0.0
        %10458 = vmatpush1.msra.mxu0 0.0
        %10459 = vmatprep.subr.mxu0 0.0
        %10460 = vmatpush1.msra.mxu0 0.0
        %10461 = vmatprep.subr.mxu0 0.0
        %10462 = vmatpush1.msra.mxu0 0.0
        %10463 = vmatprep.subr.mxu0 0.0
        %10464 = vmatpush1.msra.mxu0 0.0
        %10465 = vmatprep.subr.mxu0 0.0
        %10466 = vmatpush1.msra.mxu0 0.0
        %10467 = vmatprep.subr.mxu0 0.0
        %10468 = vmatpush1.msra.mxu0 0.0
        %10469 = vmatprep.subr.mxu0 0.0
        %10470 = vmatpush1.msra.mxu0 0.0
        %10471 = vmatprep.subr.mxu0 0.0
        %10472 = vmatpush1.msra.mxu0 0.0
        %10473 = vmatprep.subr.mxu0 0.0
        %10474 = vmatpush1.msra.mxu0 0.0
        %10475 = vmatprep.mubr.f32.mxu0 0.0
        %10476 = vmatmul.mubr.f32.gmra.mrb[0].mxu0 %v10316
        %v10477 = vpop.f32.mrb[0].mxu0
        %v10478 = vadd.f32 0.0, %v10477
        %v10479 = vpop.f32.mrb[0].mxu0
        %10480 = vmatprep.mubr.f32.mxu0 0.0
        %10481 = vmatmul.mubr.f32.gmra.mrb[0].mxu0 %v10319
        %v10482 = vpop.f32.mrb[0].mxu0
        %v10483 = vadd.f32 0.0, %v10482
        %v10484 = vpop.f32.mrb[0].mxu0
        %10485 = vmatprep.mubr.f32.mxu0 0.0
        %10486 = vmatmul.mubr.f32.gmra.mrb[0].mxu0 %v10322
        %v10487 = vpop.f32.mrb[0].mxu0
        %v10488 = vadd.f32 0.0, %v10487
        %v10489 = vpop.f32.mrb[0].mxu0
        %10490 = vmatprep.mubr.f32.mxu0 0.0
        %10491 = vmatmul.mubr.f32.gmra.mrb[0].mxu0 %v10325
        %v10492 = vpop.f32.mrb[0].mxu0
        %v10493 = vadd.f32 0.0, %v10492
        %v10494 = vpop.f32.mrb[0].mxu0
        %10495 = vmatprep.mubr.f32.mxu0 0.0
        %10496 = vmatmul.mubr.f32.gmra.mrb[0].mxu0 %v10328
        %v10497 = vpop.f32.mrb[0].mxu0
        %v10498 = vadd.f32 0.0, %v10497
        %v10499 = vpop.f32.mrb[0].mxu0
        %10500 = vmatprep.mubr.f32.mxu0 0.0
        %10501 = vmatmul.mubr.f32.gmra.mrb[0].mxu0 %v10331
        %v10502 = vpop.f32.mrb[0].mxu0
        %v10503 = vadd.f32 0.0, %v10502
        %v10504 = vpop.f32.mrb[0].mxu0
        %10505 = vmatprep.mubr.f32.mxu0 0.0
        %10506 = vmatmul.mubr.f32.gmra.mrb[0].mxu0 %v10334
        %v10507 = vpop.f32.mrb[0].mxu0
        %v10508 = vadd.f32 0.0, %v10507
        %v10509 = vpop.f32.mrb[0].mxu0
        %10510 = vmatprep.mubr.f32.mxu0 0.0
        %10511 = vmatmul.mubr.f32.gmra.mrb[0].mxu0 %v10337
        %v10512 = vpop.f32.mrb[0].mxu0
        %v10513 = vadd.f32 0.0, %v10512
        %v10514 = vpop.f32.mrb[0].mxu0
        %10515 = vmatprep.mubr.f32.mxu0 0.0
        %10516 = vmatmul.mubr.f32.gmra.mrb[0].mxu0 %v10340
        %v10517 = vpop.f32.mrb[0].mxu0
        %v10518 = vadd.f32 0.0, %v10517
        %v10519 = vpop.f32.mrb[0].mxu0
        %10520 = vmatprep.mubr.f32.mxu0 0.0
        %10521 = vmatmul.mubr.f32.gmra.mrb[0].mxu0 %v10343
        %v10522 = vpop.f32.mrb[0].mxu0
        %v10523 = vadd.f32 0.0, %v10522
        %v10524 = vpop.f32.mrb[0].mxu0
        %10525 = vmatprep.mubr.f32.mxu0 0.0
        %10526 = vmatmul.mubr.f32.gmra.mrb[0].mxu0 %v10346
        %v10527 = vpop.f32.mrb[0].mxu0
        %v10528 = vadd.f32 0.0, %v10527
        %v10529 = vpop.f32.mrb[0].mxu0
        %10530 = vmatprep.mubr.f32.mxu0 0.0
        %10531 = vmatmul.mubr.f32.gmra.mrb[0].mxu0 %v10349
        %v10532 = vpop.f32.mrb[0].mxu0
        %v10533 = vadd.f32 0.0, %v10532
        %v10534 = vpop.f32.mrb[0].mxu0
        %10535 = vmatprep.mubr.f32.mxu0 0.0
        %10536 = vmatmul.mubr.f32.gmra.mrb[0].mxu0 %v10352
        %v10537 = vpop.f32.mrb[0].mxu0
        %v10538 = vadd.f32 0.0, %v10537
        %v10539 = vpop.f32.mrb[0].mxu0
        %10540 = vmatprep.mubr.f32.mxu0 0.0
        %10541 = vmatmul.mubr.f32.gmra.mrb[0].mxu0 %v10355
        %v10542 = vpop.f32.mrb[0].mxu0
        %v10543 = vadd.f32 0.0, %v10542
        %v10544 = vpop.f32.mrb[0].mxu0
        %10545 = vmatprep.mubr.f32.mxu0 0.0
        %10546 = vmatmul.mubr.f32.gmra.mrb[0].mxu0 %v10358
        %v10547 = vpop.f32.mrb[0].mxu0
        %v10548 = vadd.f32 0.0, %v10547
        %v10549 = vpop.f32.mrb[0].mxu0
        %10550 = vmatprep.mubr.f32.mxu0 0.0
        %10551 = vmatmul.mubr.f32.gmra.mrb[0].mxu0 %v10361
        %v10552 = vpop.f32.mrb[0].mxu0
        %v10553 = vadd.f32 0.0, %v10552
        %v10554 = vpop.f32.mrb[0].mxu0
        %10555 = vmatprep.mubr.f32.mxu0 0.0
        %10556 = vmatmul.mubr.f32.gmra.mrb[0].mxu0 %v10364
        %v10557 = vpop.f32.mrb[0].mxu0
        %v10558 = vadd.f32 0.0, %v10557
        %v10559 = vpop.f32.mrb[0].mxu0
        %10560 = vmatprep.mubr.f32.mxu0 0.0
        %10561 = vmatmul.mubr.f32.gmra.mrb[0].mxu0 %v10367
        %v10562 = vpop.f32.mrb[0].mxu0
        %v10563 = vadd.f32 0.0, %v10562
        %v10564 = vpop.f32.mrb[0].mxu0
        %10565 = vmatprep.mubr.f32.mxu0 0.0
        %10566 = vmatmul.mubr.f32.gmra.mrb[0].mxu0 %v10370
        %v10567 = vpop.f32.mrb[0].mxu0
        %v10568 = vadd.f32 0.0, %v10567
        %v10569 = vpop.f32.mrb[0].mxu0
        %10570 = vmatprep.mubr.f32.mxu0 0.0
        %10571 = vmatmul.mubr.f32.gmra.mrb[0].mxu0 %v10373
        %v10572 = vpop.f32.mrb[0].mxu0
        %v10573 = vadd.f32 0.0, %v10572
        %v10574 = vpop.f32.mrb[0].mxu0
        %10575 = vmatprep.mubr.f32.mxu0 0.0
        %10576 = vmatmul.mubr.f32.gmra.mrb[0].mxu0 %v10376
        %v10577 = vpop.f32.mrb[0].mxu0
        %v10578 = vadd.f32 0.0, %v10577
        %v10579 = vpop.f32.mrb[0].mxu0
        %10580 = vmatprep.mubr.f32.mxu0 0.0
        %10581 = vmatmul.mubr.f32.gmra.mrb[0].mxu0 %v10379
        %v10582 = vpop.f32.mrb[0].mxu0
        %v10583 = vadd.f32 0.0, %v10582
        %v10584 = vpop.f32.mrb[0].mxu0
        %10585 = vmatprep.mubr.f32.mxu0 0.0
        %10586 = vmatmul.mubr.f32.gmra.mrb[0].mxu0 %v10382
        %v10587 = vpop.f32.mrb[0].mxu0
        %v10588 = vadd.f32 0.0, %v10587
        %v10589 = vpop.f32.mrb[0].mxu0
        %10590 = vmatprep.mubr.f32.mxu0 0.0
        %10591 = vmatmul.mubr.f32.gmra.mrb[0].mxu0 %v10385
        %v10592 = vpop.f32.mrb[0].mxu0
        %v10593 = vadd.f32 0.0, %v10592
        %v10594 = vpop.f32.mrb[0].mxu0
        %10595 = vmatprep.mubr.f32.mxu0 0.0
        %10596 = vmatmul.mubr.f32.gmra.mrb[0].mxu0 %v10388
        %v10597 = vpop.f32.mrb[0].mxu0
        %v10598 = vadd.f32 0.0, %v10597
        %v10599 = vpop.f32.mrb[0].mxu0
        %10600 = vmatprep.mubr.f32.mxu0 0.0
        %10601 = vmatmul.mubr.f32.gmra.mrb[0].mxu0 %v10391
        %v10602 = vpop.f32.mrb[0].mxu0
        %v10603 = vadd.f32 0.0, %v10602
        %v10604 = vpop.f32.mrb[0].mxu0
        %10605 = vmatprep.mubr.f32.mxu0 0.0
        %10606 = vmatmul.mubr.f32.gmra.mrb[0].mxu0 %v10394
        %v10607 = vpop.f32.mrb[0].mxu0
        %v10608 = vadd.f32 0.0, %v10607
        %v10609 = vpop.f32.mrb[0].mxu0
        %10610 = vmatprep.mubr.f32.mxu0 0.0
        %10611 = vmatmul.mubr.f32.gmra.mrb[0].mxu0 %v10397
        %v10612 = vpop.f32.mrb[0].mxu0
        %v10613 = vadd.f32 0.0, %v10612
        %v10614 = vpop.f32.mrb[0].mxu0
        %10615 = vmatprep.mubr.f32.mxu0 0.0
        %10616 = vmatmul.mubr.f32.gmra.mrb[0].mxu0 %v10400
        %v10617 = vpop.f32.mrb[0].mxu0
        %v10618 = vadd.f32 0.0, %v10617
        %v10619 = vpop.f32.mrb[0].mxu0
        %10620 = vmatprep.mubr.f32.mxu0 0.0
        %10621 = vmatmul.mubr.f32.gmra.mrb[0].mxu0 %v10403
        %v10622 = vpop.f32.mrb[0].mxu0
        %v10623 = vadd.f32 0.0, %v10622
        %v10624 = vpop.f32.mrb[0].mxu0
        %10625 = vmatprep.mubr.f32.mxu0 0.0
        %10626 = vmatmul.mubr.f32.gmra.mrb[0].mxu0 %v10406
        %v10627 = vpop.f32.mrb[0].mxu0
        %v10628 = vadd.f32 0.0, %v10627
        %v10629 = vpop.f32.mrb[0].mxu0
        %10630 = vmatprep.mubr.f32.mxu0 0.0
        %10631 = vmatmul.mubr.f32.gmra.mrb[0].mxu0 %v10409
        %v10632 = vpop.f32.mrb[0].mxu0
        %v10633 = vadd.f32 0.0, %v10632
        %v10634 = vpop.f32.mrb[0].mxu0
        %10635 = vdwg.mxu0
        %10636 = vst.msk [vmem:[%s761] sm:$0xff] %vm2431, %v10478
        %10637 = vst.msk [vmem:[%s761 + $0x8] sm:$0xff] %vm2431, %v10483
        %10638 = vst.msk [vmem:[%s761 + $0x10] sm:$0xff] %vm2431, %v10488
        %10639 = vst.msk [vmem:[%s761 + $0x18] sm:$0xff] %vm2431, %v10493
        %10640 = vst.msk [vmem:[%s761 + $0x20] sm:$0xff] %vm2431, %v10498
        %10641 = vst.msk [vmem:[%s761 + $0x28] sm:$0xff] %vm2431, %v10503
        %10642 = vst.msk [vmem:[%s761 + $0x30] sm:$0xff] %vm2431, %v10508
        %10643 = vst.msk [vmem:[%s761 + $0x38] sm:$0xff] %vm2431, %v10513
        %10644 = vst.msk [vmem:[%s761 + $0x40] sm:$0xff] %vm2431, %v10518
        %10645 = vst.msk [vmem:[%s761 + $0x48] sm:$0xff] %vm2431, %v10523
        %10646 = vst.msk [vmem:[%s761 + $0x50] sm:$0xff] %vm2431, %v10528
        %10647 = vst.msk [vmem:[%s761 + $0x58] sm:$0xff] %vm2431, %v10533
        %10648 = vst.msk [vmem:[%s761 + $0x60] sm:$0xff] %vm2431, %v10538
        %10649 = vst.msk [vmem:[%s761 + $0x68] sm:$0xff] %vm2431, %v10543
        %10650 = vst.msk [vmem:[%s761 + $0x70] sm:$0xff] %vm2431, %v10548
        %10651 = vst.msk [vmem:[%s761 + $0x78] sm:$0xff] %vm2431, %v10553
        %10652 = vst.msk [vmem:[%s761 + $0x80] sm:$0xff] %vm2431, %v10558
        %10653 = vst.msk [vmem:[%s761 + $0x88] sm:$0xff] %vm2431, %v10563
        %10654 = vst.msk [vmem:[%s761 + $0x90] sm:$0xff] %vm2431, %v10568
        %10655 = vst.msk [vmem:[%s761 + $0x98] sm:$0xff] %vm2431, %v10573
        %10656 = vst.msk [vmem:[%s761 + $0xa0] sm:$0xff] %vm2431, %v10578
        %10657 = vst.msk [vmem:[%s761 + $0xa8] sm:$0xff] %vm2431, %v10583
        %10658 = vst.msk [vmem:[%s761 + $0xb0] sm:$0xff] %vm2431, %v10588
        %10659 = vst.msk [vmem:[%s761 + $0xb8] sm:$0xff] %vm2431, %v10593
        %10660 = vst.msk [vmem:[%s761 + $0xc0] sm:$0xff] %vm2431, %v10598
        %10661 = vst.msk [vmem:[%s761 + $0xc8] sm:$0xff] %vm2431, %v10603
        %10662 = vst.msk [vmem:[%s761 + $0xd0] sm:$0xff] %vm2431, %v10608
        %10663 = vst.msk [vmem:[%s761 + $0xd8] sm:$0xff] %vm2431, %v10613
        %10664 = vst.msk [vmem:[%s761 + $0xe0] sm:$0xff] %vm2431, %v10618
        %10665 = vst.msk [vmem:[%s761 + $0xe8] sm:$0xff] %vm2431, %v10623
        %10666 = vst.msk [vmem:[%s761 + $0xf0] sm:$0xff] %vm2431, %v10628
        %10667 = vst.msk [vmem:[%s761 + $0xf8] sm:$0xff] %vm2431, %v10633
        %p10668 = scmp.lt.s32.totalorder %s38, 1
        %s10669 = scalar_select %p10668, %s38, 1
        %s10670 = smul.addr %s10669, 32
        %s10671 = smul.addr %s10670, 8
        %s10672 = scalar_lea.vmem %s17, %s10671
        // Predicated region
        $region145: #{decoder_forward.1} parent=87 // pred_check
          %p10673 = pneg %p423
        $region146: #{decoder_forward.1} parent=87 // pred_check_branch
          %10675 = sbr.rel (%p10673) target = $region148
        $region147: #{decoder_forward.1} parent=87 // pred_region
          _
        $region148: #{decoder_forward.1} parent=87 // pred_fallthru
          _
      $region88: #{decoder_forward.1} parent=5 // pred_fallthru
        _
      %p10676 = scmp.le.s32.totalorder 2, %s33
      // Predicated region
      $region149: #{decoder_forward.1} parent=5 // pred_check
        %p10677 = pneg %p10676
      $region150: #{decoder_forward.1} parent=5 // pred_check_branch
        %10679 = sbr.rel (%p10677) target = $region152
      $region151: #{decoder_forward.1} parent=5 // pred_region
        %s10680 = ssub.s32 %s33, 2
        // Predicated region
        $region153: #{decoder_forward.1} parent=151 // pred_check
          %p10681 = pneg %p429
        $region154: #{decoder_forward.1} parent=151 // pred_check_branch
          %10683 = sbr.rel (%p10681) target = $region156
        $region155: #{decoder_forward.1} parent=151 // pred_region
          %p10684 = scmp.lt.s32.totalorder %s39, 1
          %s10685 = scalar_select %p10684, %s39, 1
          %s10686 = smul.addr %s10685, 32
          %s10687 = smul.addr %s10686, 8
          %s10688 = scalar_lea.vmem %s17, %s10687
        $region156: #{decoder_forward.1} parent=151 // pred_fallthru
          _
      $region152: #{decoder_forward.1} parent=5 // pred_fallthru
        _
    $region6: #{decoder_forward.1} parent=1 // loop_footer
      %s37 = sadd.s32 1, %s33
    $region7: #{decoder_forward.1} parent=1 // loop_footer_branch
      %32 = sbr.rel target = $region3
    $region8: #{decoder_forward.1} parent=1 // loop_exit
      _
    %10689 = vsyncpa [#allocation5], 1
    %s10690 = scalar_lea.sflag [#allocation5], 1
    %10691 = vsyncpa %s10690, 1
    %10692 = vsyncpa [#allocation7], 1
    %10693 = vsyncpa [#allocation10], 1
    %10694 = vsyncpa [#allocation13], 1
    %10695 = vsyncpa [#allocation16], 1
    %10696 = vsyncpa [#allocation19], 1
    %10697 = vsyncpa [#allocation22], 1
    %10698 = vsyncpa [#allocation25], 1

</llo_original>
